<compile_context>
chip_gen: v5e
topology: v5e:2x2
jax: 0.10.0
libtpu: 0.0.40
codegen_flags: <defaults>
</compile_context>

<pallas_src>
import jax
import jax.numpy as jnp
from jax.experimental import pallas as pl
from jax.experimental.pallas import tpu as pltpu

SRC_DIMS = 23
DST_DIMS = 27
HIDDEN = 16
HEADS = 5
NEG_SLOPE = 0.2                       # GATv2Conv default negative_slope
OUT_DIM = HIDDEN + HEADS * HIDDEN     # 96


def _step3_kernel(att_s_ref,                                   # SMEM [HEADS, HIDDEN]
                  src_x_ref, dst_x_ref,
                  w_src_ref, b_src_ref, w_dst_ref, b_dst_ref,
                  wl_ref, bl_ref, wr_ref, br_ref,
                  att_mat_ref, att_mat_t_ref, gat_bias_ref, adj_ref,
                  out_ref):
    f32 = jnp.float32

    # ---------------- encoders: Linear + ReLU ----------------
    src_enc = jnp.maximum(
        jnp.dot(src_x_ref[...], w_src_ref[...], preferred_element_type=f32)
        + b_src_ref[...], 0.0)                                  # [Ns, H]
    dst_enc = jnp.maximum(
        jnp.dot(dst_x_ref[...], w_dst_ref[...], preferred_element_type=f32)
        + b_dst_ref[...], 0.0)                                  # [TD, H]

    # -------- fused per-head projections (lin_l / lin_r, all heads at once) --------
    xl_all = jnp.dot(src_enc, wl_ref[...], preferred_element_type=f32) + bl_ref[...]   # [Ns, H*heads]
    xr_all = jnp.dot(dst_enc, wr_ref[...], preferred_element_type=f32) + br_ref[...]   # [TD, H*heads]
    xl_all_t = xl_all.T                                         # [H*heads, Ns]

    # linear part of leaky_relu factorizes: slope * att_h . (xr_i + xl_j)
    # att_mat is block-diagonal [H*heads, heads] pre-scaled by NEG_SLOPE in the wrapper.
    xr_att = jnp.dot(xr_all, att_mat_ref[...], preferred_element_type=f32)        # [TD, heads]
    xl_att_t = jnp.dot(att_mat_t_ref[...], xl_all_t, preferred_element_type=f32)  # [heads, Ns]

    mask = adj_ref[...] > 0                                     # [TD, Ns] bool
    maskf = mask.astype(f32)
    neg = f32(-1e30)

    # destination encodings go straight into the first output slice
    out_ref[:, 0:HIDDEN] = dst_enc

    # ---------------- GATv2 attention, per head (lane-dense [TD, Ns] math) ----------------
    for h in range(HEADS):
        off = h * HIDDEN

        # leaky_relu(x) = slope*x + (1-slope)*relu(x); slope*x part is already in xr_att/xl_att_t
        logits = xr_att[:, h:h + 1] + xl_att_t[h:h + 1, :]      # [TD, Ns]
        for c in range(HIDDEN):
            k = off + c
            scale = att_s_ref[h, c]                             # (1-slope)*att[h,c], SMEM scalar
            logits = logits + scale * jnp.maximum(
                xr_all[:, k:k + 1] + xl_all_t[k:k + 1, :], 0.0)

        # masked softmax over source nodes (per destination node)
        ml = jnp.where(mask, logits, neg)
        m = jnp.max(ml, axis=-1, keepdims=True)
        e = jnp.exp(ml - m) * maskf
        s = jnp.sum(e, axis=-1, keepdims=True)
        alpha = e / jnp.maximum(s, 1e-16)                       # [TD, Ns]

        # aggregate alpha * x_j, add bias slice, outer ReLU, write output slice
        agg = jnp.dot(alpha, xl_all[:, off:off + HIDDEN],
                      preferred_element_type=f32)               # [TD, H]
        out_ref[:, HIDDEN + off:HIDDEN + off + HIDDEN] = jnp.maximum(
            agg + gat_bias_ref[:, off:off + HIDDEN], 0.0)


def step_three_forward(src_x, dst_x, edge_index, params, *, tile_d=256):
    n_src = src_x.shape[0]
    n_dst = dst_x.shape[0]

    # dense bipartite adjacency mask adj[dst, src]; values are exactly {0,1} so
    # bfloat16 is lossless and halves HBM->VMEM traffic for the largest input.
    adj = jnp.zeros((n_dst, n_src), jnp.bfloat16).at[
        edge_index[1], edge_index[0]].set(jnp.bfloat16(1.0))

    # ---- fuse per-head GATv2 parameters (wrapper-side, plain JAX) ----
    # weights [H, in, out] -> [in, H*out]; biases/att [H, 1, out] -> [1, H*out]
    wl = jnp.transpose(params["wl"], (1, 0, 2)).reshape(HIDDEN, HEADS * HIDDEN)
    wr = jnp.transpose(params["wr"], (1, 0, 2)).reshape(HIDDEN, HEADS * HIDDEN)
    bl = params["bl"].reshape(1, HEADS * HIDDEN)
    br = params["br"].reshape(1, HEADS * HIDDEN)
    gat_bias = params["gat_bias"].reshape(1, HEADS * HIDDEN)

    att_flat = params["att"].reshape(HEADS, HIDDEN)                       # [5, 16]
    att_smem = (1.0 - NEG_SLOPE) * att_flat                               # SMEM scalars
    # block-diagonal attention matrix for the factorized linear part, pre-scaled by slope
    eye = jnp.eye(HEADS, dtype=jnp.float32)
    att_mat = NEG_SLOPE * (att_flat[:, :, None] * eye[:, None, :]
                           ).reshape(HEADS * HIDDEN, HEADS)               # [80, 5]
    att_mat_t = att_mat.T                                                 # [5, 80]

    # ---- destination-node tiling ----
    td = n_dst if n_dst <= tile_d else tile_d          # tile_d must be a multiple of 8
    grid = (pl.cdiv(n_dst, td),)

    def full(shape):
        return pl.BlockSpec(shape, lambda i: (0,) * len(shape))

    in_specs = [
        pl.BlockSpec(memory_space=pltpu.MemorySpace.SMEM),            # att scalars
        full((n_src, SRC_DIMS)),                                      # src_x
        pl.BlockSpec((td, DST_DIMS), lambda i: (i, 0)),               # dst_x
        full((SRC_DIMS, HIDDEN)), full((1, HIDDEN)),                  # w_src, b_src
        full((DST_DIMS, HIDDEN)), full((1, HIDDEN)),                  # w_dst, b_dst
        full((HIDDEN, HEADS * HIDDEN)), full((1, HEADS * HIDDEN)),    # wl, bl
        full((HIDDEN, HEADS * HIDDEN)), full((1, HEADS * HIDDEN)),    # wr, br
        full((HEADS * HIDDEN, HEADS)), full((HEADS, HEADS * HIDDEN)), # att_mat, att_mat_t
        full((1, HEADS * HIDDEN)),                                    # gat_bias
        pl.BlockSpec((td, n_src), lambda i: (i, 0)),                  # adj
    ]
    out_spec = pl.BlockSpec((td, OUT_DIM), lambda i: (i, 0))

    flops = (2 * n_src * SRC_DIMS * HIDDEN + 2 * n_dst * DST_DIMS * HIDDEN
             + 2 * (n_src + n_dst) * HIDDEN * HEADS * HIDDEN
             + 4 * n_dst * n_src * HEADS * HIDDEN)
    bytes_accessed = (2 * n_dst * n_src                      # bf16 adj
                      + 4 * (n_src * SRC_DIMS + n_dst * DST_DIMS + n_dst * OUT_DIM)
                      + 4 * (SRC_DIMS + DST_DIMS + 4 * HIDDEN + 4) * HIDDEN * HEADS)

    # TODO(synk): for very large graphs raise vmem_limit_bytes (v6e) / shrink tile_d (v7x,
    # 64 MiB VMEM) and consider a CSR/scalar-prefetch formulation instead of dense adj.
    return pl.pallas_call(
        _step3_kernel,
        out_shape=jax.ShapeDtypeStruct((n_dst, OUT_DIM), jnp.float32),
        grid=grid,
        in_specs=in_specs,
        out_specs=out_spec,
        compiler_params=pltpu.CompilerParams(dimension_semantics=("parallel",)),
        cost_estimate=pl.CostEstimate(flops=flops,
                                      transcendentals=HEADS * n_dst * n_src,
                                      bytes_accessed=bytes_accessed),
    )(att_smem, src_x, dst_x,
      params["w_src"], params["b_src"], params["w_dst"], params["b_dst"],
      wl, bl, wr, br, att_mat, att_mat_t, gat_bias, adj)


def _reference(src_x, dst_x, edge_index, params):
    """Pure-JAX reference of the same math for a correctness check."""
    src_enc = jax.nn.relu(src_x @ params["w_src"] + params["b_src"][0])
    dst_enc = jax.nn.relu(dst_x @ params["w_dst"] + params["b_dst"][0])
    adj = jnp.zeros((dst_x.shape[0], src_x.shape[0])).at[
        edge_index[1], edge_index[0]].set(1.0)
    heads = []
    for h in range(HEADS):
        xl = src_enc @ params["wl"][h] + params["bl"][h, 0]
        xr = dst_enc @ params["wr"][h] + params["br"][h, 0]
        g = xr[:, None, :] + xl[None, :, :]
        g = jnp.where(g > 0, g, NEG_SLOPE * g)
        logits = jnp.sum(g * params["att"][h, 0][None, None, :], -1)
        ml = jnp.where(adj > 0, logits, -1e30)
        e = jnp.exp(ml - ml.max(-1, keepdims=True)) * adj
        alpha = e / jnp.maximum(e.sum(-1, keepdims=True), 1e-16)
        heads.append(jax.nn.relu(alpha @ xl + params["gat_bias"][h, 0]))
    return jnp.concatenate([dst_enc] + heads, -1)


def make_params(key):
    ks = jax.random.split(key, 12)
    u = lambda k, s, sc=0.2: (jax.random.uniform(k, s, jnp.float32) - 0.5) * 2 * sc
    return {
        "w_src": u(ks[0], (SRC_DIMS, HIDDEN)),
        "b_src": u(ks[1], (1, HIDDEN)),
        "w_dst": u(ks[2], (DST_DIMS, HIDDEN)),
        "b_dst": u(ks[3], (1, HIDDEN)),
        # GATv2 per-head weights: [H, in, out], biases [H, 1, out]
        "wl": u(ks[4], (HEADS, HIDDEN, HIDDEN)),
        "bl": u(ks[5], (HEADS, 1, HIDDEN)),
        "wr": u(ks[6], (HEADS, HIDDEN, HIDDEN)),
        "br": u(ks[7], (HEADS, 1, HIDDEN)),
        "att": u(ks[8], (HEADS, 1, HIDDEN)),
        "gat_bias": u(ks[9], (HEADS, 1, HIDDEN)),
    }


if __name__ == "__main__":
    key = jax.random.PRNGKey(0)
    k_p, k_src, k_dst = jax.random.split(key, 3)

    n_src, n_dst = 64, 128
    params = make_params(k_p)
    src_x = jax.random.normal(k_src, (n_src, SRC_DIMS), jnp.float32)
    dst_x = jax.random.normal(k_dst, (n_dst, DST_DIMS), jnp.float32)

    # deterministic bipartite edges: each dst node d receives from 3 distinct src nodes
    d = jnp.arange(n_dst)
    dsts = jnp.repeat(d, 3)
    srcs = jnp.stack([d % n_src, (d + 3) % n_src, (d + 7) % n_src], axis=1).reshape(-1)
    edge_index = jnp.stack([srcs, dsts], axis=0).astype(jnp.int32)   # [2, E]

    out = step_three_forward(src_x, dst_x, edge_index, params, tile_d=64)  # grid of 2 dst tiles
    out = jax.block_until_ready(out)

    ref = _reference(src_x, dst_x, edge_index, params)
    assert out.shape == (n_dst, OUT_DIM)
    assert jnp.allclose(out, ref, rtol=5e-4, atol=5e-4)

    print("KERNEL_OK")
</pallas_src>

<mosaic_0001>
module attributes {stable_mosaic.version = 11 : i64} {
  func.func @_step3_kernel(%arg0: i32, %arg1: memref<5x16xf32, #tpu.memory_space<smem>>, %arg2: memref<64x23xf32, #tpu.memory_space<vmem>>, %arg3: memref<64x27xf32, #tpu.memory_space<vmem>>, %arg4: memref<23x16xf32, #tpu.memory_space<vmem>>, %arg5: memref<1x16xf32, #tpu.memory_space<vmem>>, %arg6: memref<27x16xf32, #tpu.memory_space<vmem>>, %arg7: memref<1x16xf32, #tpu.memory_space<vmem>>, %arg8: memref<16x80xf32, #tpu.memory_space<vmem>>, %arg9: memref<1x80xf32, #tpu.memory_space<vmem>>, %arg10: memref<16x80xf32, #tpu.memory_space<vmem>>, %arg11: memref<1x80xf32, #tpu.memory_space<vmem>>, %arg12: memref<80x5xf32, #tpu.memory_space<vmem>>, %arg13: memref<5x80xf32, #tpu.memory_space<vmem>>, %arg14: memref<1x80xf32, #tpu.memory_space<vmem>>, %arg15: memref<64x64xbf16, #tpu.memory_space<vmem>>, %arg16: memref<64x96xf32, #tpu.memory_space<vmem>>) attributes {dimension_semantics = [#tpu.dimension_semantics<parallel>], iteration_bounds = array<i64: 2>, scalar_prefetch = 0 : i64, scratch_operands = 0 : i64, tpu.core_type = #tpu.core_type<tc>, window_params = [{transform_indices = @transform_0, window_bounds = array<i64: 5, 16>}, {pipeline_mode = #tpu.pipeline_mode<synchronous>, transform_indices = @transform_1, window_bounds = array<i64: 64, 23>}, {transform_indices = @transform_2, window_bounds = array<i64: 64, 27>}, {pipeline_mode = #tpu.pipeline_mode<synchronous>, transform_indices = @transform_3, window_bounds = array<i64: 23, 16>}, {pipeline_mode = #tpu.pipeline_mode<synchronous>, transform_indices = @transform_4, window_bounds = array<i64: 1, 16>}, {pipeline_mode = #tpu.pipeline_mode<synchronous>, transform_indices = @transform_5, window_bounds = array<i64: 27, 16>}, {pipeline_mode = #tpu.pipeline_mode<synchronous>, transform_indices = @transform_6, window_bounds = array<i64: 1, 16>}, {pipeline_mode = #tpu.pipeline_mode<synchronous>, transform_indices = @transform_7, window_bounds = array<i64: 16, 80>}, {pipeline_mode = #tpu.pipeline_mode<synchronous>, transform_indices = @transform_8, window_bounds = array<i64: 1, 80>}, {pipeline_mode = #tpu.pipeline_mode<synchronous>, transform_indices = @transform_9, window_bounds = array<i64: 16, 80>}, {pipeline_mode = #tpu.pipeline_mode<synchronous>, transform_indices = @transform_10, window_bounds = array<i64: 1, 80>}, {pipeline_mode = #tpu.pipeline_mode<synchronous>, transform_indices = @transform_11, window_bounds = array<i64: 80, 5>}, {pipeline_mode = #tpu.pipeline_mode<synchronous>, transform_indices = @transform_12, window_bounds = array<i64: 5, 80>}, {pipeline_mode = #tpu.pipeline_mode<synchronous>, transform_indices = @transform_13, window_bounds = array<i64: 1, 80>}, {transform_indices = @transform_14, window_bounds = array<i64: 64, 64>}, {transform_indices = @transform_15, window_bounds = array<i64: 64, 96>}]} {
    %c0 = arith.constant 0 : index
    %c0_0 = arith.constant 0 : index
    %0 = vector.load %arg2[%c0, %c0_0] : memref<64x23xf32, #tpu.memory_space<vmem>>, vector<64x23xf32>
    %c0_1 = arith.constant 0 : index
    %c0_2 = arith.constant 0 : index
    %1 = vector.load %arg4[%c0_1, %c0_2] : memref<23x16xf32, #tpu.memory_space<vmem>>, vector<23x16xf32>
    %cst = arith.constant dense<0.000000e+00> : vector<64x16xf32>
    %2 = tpu.matmul %0, %1, %cst {dimension_numbers = #tpu.dot_dimension_numbers<[1], [0], [0], [1], [0, 0, 1, 1], [], []>} : vector<64x23xf32>, vector<23x16xf32>, vector<64x16xf32> -> vector<64x16xf32>
    %c0_3 = arith.constant 0 : index
    %c0_4 = arith.constant 0 : index
    %3 = vector.load %arg5[%c0_3, %c0_4] : memref<1x16xf32, #tpu.memory_space<vmem>>, vector<1x16xf32>
    %4 = vector.broadcast %3 : vector<1x16xf32> to vector<64x16xf32>
    %5 = arith.addf %2, %4 : vector<64x16xf32>
    %cst_5 = arith.constant 0.000000e+00 : f32
    %6 = vector.broadcast %cst_5 : f32 to vector<64x16xf32>
    %7 = arith.maximumf %5, %6 : vector<64x16xf32>
    %c0_6 = arith.constant 0 : index
    %c0_7 = arith.constant 0 : index
    %8 = vector.load %arg3[%c0_6, %c0_7] : memref<64x27xf32, #tpu.memory_space<vmem>>, vector<64x27xf32>
    %c0_8 = arith.constant 0 : index
    %c0_9 = arith.constant 0 : index
    %9 = vector.load %arg6[%c0_8, %c0_9] : memref<27x16xf32, #tpu.memory_space<vmem>>, vector<27x16xf32>
    %cst_10 = arith.constant dense<0.000000e+00> : vector<64x16xf32>
    %10 = tpu.matmul %8, %9, %cst_10 {dimension_numbers = #tpu.dot_dimension_numbers<[1], [0], [0], [1], [0, 0, 1, 1], [], []>} : vector<64x27xf32>, vector<27x16xf32>, vector<64x16xf32> -> vector<64x16xf32>
    %c0_11 = arith.constant 0 : index
    %c0_12 = arith.constant 0 : index
    %11 = vector.load %arg7[%c0_11, %c0_12] : memref<1x16xf32, #tpu.memory_space<vmem>>, vector<1x16xf32>
    %12 = vector.broadcast %11 : vector<1x16xf32> to vector<64x16xf32>
    %13 = arith.addf %10, %12 : vector<64x16xf32>
    %cst_13 = arith.constant 0.000000e+00 : f32
    %14 = vector.broadcast %cst_13 : f32 to vector<64x16xf32>
    %15 = arith.maximumf %13, %14 : vector<64x16xf32>
    %c0_14 = arith.constant 0 : index
    %c0_15 = arith.constant 0 : index
    %16 = vector.load %arg8[%c0_14, %c0_15] : memref<16x80xf32, #tpu.memory_space<vmem>>, vector<16x80xf32>
    %cst_16 = arith.constant dense<0.000000e+00> : vector<64x80xf32>
    %17 = tpu.matmul %7, %16, %cst_16 {dimension_numbers = #tpu.dot_dimension_numbers<[1], [0], [0], [1], [0, 0, 1, 1], [], []>} : vector<64x16xf32>, vector<16x80xf32>, vector<64x80xf32> -> vector<64x80xf32>
    %c0_17 = arith.constant 0 : index
    %c0_18 = arith.constant 0 : index
    %18 = vector.load %arg9[%c0_17, %c0_18] : memref<1x80xf32, #tpu.memory_space<vmem>>, vector<1x80xf32>
    %19 = vector.broadcast %18 : vector<1x80xf32> to vector<64x80xf32>
    %20 = arith.addf %17, %19 : vector<64x80xf32>
    %c0_19 = arith.constant 0 : index
    %c0_20 = arith.constant 0 : index
    %21 = vector.load %arg10[%c0_19, %c0_20] : memref<16x80xf32, #tpu.memory_space<vmem>>, vector<16x80xf32>
    %cst_21 = arith.constant dense<0.000000e+00> : vector<64x80xf32>
    %22 = tpu.matmul %15, %21, %cst_21 {dimension_numbers = #tpu.dot_dimension_numbers<[1], [0], [0], [1], [0, 0, 1, 1], [], []>} : vector<64x16xf32>, vector<16x80xf32>, vector<64x80xf32> -> vector<64x80xf32>
    %c0_22 = arith.constant 0 : index
    %c0_23 = arith.constant 0 : index
    %23 = vector.load %arg11[%c0_22, %c0_23] : memref<1x80xf32, #tpu.memory_space<vmem>>, vector<1x80xf32>
    %24 = vector.broadcast %23 : vector<1x80xf32> to vector<64x80xf32>
    %25 = arith.addf %22, %24 : vector<64x80xf32>
    %26 = tpu.transpose %20, [1, 0] : vector<64x80xf32> -> vector<80x64xf32>
    %c0_24 = arith.constant 0 : index
    %c0_25 = arith.constant 0 : index
    %27 = vector.load %arg12[%c0_24, %c0_25] : memref<80x5xf32, #tpu.memory_space<vmem>>, vector<80x5xf32>
    %cst_26 = arith.constant dense<0.000000e+00> : vector<64x5xf32>
    %28 = tpu.matmul %25, %27, %cst_26 {dimension_numbers = #tpu.dot_dimension_numbers<[1], [0], [0], [1], [0, 0, 1, 1], [], []>} : vector<64x80xf32>, vector<80x5xf32>, vector<64x5xf32> -> vector<64x5xf32>
    %c0_27 = arith.constant 0 : index
    %c0_28 = arith.constant 0 : index
    %29 = vector.load %arg13[%c0_27, %c0_28] : memref<5x80xf32, #tpu.memory_space<vmem>>, vector<5x80xf32>
    %cst_29 = arith.constant dense<0.000000e+00> : vector<5x64xf32>
    %30 = tpu.matmul %29, %26, %cst_29 {dimension_numbers = #tpu.dot_dimension_numbers<[1], [0], [0], [1], [0, 0, 1, 1], [], []>} : vector<5x80xf32>, vector<80x64xf32>, vector<5x64xf32> -> vector<5x64xf32>
    %c0_30 = arith.constant 0 : index
    %c0_31 = arith.constant 0 : index
    %31 = vector.load %arg15[%c0_30, %c0_31] : memref<64x64xbf16, #tpu.memory_space<vmem>>, vector<64x64xbf16>
    %cst_32 = arith.constant 0.000000e+00 : bf16
    %32 = vector.broadcast %cst_32 : bf16 to vector<64x64xbf16>
    %33 = arith.cmpf ogt, %31, %32 : vector<64x64xbf16>
    %34 = arith.extui %33 : vector<64x64xi1> to vector<64x64xi32>
    %35 = arith.sitofp %34 : vector<64x64xi32> to vector<64x64xf32>
    %c0_33 = arith.constant 0 : index
    %c0_34 = arith.constant 0 : index
    %36 = vector.load %arg16[%c0_33, %c0_34] : memref<64x96xf32, #tpu.memory_space<vmem>>, vector<64x16xf32>
    tpu.vector_store %arg16[%c0_33, %c0_34], %15 {strides = array<i32>} : memref<64x96xf32, #tpu.memory_space<vmem>>, vector<64x16xf32>,
    %37 = vector.extract_strided_slice %28 {offsets = [0, 0], sizes = [64, 1], strides = [1, 1]} : vector<64x5xf32> to vector<64x1xf32>
    %38 = vector.extract_strided_slice %30 {offsets = [0, 0], sizes = [1, 64], strides = [1, 1]} : vector<5x64xf32> to vector<1x64xf32>
    %39 = vector.broadcast %37 : vector<64x1xf32> to vector<64x64xf32>
    %40 = vector.broadcast %38 : vector<1x64xf32> to vector<64x64xf32>
    %41 = arith.addf %39, %40 : vector<64x64xf32>
    %c0_35 = arith.constant 0 : index
    %c0_36 = arith.constant 0 : index
    %42 = memref.load %arg1[%c0_35, %c0_36] : memref<5x16xf32, #tpu.memory_space<smem>>
    %43 = vector.extract_strided_slice %25 {offsets = [0, 0], sizes = [64, 1], strides = [1, 1]} : vector<64x80xf32> to vector<64x1xf32>
    %44 = vector.extract_strided_slice %26 {offsets = [0, 0], sizes = [1, 64], strides = [1, 1]} : vector<80x64xf32> to vector<1x64xf32>
    %45 = vector.broadcast %43 : vector<64x1xf32> to vector<64x64xf32>
    %46 = vector.broadcast %44 : vector<1x64xf32> to vector<64x64xf32>
    %47 = arith.addf %45, %46 : vector<64x64xf32>
    %cst_37 = arith.constant 0.000000e+00 : f32
    %48 = vector.broadcast %cst_37 : f32 to vector<64x64xf32>
    %49 = arith.maximumf %47, %48 : vector<64x64xf32>
    %50 = vector.broadcast %42 : f32 to vector<64x64xf32>
    %51 = arith.mulf %50, %49 : vector<64x64xf32>
    %52 = arith.addf %41, %51 : vector<64x64xf32>
    %c0_38 = arith.constant 0 : index
    %c1 = arith.constant 1 : index
    %53 = memref.load %arg1[%c0_38, %c1] : memref<5x16xf32, #tpu.memory_space<smem>>
    %54 = vector.extract_strided_slice %25 {offsets = [0, 1], sizes = [64, 1], strides = [1, 1]} : vector<64x80xf32> to vector<64x1xf32>
    %55 = vector.extract_strided_slice %26 {offsets = [1, 0], sizes = [1, 64], strides = [1, 1]} : vector<80x64xf32> to vector<1x64xf32>
    %56 = vector.broadcast %54 : vector<64x1xf32> to vector<64x64xf32>
    %57 = vector.broadcast %55 : vector<1x64xf32> to vector<64x64xf32>
    %58 = arith.addf %56, %57 : vector<64x64xf32>
    %cst_39 = arith.constant 0.000000e+00 : f32
    %59 = vector.broadcast %cst_39 : f32 to vector<64x64xf32>
    %60 = arith.maximumf %58, %59 : vector<64x64xf32>
    %61 = vector.broadcast %53 : f32 to vector<64x64xf32>
    %62 = arith.mulf %61, %60 : vector<64x64xf32>
    %63 = arith.addf %52, %62 : vector<64x64xf32>
    %c0_40 = arith.constant 0 : index
    %c2 = arith.constant 2 : index
    %64 = memref.load %arg1[%c0_40, %c2] : memref<5x16xf32, #tpu.memory_space<smem>>
    %65 = vector.extract_strided_slice %25 {offsets = [0, 2], sizes = [64, 1], strides = [1, 1]} : vector<64x80xf32> to vector<64x1xf32>
    %66 = vector.extract_strided_slice %26 {offsets = [2, 0], sizes = [1, 64], strides = [1, 1]} : vector<80x64xf32> to vector<1x64xf32>
    %67 = vector.broadcast %65 : vector<64x1xf32> to vector<64x64xf32>
    %68 = vector.broadcast %66 : vector<1x64xf32> to vector<64x64xf32>
    %69 = arith.addf %67, %68 : vector<64x64xf32>
    %cst_41 = arith.constant 0.000000e+00 : f32
    %70 = vector.broadcast %cst_41 : f32 to vector<64x64xf32>
    %71 = arith.maximumf %69, %70 : vector<64x64xf32>
    %72 = vector.broadcast %64 : f32 to vector<64x64xf32>
    %73 = arith.mulf %72, %71 : vector<64x64xf32>
    %74 = arith.addf %63, %73 : vector<64x64xf32>
    %c0_42 = arith.constant 0 : index
    %c3 = arith.constant 3 : index
    %75 = memref.load %arg1[%c0_42, %c3] : memref<5x16xf32, #tpu.memory_space<smem>>
    %76 = vector.extract_strided_slice %25 {offsets = [0, 3], sizes = [64, 1], strides = [1, 1]} : vector<64x80xf32> to vector<64x1xf32>
    %77 = vector.extract_strided_slice %26 {offsets = [3, 0], sizes = [1, 64], strides = [1, 1]} : vector<80x64xf32> to vector<1x64xf32>
    %78 = vector.broadcast %76 : vector<64x1xf32> to vector<64x64xf32>
    %79 = vector.broadcast %77 : vector<1x64xf32> to vector<64x64xf32>
    %80 = arith.addf %78, %79 : vector<64x64xf32>
    %cst_43 = arith.constant 0.000000e+00 : f32
    %81 = vector.broadcast %cst_43 : f32 to vector<64x64xf32>
    %82 = arith.maximumf %80, %81 : vector<64x64xf32>
    %83 = vector.broadcast %75 : f32 to vector<64x64xf32>
    %84 = arith.mulf %83, %82 : vector<64x64xf32>
    %85 = arith.addf %74, %84 : vector<64x64xf32>
    %c0_44 = arith.constant 0 : index
    %c4 = arith.constant 4 : index
    %86 = memref.load %arg1[%c0_44, %c4] : memref<5x16xf32, #tpu.memory_space<smem>>
    %87 = vector.extract_strided_slice %25 {offsets = [0, 4], sizes = [64, 1], strides = [1, 1]} : vector<64x80xf32> to vector<64x1xf32>
    %88 = vector.extract_strided_slice %26 {offsets = [4, 0], sizes = [1, 64], strides = [1, 1]} : vector<80x64xf32> to vector<1x64xf32>
    %89 = vector.broadcast %87 : vector<64x1xf32> to vector<64x64xf32>
    %90 = vector.broadcast %88 : vector<1x64xf32> to vector<64x64xf32>
    %91 = arith.addf %89, %90 : vector<64x64xf32>
    %cst_45 = arith.constant 0.000000e+00 : f32
    %92 = vector.broadcast %cst_45 : f32 to vector<64x64xf32>
    %93 = arith.maximumf %91, %92 : vector<64x64xf32>
    %94 = vector.broadcast %86 : f32 to vector<64x64xf32>
    %95 = arith.mulf %94, %93 : vector<64x64xf32>
    %96 = arith.addf %85, %95 : vector<64x64xf32>
    %c0_46 = arith.constant 0 : index
    %c5 = arith.constant 5 : index
    %97 = memref.load %arg1[%c0_46, %c5] : memref<5x16xf32, #tpu.memory_space<smem>>
    %98 = vector.extract_strided_slice %25 {offsets = [0, 5], sizes = [64, 1], strides = [1, 1]} : vector<64x80xf32> to vector<64x1xf32>
    %99 = vector.extract_strided_slice %26 {offsets = [5, 0], sizes = [1, 64], strides = [1, 1]} : vector<80x64xf32> to vector<1x64xf32>
    %100 = vector.broadcast %98 : vector<64x1xf32> to vector<64x64xf32>
    %101 = vector.broadcast %99 : vector<1x64xf32> to vector<64x64xf32>
    %102 = arith.addf %100, %101 : vector<64x64xf32>
    %cst_47 = arith.constant 0.000000e+00 : f32
    %103 = vector.broadcast %cst_47 : f32 to vector<64x64xf32>
    %104 = arith.maximumf %102, %103 : vector<64x64xf32>
    %105 = vector.broadcast %97 : f32 to vector<64x64xf32>
    %106 = arith.mulf %105, %104 : vector<64x64xf32>
    %107 = arith.addf %96, %106 : vector<64x64xf32>
    %c0_48 = arith.constant 0 : index
    %c6 = arith.constant 6 : index
    %108 = memref.load %arg1[%c0_48, %c6] : memref<5x16xf32, #tpu.memory_space<smem>>
    %109 = vector.extract_strided_slice %25 {offsets = [0, 6], sizes = [64, 1], strides = [1, 1]} : vector<64x80xf32> to vector<64x1xf32>
    %110 = vector.extract_strided_slice %26 {offsets = [6, 0], sizes = [1, 64], strides = [1, 1]} : vector<80x64xf32> to vector<1x64xf32>
    %111 = vector.broadcast %109 : vector<64x1xf32> to vector<64x64xf32>
    %112 = vector.broadcast %110 : vector<1x64xf32> to vector<64x64xf32>
    %113 = arith.addf %111, %112 : vector<64x64xf32>
    %cst_49 = arith.constant 0.000000e+00 : f32
    %114 = vector.broadcast %cst_49 : f32 to vector<64x64xf32>
    %115 = arith.maximumf %113, %114 : vector<64x64xf32>
    %116 = vector.broadcast %108 : f32 to vector<64x64xf32>
    %117 = arith.mulf %116, %115 : vector<64x64xf32>
    %118 = arith.addf %107, %117 : vector<64x64xf32>
    %c0_50 = arith.constant 0 : index
    %c7 = arith.constant 7 : index
    %119 = memref.load %arg1[%c0_50, %c7] : memref<5x16xf32, #tpu.memory_space<smem>>
    %120 = vector.extract_strided_slice %25 {offsets = [0, 7], sizes = [64, 1], strides = [1, 1]} : vector<64x80xf32> to vector<64x1xf32>
    %121 = vector.extract_strided_slice %26 {offsets = [7, 0], sizes = [1, 64], strides = [1, 1]} : vector<80x64xf32> to vector<1x64xf32>
    %122 = vector.broadcast %120 : vector<64x1xf32> to vector<64x64xf32>
    %123 = vector.broadcast %121 : vector<1x64xf32> to vector<64x64xf32>
    %124 = arith.addf %122, %123 : vector<64x64xf32>
    %cst_51 = arith.constant 0.000000e+00 : f32
    %125 = vector.broadcast %cst_51 : f32 to vector<64x64xf32>
    %126 = arith.maximumf %124, %125 : vector<64x64xf32>
    %127 = vector.broadcast %119 : f32 to vector<64x64xf32>
    %128 = arith.mulf %127, %126 : vector<64x64xf32>
    %129 = arith.addf %118, %128 : vector<64x64xf32>
    %c0_52 = arith.constant 0 : index
    %c8 = arith.constant 8 : index
    %130 = memref.load %arg1[%c0_52, %c8] : memref<5x16xf32, #tpu.memory_space<smem>>
    %131 = vector.extract_strided_slice %25 {offsets = [0, 8], sizes = [64, 1], strides = [1, 1]} : vector<64x80xf32> to vector<64x1xf32>
    %132 = vector.extract_strided_slice %26 {offsets = [8, 0], sizes = [1, 64], strides = [1, 1]} : vector<80x64xf32> to vector<1x64xf32>
    %133 = vector.broadcast %131 : vector<64x1xf32> to vector<64x64xf32>
    %134 = vector.broadcast %132 : vector<1x64xf32> to vector<64x64xf32>
    %135 = arith.addf %133, %134 : vector<64x64xf32>
    %cst_53 = arith.constant 0.000000e+00 : f32
    %136 = vector.broadcast %cst_53 : f32 to vector<64x64xf32>
    %137 = arith.maximumf %135, %136 : vector<64x64xf32>
    %138 = vector.broadcast %130 : f32 to vector<64x64xf32>
    %139 = arith.mulf %138, %137 : vector<64x64xf32>
    %140 = arith.addf %129, %139 : vector<64x64xf32>
    %c0_54 = arith.constant 0 : index
    %c9 = arith.constant 9 : index
    %141 = memref.load %arg1[%c0_54, %c9] : memref<5x16xf32, #tpu.memory_space<smem>>
    %142 = vector.extract_strided_slice %25 {offsets = [0, 9], sizes = [64, 1], strides = [1, 1]} : vector<64x80xf32> to vector<64x1xf32>
    %143 = vector.extract_strided_slice %26 {offsets = [9, 0], sizes = [1, 64], strides = [1, 1]} : vector<80x64xf32> to vector<1x64xf32>
    %144 = vector.broadcast %142 : vector<64x1xf32> to vector<64x64xf32>
    %145 = vector.broadcast %143 : vector<1x64xf32> to vector<64x64xf32>
    %146 = arith.addf %144, %145 : vector<64x64xf32>
    %cst_55 = arith.constant 0.000000e+00 : f32
    %147 = vector.broadcast %cst_55 : f32 to vector<64x64xf32>
    %148 = arith.maximumf %146, %147 : vector<64x64xf32>
    %149 = vector.broadcast %141 : f32 to vector<64x64xf32>
    %150 = arith.mulf %149, %148 : vector<64x64xf32>
    %151 = arith.addf %140, %150 : vector<64x64xf32>
    %c0_56 = arith.constant 0 : index
    %c10 = arith.constant 10 : index
    %152 = memref.load %arg1[%c0_56, %c10] : memref<5x16xf32, #tpu.memory_space<smem>>
    %153 = vector.extract_strided_slice %25 {offsets = [0, 10], sizes = [64, 1], strides = [1, 1]} : vector<64x80xf32> to vector<64x1xf32>
    %154 = vector.extract_strided_slice %26 {offsets = [10, 0], sizes = [1, 64], strides = [1, 1]} : vector<80x64xf32> to vector<1x64xf32>
    %155 = vector.broadcast %153 : vector<64x1xf32> to vector<64x64xf32>
    %156 = vector.broadcast %154 : vector<1x64xf32> to vector<64x64xf32>
    %157 = arith.addf %155, %156 : vector<64x64xf32>
    %cst_57 = arith.constant 0.000000e+00 : f32
    %158 = vector.broadcast %cst_57 : f32 to vector<64x64xf32>
    %159 = arith.maximumf %157, %158 : vector<64x64xf32>
    %160 = vector.broadcast %152 : f32 to vector<64x64xf32>
    %161 = arith.mulf %160, %159 : vector<64x64xf32>
    %162 = arith.addf %151, %161 : vector<64x64xf32>
    %c0_58 = arith.constant 0 : index
    %c11 = arith.constant 11 : index
    %163 = memref.load %arg1[%c0_58, %c11] : memref<5x16xf32, #tpu.memory_space<smem>>
    %164 = vector.extract_strided_slice %25 {offsets = [0, 11], sizes = [64, 1], strides = [1, 1]} : vector<64x80xf32> to vector<64x1xf32>
    %165 = vector.extract_strided_slice %26 {offsets = [11, 0], sizes = [1, 64], strides = [1, 1]} : vector<80x64xf32> to vector<1x64xf32>
    %166 = vector.broadcast %164 : vector<64x1xf32> to vector<64x64xf32>
    %167 = vector.broadcast %165 : vector<1x64xf32> to vector<64x64xf32>
    %168 = arith.addf %166, %167 : vector<64x64xf32>
    %cst_59 = arith.constant 0.000000e+00 : f32
    %169 = vector.broadcast %cst_59 : f32 to vector<64x64xf32>
    %170 = arith.maximumf %168, %169 : vector<64x64xf32>
    %171 = vector.broadcast %163 : f32 to vector<64x64xf32>
    %172 = arith.mulf %171, %170 : vector<64x64xf32>
    %173 = arith.addf %162, %172 : vector<64x64xf32>
    %c0_60 = arith.constant 0 : index
    %c12 = arith.constant 12 : index
    %174 = memref.load %arg1[%c0_60, %c12] : memref<5x16xf32, #tpu.memory_space<smem>>
    %175 = vector.extract_strided_slice %25 {offsets = [0, 12], sizes = [64, 1], strides = [1, 1]} : vector<64x80xf32> to vector<64x1xf32>
    %176 = vector.extract_strided_slice %26 {offsets = [12, 0], sizes = [1, 64], strides = [1, 1]} : vector<80x64xf32> to vector<1x64xf32>
    %177 = vector.broadcast %175 : vector<64x1xf32> to vector<64x64xf32>
    %178 = vector.broadcast %176 : vector<1x64xf32> to vector<64x64xf32>
    %179 = arith.addf %177, %178 : vector<64x64xf32>
    %cst_61 = arith.constant 0.000000e+00 : f32
    %180 = vector.broadcast %cst_61 : f32 to vector<64x64xf32>
    %181 = arith.maximumf %179, %180 : vector<64x64xf32>
    %182 = vector.broadcast %174 : f32 to vector<64x64xf32>
    %183 = arith.mulf %182, %181 : vector<64x64xf32>
    %184 = arith.addf %173, %183 : vector<64x64xf32>
    %c0_62 = arith.constant 0 : index
    %c13 = arith.constant 13 : index
    %185 = memref.load %arg1[%c0_62, %c13] : memref<5x16xf32, #tpu.memory_space<smem>>
    %186 = vector.extract_strided_slice %25 {offsets = [0, 13], sizes = [64, 1], strides = [1, 1]} : vector<64x80xf32> to vector<64x1xf32>
    %187 = vector.extract_strided_slice %26 {offsets = [13, 0], sizes = [1, 64], strides = [1, 1]} : vector<80x64xf32> to vector<1x64xf32>
    %188 = vector.broadcast %186 : vector<64x1xf32> to vector<64x64xf32>
    %189 = vector.broadcast %187 : vector<1x64xf32> to vector<64x64xf32>
    %190 = arith.addf %188, %189 : vector<64x64xf32>
    %cst_63 = arith.constant 0.000000e+00 : f32
    %191 = vector.broadcast %cst_63 : f32 to vector<64x64xf32>
    %192 = arith.maximumf %190, %191 : vector<64x64xf32>
    %193 = vector.broadcast %185 : f32 to vector<64x64xf32>
    %194 = arith.mulf %193, %192 : vector<64x64xf32>
    %195 = arith.addf %184, %194 : vector<64x64xf32>
    %c0_64 = arith.constant 0 : index
    %c14 = arith.constant 14 : index
    %196 = memref.load %arg1[%c0_64, %c14] : memref<5x16xf32, #tpu.memory_space<smem>>
    %197 = vector.extract_strided_slice %25 {offsets = [0, 14], sizes = [64, 1], strides = [1, 1]} : vector<64x80xf32> to vector<64x1xf32>
    %198 = vector.extract_strided_slice %26 {offsets = [14, 0], sizes = [1, 64], strides = [1, 1]} : vector<80x64xf32> to vector<1x64xf32>
    %199 = vector.broadcast %197 : vector<64x1xf32> to vector<64x64xf32>
    %200 = vector.broadcast %198 : vector<1x64xf32> to vector<64x64xf32>
    %201 = arith.addf %199, %200 : vector<64x64xf32>
    %cst_65 = arith.constant 0.000000e+00 : f32
    %202 = vector.broadcast %cst_65 : f32 to vector<64x64xf32>
    %203 = arith.maximumf %201, %202 : vector<64x64xf32>
    %204 = vector.broadcast %196 : f32 to vector<64x64xf32>
    %205 = arith.mulf %204, %203 : vector<64x64xf32>
    %206 = arith.addf %195, %205 : vector<64x64xf32>
    %c0_66 = arith.constant 0 : index
    %c15 = arith.constant 15 : index
    %207 = memref.load %arg1[%c0_66, %c15] : memref<5x16xf32, #tpu.memory_space<smem>>
    %208 = vector.extract_strided_slice %25 {offsets = [0, 15], sizes = [64, 1], strides = [1, 1]} : vector<64x80xf32> to vector<64x1xf32>
    %209 = vector.extract_strided_slice %26 {offsets = [15, 0], sizes = [1, 64], strides = [1, 1]} : vector<80x64xf32> to vector<1x64xf32>
    %210 = vector.broadcast %208 : vector<64x1xf32> to vector<64x64xf32>
    %211 = vector.broadcast %209 : vector<1x64xf32> to vector<64x64xf32>
    %212 = arith.addf %210, %211 : vector<64x64xf32>
    %cst_67 = arith.constant 0.000000e+00 : f32
    %213 = vector.broadcast %cst_67 : f32 to vector<64x64xf32>
    %214 = arith.maximumf %212, %213 : vector<64x64xf32>
    %215 = vector.broadcast %207 : f32 to vector<64x64xf32>
    %216 = arith.mulf %215, %214 : vector<64x64xf32>
    %217 = arith.addf %206, %216 : vector<64x64xf32>
    %cst_68 = arith.constant -1.000000e+30 : f32
    %218 = vector.broadcast %cst_68 : f32 to vector<64x64xf32>
    %219 = arith.select %33, %217, %218 : vector<64x64xi1>, vector<64x64xf32>
    %cst_69 = arith.constant dense<0xFF800000> : vector<64xf32>
    %220 = vector.multi_reduction <maximumf>, %219, %cst_69 [1] : vector<64x64xf32> to vector<64xf32>
    %221 = vector.shape_cast %220 : vector<64xf32> to vector<64x1xf32>
    %222 = vector.broadcast %221 : vector<64x1xf32> to vector<64x64xf32>
    %223 = arith.subf %219, %222 : vector<64x64xf32>
    %224 = math.exp %223 : vector<64x64xf32>
    %225 = arith.mulf %224, %35 : vector<64x64xf32>
    %cst_70 = arith.constant dense<0.000000e+00> : vector<64xf32>
    %226 = vector.multi_reduction <add>, %225, %cst_70 [1] : vector<64x64xf32> to vector<64xf32>
    %227 = vector.shape_cast %226 : vector<64xf32> to vector<64x1xf32>
    %cst_71 = arith.constant 1.000000e-16 : f32
    %228 = vector.broadcast %cst_71 : f32 to vector<64x1xf32>
    %229 = arith.maximumf %227, %228 : vector<64x1xf32>
    %230 = vector.broadcast %229 : vector<64x1xf32> to vector<64x64xf32>
    %231 = arith.divf %225, %230 : vector<64x64xf32>
    %232 = vector.extract_strided_slice %20 {offsets = [0, 0], sizes = [64, 16], strides = [1, 1]} : vector<64x80xf32> to vector<64x16xf32>
    %cst_72 = arith.constant dense<0.000000e+00> : vector<64x16xf32>
    %233 = tpu.matmul %231, %232, %cst_72 {dimension_numbers = #tpu.dot_dimension_numbers<[1], [0], [0], [1], [0, 0, 1, 1], [], []>} : vector<64x64xf32>, vector<64x16xf32>, vector<64x16xf32> -> vector<64x16xf32>
    %c0_73 = arith.constant 0 : index
    %c0_74 = arith.constant 0 : index
    %234 = vector.load %arg14[%c0_73, %c0_74] : memref<1x80xf32, #tpu.memory_space<vmem>>, vector<1x16xf32>
    %235 = vector.broadcast %234 : vector<1x16xf32> to vector<64x16xf32>
    %236 = arith.addf %233, %235 : vector<64x16xf32>
    %cst_75 = arith.constant 0.000000e+00 : f32
    %237 = vector.broadcast %cst_75 : f32 to vector<64x16xf32>
    %238 = arith.maximumf %236, %237 : vector<64x16xf32>
    %c0_76 = arith.constant 0 : index
    %c16 = arith.constant 16 : index
    %239 = vector.load %arg16[%c0_76, %c16] : memref<64x96xf32, #tpu.memory_space<vmem>>, vector<64x16xf32>
    tpu.vector_store %arg16[%c0_76, %c16], %238 {strides = array<i32>} : memref<64x96xf32, #tpu.memory_space<vmem>>, vector<64x16xf32>,
    %240 = vector.extract_strided_slice %28 {offsets = [0, 1], sizes = [64, 1], strides = [1, 1]} : vector<64x5xf32> to vector<64x1xf32>
    %241 = vector.extract_strided_slice %30 {offsets = [1, 0], sizes = [1, 64], strides = [1, 1]} : vector<5x64xf32> to vector<1x64xf32>
    %242 = vector.broadcast %240 : vector<64x1xf32> to vector<64x64xf32>
    %243 = vector.broadcast %241 : vector<1x64xf32> to vector<64x64xf32>
    %244 = arith.addf %242, %243 : vector<64x64xf32>
    %c1_77 = arith.constant 1 : index
    %c0_78 = arith.constant 0 : index
    %245 = memref.load %arg1[%c1_77, %c0_78] : memref<5x16xf32, #tpu.memory_space<smem>>
    %246 = vector.extract_strided_slice %25 {offsets = [0, 16], sizes = [64, 1], strides = [1, 1]} : vector<64x80xf32> to vector<64x1xf32>
    %247 = vector.extract_strided_slice %26 {offsets = [16, 0], sizes = [1, 64], strides = [1, 1]} : vector<80x64xf32> to vector<1x64xf32>
    %248 = vector.broadcast %246 : vector<64x1xf32> to vector<64x64xf32>
    %249 = vector.broadcast %247 : vector<1x64xf32> to vector<64x64xf32>
    %250 = arith.addf %248, %249 : vector<64x64xf32>
    %cst_79 = arith.constant 0.000000e+00 : f32
    %251 = vector.broadcast %cst_79 : f32 to vector<64x64xf32>
    %252 = arith.maximumf %250, %251 : vector<64x64xf32>
    %253 = vector.broadcast %245 : f32 to vector<64x64xf32>
    %254 = arith.mulf %253, %252 : vector<64x64xf32>
    %255 = arith.addf %244, %254 : vector<64x64xf32>
    %c1_80 = arith.constant 1 : index
    %c1_81 = arith.constant 1 : index
    %256 = memref.load %arg1[%c1_80, %c1_81] : memref<5x16xf32, #tpu.memory_space<smem>>
    %257 = vector.extract_strided_slice %25 {offsets = [0, 17], sizes = [64, 1], strides = [1, 1]} : vector<64x80xf32> to vector<64x1xf32>
    %258 = vector.extract_strided_slice %26 {offsets = [17, 0], sizes = [1, 64], strides = [1, 1]} : vector<80x64xf32> to vector<1x64xf32>
    %259 = vector.broadcast %257 : vector<64x1xf32> to vector<64x64xf32>
    %260 = vector.broadcast %258 : vector<1x64xf32> to vector<64x64xf32>
    %261 = arith.addf %259, %260 : vector<64x64xf32>
    %cst_82 = arith.constant 0.000000e+00 : f32
    %262 = vector.broadcast %cst_82 : f32 to vector<64x64xf32>
    %263 = arith.maximumf %261, %262 : vector<64x64xf32>
    %264 = vector.broadcast %256 : f32 to vector<64x64xf32>
    %265 = arith.mulf %264, %263 : vector<64x64xf32>
    %266 = arith.addf %255, %265 : vector<64x64xf32>
    %c1_83 = arith.constant 1 : index
    %c2_84 = arith.constant 2 : index
    %267 = memref.load %arg1[%c1_83, %c2_84] : memref<5x16xf32, #tpu.memory_space<smem>>
    %268 = vector.extract_strided_slice %25 {offsets = [0, 18], sizes = [64, 1], strides = [1, 1]} : vector<64x80xf32> to vector<64x1xf32>
    %269 = vector.extract_strided_slice %26 {offsets = [18, 0], sizes = [1, 64], strides = [1, 1]} : vector<80x64xf32> to vector<1x64xf32>
    %270 = vector.broadcast %268 : vector<64x1xf32> to vector<64x64xf32>
    %271 = vector.broadcast %269 : vector<1x64xf32> to vector<64x64xf32>
    %272 = arith.addf %270, %271 : vector<64x64xf32>
    %cst_85 = arith.constant 0.000000e+00 : f32
    %273 = vector.broadcast %cst_85 : f32 to vector<64x64xf32>
    %274 = arith.maximumf %272, %273 : vector<64x64xf32>
    %275 = vector.broadcast %267 : f32 to vector<64x64xf32>
    %276 = arith.mulf %275, %274 : vector<64x64xf32>
    %277 = arith.addf %266, %276 : vector<64x64xf32>
    %c1_86 = arith.constant 1 : index
    %c3_87 = arith.constant 3 : index
    %278 = memref.load %arg1[%c1_86, %c3_87] : memref<5x16xf32, #tpu.memory_space<smem>>
    %279 = vector.extract_strided_slice %25 {offsets = [0, 19], sizes = [64, 1], strides = [1, 1]} : vector<64x80xf32> to vector<64x1xf32>
    %280 = vector.extract_strided_slice %26 {offsets = [19, 0], sizes = [1, 64], strides = [1, 1]} : vector<80x64xf32> to vector<1x64xf32>
    %281 = vector.broadcast %279 : vector<64x1xf32> to vector<64x64xf32>
    %282 = vector.broadcast %280 : vector<1x64xf32> to vector<64x64xf32>
    %283 = arith.addf %281, %282 : vector<64x64xf32>
    %cst_88 = arith.constant 0.000000e+00 : f32
    %284 = vector.broadcast %cst_88 : f32 to vector<64x64xf32>
    %285 = arith.maximumf %283, %284 : vector<64x64xf32>
    %286 = vector.broadcast %278 : f32 to vector<64x64xf32>
    %287 = arith.mulf %286, %285 : vector<64x64xf32>
    %288 = arith.addf %277, %287 : vector<64x64xf32>
    %c1_89 = arith.constant 1 : index
    %c4_90 = arith.constant 4 : index
    %289 = memref.load %arg1[%c1_89, %c4_90] : memref<5x16xf32, #tpu.memory_space<smem>>
    %290 = vector.extract_strided_slice %25 {offsets = [0, 20], sizes = [64, 1], strides = [1, 1]} : vector<64x80xf32> to vector<64x1xf32>
    %291 = vector.extract_strided_slice %26 {offsets = [20, 0], sizes = [1, 64], strides = [1, 1]} : vector<80x64xf32> to vector<1x64xf32>
    %292 = vector.broadcast %290 : vector<64x1xf32> to vector<64x64xf32>
    %293 = vector.broadcast %291 : vector<1x64xf32> to vector<64x64xf32>
    %294 = arith.addf %292, %293 : vector<64x64xf32>
    %cst_91 = arith.constant 0.000000e+00 : f32
    %295 = vector.broadcast %cst_91 : f32 to vector<64x64xf32>
    %296 = arith.maximumf %294, %295 : vector<64x64xf32>
    %297 = vector.broadcast %289 : f32 to vector<64x64xf32>
    %298 = arith.mulf %297, %296 : vector<64x64xf32>
    %299 = arith.addf %288, %298 : vector<64x64xf32>
    %c1_92 = arith.constant 1 : index
    %c5_93 = arith.constant 5 : index
    %300 = memref.load %arg1[%c1_92, %c5_93] : memref<5x16xf32, #tpu.memory_space<smem>>
    %301 = vector.extract_strided_slice %25 {offsets = [0, 21], sizes = [64, 1], strides = [1, 1]} : vector<64x80xf32> to vector<64x1xf32>
    %302 = vector.extract_strided_slice %26 {offsets = [21, 0], sizes = [1, 64], strides = [1, 1]} : vector<80x64xf32> to vector<1x64xf32>
    %303 = vector.broadcast %301 : vector<64x1xf32> to vector<64x64xf32>
    %304 = vector.broadcast %302 : vector<1x64xf32> to vector<64x64xf32>
    %305 = arith.addf %303, %304 : vector<64x64xf32>
    %cst_94 = arith.constant 0.000000e+00 : f32
    %306 = vector.broadcast %cst_94 : f32 to vector<64x64xf32>
    %307 = arith.maximumf %305, %306 : vector<64x64xf32>
    %308 = vector.broadcast %300 : f32 to vector<64x64xf32>
    %309 = arith.mulf %308, %307 : vector<64x64xf32>
    %310 = arith.addf %299, %309 : vector<64x64xf32>
    %c1_95 = arith.constant 1 : index
    %c6_96 = arith.constant 6 : index
    %311 = memref.load %arg1[%c1_95, %c6_96] : memref<5x16xf32, #tpu.memory_space<smem>>
    %312 = vector.extract_strided_slice %25 {offsets = [0, 22], sizes = [64, 1], strides = [1, 1]} : vector<64x80xf32> to vector<64x1xf32>
    %313 = vector.extract_strided_slice %26 {offsets = [22, 0], sizes = [1, 64], strides = [1, 1]} : vector<80x64xf32> to vector<1x64xf32>
    %314 = vector.broadcast %312 : vector<64x1xf32> to vector<64x64xf32>
    %315 = vector.broadcast %313 : vector<1x64xf32> to vector<64x64xf32>
    %316 = arith.addf %314, %315 : vector<64x64xf32>
    %cst_97 = arith.constant 0.000000e+00 : f32
    %317 = vector.broadcast %cst_97 : f32 to vector<64x64xf32>
    %318 = arith.maximumf %316, %317 : vector<64x64xf32>
    %319 = vector.broadcast %311 : f32 to vector<64x64xf32>
    %320 = arith.mulf %319, %318 : vector<64x64xf32>
    %321 = arith.addf %310, %320 : vector<64x64xf32>
    %c1_98 = arith.constant 1 : index
    %c7_99 = arith.constant 7 : index
    %322 = memref.load %arg1[%c1_98, %c7_99] : memref<5x16xf32, #tpu.memory_space<smem>>
    %323 = vector.extract_strided_slice %25 {offsets = [0, 23], sizes = [64, 1], strides = [1, 1]} : vector<64x80xf32> to vector<64x1xf32>
    %324 = vector.extract_strided_slice %26 {offsets = [23, 0], sizes = [1, 64], strides = [1, 1]} : vector<80x64xf32> to vector<1x64xf32>
    %325 = vector.broadcast %323 : vector<64x1xf32> to vector<64x64xf32>
    %326 = vector.broadcast %324 : vector<1x64xf32> to vector<64x64xf32>
    %327 = arith.addf %325, %326 : vector<64x64xf32>
    %cst_100 = arith.constant 0.000000e+00 : f32
    %328 = vector.broadcast %cst_100 : f32 to vector<64x64xf32>
    %329 = arith.maximumf %327, %328 : vector<64x64xf32>
    %330 = vector.broadcast %322 : f32 to vector<64x64xf32>
    %331 = arith.mulf %330, %329 : vector<64x64xf32>
    %332 = arith.addf %321, %331 : vector<64x64xf32>
    %c1_101 = arith.constant 1 : index
    %c8_102 = arith.constant 8 : index
    %333 = memref.load %arg1[%c1_101, %c8_102] : memref<5x16xf32, #tpu.memory_space<smem>>
    %334 = vector.extract_strided_slice %25 {offsets = [0, 24], sizes = [64, 1], strides = [1, 1]} : vector<64x80xf32> to vector<64x1xf32>
    %335 = vector.extract_strided_slice %26 {offsets = [24, 0], sizes = [1, 64], strides = [1, 1]} : vector<80x64xf32> to vector<1x64xf32>
    %336 = vector.broadcast %334 : vector<64x1xf32> to vector<64x64xf32>
    %337 = vector.broadcast %335 : vector<1x64xf32> to vector<64x64xf32>
    %338 = arith.addf %336, %337 : vector<64x64xf32>
    %cst_103 = arith.constant 0.000000e+00 : f32
    %339 = vector.broadcast %cst_103 : f32 to vector<64x64xf32>
    %340 = arith.maximumf %338, %339 : vector<64x64xf32>
    %341 = vector.broadcast %333 : f32 to vector<64x64xf32>
    %342 = arith.mulf %341, %340 : vector<64x64xf32>
    %343 = arith.addf %332, %342 : vector<64x64xf32>
    %c1_104 = arith.constant 1 : index
    %c9_105 = arith.constant 9 : index
    %344 = memref.load %arg1[%c1_104, %c9_105] : memref<5x16xf32, #tpu.memory_space<smem>>
    %345 = vector.extract_strided_slice %25 {offsets = [0, 25], sizes = [64, 1], strides = [1, 1]} : vector<64x80xf32> to vector<64x1xf32>
    %346 = vector.extract_strided_slice %26 {offsets = [25, 0], sizes = [1, 64], strides = [1, 1]} : vector<80x64xf32> to vector<1x64xf32>
    %347 = vector.broadcast %345 : vector<64x1xf32> to vector<64x64xf32>
    %348 = vector.broadcast %346 : vector<1x64xf32> to vector<64x64xf32>
    %349 = arith.addf %347, %348 : vector<64x64xf32>
    %cst_106 = arith.constant 0.000000e+00 : f32
    %350 = vector.broadcast %cst_106 : f32 to vector<64x64xf32>
    %351 = arith.maximumf %349, %350 : vector<64x64xf32>
    %352 = vector.broadcast %344 : f32 to vector<64x64xf32>
    %353 = arith.mulf %352, %351 : vector<64x64xf32>
    %354 = arith.addf %343, %353 : vector<64x64xf32>
    %c1_107 = arith.constant 1 : index
    %c10_108 = arith.constant 10 : index
    %355 = memref.load %arg1[%c1_107, %c10_108] : memref<5x16xf32, #tpu.memory_space<smem>>
    %356 = vector.extract_strided_slice %25 {offsets = [0, 26], sizes = [64, 1], strides = [1, 1]} : vector<64x80xf32> to vector<64x1xf32>
    %357 = vector.extract_strided_slice %26 {offsets = [26, 0], sizes = [1, 64], strides = [1, 1]} : vector<80x64xf32> to vector<1x64xf32>
    %358 = vector.broadcast %356 : vector<64x1xf32> to vector<64x64xf32>
    %359 = vector.broadcast %357 : vector<1x64xf32> to vector<64x64xf32>
    %360 = arith.addf %358, %359 : vector<64x64xf32>
    %cst_109 = arith.constant 0.000000e+00 : f32
    %361 = vector.broadcast %cst_109 : f32 to vector<64x64xf32>
    %362 = arith.maximumf %360, %361 : vector<64x64xf32>
    %363 = vector.broadcast %355 : f32 to vector<64x64xf32>
    %364 = arith.mulf %363, %362 : vector<64x64xf32>
    %365 = arith.addf %354, %364 : vector<64x64xf32>
    %c1_110 = arith.constant 1 : index
    %c11_111 = arith.constant 11 : index
    %366 = memref.load %arg1[%c1_110, %c11_111] : memref<5x16xf32, #tpu.memory_space<smem>>
    %367 = vector.extract_strided_slice %25 {offsets = [0, 27], sizes = [64, 1], strides = [1, 1]} : vector<64x80xf32> to vector<64x1xf32>
    %368 = vector.extract_strided_slice %26 {offsets = [27, 0], sizes = [1, 64], strides = [1, 1]} : vector<80x64xf32> to vector<1x64xf32>
    %369 = vector.broadcast %367 : vector<64x1xf32> to vector<64x64xf32>
    %370 = vector.broadcast %368 : vector<1x64xf32> to vector<64x64xf32>
    %371 = arith.addf %369, %370 : vector<64x64xf32>
    %cst_112 = arith.constant 0.000000e+00 : f32
    %372 = vector.broadcast %cst_112 : f32 to vector<64x64xf32>
    %373 = arith.maximumf %371, %372 : vector<64x64xf32>
    %374 = vector.broadcast %366 : f32 to vector<64x64xf32>
    %375 = arith.mulf %374, %373 : vector<64x64xf32>
    %376 = arith.addf %365, %375 : vector<64x64xf32>
    %c1_113 = arith.constant 1 : index
    %c12_114 = arith.constant 12 : index
    %377 = memref.load %arg1[%c1_113, %c12_114] : memref<5x16xf32, #tpu.memory_space<smem>>
    %378 = vector.extract_strided_slice %25 {offsets = [0, 28], sizes = [64, 1], strides = [1, 1]} : vector<64x80xf32> to vector<64x1xf32>
    %379 = vector.extract_strided_slice %26 {offsets = [28, 0], sizes = [1, 64], strides = [1, 1]} : vector<80x64xf32> to vector<1x64xf32>
    %380 = vector.broadcast %378 : vector<64x1xf32> to vector<64x64xf32>
    %381 = vector.broadcast %379 : vector<1x64xf32> to vector<64x64xf32>
    %382 = arith.addf %380, %381 : vector<64x64xf32>
    %cst_115 = arith.constant 0.000000e+00 : f32
    %383 = vector.broadcast %cst_115 : f32 to vector<64x64xf32>
    %384 = arith.maximumf %382, %383 : vector<64x64xf32>
    %385 = vector.broadcast %377 : f32 to vector<64x64xf32>
    %386 = arith.mulf %385, %384 : vector<64x64xf32>
    %387 = arith.addf %376, %386 : vector<64x64xf32>
    %c1_116 = arith.constant 1 : index
    %c13_117 = arith.constant 13 : index
    %388 = memref.load %arg1[%c1_116, %c13_117] : memref<5x16xf32, #tpu.memory_space<smem>>
    %389 = vector.extract_strided_slice %25 {offsets = [0, 29], sizes = [64, 1], strides = [1, 1]} : vector<64x80xf32> to vector<64x1xf32>
    %390 = vector.extract_strided_slice %26 {offsets = [29, 0], sizes = [1, 64], strides = [1, 1]} : vector<80x64xf32> to vector<1x64xf32>
    %391 = vector.broadcast %389 : vector<64x1xf32> to vector<64x64xf32>
    %392 = vector.broadcast %390 : vector<1x64xf32> to vector<64x64xf32>
    %393 = arith.addf %391, %392 : vector<64x64xf32>
    %cst_118 = arith.constant 0.000000e+00 : f32
    %394 = vector.broadcast %cst_118 : f32 to vector<64x64xf32>
    %395 = arith.maximumf %393, %394 : vector<64x64xf32>
    %396 = vector.broadcast %388 : f32 to vector<64x64xf32>
    %397 = arith.mulf %396, %395 : vector<64x64xf32>
    %398 = arith.addf %387, %397 : vector<64x64xf32>
    %c1_119 = arith.constant 1 : index
    %c14_120 = arith.constant 14 : index
    %399 = memref.load %arg1[%c1_119, %c14_120] : memref<5x16xf32, #tpu.memory_space<smem>>
    %400 = vector.extract_strided_slice %25 {offsets = [0, 30], sizes = [64, 1], strides = [1, 1]} : vector<64x80xf32> to vector<64x1xf32>
    %401 = vector.extract_strided_slice %26 {offsets = [30, 0], sizes = [1, 64], strides = [1, 1]} : vector<80x64xf32> to vector<1x64xf32>
    %402 = vector.broadcast %400 : vector<64x1xf32> to vector<64x64xf32>
    %403 = vector.broadcast %401 : vector<1x64xf32> to vector<64x64xf32>
    %404 = arith.addf %402, %403 : vector<64x64xf32>
    %cst_121 = arith.constant 0.000000e+00 : f32
    %405 = vector.broadcast %cst_121 : f32 to vector<64x64xf32>
    %406 = arith.maximumf %404, %405 : vector<64x64xf32>
    %407 = vector.broadcast %399 : f32 to vector<64x64xf32>
    %408 = arith.mulf %407, %406 : vector<64x64xf32>
    %409 = arith.addf %398, %408 : vector<64x64xf32>
    %c1_122 = arith.constant 1 : index
    %c15_123 = arith.constant 15 : index
    %410 = memref.load %arg1[%c1_122, %c15_123] : memref<5x16xf32, #tpu.memory_space<smem>>
    %411 = vector.extract_strided_slice %25 {offsets = [0, 31], sizes = [64, 1], strides = [1, 1]} : vector<64x80xf32> to vector<64x1xf32>
    %412 = vector.extract_strided_slice %26 {offsets = [31, 0], sizes = [1, 64], strides = [1, 1]} : vector<80x64xf32> to vector<1x64xf32>
    %413 = vector.broadcast %411 : vector<64x1xf32> to vector<64x64xf32>
    %414 = vector.broadcast %412 : vector<1x64xf32> to vector<64x64xf32>
    %415 = arith.addf %413, %414 : vector<64x64xf32>
    %cst_124 = arith.constant 0.000000e+00 : f32
    %416 = vector.broadcast %cst_124 : f32 to vector<64x64xf32>
    %417 = arith.maximumf %415, %416 : vector<64x64xf32>
    %418 = vector.broadcast %410 : f32 to vector<64x64xf32>
    %419 = arith.mulf %418, %417 : vector<64x64xf32>
    %420 = arith.addf %409, %419 : vector<64x64xf32>
    %cst_125 = arith.constant -1.000000e+30 : f32
    %421 = vector.broadcast %cst_125 : f32 to vector<64x64xf32>
    %422 = arith.select %33, %420, %421 : vector<64x64xi1>, vector<64x64xf32>
    %cst_126 = arith.constant dense<0xFF800000> : vector<64xf32>
    %423 = vector.multi_reduction <maximumf>, %422, %cst_126 [1] : vector<64x64xf32> to vector<64xf32>
    %424 = vector.shape_cast %423 : vector<64xf32> to vector<64x1xf32>
    %425 = vector.broadcast %424 : vector<64x1xf32> to vector<64x64xf32>
    %426 = arith.subf %422, %425 : vector<64x64xf32>
    %427 = math.exp %426 : vector<64x64xf32>
    %428 = arith.mulf %427, %35 : vector<64x64xf32>
    %cst_127 = arith.constant dense<0.000000e+00> : vector<64xf32>
    %429 = vector.multi_reduction <add>, %428, %cst_127 [1] : vector<64x64xf32> to vector<64xf32>
    %430 = vector.shape_cast %429 : vector<64xf32> to vector<64x1xf32>
    %cst_128 = arith.constant 1.000000e-16 : f32
    %431 = vector.broadcast %cst_128 : f32 to vector<64x1xf32>
    %432 = arith.maximumf %430, %431 : vector<64x1xf32>
    %433 = vector.broadcast %432 : vector<64x1xf32> to vector<64x64xf32>
    %434 = arith.divf %428, %433 : vector<64x64xf32>
    %435 = vector.extract_strided_slice %20 {offsets = [0, 16], sizes = [64, 16], strides = [1, 1]} : vector<64x80xf32> to vector<64x16xf32>
    %cst_129 = arith.constant dense<0.000000e+00> : vector<64x16xf32>
    %436 = tpu.matmul %434, %435, %cst_129 {dimension_numbers = #tpu.dot_dimension_numbers<[1], [0], [0], [1], [0, 0, 1, 1], [], []>} : vector<64x64xf32>, vector<64x16xf32>, vector<64x16xf32> -> vector<64x16xf32>
    %c0_130 = arith.constant 0 : index
    %c16_131 = arith.constant 16 : index
    %437 = vector.load %arg14[%c0_130, %c16_131] : memref<1x80xf32, #tpu.memory_space<vmem>>, vector<1x16xf32>
    %438 = vector.broadcast %437 : vector<1x16xf32> to vector<64x16xf32>
    %439 = arith.addf %436, %438 : vector<64x16xf32>
    %cst_132 = arith.constant 0.000000e+00 : f32
    %440 = vector.broadcast %cst_132 : f32 to vector<64x16xf32>
    %441 = arith.maximumf %439, %440 : vector<64x16xf32>
    %c0_133 = arith.constant 0 : index
    %c32 = arith.constant 32 : index
    %442 = vector.load %arg16[%c0_133, %c32] : memref<64x96xf32, #tpu.memory_space<vmem>>, vector<64x16xf32>
    tpu.vector_store %arg16[%c0_133, %c32], %441 {strides = array<i32>} : memref<64x96xf32, #tpu.memory_space<vmem>>, vector<64x16xf32>,
    %443 = vector.extract_strided_slice %28 {offsets = [0, 2], sizes = [64, 1], strides = [1, 1]} : vector<64x5xf32> to vector<64x1xf32>
    %444 = vector.extract_strided_slice %30 {offsets = [2, 0], sizes = [1, 64], strides = [1, 1]} : vector<5x64xf32> to vector<1x64xf32>
    %445 = vector.broadcast %443 : vector<64x1xf32> to vector<64x64xf32>
    %446 = vector.broadcast %444 : vector<1x64xf32> to vector<64x64xf32>
    %447 = arith.addf %445, %446 : vector<64x64xf32>
    %c2_134 = arith.constant 2 : index
    %c0_135 = arith.constant 0 : index
    %448 = memref.load %arg1[%c2_134, %c0_135] : memref<5x16xf32, #tpu.memory_space<smem>>
    %449 = vector.extract_strided_slice %25 {offsets = [0, 32], sizes = [64, 1], strides = [1, 1]} : vector<64x80xf32> to vector<64x1xf32>
    %450 = vector.extract_strided_slice %26 {offsets = [32, 0], sizes = [1, 64], strides = [1, 1]} : vector<80x64xf32> to vector<1x64xf32>
    %451 = vector.broadcast %449 : vector<64x1xf32> to vector<64x64xf32>
    %452 = vector.broadcast %450 : vector<1x64xf32> to vector<64x64xf32>
    %453 = arith.addf %451, %452 : vector<64x64xf32>
    %cst_136 = arith.constant 0.000000e+00 : f32
    %454 = vector.broadcast %cst_136 : f32 to vector<64x64xf32>
    %455 = arith.maximumf %453, %454 : vector<64x64xf32>
    %456 = vector.broadcast %448 : f32 to vector<64x64xf32>
    %457 = arith.mulf %456, %455 : vector<64x64xf32>
    %458 = arith.addf %447, %457 : vector<64x64xf32>
    %c2_137 = arith.constant 2 : index
    %c1_138 = arith.constant 1 : index
    %459 = memref.load %arg1[%c2_137, %c1_138] : memref<5x16xf32, #tpu.memory_space<smem>>
    %460 = vector.extract_strided_slice %25 {offsets = [0, 33], sizes = [64, 1], strides = [1, 1]} : vector<64x80xf32> to vector<64x1xf32>
    %461 = vector.extract_strided_slice %26 {offsets = [33, 0], sizes = [1, 64], strides = [1, 1]} : vector<80x64xf32> to vector<1x64xf32>
    %462 = vector.broadcast %460 : vector<64x1xf32> to vector<64x64xf32>
    %463 = vector.broadcast %461 : vector<1x64xf32> to vector<64x64xf32>
    %464 = arith.addf %462, %463 : vector<64x64xf32>
    %cst_139 = arith.constant 0.000000e+00 : f32
    %465 = vector.broadcast %cst_139 : f32 to vector<64x64xf32>
    %466 = arith.maximumf %464, %465 : vector<64x64xf32>
    %467 = vector.broadcast %459 : f32 to vector<64x64xf32>
    %468 = arith.mulf %467, %466 : vector<64x64xf32>
    %469 = arith.addf %458, %468 : vector<64x64xf32>
    %c2_140 = arith.constant 2 : index
    %c2_141 = arith.constant 2 : index
    %470 = memref.load %arg1[%c2_140, %c2_141] : memref<5x16xf32, #tpu.memory_space<smem>>
    %471 = vector.extract_strided_slice %25 {offsets = [0, 34], sizes = [64, 1], strides = [1, 1]} : vector<64x80xf32> to vector<64x1xf32>
    %472 = vector.extract_strided_slice %26 {offsets = [34, 0], sizes = [1, 64], strides = [1, 1]} : vector<80x64xf32> to vector<1x64xf32>
    %473 = vector.broadcast %471 : vector<64x1xf32> to vector<64x64xf32>
    %474 = vector.broadcast %472 : vector<1x64xf32> to vector<64x64xf32>
    %475 = arith.addf %473, %474 : vector<64x64xf32>
    %cst_142 = arith.constant 0.000000e+00 : f32
    %476 = vector.broadcast %cst_142 : f32 to vector<64x64xf32>
    %477 = arith.maximumf %475, %476 : vector<64x64xf32>
    %478 = vector.broadcast %470 : f32 to vector<64x64xf32>
    %479 = arith.mulf %478, %477 : vector<64x64xf32>
    %480 = arith.addf %469, %479 : vector<64x64xf32>
    %c2_143 = arith.constant 2 : index
    %c3_144 = arith.constant 3 : index
    %481 = memref.load %arg1[%c2_143, %c3_144] : memref<5x16xf32, #tpu.memory_space<smem>>
    %482 = vector.extract_strided_slice %25 {offsets = [0, 35], sizes = [64, 1], strides = [1, 1]} : vector<64x80xf32> to vector<64x1xf32>
    %483 = vector.extract_strided_slice %26 {offsets = [35, 0], sizes = [1, 64], strides = [1, 1]} : vector<80x64xf32> to vector<1x64xf32>
    %484 = vector.broadcast %482 : vector<64x1xf32> to vector<64x64xf32>
    %485 = vector.broadcast %483 : vector<1x64xf32> to vector<64x64xf32>
    %486 = arith.addf %484, %485 : vector<64x64xf32>
    %cst_145 = arith.constant 0.000000e+00 : f32
    %487 = vector.broadcast %cst_145 : f32 to vector<64x64xf32>
    %488 = arith.maximumf %486, %487 : vector<64x64xf32>
    %489 = vector.broadcast %481 : f32 to vector<64x64xf32>
    %490 = arith.mulf %489, %488 : vector<64x64xf32>
    %491 = arith.addf %480, %490 : vector<64x64xf32>
    %c2_146 = arith.constant 2 : index
    %c4_147 = arith.constant 4 : index
    %492 = memref.load %arg1[%c2_146, %c4_147] : memref<5x16xf32, #tpu.memory_space<smem>>
    %493 = vector.extract_strided_slice %25 {offsets = [0, 36], sizes = [64, 1], strides = [1, 1]} : vector<64x80xf32> to vector<64x1xf32>
    %494 = vector.extract_strided_slice %26 {offsets = [36, 0], sizes = [1, 64], strides = [1, 1]} : vector<80x64xf32> to vector<1x64xf32>
    %495 = vector.broadcast %493 : vector<64x1xf32> to vector<64x64xf32>
    %496 = vector.broadcast %494 : vector<1x64xf32> to vector<64x64xf32>
    %497 = arith.addf %495, %496 : vector<64x64xf32>
    %cst_148 = arith.constant 0.000000e+00 : f32
    %498 = vector.broadcast %cst_148 : f32 to vector<64x64xf32>
    %499 = arith.maximumf %497, %498 : vector<64x64xf32>
    %500 = vector.broadcast %492 : f32 to vector<64x64xf32>
    %501 = arith.mulf %500, %499 : vector<64x64xf32>
    %502 = arith.addf %491, %501 : vector<64x64xf32>
    %c2_149 = arith.constant 2 : index
    %c5_150 = arith.constant 5 : index
    %503 = memref.load %arg1[%c2_149, %c5_150] : memref<5x16xf32, #tpu.memory_space<smem>>
    %504 = vector.extract_strided_slice %25 {offsets = [0, 37], sizes = [64, 1], strides = [1, 1]} : vector<64x80xf32> to vector<64x1xf32>
    %505 = vector.extract_strided_slice %26 {offsets = [37, 0], sizes = [1, 64], strides = [1, 1]} : vector<80x64xf32> to vector<1x64xf32>
    %506 = vector.broadcast %504 : vector<64x1xf32> to vector<64x64xf32>
    %507 = vector.broadcast %505 : vector<1x64xf32> to vector<64x64xf32>
    %508 = arith.addf %506, %507 : vector<64x64xf32>
    %cst_151 = arith.constant 0.000000e+00 : f32
    %509 = vector.broadcast %cst_151 : f32 to vector<64x64xf32>
    %510 = arith.maximumf %508, %509 : vector<64x64xf32>
    %511 = vector.broadcast %503 : f32 to vector<64x64xf32>
    %512 = arith.mulf %511, %510 : vector<64x64xf32>
    %513 = arith.addf %502, %512 : vector<64x64xf32>
    %c2_152 = arith.constant 2 : index
    %c6_153 = arith.constant 6 : index
    %514 = memref.load %arg1[%c2_152, %c6_153] : memref<5x16xf32, #tpu.memory_space<smem>>
    %515 = vector.extract_strided_slice %25 {offsets = [0, 38], sizes = [64, 1], strides = [1, 1]} : vector<64x80xf32> to vector<64x1xf32>
    %516 = vector.extract_strided_slice %26 {offsets = [38, 0], sizes = [1, 64], strides = [1, 1]} : vector<80x64xf32> to vector<1x64xf32>
    %517 = vector.broadcast %515 : vector<64x1xf32> to vector<64x64xf32>
    %518 = vector.broadcast %516 : vector<1x64xf32> to vector<64x64xf32>
    %519 = arith.addf %517, %518 : vector<64x64xf32>
    %cst_154 = arith.constant 0.000000e+00 : f32
    %520 = vector.broadcast %cst_154 : f32 to vector<64x64xf32>
    %521 = arith.maximumf %519, %520 : vector<64x64xf32>
    %522 = vector.broadcast %514 : f32 to vector<64x64xf32>
    %523 = arith.mulf %522, %521 : vector<64x64xf32>
    %524 = arith.addf %513, %523 : vector<64x64xf32>
    %c2_155 = arith.constant 2 : index
    %c7_156 = arith.constant 7 : index
    %525 = memref.load %arg1[%c2_155, %c7_156] : memref<5x16xf32, #tpu.memory_space<smem>>
    %526 = vector.extract_strided_slice %25 {offsets = [0, 39], sizes = [64, 1], strides = [1, 1]} : vector<64x80xf32> to vector<64x1xf32>
    %527 = vector.extract_strided_slice %26 {offsets = [39, 0], sizes = [1, 64], strides = [1, 1]} : vector<80x64xf32> to vector<1x64xf32>
    %528 = vector.broadcast %526 : vector<64x1xf32> to vector<64x64xf32>
    %529 = vector.broadcast %527 : vector<1x64xf32> to vector<64x64xf32>
    %530 = arith.addf %528, %529 : vector<64x64xf32>
    %cst_157 = arith.constant 0.000000e+00 : f32
    %531 = vector.broadcast %cst_157 : f32 to vector<64x64xf32>
    %532 = arith.maximumf %530, %531 : vector<64x64xf32>
    %533 = vector.broadcast %525 : f32 to vector<64x64xf32>
    %534 = arith.mulf %533, %532 : vector<64x64xf32>
    %535 = arith.addf %524, %534 : vector<64x64xf32>
    %c2_158 = arith.constant 2 : index
    %c8_159 = arith.constant 8 : index
    %536 = memref.load %arg1[%c2_158, %c8_159] : memref<5x16xf32, #tpu.memory_space<smem>>
    %537 = vector.extract_strided_slice %25 {offsets = [0, 40], sizes = [64, 1], strides = [1, 1]} : vector<64x80xf32> to vector<64x1xf32>
    %538 = vector.extract_strided_slice %26 {offsets = [40, 0], sizes = [1, 64], strides = [1, 1]} : vector<80x64xf32> to vector<1x64xf32>
    %539 = vector.broadcast %537 : vector<64x1xf32> to vector<64x64xf32>
    %540 = vector.broadcast %538 : vector<1x64xf32> to vector<64x64xf32>
    %541 = arith.addf %539, %540 : vector<64x64xf32>
    %cst_160 = arith.constant 0.000000e+00 : f32
    %542 = vector.broadcast %cst_160 : f32 to vector<64x64xf32>
    %543 = arith.maximumf %541, %542 : vector<64x64xf32>
    %544 = vector.broadcast %536 : f32 to vector<64x64xf32>
    %545 = arith.mulf %544, %543 : vector<64x64xf32>
    %546 = arith.addf %535, %545 : vector<64x64xf32>
    %c2_161 = arith.constant 2 : index
    %c9_162 = arith.constant 9 : index
    %547 = memref.load %arg1[%c2_161, %c9_162] : memref<5x16xf32, #tpu.memory_space<smem>>
    %548 = vector.extract_strided_slice %25 {offsets = [0, 41], sizes = [64, 1], strides = [1, 1]} : vector<64x80xf32> to vector<64x1xf32>
    %549 = vector.extract_strided_slice %26 {offsets = [41, 0], sizes = [1, 64], strides = [1, 1]} : vector<80x64xf32> to vector<1x64xf32>
    %550 = vector.broadcast %548 : vector<64x1xf32> to vector<64x64xf32>
    %551 = vector.broadcast %549 : vector<1x64xf32> to vector<64x64xf32>
    %552 = arith.addf %550, %551 : vector<64x64xf32>
    %cst_163 = arith.constant 0.000000e+00 : f32
    %553 = vector.broadcast %cst_163 : f32 to vector<64x64xf32>
    %554 = arith.maximumf %552, %553 : vector<64x64xf32>
    %555 = vector.broadcast %547 : f32 to vector<64x64xf32>
    %556 = arith.mulf %555, %554 : vector<64x64xf32>
    %557 = arith.addf %546, %556 : vector<64x64xf32>
    %c2_164 = arith.constant 2 : index
    %c10_165 = arith.constant 10 : index
    %558 = memref.load %arg1[%c2_164, %c10_165] : memref<5x16xf32, #tpu.memory_space<smem>>
    %559 = vector.extract_strided_slice %25 {offsets = [0, 42], sizes = [64, 1], strides = [1, 1]} : vector<64x80xf32> to vector<64x1xf32>
    %560 = vector.extract_strided_slice %26 {offsets = [42, 0], sizes = [1, 64], strides = [1, 1]} : vector<80x64xf32> to vector<1x64xf32>
    %561 = vector.broadcast %559 : vector<64x1xf32> to vector<64x64xf32>
    %562 = vector.broadcast %560 : vector<1x64xf32> to vector<64x64xf32>
    %563 = arith.addf %561, %562 : vector<64x64xf32>
    %cst_166 = arith.constant 0.000000e+00 : f32
    %564 = vector.broadcast %cst_166 : f32 to vector<64x64xf32>
    %565 = arith.maximumf %563, %564 : vector<64x64xf32>
    %566 = vector.broadcast %558 : f32 to vector<64x64xf32>
    %567 = arith.mulf %566, %565 : vector<64x64xf32>
    %568 = arith.addf %557, %567 : vector<64x64xf32>
    %c2_167 = arith.constant 2 : index
    %c11_168 = arith.constant 11 : index
    %569 = memref.load %arg1[%c2_167, %c11_168] : memref<5x16xf32, #tpu.memory_space<smem>>
    %570 = vector.extract_strided_slice %25 {offsets = [0, 43], sizes = [64, 1], strides = [1, 1]} : vector<64x80xf32> to vector<64x1xf32>
    %571 = vector.extract_strided_slice %26 {offsets = [43, 0], sizes = [1, 64], strides = [1, 1]} : vector<80x64xf32> to vector<1x64xf32>
    %572 = vector.broadcast %570 : vector<64x1xf32> to vector<64x64xf32>
    %573 = vector.broadcast %571 : vector<1x64xf32> to vector<64x64xf32>
    %574 = arith.addf %572, %573 : vector<64x64xf32>
    %cst_169 = arith.constant 0.000000e+00 : f32
    %575 = vector.broadcast %cst_169 : f32 to vector<64x64xf32>
    %576 = arith.maximumf %574, %575 : vector<64x64xf32>
    %577 = vector.broadcast %569 : f32 to vector<64x64xf32>
    %578 = arith.mulf %577, %576 : vector<64x64xf32>
    %579 = arith.addf %568, %578 : vector<64x64xf32>
    %c2_170 = arith.constant 2 : index
    %c12_171 = arith.constant 12 : index
    %580 = memref.load %arg1[%c2_170, %c12_171] : memref<5x16xf32, #tpu.memory_space<smem>>
    %581 = vector.extract_strided_slice %25 {offsets = [0, 44], sizes = [64, 1], strides = [1, 1]} : vector<64x80xf32> to vector<64x1xf32>
    %582 = vector.extract_strided_slice %26 {offsets = [44, 0], sizes = [1, 64], strides = [1, 1]} : vector<80x64xf32> to vector<1x64xf32>
    %583 = vector.broadcast %581 : vector<64x1xf32> to vector<64x64xf32>
    %584 = vector.broadcast %582 : vector<1x64xf32> to vector<64x64xf32>
    %585 = arith.addf %583, %584 : vector<64x64xf32>
    %cst_172 = arith.constant 0.000000e+00 : f32
    %586 = vector.broadcast %cst_172 : f32 to vector<64x64xf32>
    %587 = arith.maximumf %585, %586 : vector<64x64xf32>
    %588 = vector.broadcast %580 : f32 to vector<64x64xf32>
    %589 = arith.mulf %588, %587 : vector<64x64xf32>
    %590 = arith.addf %579, %589 : vector<64x64xf32>
    %c2_173 = arith.constant 2 : index
    %c13_174 = arith.constant 13 : index
    %591 = memref.load %arg1[%c2_173, %c13_174] : memref<5x16xf32, #tpu.memory_space<smem>>
    %592 = vector.extract_strided_slice %25 {offsets = [0, 45], sizes = [64, 1], strides = [1, 1]} : vector<64x80xf32> to vector<64x1xf32>
    %593 = vector.extract_strided_slice %26 {offsets = [45, 0], sizes = [1, 64], strides = [1, 1]} : vector<80x64xf32> to vector<1x64xf32>
    %594 = vector.broadcast %592 : vector<64x1xf32> to vector<64x64xf32>
    %595 = vector.broadcast %593 : vector<1x64xf32> to vector<64x64xf32>
    %596 = arith.addf %594, %595 : vector<64x64xf32>
    %cst_175 = arith.constant 0.000000e+00 : f32
    %597 = vector.broadcast %cst_175 : f32 to vector<64x64xf32>
    %598 = arith.maximumf %596, %597 : vector<64x64xf32>
    %599 = vector.broadcast %591 : f32 to vector<64x64xf32>
    %600 = arith.mulf %599, %598 : vector<64x64xf32>
    %601 = arith.addf %590, %600 : vector<64x64xf32>
    %c2_176 = arith.constant 2 : index
    %c14_177 = arith.constant 14 : index
    %602 = memref.load %arg1[%c2_176, %c14_177] : memref<5x16xf32, #tpu.memory_space<smem>>
    %603 = vector.extract_strided_slice %25 {offsets = [0, 46], sizes = [64, 1], strides = [1, 1]} : vector<64x80xf32> to vector<64x1xf32>
    %604 = vector.extract_strided_slice %26 {offsets = [46, 0], sizes = [1, 64], strides = [1, 1]} : vector<80x64xf32> to vector<1x64xf32>
    %605 = vector.broadcast %603 : vector<64x1xf32> to vector<64x64xf32>
    %606 = vector.broadcast %604 : vector<1x64xf32> to vector<64x64xf32>
    %607 = arith.addf %605, %606 : vector<64x64xf32>
    %cst_178 = arith.constant 0.000000e+00 : f32
    %608 = vector.broadcast %cst_178 : f32 to vector<64x64xf32>
    %609 = arith.maximumf %607, %608 : vector<64x64xf32>
    %610 = vector.broadcast %602 : f32 to vector<64x64xf32>
    %611 = arith.mulf %610, %609 : vector<64x64xf32>
    %612 = arith.addf %601, %611 : vector<64x64xf32>
    %c2_179 = arith.constant 2 : index
    %c15_180 = arith.constant 15 : index
    %613 = memref.load %arg1[%c2_179, %c15_180] : memref<5x16xf32, #tpu.memory_space<smem>>
    %614 = vector.extract_strided_slice %25 {offsets = [0, 47], sizes = [64, 1], strides = [1, 1]} : vector<64x80xf32> to vector<64x1xf32>
    %615 = vector.extract_strided_slice %26 {offsets = [47, 0], sizes = [1, 64], strides = [1, 1]} : vector<80x64xf32> to vector<1x64xf32>
    %616 = vector.broadcast %614 : vector<64x1xf32> to vector<64x64xf32>
    %617 = vector.broadcast %615 : vector<1x64xf32> to vector<64x64xf32>
    %618 = arith.addf %616, %617 : vector<64x64xf32>
    %cst_181 = arith.constant 0.000000e+00 : f32
    %619 = vector.broadcast %cst_181 : f32 to vector<64x64xf32>
    %620 = arith.maximumf %618, %619 : vector<64x64xf32>
    %621 = vector.broadcast %613 : f32 to vector<64x64xf32>
    %622 = arith.mulf %621, %620 : vector<64x64xf32>
    %623 = arith.addf %612, %622 : vector<64x64xf32>
    %cst_182 = arith.constant -1.000000e+30 : f32
    %624 = vector.broadcast %cst_182 : f32 to vector<64x64xf32>
    %625 = arith.select %33, %623, %624 : vector<64x64xi1>, vector<64x64xf32>
    %cst_183 = arith.constant dense<0xFF800000> : vector<64xf32>
    %626 = vector.multi_reduction <maximumf>, %625, %cst_183 [1] : vector<64x64xf32> to vector<64xf32>
    %627 = vector.shape_cast %626 : vector<64xf32> to vector<64x1xf32>
    %628 = vector.broadcast %627 : vector<64x1xf32> to vector<64x64xf32>
    %629 = arith.subf %625, %628 : vector<64x64xf32>
    %630 = math.exp %629 : vector<64x64xf32>
    %631 = arith.mulf %630, %35 : vector<64x64xf32>
    %cst_184 = arith.constant dense<0.000000e+00> : vector<64xf32>
    %632 = vector.multi_reduction <add>, %631, %cst_184 [1] : vector<64x64xf32> to vector<64xf32>
    %633 = vector.shape_cast %632 : vector<64xf32> to vector<64x1xf32>
    %cst_185 = arith.constant 1.000000e-16 : f32
    %634 = vector.broadcast %cst_185 : f32 to vector<64x1xf32>
    %635 = arith.maximumf %633, %634 : vector<64x1xf32>
    %636 = vector.broadcast %635 : vector<64x1xf32> to vector<64x64xf32>
    %637 = arith.divf %631, %636 : vector<64x64xf32>
    %638 = vector.extract_strided_slice %20 {offsets = [0, 32], sizes = [64, 16], strides = [1, 1]} : vector<64x80xf32> to vector<64x16xf32>
    %cst_186 = arith.constant dense<0.000000e+00> : vector<64x16xf32>
    %639 = tpu.matmul %637, %638, %cst_186 {dimension_numbers = #tpu.dot_dimension_numbers<[1], [0], [0], [1], [0, 0, 1, 1], [], []>} : vector<64x64xf32>, vector<64x16xf32>, vector<64x16xf32> -> vector<64x16xf32>
    %c0_187 = arith.constant 0 : index
    %c32_188 = arith.constant 32 : index
    %640 = vector.load %arg14[%c0_187, %c32_188] : memref<1x80xf32, #tpu.memory_space<vmem>>, vector<1x16xf32>
    %641 = vector.broadcast %640 : vector<1x16xf32> to vector<64x16xf32>
    %642 = arith.addf %639, %641 : vector<64x16xf32>
    %cst_189 = arith.constant 0.000000e+00 : f32
    %643 = vector.broadcast %cst_189 : f32 to vector<64x16xf32>
    %644 = arith.maximumf %642, %643 : vector<64x16xf32>
    %c0_190 = arith.constant 0 : index
    %c48 = arith.constant 48 : index
    %645 = vector.load %arg16[%c0_190, %c48] : memref<64x96xf32, #tpu.memory_space<vmem>>, vector<64x16xf32>
    tpu.vector_store %arg16[%c0_190, %c48], %644 {strides = array<i32>} : memref<64x96xf32, #tpu.memory_space<vmem>>, vector<64x16xf32>,
    %646 = vector.extract_strided_slice %28 {offsets = [0, 3], sizes = [64, 1], strides = [1, 1]} : vector<64x5xf32> to vector<64x1xf32>
    %647 = vector.extract_strided_slice %30 {offsets = [3, 0], sizes = [1, 64], strides = [1, 1]} : vector<5x64xf32> to vector<1x64xf32>
    %648 = vector.broadcast %646 : vector<64x1xf32> to vector<64x64xf32>
    %649 = vector.broadcast %647 : vector<1x64xf32> to vector<64x64xf32>
    %650 = arith.addf %648, %649 : vector<64x64xf32>
    %c3_191 = arith.constant 3 : index
    %c0_192 = arith.constant 0 : index
    %651 = memref.load %arg1[%c3_191, %c0_192] : memref<5x16xf32, #tpu.memory_space<smem>>
    %652 = vector.extract_strided_slice %25 {offsets = [0, 48], sizes = [64, 1], strides = [1, 1]} : vector<64x80xf32> to vector<64x1xf32>
    %653 = vector.extract_strided_slice %26 {offsets = [48, 0], sizes = [1, 64], strides = [1, 1]} : vector<80x64xf32> to vector<1x64xf32>
    %654 = vector.broadcast %652 : vector<64x1xf32> to vector<64x64xf32>
    %655 = vector.broadcast %653 : vector<1x64xf32> to vector<64x64xf32>
    %656 = arith.addf %654, %655 : vector<64x64xf32>
    %cst_193 = arith.constant 0.000000e+00 : f32
    %657 = vector.broadcast %cst_193 : f32 to vector<64x64xf32>
    %658 = arith.maximumf %656, %657 : vector<64x64xf32>
    %659 = vector.broadcast %651 : f32 to vector<64x64xf32>
    %660 = arith.mulf %659, %658 : vector<64x64xf32>
    %661 = arith.addf %650, %660 : vector<64x64xf32>
    %c3_194 = arith.constant 3 : index
    %c1_195 = arith.constant 1 : index
    %662 = memref.load %arg1[%c3_194, %c1_195] : memref<5x16xf32, #tpu.memory_space<smem>>
    %663 = vector.extract_strided_slice %25 {offsets = [0, 49], sizes = [64, 1], strides = [1, 1]} : vector<64x80xf32> to vector<64x1xf32>
    %664 = vector.extract_strided_slice %26 {offsets = [49, 0], sizes = [1, 64], strides = [1, 1]} : vector<80x64xf32> to vector<1x64xf32>
    %665 = vector.broadcast %663 : vector<64x1xf32> to vector<64x64xf32>
    %666 = vector.broadcast %664 : vector<1x64xf32> to vector<64x64xf32>
    %667 = arith.addf %665, %666 : vector<64x64xf32>
    %cst_196 = arith.constant 0.000000e+00 : f32
    %668 = vector.broadcast %cst_196 : f32 to vector<64x64xf32>
    %669 = arith.maximumf %667, %668 : vector<64x64xf32>
    %670 = vector.broadcast %662 : f32 to vector<64x64xf32>
    %671 = arith.mulf %670, %669 : vector<64x64xf32>
    %672 = arith.addf %661, %671 : vector<64x64xf32>
    %c3_197 = arith.constant 3 : index
    %c2_198 = arith.constant 2 : index
    %673 = memref.load %arg1[%c3_197, %c2_198] : memref<5x16xf32, #tpu.memory_space<smem>>
    %674 = vector.extract_strided_slice %25 {offsets = [0, 50], sizes = [64, 1], strides = [1, 1]} : vector<64x80xf32> to vector<64x1xf32>
    %675 = vector.extract_strided_slice %26 {offsets = [50, 0], sizes = [1, 64], strides = [1, 1]} : vector<80x64xf32> to vector<1x64xf32>
    %676 = vector.broadcast %674 : vector<64x1xf32> to vector<64x64xf32>
    %677 = vector.broadcast %675 : vector<1x64xf32> to vector<64x64xf32>
    %678 = arith.addf %676, %677 : vector<64x64xf32>
    %cst_199 = arith.constant 0.000000e+00 : f32
    %679 = vector.broadcast %cst_199 : f32 to vector<64x64xf32>
    %680 = arith.maximumf %678, %679 : vector<64x64xf32>
    %681 = vector.broadcast %673 : f32 to vector<64x64xf32>
    %682 = arith.mulf %681, %680 : vector<64x64xf32>
    %683 = arith.addf %672, %682 : vector<64x64xf32>
    %c3_200 = arith.constant 3 : index
    %c3_201 = arith.constant 3 : index
    %684 = memref.load %arg1[%c3_200, %c3_201] : memref<5x16xf32, #tpu.memory_space<smem>>
    %685 = vector.extract_strided_slice %25 {offsets = [0, 51], sizes = [64, 1], strides = [1, 1]} : vector<64x80xf32> to vector<64x1xf32>
    %686 = vector.extract_strided_slice %26 {offsets = [51, 0], sizes = [1, 64], strides = [1, 1]} : vector<80x64xf32> to vector<1x64xf32>
    %687 = vector.broadcast %685 : vector<64x1xf32> to vector<64x64xf32>
    %688 = vector.broadcast %686 : vector<1x64xf32> to vector<64x64xf32>
    %689 = arith.addf %687, %688 : vector<64x64xf32>
    %cst_202 = arith.constant 0.000000e+00 : f32
    %690 = vector.broadcast %cst_202 : f32 to vector<64x64xf32>
    %691 = arith.maximumf %689, %690 : vector<64x64xf32>
    %692 = vector.broadcast %684 : f32 to vector<64x64xf32>
    %693 = arith.mulf %692, %691 : vector<64x64xf32>
    %694 = arith.addf %683, %693 : vector<64x64xf32>
    %c3_203 = arith.constant 3 : index
    %c4_204 = arith.constant 4 : index
    %695 = memref.load %arg1[%c3_203, %c4_204] : memref<5x16xf32, #tpu.memory_space<smem>>
    %696 = vector.extract_strided_slice %25 {offsets = [0, 52], sizes = [64, 1], strides = [1, 1]} : vector<64x80xf32> to vector<64x1xf32>
    %697 = vector.extract_strided_slice %26 {offsets = [52, 0], sizes = [1, 64], strides = [1, 1]} : vector<80x64xf32> to vector<1x64xf32>
    %698 = vector.broadcast %696 : vector<64x1xf32> to vector<64x64xf32>
    %699 = vector.broadcast %697 : vector<1x64xf32> to vector<64x64xf32>
    %700 = arith.addf %698, %699 : vector<64x64xf32>
    %cst_205 = arith.constant 0.000000e+00 : f32
    %701 = vector.broadcast %cst_205 : f32 to vector<64x64xf32>
    %702 = arith.maximumf %700, %701 : vector<64x64xf32>
    %703 = vector.broadcast %695 : f32 to vector<64x64xf32>
    %704 = arith.mulf %703, %702 : vector<64x64xf32>
    %705 = arith.addf %694, %704 : vector<64x64xf32>
    %c3_206 = arith.constant 3 : index
    %c5_207 = arith.constant 5 : index
    %706 = memref.load %arg1[%c3_206, %c5_207] : memref<5x16xf32, #tpu.memory_space<smem>>
    %707 = vector.extract_strided_slice %25 {offsets = [0, 53], sizes = [64, 1], strides = [1, 1]} : vector<64x80xf32> to vector<64x1xf32>
    %708 = vector.extract_strided_slice %26 {offsets = [53, 0], sizes = [1, 64], strides = [1, 1]} : vector<80x64xf32> to vector<1x64xf32>
    %709 = vector.broadcast %707 : vector<64x1xf32> to vector<64x64xf32>
    %710 = vector.broadcast %708 : vector<1x64xf32> to vector<64x64xf32>
    %711 = arith.addf %709, %710 : vector<64x64xf32>
    %cst_208 = arith.constant 0.000000e+00 : f32
    %712 = vector.broadcast %cst_208 : f32 to vector<64x64xf32>
    %713 = arith.maximumf %711, %712 : vector<64x64xf32>
    %714 = vector.broadcast %706 : f32 to vector<64x64xf32>
    %715 = arith.mulf %714, %713 : vector<64x64xf32>
    %716 = arith.addf %705, %715 : vector<64x64xf32>
    %c3_209 = arith.constant 3 : index
    %c6_210 = arith.constant 6 : index
    %717 = memref.load %arg1[%c3_209, %c6_210] : memref<5x16xf32, #tpu.memory_space<smem>>
    %718 = vector.extract_strided_slice %25 {offsets = [0, 54], sizes = [64, 1], strides = [1, 1]} : vector<64x80xf32> to vector<64x1xf32>
    %719 = vector.extract_strided_slice %26 {offsets = [54, 0], sizes = [1, 64], strides = [1, 1]} : vector<80x64xf32> to vector<1x64xf32>
    %720 = vector.broadcast %718 : vector<64x1xf32> to vector<64x64xf32>
    %721 = vector.broadcast %719 : vector<1x64xf32> to vector<64x64xf32>
    %722 = arith.addf %720, %721 : vector<64x64xf32>
    %cst_211 = arith.constant 0.000000e+00 : f32
    %723 = vector.broadcast %cst_211 : f32 to vector<64x64xf32>
    %724 = arith.maximumf %722, %723 : vector<64x64xf32>
    %725 = vector.broadcast %717 : f32 to vector<64x64xf32>
    %726 = arith.mulf %725, %724 : vector<64x64xf32>
    %727 = arith.addf %716, %726 : vector<64x64xf32>
    %c3_212 = arith.constant 3 : index
    %c7_213 = arith.constant 7 : index
    %728 = memref.load %arg1[%c3_212, %c7_213] : memref<5x16xf32, #tpu.memory_space<smem>>
    %729 = vector.extract_strided_slice %25 {offsets = [0, 55], sizes = [64, 1], strides = [1, 1]} : vector<64x80xf32> to vector<64x1xf32>
    %730 = vector.extract_strided_slice %26 {offsets = [55, 0], sizes = [1, 64], strides = [1, 1]} : vector<80x64xf32> to vector<1x64xf32>
    %731 = vector.broadcast %729 : vector<64x1xf32> to vector<64x64xf32>
    %732 = vector.broadcast %730 : vector<1x64xf32> to vector<64x64xf32>
    %733 = arith.addf %731, %732 : vector<64x64xf32>
    %cst_214 = arith.constant 0.000000e+00 : f32
    %734 = vector.broadcast %cst_214 : f32 to vector<64x64xf32>
    %735 = arith.maximumf %733, %734 : vector<64x64xf32>
    %736 = vector.broadcast %728 : f32 to vector<64x64xf32>
    %737 = arith.mulf %736, %735 : vector<64x64xf32>
    %738 = arith.addf %727, %737 : vector<64x64xf32>
    %c3_215 = arith.constant 3 : index
    %c8_216 = arith.constant 8 : index
    %739 = memref.load %arg1[%c3_215, %c8_216] : memref<5x16xf32, #tpu.memory_space<smem>>
    %740 = vector.extract_strided_slice %25 {offsets = [0, 56], sizes = [64, 1], strides = [1, 1]} : vector<64x80xf32> to vector<64x1xf32>
    %741 = vector.extract_strided_slice %26 {offsets = [56, 0], sizes = [1, 64], strides = [1, 1]} : vector<80x64xf32> to vector<1x64xf32>
    %742 = vector.broadcast %740 : vector<64x1xf32> to vector<64x64xf32>
    %743 = vector.broadcast %741 : vector<1x64xf32> to vector<64x64xf32>
    %744 = arith.addf %742, %743 : vector<64x64xf32>
    %cst_217 = arith.constant 0.000000e+00 : f32
    %745 = vector.broadcast %cst_217 : f32 to vector<64x64xf32>
    %746 = arith.maximumf %744, %745 : vector<64x64xf32>
    %747 = vector.broadcast %739 : f32 to vector<64x64xf32>
    %748 = arith.mulf %747, %746 : vector<64x64xf32>
    %749 = arith.addf %738, %748 : vector<64x64xf32>
    %c3_218 = arith.constant 3 : index
    %c9_219 = arith.constant 9 : index
    %750 = memref.load %arg1[%c3_218, %c9_219] : memref<5x16xf32, #tpu.memory_space<smem>>
    %751 = vector.extract_strided_slice %25 {offsets = [0, 57], sizes = [64, 1], strides = [1, 1]} : vector<64x80xf32> to vector<64x1xf32>
    %752 = vector.extract_strided_slice %26 {offsets = [57, 0], sizes = [1, 64], strides = [1, 1]} : vector<80x64xf32> to vector<1x64xf32>
    %753 = vector.broadcast %751 : vector<64x1xf32> to vector<64x64xf32>
    %754 = vector.broadcast %752 : vector<1x64xf32> to vector<64x64xf32>
    %755 = arith.addf %753, %754 : vector<64x64xf32>
    %cst_220 = arith.constant 0.000000e+00 : f32
    %756 = vector.broadcast %cst_220 : f32 to vector<64x64xf32>
    %757 = arith.maximumf %755, %756 : vector<64x64xf32>
    %758 = vector.broadcast %750 : f32 to vector<64x64xf32>
    %759 = arith.mulf %758, %757 : vector<64x64xf32>
    %760 = arith.addf %749, %759 : vector<64x64xf32>
    %c3_221 = arith.constant 3 : index
    %c10_222 = arith.constant 10 : index
    %761 = memref.load %arg1[%c3_221, %c10_222] : memref<5x16xf32, #tpu.memory_space<smem>>
    %762 = vector.extract_strided_slice %25 {offsets = [0, 58], sizes = [64, 1], strides = [1, 1]} : vector<64x80xf32> to vector<64x1xf32>
    %763 = vector.extract_strided_slice %26 {offsets = [58, 0], sizes = [1, 64], strides = [1, 1]} : vector<80x64xf32> to vector<1x64xf32>
    %764 = vector.broadcast %762 : vector<64x1xf32> to vector<64x64xf32>
    %765 = vector.broadcast %763 : vector<1x64xf32> to vector<64x64xf32>
    %766 = arith.addf %764, %765 : vector<64x64xf32>
    %cst_223 = arith.constant 0.000000e+00 : f32
    %767 = vector.broadcast %cst_223 : f32 to vector<64x64xf32>
    %768 = arith.maximumf %766, %767 : vector<64x64xf32>
    %769 = vector.broadcast %761 : f32 to vector<64x64xf32>
    %770 = arith.mulf %769, %768 : vector<64x64xf32>
    %771 = arith.addf %760, %770 : vector<64x64xf32>
    %c3_224 = arith.constant 3 : index
    %c11_225 = arith.constant 11 : index
    %772 = memref.load %arg1[%c3_224, %c11_225] : memref<5x16xf32, #tpu.memory_space<smem>>
    %773 = vector.extract_strided_slice %25 {offsets = [0, 59], sizes = [64, 1], strides = [1, 1]} : vector<64x80xf32> to vector<64x1xf32>
    %774 = vector.extract_strided_slice %26 {offsets = [59, 0], sizes = [1, 64], strides = [1, 1]} : vector<80x64xf32> to vector<1x64xf32>
    %775 = vector.broadcast %773 : vector<64x1xf32> to vector<64x64xf32>
    %776 = vector.broadcast %774 : vector<1x64xf32> to vector<64x64xf32>
    %777 = arith.addf %775, %776 : vector<64x64xf32>
    %cst_226 = arith.constant 0.000000e+00 : f32
    %778 = vector.broadcast %cst_226 : f32 to vector<64x64xf32>
    %779 = arith.maximumf %777, %778 : vector<64x64xf32>
    %780 = vector.broadcast %772 : f32 to vector<64x64xf32>
    %781 = arith.mulf %780, %779 : vector<64x64xf32>
    %782 = arith.addf %771, %781 : vector<64x64xf32>
    %c3_227 = arith.constant 3 : index
    %c12_228 = arith.constant 12 : index
    %783 = memref.load %arg1[%c3_227, %c12_228] : memref<5x16xf32, #tpu.memory_space<smem>>
    %784 = vector.extract_strided_slice %25 {offsets = [0, 60], sizes = [64, 1], strides = [1, 1]} : vector<64x80xf32> to vector<64x1xf32>
    %785 = vector.extract_strided_slice %26 {offsets = [60, 0], sizes = [1, 64], strides = [1, 1]} : vector<80x64xf32> to vector<1x64xf32>
    %786 = vector.broadcast %784 : vector<64x1xf32> to vector<64x64xf32>
    %787 = vector.broadcast %785 : vector<1x64xf32> to vector<64x64xf32>
    %788 = arith.addf %786, %787 : vector<64x64xf32>
    %cst_229 = arith.constant 0.000000e+00 : f32
    %789 = vector.broadcast %cst_229 : f32 to vector<64x64xf32>
    %790 = arith.maximumf %788, %789 : vector<64x64xf32>
    %791 = vector.broadcast %783 : f32 to vector<64x64xf32>
    %792 = arith.mulf %791, %790 : vector<64x64xf32>
    %793 = arith.addf %782, %792 : vector<64x64xf32>
    %c3_230 = arith.constant 3 : index
    %c13_231 = arith.constant 13 : index
    %794 = memref.load %arg1[%c3_230, %c13_231] : memref<5x16xf32, #tpu.memory_space<smem>>
    %795 = vector.extract_strided_slice %25 {offsets = [0, 61], sizes = [64, 1], strides = [1, 1]} : vector<64x80xf32> to vector<64x1xf32>
    %796 = vector.extract_strided_slice %26 {offsets = [61, 0], sizes = [1, 64], strides = [1, 1]} : vector<80x64xf32> to vector<1x64xf32>
    %797 = vector.broadcast %795 : vector<64x1xf32> to vector<64x64xf32>
    %798 = vector.broadcast %796 : vector<1x64xf32> to vector<64x64xf32>
    %799 = arith.addf %797, %798 : vector<64x64xf32>
    %cst_232 = arith.constant 0.000000e+00 : f32
    %800 = vector.broadcast %cst_232 : f32 to vector<64x64xf32>
    %801 = arith.maximumf %799, %800 : vector<64x64xf32>
    %802 = vector.broadcast %794 : f32 to vector<64x64xf32>
    %803 = arith.mulf %802, %801 : vector<64x64xf32>
    %804 = arith.addf %793, %803 : vector<64x64xf32>
    %c3_233 = arith.constant 3 : index
    %c14_234 = arith.constant 14 : index
    %805 = memref.load %arg1[%c3_233, %c14_234] : memref<5x16xf32, #tpu.memory_space<smem>>
    %806 = vector.extract_strided_slice %25 {offsets = [0, 62], sizes = [64, 1], strides = [1, 1]} : vector<64x80xf32> to vector<64x1xf32>
    %807 = vector.extract_strided_slice %26 {offsets = [62, 0], sizes = [1, 64], strides = [1, 1]} : vector<80x64xf32> to vector<1x64xf32>
    %808 = vector.broadcast %806 : vector<64x1xf32> to vector<64x64xf32>
    %809 = vector.broadcast %807 : vector<1x64xf32> to vector<64x64xf32>
    %810 = arith.addf %808, %809 : vector<64x64xf32>
    %cst_235 = arith.constant 0.000000e+00 : f32
    %811 = vector.broadcast %cst_235 : f32 to vector<64x64xf32>
    %812 = arith.maximumf %810, %811 : vector<64x64xf32>
    %813 = vector.broadcast %805 : f32 to vector<64x64xf32>
    %814 = arith.mulf %813, %812 : vector<64x64xf32>
    %815 = arith.addf %804, %814 : vector<64x64xf32>
    %c3_236 = arith.constant 3 : index
    %c15_237 = arith.constant 15 : index
    %816 = memref.load %arg1[%c3_236, %c15_237] : memref<5x16xf32, #tpu.memory_space<smem>>
    %817 = vector.extract_strided_slice %25 {offsets = [0, 63], sizes = [64, 1], strides = [1, 1]} : vector<64x80xf32> to vector<64x1xf32>
    %818 = vector.extract_strided_slice %26 {offsets = [63, 0], sizes = [1, 64], strides = [1, 1]} : vector<80x64xf32> to vector<1x64xf32>
    %819 = vector.broadcast %817 : vector<64x1xf32> to vector<64x64xf32>
    %820 = vector.broadcast %818 : vector<1x64xf32> to vector<64x64xf32>
    %821 = arith.addf %819, %820 : vector<64x64xf32>
    %cst_238 = arith.constant 0.000000e+00 : f32
    %822 = vector.broadcast %cst_238 : f32 to vector<64x64xf32>
    %823 = arith.maximumf %821, %822 : vector<64x64xf32>
    %824 = vector.broadcast %816 : f32 to vector<64x64xf32>
    %825 = arith.mulf %824, %823 : vector<64x64xf32>
    %826 = arith.addf %815, %825 : vector<64x64xf32>
    %cst_239 = arith.constant -1.000000e+30 : f32
    %827 = vector.broadcast %cst_239 : f32 to vector<64x64xf32>
    %828 = arith.select %33, %826, %827 : vector<64x64xi1>, vector<64x64xf32>
    %cst_240 = arith.constant dense<0xFF800000> : vector<64xf32>
    %829 = vector.multi_reduction <maximumf>, %828, %cst_240 [1] : vector<64x64xf32> to vector<64xf32>
    %830 = vector.shape_cast %829 : vector<64xf32> to vector<64x1xf32>
    %831 = vector.broadcast %830 : vector<64x1xf32> to vector<64x64xf32>
    %832 = arith.subf %828, %831 : vector<64x64xf32>
    %833 = math.exp %832 : vector<64x64xf32>
    %834 = arith.mulf %833, %35 : vector<64x64xf32>
    %cst_241 = arith.constant dense<0.000000e+00> : vector<64xf32>
    %835 = vector.multi_reduction <add>, %834, %cst_241 [1] : vector<64x64xf32> to vector<64xf32>
    %836 = vector.shape_cast %835 : vector<64xf32> to vector<64x1xf32>
    %cst_242 = arith.constant 1.000000e-16 : f32
    %837 = vector.broadcast %cst_242 : f32 to vector<64x1xf32>
    %838 = arith.maximumf %836, %837 : vector<64x1xf32>
    %839 = vector.broadcast %838 : vector<64x1xf32> to vector<64x64xf32>
    %840 = arith.divf %834, %839 : vector<64x64xf32>
    %841 = vector.extract_strided_slice %20 {offsets = [0, 48], sizes = [64, 16], strides = [1, 1]} : vector<64x80xf32> to vector<64x16xf32>
    %cst_243 = arith.constant dense<0.000000e+00> : vector<64x16xf32>
    %842 = tpu.matmul %840, %841, %cst_243 {dimension_numbers = #tpu.dot_dimension_numbers<[1], [0], [0], [1], [0, 0, 1, 1], [], []>} : vector<64x64xf32>, vector<64x16xf32>, vector<64x16xf32> -> vector<64x16xf32>
    %c0_244 = arith.constant 0 : index
    %c48_245 = arith.constant 48 : index
    %843 = vector.load %arg14[%c0_244, %c48_245] : memref<1x80xf32, #tpu.memory_space<vmem>>, vector<1x16xf32>
    %844 = vector.broadcast %843 : vector<1x16xf32> to vector<64x16xf32>
    %845 = arith.addf %842, %844 : vector<64x16xf32>
    %cst_246 = arith.constant 0.000000e+00 : f32
    %846 = vector.broadcast %cst_246 : f32 to vector<64x16xf32>
    %847 = arith.maximumf %845, %846 : vector<64x16xf32>
    %c0_247 = arith.constant 0 : index
    %c64 = arith.constant 64 : index
    %848 = vector.load %arg16[%c0_247, %c64] : memref<64x96xf32, #tpu.memory_space<vmem>>, vector<64x16xf32>
    tpu.vector_store %arg16[%c0_247, %c64], %847 {strides = array<i32>} : memref<64x96xf32, #tpu.memory_space<vmem>>, vector<64x16xf32>,
    %849 = vector.extract_strided_slice %28 {offsets = [0, 4], sizes = [64, 1], strides = [1, 1]} : vector<64x5xf32> to vector<64x1xf32>
    %850 = vector.extract_strided_slice %30 {offsets = [4, 0], sizes = [1, 64], strides = [1, 1]} : vector<5x64xf32> to vector<1x64xf32>
    %851 = vector.broadcast %849 : vector<64x1xf32> to vector<64x64xf32>
    %852 = vector.broadcast %850 : vector<1x64xf32> to vector<64x64xf32>
    %853 = arith.addf %851, %852 : vector<64x64xf32>
    %c4_248 = arith.constant 4 : index
    %c0_249 = arith.constant 0 : index
    %854 = memref.load %arg1[%c4_248, %c0_249] : memref<5x16xf32, #tpu.memory_space<smem>>
    %855 = vector.extract_strided_slice %25 {offsets = [0, 64], sizes = [64, 1], strides = [1, 1]} : vector<64x80xf32> to vector<64x1xf32>
    %856 = vector.extract_strided_slice %26 {offsets = [64, 0], sizes = [1, 64], strides = [1, 1]} : vector<80x64xf32> to vector<1x64xf32>
    %857 = vector.broadcast %855 : vector<64x1xf32> to vector<64x64xf32>
    %858 = vector.broadcast %856 : vector<1x64xf32> to vector<64x64xf32>
    %859 = arith.addf %857, %858 : vector<64x64xf32>
    %cst_250 = arith.constant 0.000000e+00 : f32
    %860 = vector.broadcast %cst_250 : f32 to vector<64x64xf32>
    %861 = arith.maximumf %859, %860 : vector<64x64xf32>
    %862 = vector.broadcast %854 : f32 to vector<64x64xf32>
    %863 = arith.mulf %862, %861 : vector<64x64xf32>
    %864 = arith.addf %853, %863 : vector<64x64xf32>
    %c4_251 = arith.constant 4 : index
    %c1_252 = arith.constant 1 : index
    %865 = memref.load %arg1[%c4_251, %c1_252] : memref<5x16xf32, #tpu.memory_space<smem>>
    %866 = vector.extract_strided_slice %25 {offsets = [0, 65], sizes = [64, 1], strides = [1, 1]} : vector<64x80xf32> to vector<64x1xf32>
    %867 = vector.extract_strided_slice %26 {offsets = [65, 0], sizes = [1, 64], strides = [1, 1]} : vector<80x64xf32> to vector<1x64xf32>
    %868 = vector.broadcast %866 : vector<64x1xf32> to vector<64x64xf32>
    %869 = vector.broadcast %867 : vector<1x64xf32> to vector<64x64xf32>
    %870 = arith.addf %868, %869 : vector<64x64xf32>
    %cst_253 = arith.constant 0.000000e+00 : f32
    %871 = vector.broadcast %cst_253 : f32 to vector<64x64xf32>
    %872 = arith.maximumf %870, %871 : vector<64x64xf32>
    %873 = vector.broadcast %865 : f32 to vector<64x64xf32>
    %874 = arith.mulf %873, %872 : vector<64x64xf32>
    %875 = arith.addf %864, %874 : vector<64x64xf32>
    %c4_254 = arith.constant 4 : index
    %c2_255 = arith.constant 2 : index
    %876 = memref.load %arg1[%c4_254, %c2_255] : memref<5x16xf32, #tpu.memory_space<smem>>
    %877 = vector.extract_strided_slice %25 {offsets = [0, 66], sizes = [64, 1], strides = [1, 1]} : vector<64x80xf32> to vector<64x1xf32>
    %878 = vector.extract_strided_slice %26 {offsets = [66, 0], sizes = [1, 64], strides = [1, 1]} : vector<80x64xf32> to vector<1x64xf32>
    %879 = vector.broadcast %877 : vector<64x1xf32> to vector<64x64xf32>
    %880 = vector.broadcast %878 : vector<1x64xf32> to vector<64x64xf32>
    %881 = arith.addf %879, %880 : vector<64x64xf32>
    %cst_256 = arith.constant 0.000000e+00 : f32
    %882 = vector.broadcast %cst_256 : f32 to vector<64x64xf32>
    %883 = arith.maximumf %881, %882 : vector<64x64xf32>
    %884 = vector.broadcast %876 : f32 to vector<64x64xf32>
    %885 = arith.mulf %884, %883 : vector<64x64xf32>
    %886 = arith.addf %875, %885 : vector<64x64xf32>
    %c4_257 = arith.constant 4 : index
    %c3_258 = arith.constant 3 : index
    %887 = memref.load %arg1[%c4_257, %c3_258] : memref<5x16xf32, #tpu.memory_space<smem>>
    %888 = vector.extract_strided_slice %25 {offsets = [0, 67], sizes = [64, 1], strides = [1, 1]} : vector<64x80xf32> to vector<64x1xf32>
    %889 = vector.extract_strided_slice %26 {offsets = [67, 0], sizes = [1, 64], strides = [1, 1]} : vector<80x64xf32> to vector<1x64xf32>
    %890 = vector.broadcast %888 : vector<64x1xf32> to vector<64x64xf32>
    %891 = vector.broadcast %889 : vector<1x64xf32> to vector<64x64xf32>
    %892 = arith.addf %890, %891 : vector<64x64xf32>
    %cst_259 = arith.constant 0.000000e+00 : f32
    %893 = vector.broadcast %cst_259 : f32 to vector<64x64xf32>
    %894 = arith.maximumf %892, %893 : vector<64x64xf32>
    %895 = vector.broadcast %887 : f32 to vector<64x64xf32>
    %896 = arith.mulf %895, %894 : vector<64x64xf32>
    %897 = arith.addf %886, %896 : vector<64x64xf32>
    %c4_260 = arith.constant 4 : index
    %c4_261 = arith.constant 4 : index
    %898 = memref.load %arg1[%c4_260, %c4_261] : memref<5x16xf32, #tpu.memory_space<smem>>
    %899 = vector.extract_strided_slice %25 {offsets = [0, 68], sizes = [64, 1], strides = [1, 1]} : vector<64x80xf32> to vector<64x1xf32>
    %900 = vector.extract_strided_slice %26 {offsets = [68, 0], sizes = [1, 64], strides = [1, 1]} : vector<80x64xf32> to vector<1x64xf32>
    %901 = vector.broadcast %899 : vector<64x1xf32> to vector<64x64xf32>
    %902 = vector.broadcast %900 : vector<1x64xf32> to vector<64x64xf32>
    %903 = arith.addf %901, %902 : vector<64x64xf32>
    %cst_262 = arith.constant 0.000000e+00 : f32
    %904 = vector.broadcast %cst_262 : f32 to vector<64x64xf32>
    %905 = arith.maximumf %903, %904 : vector<64x64xf32>
    %906 = vector.broadcast %898 : f32 to vector<64x64xf32>
    %907 = arith.mulf %906, %905 : vector<64x64xf32>
    %908 = arith.addf %897, %907 : vector<64x64xf32>
    %c4_263 = arith.constant 4 : index
    %c5_264 = arith.constant 5 : index
    %909 = memref.load %arg1[%c4_263, %c5_264] : memref<5x16xf32, #tpu.memory_space<smem>>
    %910 = vector.extract_strided_slice %25 {offsets = [0, 69], sizes = [64, 1], strides = [1, 1]} : vector<64x80xf32> to vector<64x1xf32>
    %911 = vector.extract_strided_slice %26 {offsets = [69, 0], sizes = [1, 64], strides = [1, 1]} : vector<80x64xf32> to vector<1x64xf32>
    %912 = vector.broadcast %910 : vector<64x1xf32> to vector<64x64xf32>
    %913 = vector.broadcast %911 : vector<1x64xf32> to vector<64x64xf32>
    %914 = arith.addf %912, %913 : vector<64x64xf32>
    %cst_265 = arith.constant 0.000000e+00 : f32
    %915 = vector.broadcast %cst_265 : f32 to vector<64x64xf32>
    %916 = arith.maximumf %914, %915 : vector<64x64xf32>
    %917 = vector.broadcast %909 : f32 to vector<64x64xf32>
    %918 = arith.mulf %917, %916 : vector<64x64xf32>
    %919 = arith.addf %908, %918 : vector<64x64xf32>
    %c4_266 = arith.constant 4 : index
    %c6_267 = arith.constant 6 : index
    %920 = memref.load %arg1[%c4_266, %c6_267] : memref<5x16xf32, #tpu.memory_space<smem>>
    %921 = vector.extract_strided_slice %25 {offsets = [0, 70], sizes = [64, 1], strides = [1, 1]} : vector<64x80xf32> to vector<64x1xf32>
    %922 = vector.extract_strided_slice %26 {offsets = [70, 0], sizes = [1, 64], strides = [1, 1]} : vector<80x64xf32> to vector<1x64xf32>
    %923 = vector.broadcast %921 : vector<64x1xf32> to vector<64x64xf32>
    %924 = vector.broadcast %922 : vector<1x64xf32> to vector<64x64xf32>
    %925 = arith.addf %923, %924 : vector<64x64xf32>
    %cst_268 = arith.constant 0.000000e+00 : f32
    %926 = vector.broadcast %cst_268 : f32 to vector<64x64xf32>
    %927 = arith.maximumf %925, %926 : vector<64x64xf32>
    %928 = vector.broadcast %920 : f32 to vector<64x64xf32>
    %929 = arith.mulf %928, %927 : vector<64x64xf32>
    %930 = arith.addf %919, %929 : vector<64x64xf32>
    %c4_269 = arith.constant 4 : index
    %c7_270 = arith.constant 7 : index
    %931 = memref.load %arg1[%c4_269, %c7_270] : memref<5x16xf32, #tpu.memory_space<smem>>
    %932 = vector.extract_strided_slice %25 {offsets = [0, 71], sizes = [64, 1], strides = [1, 1]} : vector<64x80xf32> to vector<64x1xf32>
    %933 = vector.extract_strided_slice %26 {offsets = [71, 0], sizes = [1, 64], strides = [1, 1]} : vector<80x64xf32> to vector<1x64xf32>
    %934 = vector.broadcast %932 : vector<64x1xf32> to vector<64x64xf32>
    %935 = vector.broadcast %933 : vector<1x64xf32> to vector<64x64xf32>
    %936 = arith.addf %934, %935 : vector<64x64xf32>
    %cst_271 = arith.constant 0.000000e+00 : f32
    %937 = vector.broadcast %cst_271 : f32 to vector<64x64xf32>
    %938 = arith.maximumf %936, %937 : vector<64x64xf32>
    %939 = vector.broadcast %931 : f32 to vector<64x64xf32>
    %940 = arith.mulf %939, %938 : vector<64x64xf32>
    %941 = arith.addf %930, %940 : vector<64x64xf32>
    %c4_272 = arith.constant 4 : index
    %c8_273 = arith.constant 8 : index
    %942 = memref.load %arg1[%c4_272, %c8_273] : memref<5x16xf32, #tpu.memory_space<smem>>
    %943 = vector.extract_strided_slice %25 {offsets = [0, 72], sizes = [64, 1], strides = [1, 1]} : vector<64x80xf32> to vector<64x1xf32>
    %944 = vector.extract_strided_slice %26 {offsets = [72, 0], sizes = [1, 64], strides = [1, 1]} : vector<80x64xf32> to vector<1x64xf32>
    %945 = vector.broadcast %943 : vector<64x1xf32> to vector<64x64xf32>
    %946 = vector.broadcast %944 : vector<1x64xf32> to vector<64x64xf32>
    %947 = arith.addf %945, %946 : vector<64x64xf32>
    %cst_274 = arith.constant 0.000000e+00 : f32
    %948 = vector.broadcast %cst_274 : f32 to vector<64x64xf32>
    %949 = arith.maximumf %947, %948 : vector<64x64xf32>
    %950 = vector.broadcast %942 : f32 to vector<64x64xf32>
    %951 = arith.mulf %950, %949 : vector<64x64xf32>
    %952 = arith.addf %941, %951 : vector<64x64xf32>
    %c4_275 = arith.constant 4 : index
    %c9_276 = arith.constant 9 : index
    %953 = memref.load %arg1[%c4_275, %c9_276] : memref<5x16xf32, #tpu.memory_space<smem>>
    %954 = vector.extract_strided_slice %25 {offsets = [0, 73], sizes = [64, 1], strides = [1, 1]} : vector<64x80xf32> to vector<64x1xf32>
    %955 = vector.extract_strided_slice %26 {offsets = [73, 0], sizes = [1, 64], strides = [1, 1]} : vector<80x64xf32> to vector<1x64xf32>
    %956 = vector.broadcast %954 : vector<64x1xf32> to vector<64x64xf32>
    %957 = vector.broadcast %955 : vector<1x64xf32> to vector<64x64xf32>
    %958 = arith.addf %956, %957 : vector<64x64xf32>
    %cst_277 = arith.constant 0.000000e+00 : f32
    %959 = vector.broadcast %cst_277 : f32 to vector<64x64xf32>
    %960 = arith.maximumf %958, %959 : vector<64x64xf32>
    %961 = vector.broadcast %953 : f32 to vector<64x64xf32>
    %962 = arith.mulf %961, %960 : vector<64x64xf32>
    %963 = arith.addf %952, %962 : vector<64x64xf32>
    %c4_278 = arith.constant 4 : index
    %c10_279 = arith.constant 10 : index
    %964 = memref.load %arg1[%c4_278, %c10_279] : memref<5x16xf32, #tpu.memory_space<smem>>
    %965 = vector.extract_strided_slice %25 {offsets = [0, 74], sizes = [64, 1], strides = [1, 1]} : vector<64x80xf32> to vector<64x1xf32>
    %966 = vector.extract_strided_slice %26 {offsets = [74, 0], sizes = [1, 64], strides = [1, 1]} : vector<80x64xf32> to vector<1x64xf32>
    %967 = vector.broadcast %965 : vector<64x1xf32> to vector<64x64xf32>
    %968 = vector.broadcast %966 : vector<1x64xf32> to vector<64x64xf32>
    %969 = arith.addf %967, %968 : vector<64x64xf32>
    %cst_280 = arith.constant 0.000000e+00 : f32
    %970 = vector.broadcast %cst_280 : f32 to vector<64x64xf32>
    %971 = arith.maximumf %969, %970 : vector<64x64xf32>
    %972 = vector.broadcast %964 : f32 to vector<64x64xf32>
    %973 = arith.mulf %972, %971 : vector<64x64xf32>
    %974 = arith.addf %963, %973 : vector<64x64xf32>
    %c4_281 = arith.constant 4 : index
    %c11_282 = arith.constant 11 : index
    %975 = memref.load %arg1[%c4_281, %c11_282] : memref<5x16xf32, #tpu.memory_space<smem>>
    %976 = vector.extract_strided_slice %25 {offsets = [0, 75], sizes = [64, 1], strides = [1, 1]} : vector<64x80xf32> to vector<64x1xf32>
    %977 = vector.extract_strided_slice %26 {offsets = [75, 0], sizes = [1, 64], strides = [1, 1]} : vector<80x64xf32> to vector<1x64xf32>
    %978 = vector.broadcast %976 : vector<64x1xf32> to vector<64x64xf32>
    %979 = vector.broadcast %977 : vector<1x64xf32> to vector<64x64xf32>
    %980 = arith.addf %978, %979 : vector<64x64xf32>
    %cst_283 = arith.constant 0.000000e+00 : f32
    %981 = vector.broadcast %cst_283 : f32 to vector<64x64xf32>
    %982 = arith.maximumf %980, %981 : vector<64x64xf32>
    %983 = vector.broadcast %975 : f32 to vector<64x64xf32>
    %984 = arith.mulf %983, %982 : vector<64x64xf32>
    %985 = arith.addf %974, %984 : vector<64x64xf32>
    %c4_284 = arith.constant 4 : index
    %c12_285 = arith.constant 12 : index
    %986 = memref.load %arg1[%c4_284, %c12_285] : memref<5x16xf32, #tpu.memory_space<smem>>
    %987 = vector.extract_strided_slice %25 {offsets = [0, 76], sizes = [64, 1], strides = [1, 1]} : vector<64x80xf32> to vector<64x1xf32>
    %988 = vector.extract_strided_slice %26 {offsets = [76, 0], sizes = [1, 64], strides = [1, 1]} : vector<80x64xf32> to vector<1x64xf32>
    %989 = vector.broadcast %987 : vector<64x1xf32> to vector<64x64xf32>
    %990 = vector.broadcast %988 : vector<1x64xf32> to vector<64x64xf32>
    %991 = arith.addf %989, %990 : vector<64x64xf32>
    %cst_286 = arith.constant 0.000000e+00 : f32
    %992 = vector.broadcast %cst_286 : f32 to vector<64x64xf32>
    %993 = arith.maximumf %991, %992 : vector<64x64xf32>
    %994 = vector.broadcast %986 : f32 to vector<64x64xf32>
    %995 = arith.mulf %994, %993 : vector<64x64xf32>
    %996 = arith.addf %985, %995 : vector<64x64xf32>
    %c4_287 = arith.constant 4 : index
    %c13_288 = arith.constant 13 : index
    %997 = memref.load %arg1[%c4_287, %c13_288] : memref<5x16xf32, #tpu.memory_space<smem>>
    %998 = vector.extract_strided_slice %25 {offsets = [0, 77], sizes = [64, 1], strides = [1, 1]} : vector<64x80xf32> to vector<64x1xf32>
    %999 = vector.extract_strided_slice %26 {offsets = [77, 0], sizes = [1, 64], strides = [1, 1]} : vector<80x64xf32> to vector<1x64xf32>
    %1000 = vector.broadcast %998 : vector<64x1xf32> to vector<64x64xf32>
    %1001 = vector.broadcast %999 : vector<1x64xf32> to vector<64x64xf32>
    %1002 = arith.addf %1000, %1001 : vector<64x64xf32>
    %cst_289 = arith.constant 0.000000e+00 : f32
    %1003 = vector.broadcast %cst_289 : f32 to vector<64x64xf32>
    %1004 = arith.maximumf %1002, %1003 : vector<64x64xf32>
    %1005 = vector.broadcast %997 : f32 to vector<64x64xf32>
    %1006 = arith.mulf %1005, %1004 : vector<64x64xf32>
    %1007 = arith.addf %996, %1006 : vector<64x64xf32>
    %c4_290 = arith.constant 4 : index
    %c14_291 = arith.constant 14 : index
    %1008 = memref.load %arg1[%c4_290, %c14_291] : memref<5x16xf32, #tpu.memory_space<smem>>
    %1009 = vector.extract_strided_slice %25 {offsets = [0, 78], sizes = [64, 1], strides = [1, 1]} : vector<64x80xf32> to vector<64x1xf32>
    %1010 = vector.extract_strided_slice %26 {offsets = [78, 0], sizes = [1, 64], strides = [1, 1]} : vector<80x64xf32> to vector<1x64xf32>
    %1011 = vector.broadcast %1009 : vector<64x1xf32> to vector<64x64xf32>
    %1012 = vector.broadcast %1010 : vector<1x64xf32> to vector<64x64xf32>
    %1013 = arith.addf %1011, %1012 : vector<64x64xf32>
    %cst_292 = arith.constant 0.000000e+00 : f32
    %1014 = vector.broadcast %cst_292 : f32 to vector<64x64xf32>
    %1015 = arith.maximumf %1013, %1014 : vector<64x64xf32>
    %1016 = vector.broadcast %1008 : f32 to vector<64x64xf32>
    %1017 = arith.mulf %1016, %1015 : vector<64x64xf32>
    %1018 = arith.addf %1007, %1017 : vector<64x64xf32>
    %c4_293 = arith.constant 4 : index
    %c15_294 = arith.constant 15 : index
    %1019 = memref.load %arg1[%c4_293, %c15_294] : memref<5x16xf32, #tpu.memory_space<smem>>
    %1020 = vector.extract_strided_slice %25 {offsets = [0, 79], sizes = [64, 1], strides = [1, 1]} : vector<64x80xf32> to vector<64x1xf32>
    %1021 = vector.extract_strided_slice %26 {offsets = [79, 0], sizes = [1, 64], strides = [1, 1]} : vector<80x64xf32> to vector<1x64xf32>
    %1022 = vector.broadcast %1020 : vector<64x1xf32> to vector<64x64xf32>
    %1023 = vector.broadcast %1021 : vector<1x64xf32> to vector<64x64xf32>
    %1024 = arith.addf %1022, %1023 : vector<64x64xf32>
    %cst_295 = arith.constant 0.000000e+00 : f32
    %1025 = vector.broadcast %cst_295 : f32 to vector<64x64xf32>
    %1026 = arith.maximumf %1024, %1025 : vector<64x64xf32>
    %1027 = vector.broadcast %1019 : f32 to vector<64x64xf32>
    %1028 = arith.mulf %1027, %1026 : vector<64x64xf32>
    %1029 = arith.addf %1018, %1028 : vector<64x64xf32>
    %cst_296 = arith.constant -1.000000e+30 : f32
    %1030 = vector.broadcast %cst_296 : f32 to vector<64x64xf32>
    %1031 = arith.select %33, %1029, %1030 : vector<64x64xi1>, vector<64x64xf32>
    %cst_297 = arith.constant dense<0xFF800000> : vector<64xf32>
    %1032 = vector.multi_reduction <maximumf>, %1031, %cst_297 [1] : vector<64x64xf32> to vector<64xf32>
    %1033 = vector.shape_cast %1032 : vector<64xf32> to vector<64x1xf32>
    %1034 = vector.broadcast %1033 : vector<64x1xf32> to vector<64x64xf32>
    %1035 = arith.subf %1031, %1034 : vector<64x64xf32>
    %1036 = math.exp %1035 : vector<64x64xf32>
    %1037 = arith.mulf %1036, %35 : vector<64x64xf32>
    %cst_298 = arith.constant dense<0.000000e+00> : vector<64xf32>
    %1038 = vector.multi_reduction <add>, %1037, %cst_298 [1] : vector<64x64xf32> to vector<64xf32>
    %1039 = vector.shape_cast %1038 : vector<64xf32> to vector<64x1xf32>
    %cst_299 = arith.constant 1.000000e-16 : f32
    %1040 = vector.broadcast %cst_299 : f32 to vector<64x1xf32>
    %1041 = arith.maximumf %1039, %1040 : vector<64x1xf32>
    %1042 = vector.broadcast %1041 : vector<64x1xf32> to vector<64x64xf32>
    %1043 = arith.divf %1037, %1042 : vector<64x64xf32>
    %1044 = vector.extract_strided_slice %20 {offsets = [0, 64], sizes = [64, 16], strides = [1, 1]} : vector<64x80xf32> to vector<64x16xf32>
    %cst_300 = arith.constant dense<0.000000e+00> : vector<64x16xf32>
    %1045 = tpu.matmul %1043, %1044, %cst_300 {dimension_numbers = #tpu.dot_dimension_numbers<[1], [0], [0], [1], [0, 0, 1, 1], [], []>} : vector<64x64xf32>, vector<64x16xf32>, vector<64x16xf32> -> vector<64x16xf32>
    %c0_301 = arith.constant 0 : index
    %c64_302 = arith.constant 64 : index
    %1046 = vector.load %arg14[%c0_301, %c64_302] : memref<1x80xf32, #tpu.memory_space<vmem>>, vector<1x16xf32>
    %1047 = vector.broadcast %1046 : vector<1x16xf32> to vector<64x16xf32>
    %1048 = arith.addf %1045, %1047 : vector<64x16xf32>
    %cst_303 = arith.constant 0.000000e+00 : f32
    %1049 = vector.broadcast %cst_303 : f32 to vector<64x16xf32>
    %1050 = arith.maximumf %1048, %1049 : vector<64x16xf32>
    %c0_304 = arith.constant 0 : index
    %c80 = arith.constant 80 : index
    %1051 = vector.load %arg16[%c0_304, %c80] : memref<64x96xf32, #tpu.memory_space<vmem>>, vector<64x16xf32>
    tpu.vector_store %arg16[%c0_304, %c80], %1050 {strides = array<i32>} : memref<64x96xf32, #tpu.memory_space<vmem>>, vector<64x16xf32>,
    return
  }
  func.func @transform_0(%arg0: i32) -> (i32, i32) {
    %c0_i32 = arith.constant 0 : i32
    %c0_i32_0 = arith.constant 0 : i32
    %c0_i32_1 = arith.constant 0 : i32
    return %c0_i32, %c0_i32_0 : i32, i32
  }
  func.func @transform_1(%arg0: i32) -> (i32, i32) {
    %c0_i32 = arith.constant 0 : i32
    %c0_i32_0 = arith.constant 0 : i32
    %c0_i32_1 = arith.constant 0 : i32
    return %c0_i32, %c0_i32_0 : i32, i32
  }
  func.func @transform_2(%arg0: i32) -> (i32, i32) {
    %c0_i32 = arith.constant 0 : i32
    %c0_i32_0 = arith.constant 0 : i32
    return %arg0, %c0_i32 : i32, i32
  }
  func.func @transform_3(%arg0: i32) -> (i32, i32) {
    %c0_i32 = arith.constant 0 : i32
    %c0_i32_0 = arith.constant 0 : i32
    %c0_i32_1 = arith.constant 0 : i32
    return %c0_i32, %c0_i32_0 : i32, i32
  }
  func.func @transform_4(%arg0: i32) -> (i32, i32) {
    %c0_i32 = arith.constant 0 : i32
    %c0_i32_0 = arith.constant 0 : i32
    %c0_i32_1 = arith.constant 0 : i32
    return %c0_i32, %c0_i32_0 : i32, i32
  }
  func.func @transform_5(%arg0: i32) -> (i32, i32) {
    %c0_i32 = arith.constant 0 : i32
    %c0_i32_0 = arith.constant 0 : i32
    %c0_i32_1 = arith.constant 0 : i32
    return %c0_i32, %c0_i32_0 : i32, i32
  }
  func.func @transform_6(%arg0: i32) -> (i32, i32) {
    %c0_i32 = arith.constant 0 : i32
    %c0_i32_0 = arith.constant 0 : i32
    %c0_i32_1 = arith.constant 0 : i32
    return %c0_i32, %c0_i32_0 : i32, i32
  }
  func.func @transform_7(%arg0: i32) -> (i32, i32) {
    %c0_i32 = arith.constant 0 : i32
    %c0_i32_0 = arith.constant 0 : i32
    %c0_i32_1 = arith.constant 0 : i32
    return %c0_i32, %c0_i32_0 : i32, i32
  }
  func.func @transform_8(%arg0: i32) -> (i32, i32) {
    %c0_i32 = arith.constant 0 : i32
    %c0_i32_0 = arith.constant 0 : i32
    %c0_i32_1 = arith.constant 0 : i32
    return %c0_i32, %c0_i32_0 : i32, i32
  }
  func.func @transform_9(%arg0: i32) -> (i32, i32) {
    %c0_i32 = arith.constant 0 : i32
    %c0_i32_0 = arith.constant 0 : i32
    %c0_i32_1 = arith.constant 0 : i32
    return %c0_i32, %c0_i32_0 : i32, i32
  }
  func.func @transform_10(%arg0: i32) -> (i32, i32) {
    %c0_i32 = arith.constant 0 : i32
    %c0_i32_0 = arith.constant 0 : i32
    %c0_i32_1 = arith.constant 0 : i32
    return %c0_i32, %c0_i32_0 : i32, i32
  }
  func.func @transform_11(%arg0: i32) -> (i32, i32) {
    %c0_i32 = arith.constant 0 : i32
    %c0_i32_0 = arith.constant 0 : i32
    %c0_i32_1 = arith.constant 0 : i32
    return %c0_i32, %c0_i32_0 : i32, i32
  }
  func.func @transform_12(%arg0: i32) -> (i32, i32) {
    %c0_i32 = arith.constant 0 : i32
    %c0_i32_0 = arith.constant 0 : i32
    %c0_i32_1 = arith.constant 0 : i32
    return %c0_i32, %c0_i32_0 : i32, i32
  }
  func.func @transform_13(%arg0: i32) -> (i32, i32) {
    %c0_i32 = arith.constant 0 : i32
    %c0_i32_0 = arith.constant 0 : i32
    %c0_i32_1 = arith.constant 0 : i32
    return %c0_i32, %c0_i32_0 : i32, i32
  }
  func.func @transform_14(%arg0: i32) -> (i32, i32) {
    %c0_i32 = arith.constant 0 : i32
    %c0_i32_0 = arith.constant 0 : i32
    return %arg0, %c0_i32 : i32, i32
  }
  func.func @transform_15(%arg0: i32) -> (i32, i32) {
    %c0_i32 = arith.constant 0 : i32
    %c0_i32_0 = arith.constant 0 : i32
    return %arg0, %c0_i32 : i32, i32
  }
}

</mosaic_0001>

<llo_original>
// kernel: tpu_custom_call.1
$region0: #{tpu_custom_call.1}
  #allocation0 [shape = 'u32[]', space=smem, size = 0x4, offset = 0x4, fixed_abs, tag = 'smem constant byte address 0x4 - core index']
  #allocation1 [shape = 'u32[72,128]{1,0:T(1,128)}', space=vmem, size = 0x9000, scoped, tag = 'internal scratch']
  %s0 = inlined_call_operand.vmem [shape: f32[5,16], index: 0, kind: input, shape index: {}]
  %s1 = inlined_call_operand.vmem [shape: f32[64,23], index: 1, kind: input, shape index: {}]
  %s2 = inlined_call_operand.vmem [shape: f32[128,27], index: 2, kind: input, shape index: {}]
  %s3 = inlined_call_operand.vmem [shape: f32[23,16], index: 3, kind: input, shape index: {}]
  %s4 = inlined_call_operand.vmem [shape: f32[1,16], index: 4, kind: input, shape index: {}]
  %s5 = inlined_call_operand.vmem [shape: f32[27,16], index: 5, kind: input, shape index: {}]
  %s6 = inlined_call_operand.vmem [shape: f32[1,16], index: 6, kind: input, shape index: {}]
  %s7 = inlined_call_operand.vmem [shape: f32[16,80], index: 7, kind: input, shape index: {}]
  %s8 = inlined_call_operand.vmem [shape: f32[1,80], index: 8, kind: input, shape index: {}]
  %s9 = inlined_call_operand.vmem [shape: f32[16,80], index: 9, kind: input, shape index: {}]
  %s10 = inlined_call_operand.vmem [shape: f32[1,80], index: 10, kind: input, shape index: {}]
  %s11 = inlined_call_operand.vmem [shape: f32[80,5], index: 11, kind: input, shape index: {}]
  %s12 = inlined_call_operand.vmem [shape: f32[5,80], index: 12, kind: input, shape index: {}]
  %s13 = inlined_call_operand.vmem [shape: f32[1,80], index: 13, kind: input, shape index: {}]
  %s14 = inlined_call_operand.vmem [shape: bf16[128,64], index: 14, kind: input, shape index: {}]
  %s15 = inlined_call_operand.vmem [shape: f32[128,96], index: 15, kind: output, shape index: {}]
  %s16 = sld [smem:[#allocation0]]
  $region97: #{tpu_custom_call.1} parent=0
    _
  %s18 = ssub.s32 1, %s16
  %s19 = scalar_select 0, %s18, %s16
  $region1: #{tpu_custom_call.1} parent=0
    #allocation2 [shape = 'u8[4096]{0}', space=smem, size = 0x1000, scoped, tag = 'input window, operand 0, single buffered']
    #allocation3 [shape = 's32[2]{0}', space=sflag, size = 0x8, scoped, tag = 'scoped memory for tpu_custom_call.1']
    %20 = vsyncpa [#allocation3], 0
    loop: start=0, step=1, limit=4
    $region2: #{tpu_custom_call.1} parent=1 // loop_pre_header
      _
    $region3: #{tpu_custom_call.1} parent=1 // loop_header
      %s22 = sphi 0, %s26
      %p23 = scmp.ge.s32.totalorder %s22, 4
      %s30 = sphi 0, %s30
      %s32 = sphi 0, %s30
      %s33 = sphi 0, %s32
      %s47 = sphi 0, %s33
      %s51 = sphi 0, %s51
      %s53 = sphi 0, %s51
      %s54 = sphi 0, %s53
      %s68 = sphi 0, %s54
      %s74 = sphi 0, %s76
      %s77 = sphi 0, %s74
      %s78 = sphi 0, %s77
      %s94 = sphi 0, %s78
      %s98 = sphi 0, %s98
      %s100 = sphi 0, %s98
      %s101 = sphi 0, %s100
      %s115 = sphi 0, %s101
      %s119 = sphi 0, %s119
      %s121 = sphi 0, %s119
      %s122 = sphi 0, %s121
      %s136 = sphi 0, %s122
      %s140 = sphi 0, %s140
      %s142 = sphi 0, %s140
      %s143 = sphi 0, %s142
      %s157 = sphi 0, %s143
      %s161 = sphi 0, %s161
      %s163 = sphi 0, %s161
      %s164 = sphi 0, %s163
      %s178 = sphi 0, %s164
      %s182 = sphi 0, %s182
      %s184 = sphi 0, %s182
      %s185 = sphi 0, %s184
      %s199 = sphi 0, %s185
      %s203 = sphi 0, %s203
      %s205 = sphi 0, %s203
      %s206 = sphi 0, %s205
      %s220 = sphi 0, %s206
      %s224 = sphi 0, %s224
      %s226 = sphi 0, %s224
      %s227 = sphi 0, %s226
      %s241 = sphi 0, %s227
      %s245 = sphi 0, %s245
      %s247 = sphi 0, %s245
      %s248 = sphi 0, %s247
      %s262 = sphi 0, %s248
      %s266 = sphi 0, %s266
      %s268 = sphi 0, %s266
      %s269 = sphi 0, %s268
      %s283 = sphi 0, %s269
      %s287 = sphi 0, %s287
      %s289 = sphi 0, %s287
      %s290 = sphi 0, %s289
      %s304 = sphi 0, %s290
      %s308 = sphi 0, %s308
      %s310 = sphi 0, %s308
      %s311 = sphi 0, %s310
      %s325 = sphi 0, %s311
      %s331 = sphi 0, %s333
      %s334 = sphi 0, %s331
      %s335 = sphi 0, %s334
      %s351 = sphi 0, %s335
      %s357 = sphi 0, %s359
      %s360 = sphi 0, %s357
      %s361 = sphi 0, %s360
      %s377 = sphi 0, %s361
    $region4: #{tpu_custom_call.1} parent=1 // loop_header_branch
      %25 = sbr.rel (%p23) target = $region8
    $region5: #{tpu_custom_call.1} parent=1 // loop_body
      %s27 = ssub.s32 %s22, 1
      %s28 = ssub.s32 %s22, 2
      %s29 = sadd.s32 %s22, 1
      %s31 = sadd.s32 %s30, 1
      %p34 = scmp.eq.s32.totalorder %s22, 1
      %p35 = scmp.ne.s32.totalorder %s30, %s32
      %p36 = scmp.eq.s32.totalorder %s22, 0
      %p37 = por %p35, %p36
      %p38 = scmp.ne.s32.totalorder %s30, %s32
      %p39 = scmp.eq.s32.totalorder %s27, 1
      %p40 = por %p38, %p39
      %p41 = scmp.ne.s32.totalorder %s32, %s33
      %p42 = scmp.eq.s32.totalorder %s27, 0
      %p43 = por %p41, %p42
      %p44 = scmp.ne.s32.totalorder %s32, %s33
      %p45 = scmp.eq.s32.totalorder %s28, 1
      %p46 = por %p44, %p45
      %p48 = scmp.ne.s32.totalorder %s33, %s47
      %p49 = scmp.eq.s32.totalorder %s28, 0
      %p50 = por %p48, %p49
      %s52 = sadd.s32 %s51, 1
      %p55 = scmp.eq.s32.totalorder %s22, 1
      %p56 = scmp.ne.s32.totalorder %s51, %s53
      %p57 = scmp.eq.s32.totalorder %s22, 0
      %p58 = por %p56, %p57
      %p59 = scmp.ne.s32.totalorder %s51, %s53
      %p60 = scmp.eq.s32.totalorder %s27, 1
      %p61 = por %p59, %p60
      %p62 = scmp.ne.s32.totalorder %s53, %s54
      %p63 = scmp.eq.s32.totalorder %s27, 0
      %p64 = por %p62, %p63
      %p65 = scmp.ne.s32.totalorder %s53, %s54
      %p66 = scmp.eq.s32.totalorder %s28, 1
      %p67 = por %p65, %p66
      %p69 = scmp.ne.s32.totalorder %s54, %s68
      %p70 = scmp.eq.s32.totalorder %s28, 0
      %p71 = por %p69, %p70
      %s72 = ssub.s32 %s22, %s29
      %p73 = scmp.eq.s32.totalorder %s72, 0
      %s75 = sadd.s32 %s74, 1
      %s76 = scalar_select %p73, %s74, %s75
      %p79 = pneg %p73
      %p80 = scmp.eq.s32.totalorder %s22, 1
      %p81 = por %p79, %p80
      %p82 = scmp.ne.s32.totalorder %s74, %s77
      %p83 = scmp.eq.s32.totalorder %s22, 0
      %p84 = por %p82, %p83
      %p85 = scmp.ne.s32.totalorder %s74, %s77
      %p86 = scmp.eq.s32.totalorder %s27, 1
      %p87 = por %p85, %p86
      %p88 = scmp.ne.s32.totalorder %s77, %s78
      %p89 = scmp.eq.s32.totalorder %s27, 0
      %p90 = por %p88, %p89
      %p91 = scmp.ne.s32.totalorder %s77, %s78
      %p92 = scmp.eq.s32.totalorder %s28, 1
      %p93 = por %p91, %p92
      %p95 = scmp.ne.s32.totalorder %s78, %s94
      %p96 = scmp.eq.s32.totalorder %s28, 0
      %p97 = por %p95, %p96
      %s99 = sadd.s32 %s98, 1
      %p102 = scmp.eq.s32.totalorder %s22, 1
      %p103 = scmp.ne.s32.totalorder %s98, %s100
      %p104 = scmp.eq.s32.totalorder %s22, 0
      %p105 = por %p103, %p104
      %p106 = scmp.ne.s32.totalorder %s98, %s100
      %p107 = scmp.eq.s32.totalorder %s27, 1
      %p108 = por %p106, %p107
      %p109 = scmp.ne.s32.totalorder %s100, %s101
      %p110 = scmp.eq.s32.totalorder %s27, 0
      %p111 = por %p109, %p110
      %p112 = scmp.ne.s32.totalorder %s100, %s101
      %p113 = scmp.eq.s32.totalorder %s28, 1
      %p114 = por %p112, %p113
      %p116 = scmp.ne.s32.totalorder %s101, %s115
      %p117 = scmp.eq.s32.totalorder %s28, 0
      %p118 = por %p116, %p117
      %s120 = sadd.s32 %s119, 1
      %p123 = scmp.eq.s32.totalorder %s22, 1
      %p124 = scmp.ne.s32.totalorder %s119, %s121
      %p125 = scmp.eq.s32.totalorder %s22, 0
      %p126 = por %p124, %p125
      %p127 = scmp.ne.s32.totalorder %s119, %s121
      %p128 = scmp.eq.s32.totalorder %s27, 1
      %p129 = por %p127, %p128
      %p130 = scmp.ne.s32.totalorder %s121, %s122
      %p131 = scmp.eq.s32.totalorder %s27, 0
      %p132 = por %p130, %p131
      %p133 = scmp.ne.s32.totalorder %s121, %s122
      %p134 = scmp.eq.s32.totalorder %s28, 1
      %p135 = por %p133, %p134
      %p137 = scmp.ne.s32.totalorder %s122, %s136
      %p138 = scmp.eq.s32.totalorder %s28, 0
      %p139 = por %p137, %p138
      %s141 = sadd.s32 %s140, 1
      %p144 = scmp.eq.s32.totalorder %s22, 1
      %p145 = scmp.ne.s32.totalorder %s140, %s142
      %p146 = scmp.eq.s32.totalorder %s22, 0
      %p147 = por %p145, %p146
      %p148 = scmp.ne.s32.totalorder %s140, %s142
      %p149 = scmp.eq.s32.totalorder %s27, 1
      %p150 = por %p148, %p149
      %p151 = scmp.ne.s32.totalorder %s142, %s143
      %p152 = scmp.eq.s32.totalorder %s27, 0
      %p153 = por %p151, %p152
      %p154 = scmp.ne.s32.totalorder %s142, %s143
      %p155 = scmp.eq.s32.totalorder %s28, 1
      %p156 = por %p154, %p155
      %p158 = scmp.ne.s32.totalorder %s143, %s157
      %p159 = scmp.eq.s32.totalorder %s28, 0
      %p160 = por %p158, %p159
      %s162 = sadd.s32 %s161, 1
      %p165 = scmp.eq.s32.totalorder %s22, 1
      %p166 = scmp.ne.s32.totalorder %s161, %s163
      %p167 = scmp.eq.s32.totalorder %s22, 0
      %p168 = por %p166, %p167
      %p169 = scmp.ne.s32.totalorder %s161, %s163
      %p170 = scmp.eq.s32.totalorder %s27, 1
      %p171 = por %p169, %p170
      %p172 = scmp.ne.s32.totalorder %s163, %s164
      %p173 = scmp.eq.s32.totalorder %s27, 0
      %p174 = por %p172, %p173
      %p175 = scmp.ne.s32.totalorder %s163, %s164
      %p176 = scmp.eq.s32.totalorder %s28, 1
      %p177 = por %p175, %p176
      %p179 = scmp.ne.s32.totalorder %s164, %s178
      %p180 = scmp.eq.s32.totalorder %s28, 0
      %p181 = por %p179, %p180
      %s183 = sadd.s32 %s182, 1
      %p186 = scmp.eq.s32.totalorder %s22, 1
      %p187 = scmp.ne.s32.totalorder %s182, %s184
      %p188 = scmp.eq.s32.totalorder %s22, 0
      %p189 = por %p187, %p188
      %p190 = scmp.ne.s32.totalorder %s182, %s184
      %p191 = scmp.eq.s32.totalorder %s27, 1
      %p192 = por %p190, %p191
      %p193 = scmp.ne.s32.totalorder %s184, %s185
      %p194 = scmp.eq.s32.totalorder %s27, 0
      %p195 = por %p193, %p194
      %p196 = scmp.ne.s32.totalorder %s184, %s185
      %p197 = scmp.eq.s32.totalorder %s28, 1
      %p198 = por %p196, %p197
      %p200 = scmp.ne.s32.totalorder %s185, %s199
      %p201 = scmp.eq.s32.totalorder %s28, 0
      %p202 = por %p200, %p201
      %s204 = sadd.s32 %s203, 1
      %p207 = scmp.eq.s32.totalorder %s22, 1
      %p208 = scmp.ne.s32.totalorder %s203, %s205
      %p209 = scmp.eq.s32.totalorder %s22, 0
      %p210 = por %p208, %p209
      %p211 = scmp.ne.s32.totalorder %s203, %s205
      %p212 = scmp.eq.s32.totalorder %s27, 1
      %p213 = por %p211, %p212
      %p214 = scmp.ne.s32.totalorder %s205, %s206
      %p215 = scmp.eq.s32.totalorder %s27, 0
      %p216 = por %p214, %p215
      %p217 = scmp.ne.s32.totalorder %s205, %s206
      %p218 = scmp.eq.s32.totalorder %s28, 1
      %p219 = por %p217, %p218
      %p221 = scmp.ne.s32.totalorder %s206, %s220
      %p222 = scmp.eq.s32.totalorder %s28, 0
      %p223 = por %p221, %p222
      %s225 = sadd.s32 %s224, 1
      %p228 = scmp.eq.s32.totalorder %s22, 1
      %p229 = scmp.ne.s32.totalorder %s224, %s226
      %p230 = scmp.eq.s32.totalorder %s22, 0
      %p231 = por %p229, %p230
      %p232 = scmp.ne.s32.totalorder %s224, %s226
      %p233 = scmp.eq.s32.totalorder %s27, 1
      %p234 = por %p232, %p233
      %p235 = scmp.ne.s32.totalorder %s226, %s227
      %p236 = scmp.eq.s32.totalorder %s27, 0
      %p237 = por %p235, %p236
      %p238 = scmp.ne.s32.totalorder %s226, %s227
      %p239 = scmp.eq.s32.totalorder %s28, 1
      %p240 = por %p238, %p239
      %p242 = scmp.ne.s32.totalorder %s227, %s241
      %p243 = scmp.eq.s32.totalorder %s28, 0
      %p244 = por %p242, %p243
      %s246 = sadd.s32 %s245, 1
      %p249 = scmp.eq.s32.totalorder %s22, 1
      %p250 = scmp.ne.s32.totalorder %s245, %s247
      %p251 = scmp.eq.s32.totalorder %s22, 0
      %p252 = por %p250, %p251
      %p253 = scmp.ne.s32.totalorder %s245, %s247
      %p254 = scmp.eq.s32.totalorder %s27, 1
      %p255 = por %p253, %p254
      %p256 = scmp.ne.s32.totalorder %s247, %s248
      %p257 = scmp.eq.s32.totalorder %s27, 0
      %p258 = por %p256, %p257
      %p259 = scmp.ne.s32.totalorder %s247, %s248
      %p260 = scmp.eq.s32.totalorder %s28, 1
      %p261 = por %p259, %p260
      %p263 = scmp.ne.s32.totalorder %s248, %s262
      %p264 = scmp.eq.s32.totalorder %s28, 0
      %p265 = por %p263, %p264
      %s267 = sadd.s32 %s266, 1
      %p270 = scmp.eq.s32.totalorder %s22, 1
      %p271 = scmp.ne.s32.totalorder %s266, %s268
      %p272 = scmp.eq.s32.totalorder %s22, 0
      %p273 = por %p271, %p272
      %p274 = scmp.ne.s32.totalorder %s266, %s268
      %p275 = scmp.eq.s32.totalorder %s27, 1
      %p276 = por %p274, %p275
      %p277 = scmp.ne.s32.totalorder %s268, %s269
      %p278 = scmp.eq.s32.totalorder %s27, 0
      %p279 = por %p277, %p278
      %p280 = scmp.ne.s32.totalorder %s268, %s269
      %p281 = scmp.eq.s32.totalorder %s28, 1
      %p282 = por %p280, %p281
      %p284 = scmp.ne.s32.totalorder %s269, %s283
      %p285 = scmp.eq.s32.totalorder %s28, 0
      %p286 = por %p284, %p285
      %s288 = sadd.s32 %s287, 1
      %p291 = scmp.eq.s32.totalorder %s22, 1
      %p292 = scmp.ne.s32.totalorder %s287, %s289
      %p293 = scmp.eq.s32.totalorder %s22, 0
      %p294 = por %p292, %p293
      %p295 = scmp.ne.s32.totalorder %s287, %s289
      %p296 = scmp.eq.s32.totalorder %s27, 1
      %p297 = por %p295, %p296
      %p298 = scmp.ne.s32.totalorder %s289, %s290
      %p299 = scmp.eq.s32.totalorder %s27, 0
      %p300 = por %p298, %p299
      %p301 = scmp.ne.s32.totalorder %s289, %s290
      %p302 = scmp.eq.s32.totalorder %s28, 1
      %p303 = por %p301, %p302
      %p305 = scmp.ne.s32.totalorder %s290, %s304
      %p306 = scmp.eq.s32.totalorder %s28, 0
      %p307 = por %p305, %p306
      %s309 = sadd.s32 %s308, 1
      %p312 = scmp.eq.s32.totalorder %s22, 1
      %p313 = scmp.ne.s32.totalorder %s308, %s310
      %p314 = scmp.eq.s32.totalorder %s22, 0
      %p315 = por %p313, %p314
      %p316 = scmp.ne.s32.totalorder %s308, %s310
      %p317 = scmp.eq.s32.totalorder %s27, 1
      %p318 = por %p316, %p317
      %p319 = scmp.ne.s32.totalorder %s310, %s311
      %p320 = scmp.eq.s32.totalorder %s27, 0
      %p321 = por %p319, %p320
      %p322 = scmp.ne.s32.totalorder %s310, %s311
      %p323 = scmp.eq.s32.totalorder %s28, 1
      %p324 = por %p322, %p323
      %p326 = scmp.ne.s32.totalorder %s311, %s325
      %p327 = scmp.eq.s32.totalorder %s28, 0
      %p328 = por %p326, %p327
      %s329 = ssub.s32 %s22, %s29
      %p330 = scmp.eq.s32.totalorder %s329, 0
      %s332 = sadd.s32 %s331, 1
      %s333 = scalar_select %p330, %s331, %s332
      %p336 = pneg %p330
      %p337 = scmp.eq.s32.totalorder %s22, 1
      %p338 = por %p336, %p337
      %p339 = scmp.ne.s32.totalorder %s331, %s334
      %p340 = scmp.eq.s32.totalorder %s22, 0
      %p341 = por %p339, %p340
      %p342 = scmp.ne.s32.totalorder %s331, %s334
      %p343 = scmp.eq.s32.totalorder %s27, 1
      %p344 = por %p342, %p343
      %p345 = scmp.ne.s32.totalorder %s334, %s335
      %p346 = scmp.eq.s32.totalorder %s27, 0
      %p347 = por %p345, %p346
      %p348 = scmp.ne.s32.totalorder %s334, %s335
      %p349 = scmp.eq.s32.totalorder %s28, 1
      %p350 = por %p348, %p349
      %p352 = scmp.ne.s32.totalorder %s335, %s351
      %p353 = scmp.eq.s32.totalorder %s28, 0
      %p354 = por %p352, %p353
      %s355 = ssub.s32 %s22, %s29
      %p356 = scmp.eq.s32.totalorder %s355, 0
      %s358 = sadd.s32 %s357, 1
      %s359 = scalar_select %p356, %s357, %s358
      %p362 = pneg %p356
      %p363 = scmp.eq.s32.totalorder %s22, 1
      %p364 = por %p362, %p363
      %p365 = scmp.ne.s32.totalorder %s357, %s360
      %p366 = scmp.eq.s32.totalorder %s22, 0
      %p367 = por %p365, %p366
      %p368 = scmp.ne.s32.totalorder %s357, %s360
      %p369 = scmp.eq.s32.totalorder %s27, 1
      %p370 = por %p368, %p369
      %p371 = scmp.ne.s32.totalorder %s360, %s361
      %p372 = scmp.eq.s32.totalorder %s27, 0
      %p373 = por %p371, %p372
      %p374 = scmp.ne.s32.totalorder %s360, %s361
      %p375 = scmp.eq.s32.totalorder %s28, 1
      %p376 = por %p374, %p375
      %p378 = scmp.ne.s32.totalorder %s361, %s377
      %p379 = scmp.eq.s32.totalorder %s28, 0
      %p380 = por %p378, %p379
      %p381 = scmp.le.s32.totalorder 1, %s22
      %p382 = scmp.lt.s32.totalorder %s22, 3
      %p383 = pnand %p381, %p382
      %p384 = pneg %p383
      // Predicated region
      $region9: #{tpu_custom_call.1} parent=5 // pred_check
        _
      $region10: #{tpu_custom_call.1} parent=5 // pred_check_branch
        %386 = sbr.rel (%p383) target = $region12
      $region11: #{tpu_custom_call.1} parent=5 // pred_region
        %s387 = ssub.s32 %s22, 1
        // Predicated region
        $region13: #{tpu_custom_call.1} parent=11 // pred_check
          %p388 = pneg %p43
        $region14: #{tpu_custom_call.1} parent=11 // pred_check_branch
          %390 = sbr.rel (%p388) target = $region16
        $region15: #{tpu_custom_call.1} parent=11 // pred_region
          %392 = vsyncadd [#allocation3], 0
          %s394 = sshll.u32 %s0, 4
          %s395 = int_to_ptr.vmem [resolvable:$true] %s394
          %397 = dma.vmem_to_smem %s395, 128, [#allocation2], [#allocation3]
        $region16: #{tpu_custom_call.1} parent=11 // pred_fallthru
          _
        // Predicated region
        $region17: #{tpu_custom_call.1} parent=11 // pred_check
          %p398 = pneg %p64
        $region18: #{tpu_custom_call.1} parent=11 // pred_check_branch
          %400 = sbr.rel (%p398) target = $region20
        $region19: #{tpu_custom_call.1} parent=11 // pred_region
          _
        $region20: #{tpu_custom_call.1} parent=11 // pred_fallthru
          _
        // Predicated region
        $region21: #{tpu_custom_call.1} parent=11 // pred_check
          %p401 = pneg %p111
        $region22: #{tpu_custom_call.1} parent=11 // pred_check_branch
          %403 = sbr.rel (%p401) target = $region24
        $region23: #{tpu_custom_call.1} parent=11 // pred_region
          _
        $region24: #{tpu_custom_call.1} parent=11 // pred_fallthru
          _
        // Predicated region
        $region25: #{tpu_custom_call.1} parent=11 // pred_check
          %p404 = pneg %p132
        $region26: #{tpu_custom_call.1} parent=11 // pred_check_branch
          %406 = sbr.rel (%p404) target = $region28
        $region27: #{tpu_custom_call.1} parent=11 // pred_region
          _
        $region28: #{tpu_custom_call.1} parent=11 // pred_fallthru
          _
        // Predicated region
        $region29: #{tpu_custom_call.1} parent=11 // pred_check
          %p407 = pneg %p153
        $region30: #{tpu_custom_call.1} parent=11 // pred_check_branch
          %409 = sbr.rel (%p407) target = $region32
        $region31: #{tpu_custom_call.1} parent=11 // pred_region
          _
        $region32: #{tpu_custom_call.1} parent=11 // pred_fallthru
          _
        // Predicated region
        $region33: #{tpu_custom_call.1} parent=11 // pred_check
          %p410 = pneg %p174
        $region34: #{tpu_custom_call.1} parent=11 // pred_check_branch
          %412 = sbr.rel (%p410) target = $region36
        $region35: #{tpu_custom_call.1} parent=11 // pred_region
          _
        $region36: #{tpu_custom_call.1} parent=11 // pred_fallthru
          _
        // Predicated region
        $region37: #{tpu_custom_call.1} parent=11 // pred_check
          %p413 = pneg %p195
        $region38: #{tpu_custom_call.1} parent=11 // pred_check_branch
          %415 = sbr.rel (%p413) target = $region40
        $region39: #{tpu_custom_call.1} parent=11 // pred_region
          _
        $region40: #{tpu_custom_call.1} parent=11 // pred_fallthru
          _
        // Predicated region
        $region41: #{tpu_custom_call.1} parent=11 // pred_check
          %p416 = pneg %p216
        $region42: #{tpu_custom_call.1} parent=11 // pred_check_branch
          %418 = sbr.rel (%p416) target = $region44
        $region43: #{tpu_custom_call.1} parent=11 // pred_region
          _
        $region44: #{tpu_custom_call.1} parent=11 // pred_fallthru
          _
        // Predicated region
        $region45: #{tpu_custom_call.1} parent=11 // pred_check
          %p419 = pneg %p237
        $region46: #{tpu_custom_call.1} parent=11 // pred_check_branch
          %421 = sbr.rel (%p419) target = $region48
        $region47: #{tpu_custom_call.1} parent=11 // pred_region
          _
        $region48: #{tpu_custom_call.1} parent=11 // pred_fallthru
          _
        // Predicated region
        $region49: #{tpu_custom_call.1} parent=11 // pred_check
          %p422 = pneg %p258
        $region50: #{tpu_custom_call.1} parent=11 // pred_check_branch
          %424 = sbr.rel (%p422) target = $region52
        $region51: #{tpu_custom_call.1} parent=11 // pred_region
          _
        $region52: #{tpu_custom_call.1} parent=11 // pred_fallthru
          _
        // Predicated region
        $region53: #{tpu_custom_call.1} parent=11 // pred_check
          %p425 = pneg %p279
        $region54: #{tpu_custom_call.1} parent=11 // pred_check_branch
          %427 = sbr.rel (%p425) target = $region56
        $region55: #{tpu_custom_call.1} parent=11 // pred_region
          _
        $region56: #{tpu_custom_call.1} parent=11 // pred_fallthru
          _
        // Predicated region
        $region57: #{tpu_custom_call.1} parent=11 // pred_check
          %p428 = pneg %p300
        $region58: #{tpu_custom_call.1} parent=11 // pred_check_branch
          %430 = sbr.rel (%p428) target = $region60
        $region59: #{tpu_custom_call.1} parent=11 // pred_region
          _
        $region60: #{tpu_custom_call.1} parent=11 // pred_fallthru
          _
        // Predicated region
        $region61: #{tpu_custom_call.1} parent=11 // pred_check
          %p431 = pneg %p321
        $region62: #{tpu_custom_call.1} parent=11 // pred_check_branch
          %433 = sbr.rel (%p431) target = $region64
        $region63: #{tpu_custom_call.1} parent=11 // pred_region
          _
        $region64: #{tpu_custom_call.1} parent=11 // pred_fallthru
          _
      $region12: #{tpu_custom_call.1} parent=5 // pred_fallthru
        _
      %p434 = scmp.lt.s32.totalorder %s22, 2
      // Predicated region
      $region65: #{tpu_custom_call.1} parent=5 // pred_check
        %p435 = pneg %p434
      $region66: #{tpu_custom_call.1} parent=5 // pred_check_branch
        %437 = sbr.rel (%p435) target = $region68
      $region67: #{tpu_custom_call.1} parent=5 // pred_region
        // Predicated region
        $region69: #{tpu_custom_call.1} parent=67 // pred_check
          %p438 = pneg %p84
        $region70: #{tpu_custom_call.1} parent=67 // pred_check_branch
          %440 = sbr.rel (%p438) target = $region72
        $region71: #{tpu_custom_call.1} parent=67 // pred_region
          %s441 = smul.u32 8, %s22
          %p442 = scmp.lt.s32.totalorder %s441, 15
          %s443 = scalar_select %p442, %s441, 15
          %s444 = smul.addr %s443, 8
          %s445 = scalar_lea.vmem %s2, %s444
          %s446 = smul.u32 8, %s22
        $region72: #{tpu_custom_call.1} parent=67 // pred_fallthru
          _
        // Predicated region
        $region73: #{tpu_custom_call.1} parent=67 // pred_check
          %p447 = pneg %p341
        $region74: #{tpu_custom_call.1} parent=67 // pred_check_branch
          %449 = sbr.rel (%p447) target = $region76
        $region75: #{tpu_custom_call.1} parent=67 // pred_region
          %s450 = smul.u32 8, %s22
          %p451 = scmp.lt.s32.totalorder %s450, 15
          %s452 = scalar_select %p451, %s450, 15
          %s453 = smul.addr %s452, 4
          %s454 = scalar_lea.vmem %s14, %s453
          %s455 = smul.u32 8, %s22
        $region76: #{tpu_custom_call.1} parent=67 // pred_fallthru
          _
      $region68: #{tpu_custom_call.1} parent=5 // pred_fallthru
        _
      %p456 = scmp.le.s32.totalorder 1, %s22
      %p457 = scmp.lt.s32.totalorder %s22, 3
      %p458 = pnand %p456, %p457
      %p459 = pneg %p458
      // Predicated region
      $region77: #{tpu_custom_call.1} parent=5 // pred_check
        _
      $region78: #{tpu_custom_call.1} parent=5 // pred_check_branch
        %461 = sbr.rel (%p458) target = $region80
      $region79: #{tpu_custom_call.1} parent=5 // pred_region
        %s462 = ssub.s32 %s22, 1
        // Predicated region
        $region81: #{tpu_custom_call.1} parent=79 // pred_check
          %p463 = pneg %p43
        $region82: #{tpu_custom_call.1} parent=79 // pred_check_branch
          %465 = sbr.rel (%p463) target = $region84
        $region83: #{tpu_custom_call.1} parent=79 // pred_region
          %467 = dma.done [#allocation3], 128
        $region84: #{tpu_custom_call.1} parent=79 // pred_fallthru
          _
        %468 = sfence
        %p469 = pneg %p43
        %p470 = pneg %p40
        %p471 = pneg %p64
        %p472 = pneg %p61
        %s473 = smul.u32 8, %s27
        %p474 = scmp.lt.s32.totalorder %s473, 15
        %s475 = scalar_select %p474, %s473, 15
        %s476 = smul.addr %s475, 8
        %s477 = scalar_lea.vmem %s2, %s476
        %p478 = pneg %p90
        %p479 = pneg %p87
        %p480 = pneg %p111
        %p481 = pneg %p108
        %p482 = pneg %p132
        %p483 = pneg %p129
        %p484 = pneg %p153
        %p485 = pneg %p150
        %p486 = pneg %p174
        %p487 = pneg %p171
        %p488 = pneg %p195
        %p489 = pneg %p192
        %p490 = pneg %p216
        %p491 = pneg %p213
        %p492 = pneg %p237
        %p493 = pneg %p234
        %p494 = pneg %p258
        %p495 = pneg %p255
        %p496 = pneg %p279
        %p497 = pneg %p276
        %p498 = pneg %p300
        %p499 = pneg %p297
        %p500 = pneg %p321
        %p501 = pneg %p318
        %s502 = smul.u32 8, %s27
        %p503 = scmp.lt.s32.totalorder %s502, 15
        %s504 = scalar_select %p503, %s502, 15
        %s505 = smul.addr %s504, 4
        %s506 = scalar_lea.vmem %s14, %s505
        %p507 = pneg %p347
        %p508 = pneg %p344
        %p509 = pneg %p373
        %p510 = pneg %p370
        %s511 = smul.u32 8, %s27
        %p512 = scmp.lt.s32.totalorder %s511, 15
        %s513 = scalar_select %p512, %s511, 15
        %s514 = smul.addr %s513, 8
        %s515 = scalar_lea.vmem %s15, %s514
        %s516 = smul.u32 8, %s27
        %p517 = scmp.lt.s32.totalorder %s516, 15
        %s518 = scalar_select %p517, %s516, 15
        %s519 = smul.addr %s518, 8
        %s520 = scalar_lea.vmem %s2, %s519
        %s521 = smul.u32 8, %s27
        %s522 = smul.u32 8, %s27
        %p523 = scmp.lt.s32.totalorder %s522, 15
        %s524 = scalar_select %p523, %s522, 15
        %s525 = smul.addr %s524, 4
        %s526 = scalar_lea.vmem %s14, %s525
        %s527 = smul.u32 8, %s27
        %s528 = smul.u32 8, %s27
        %p529 = scmp.lt.s32.totalorder %s528, 15
        %s530 = scalar_select %p529, %s528, 15
        %s531 = smul.addr %s530, 8
        %s532 = scalar_lea.vmem %s15, %s531
        %s533 = smul.u32 8, %s27
        %v534 = vld [vmem:[%s1] sm:$0xff]
        %v535 = vld [vmem:[%s1 + $0x8] sm:$0xff]
        %v536 = vld [vmem:[%s1 + $0x10] sm:$0xff]
        %v537 = vld [vmem:[%s1 + $0x18] sm:$0xff]
        %v538 = vld [vmem:[%s1 + $0x20] sm:$0xff]
        %v539 = vld [vmem:[%s1 + $0x28] sm:$0xff]
        %v540 = vld [vmem:[%s1 + $0x30] sm:$0xff]
        %v541 = vld [vmem:[%s1 + $0x38] sm:$0xff]
        %v542 = vld [vmem:[%s3] sm:$0xff]
        %v543 = vld [vmem:[%s3 + $0x8] sm:$0xff]
        %v544 = vld [vmem:[%s3 + $0x10] sm:$0x7f]
        %v545 = vld [vmem:[%s4] sm:$0x1]
        %v547 = vperm.slane %v545, 0
        %vm549 = vcmask 187392
        %v551 = vsel %vm549, %v534, 0
        %v554 = vsel %vm549, %v535, 0
        %v557 = vsel %vm549, %v536, 0
        %v560 = vsel %vm549, %v537, 0
        %v563 = vsel %vm549, %v538, 0
        %v566 = vsel %vm549, %v539, 0
        %v569 = vsel %vm549, %v540, 0
        %v572 = vsel %vm549, %v541, 0
        %vm574 = vcmask 1046528
        %v576 = vsel %vm574, %v544, 0
        %578 = vmatpush.msra.mxu0 0.0
        %579 = vmatpush.msra.mxu0 0.0
        %580 = vmatpush.msra.mxu0 0.0
        %581 = vmatpush.msra.mxu0 0.0
        %582 = vmatpush.msra.mxu0 0.0
        %583 = vmatpush.msra.mxu0 0.0
        %584 = vmatpush.msra.mxu0 0.0
        %585 = vmatpush.msra.mxu0 0.0
        %586 = vmatpush.msra.mxu0 0.0
        %587 = vmatpush.msra.mxu0 0.0
        %588 = vmatpush.msra.mxu0 0.0
        %589 = vmatpush.msra.mxu0 0.0
        %590 = vmatpush.msra.mxu0 0.0
        %591 = vmatpush.msra.mxu0 %v576
        %592 = vmatpush.msra.mxu0 %v543
        %593 = vmatpush.msra.mxu0 %v542
        %594 = vmatmul.f32.gmra.mxu0 %v551
        %v595 = vpop.f32.mrf.mxu0
        %v596 = vadd.f32 %v547, %v595
        %597 = vmatmul.f32.gmra.mxu0 %v554
        %v598 = vpop.f32.mrf.mxu0
        %v599 = vadd.f32 %v547, %v598
        %600 = vmatmul.f32.gmra.mxu0 %v557
        %v601 = vpop.f32.mrf.mxu0
        %v602 = vadd.f32 %v547, %v601
        %603 = vmatmul.f32.gmra.mxu0 %v560
        %v604 = vpop.f32.mrf.mxu0
        %v605 = vadd.f32 %v547, %v604
        %606 = vmatmul.f32.gmra.mxu0 %v563
        %v607 = vpop.f32.mrf.mxu0
        %v608 = vadd.f32 %v547, %v607
        %609 = vmatmul.f32.gmra.mxu0 %v566
        %v610 = vpop.f32.mrf.mxu0
        %v611 = vadd.f32 %v547, %v610
        %612 = vmatmul.f32.gmra.mxu0 %v569
        %v613 = vpop.f32.mrf.mxu0
        %v614 = vadd.f32 %v547, %v613
        %615 = vmatmul.f32.gmra.mxu0 %v572
        %v616 = vpop.f32.mrf.mxu0
        %v617 = vadd.f32 %v547, %v616
        %618 = vdwg.mxu0
        %v619 = vmax.f32 %v596, 0.0
        %v620 = vmax.f32 %v599, 0.0
        %v621 = vmax.f32 %v602, 0.0
        %v622 = vmax.f32 %v605, 0.0
        %v623 = vmax.f32 %v608, 0.0
        %v624 = vmax.f32 %v611, 0.0
        %v625 = vmax.f32 %v614, 0.0
        %v626 = vmax.f32 %v617, 0.0
        %v627 = vld [vmem:[%s520] sm:$0xff]
        %v628 = vld [vmem:[%s520 + $0x8] sm:$0xff]
        %v629 = vld [vmem:[%s520 + $0x10] sm:$0xff]
        %v630 = vld [vmem:[%s520 + $0x18] sm:$0xff]
        %v631 = vld [vmem:[%s520 + $0x20] sm:$0xff]
        %v632 = vld [vmem:[%s520 + $0x28] sm:$0xff]
        %v633 = vld [vmem:[%s520 + $0x30] sm:$0xff]
        %v634 = vld [vmem:[%s520 + $0x38] sm:$0xff]
        %v635 = vld [vmem:[%s5] sm:$0xff]
        %v636 = vld [vmem:[%s5 + $0x8] sm:$0xff]
        %v637 = vld [vmem:[%s5 + $0x10] sm:$0xff]
        %v638 = vld [vmem:[%s5 + $0x18] sm:$0x7]
        %v639 = vld [vmem:[%s6] sm:$0x1]
        %v641 = vperm.slane %v639, 0
        %vm643 = vcmask 220160
        %v645 = vsel %vm643, %v627, 0
        %v648 = vsel %vm643, %v628, 0
        %v651 = vsel %vm643, %v629, 0
        %v654 = vsel %vm643, %v630, 0
        %v657 = vsel %vm643, %v631, 0
        %v660 = vsel %vm643, %v632, 0
        %v663 = vsel %vm643, %v633, 0
        %v666 = vsel %vm643, %v634, 0
        %vm668 = vcmask 1042432
        %v670 = vsel %vm668, %v638, 0
        %672 = vmatpush.msra.mxu0 0.0
        %673 = vmatpush.msra.mxu0 0.0
        %674 = vmatpush.msra.mxu0 0.0
        %675 = vmatpush.msra.mxu0 0.0
        %676 = vmatpush.msra.mxu0 0.0
        %677 = vmatpush.msra.mxu0 0.0
        %678 = vmatpush.msra.mxu0 0.0
        %679 = vmatpush.msra.mxu0 0.0
        %680 = vmatpush.msra.mxu0 0.0
        %681 = vmatpush.msra.mxu0 0.0
        %682 = vmatpush.msra.mxu0 0.0
        %683 = vmatpush.msra.mxu0 0.0
        %684 = vmatpush.msra.mxu0 %v670
        %685 = vmatpush.msra.mxu0 %v637
        %686 = vmatpush.msra.mxu0 %v636
        %687 = vmatpush.msra.mxu0 %v635
        %688 = vmatmul.f32.gmra.mxu0 %v645
        %v689 = vpop.f32.mrf.mxu0
        %v690 = vadd.f32 %v641, %v689
        %691 = vmatmul.f32.gmra.mxu0 %v648
        %v692 = vpop.f32.mrf.mxu0
        %v693 = vadd.f32 %v641, %v692
        %694 = vmatmul.f32.gmra.mxu0 %v651
        %v695 = vpop.f32.mrf.mxu0
        %v696 = vadd.f32 %v641, %v695
        %697 = vmatmul.f32.gmra.mxu0 %v654
        %v698 = vpop.f32.mrf.mxu0
        %v699 = vadd.f32 %v641, %v698
        %700 = vmatmul.f32.gmra.mxu0 %v657
        %v701 = vpop.f32.mrf.mxu0
        %v702 = vadd.f32 %v641, %v701
        %703 = vmatmul.f32.gmra.mxu0 %v660
        %v704 = vpop.f32.mrf.mxu0
        %v705 = vadd.f32 %v641, %v704
        %706 = vmatmul.f32.gmra.mxu0 %v663
        %v707 = vpop.f32.mrf.mxu0
        %v708 = vadd.f32 %v641, %v707
        %709 = vmatmul.f32.gmra.mxu0 %v666
        %v710 = vpop.f32.mrf.mxu0
        %v711 = vadd.f32 %v641, %v710
        %712 = vdwg.mxu0
        %v713 = vmax.f32 %v690, 0.0
        %v714 = vmax.f32 %v693, 0.0
        %v715 = vmax.f32 %v696, 0.0
        %v716 = vmax.f32 %v699, 0.0
        %v717 = vmax.f32 %v702, 0.0
        %v718 = vmax.f32 %v705, 0.0
        %v719 = vmax.f32 %v708, 0.0
        %v720 = vmax.f32 %v711, 0.0
        %v721 = vld [vmem:[%s7] sm:$0xff]
        %v722 = vld [vmem:[%s7 + $0x8] sm:$0xff]
        %v723 = vld [vmem:[%s8] sm:$0x1]
        %v725 = vperm.slane %v723, 0
        %vm727 = vcmask 130048
        %v729 = vsel %vm727, %v619, 0
        %v732 = vsel %vm727, %v620, 0
        %v735 = vsel %vm727, %v621, 0
        %v738 = vsel %vm727, %v622, 0
        %v741 = vsel %vm727, %v623, 0
        %v744 = vsel %vm727, %v624, 0
        %v747 = vsel %vm727, %v625, 0
        %v750 = vsel %vm727, %v626, 0
        %752 = vmatpush.msra.mxu0 0.0
        %753 = vmatpush.msra.mxu0 0.0
        %754 = vmatpush.msra.mxu0 0.0
        %755 = vmatpush.msra.mxu0 0.0
        %756 = vmatpush.msra.mxu0 0.0
        %757 = vmatpush.msra.mxu0 0.0
        %758 = vmatpush.msra.mxu0 0.0
        %759 = vmatpush.msra.mxu0 0.0
        %760 = vmatpush.msra.mxu0 0.0
        %761 = vmatpush.msra.mxu0 0.0
        %762 = vmatpush.msra.mxu0 0.0
        %763 = vmatpush.msra.mxu0 0.0
        %764 = vmatpush.msra.mxu0 0.0
        %765 = vmatpush.msra.mxu0 0.0
        %766 = vmatpush.msra.mxu0 %v722
        %767 = vmatpush.msra.mxu0 %v721
        %768 = vmatmul.f32.gmra.mxu0 %v729
        %v769 = vpop.f32.mrf.mxu0
        %v770 = vadd.f32 %v725, %v769
        %771 = vmatmul.f32.gmra.mxu0 %v732
        %v772 = vpop.f32.mrf.mxu0
        %v773 = vadd.f32 %v725, %v772
        %774 = vmatmul.f32.gmra.mxu0 %v735
        %v775 = vpop.f32.mrf.mxu0
        %v776 = vadd.f32 %v725, %v775
        %777 = vmatmul.f32.gmra.mxu0 %v738
        %v778 = vpop.f32.mrf.mxu0
        %v779 = vadd.f32 %v725, %v778
        %780 = vmatmul.f32.gmra.mxu0 %v741
        %v781 = vpop.f32.mrf.mxu0
        %v782 = vadd.f32 %v725, %v781
        %783 = vmatmul.f32.gmra.mxu0 %v744
        %v784 = vpop.f32.mrf.mxu0
        %v785 = vadd.f32 %v725, %v784
        %786 = vmatmul.f32.gmra.mxu0 %v747
        %v787 = vpop.f32.mrf.mxu0
        %v788 = vadd.f32 %v725, %v787
        %789 = vmatmul.f32.gmra.mxu0 %v750
        %v790 = vpop.f32.mrf.mxu0
        %v791 = vadd.f32 %v725, %v790
        %792 = vdwg.mxu0
        %v793 = vld [vmem:[%s9] sm:$0xff]
        %v794 = vld [vmem:[%s9 + $0x8] sm:$0xff]
        %v795 = vld [vmem:[%s10] sm:$0x1]
        %v797 = vperm.slane %v795, 0
        %v800 = vsel %vm727, %v713, 0
        %v803 = vsel %vm727, %v714, 0
        %v806 = vsel %vm727, %v715, 0
        %v809 = vsel %vm727, %v716, 0
        %v812 = vsel %vm727, %v717, 0
        %v815 = vsel %vm727, %v718, 0
        %v818 = vsel %vm727, %v719, 0
        %v821 = vsel %vm727, %v720, 0
        %823 = vmatpush.msra.mxu0 0.0
        %824 = vmatpush.msra.mxu0 0.0
        %825 = vmatpush.msra.mxu0 0.0
        %826 = vmatpush.msra.mxu0 0.0
        %827 = vmatpush.msra.mxu0 0.0
        %828 = vmatpush.msra.mxu0 0.0
        %829 = vmatpush.msra.mxu0 0.0
        %830 = vmatpush.msra.mxu0 0.0
        %831 = vmatpush.msra.mxu0 0.0
        %832 = vmatpush.msra.mxu0 0.0
        %833 = vmatpush.msra.mxu0 0.0
        %834 = vmatpush.msra.mxu0 0.0
        %835 = vmatpush.msra.mxu0 0.0
        %836 = vmatpush.msra.mxu0 0.0
        %837 = vmatpush.msra.mxu0 %v794
        %838 = vmatpush.msra.mxu0 %v793
        %839 = vmatmul.f32.gmra.mxu0 %v800
        %v840 = vpop.f32.mrf.mxu0
        %v841 = vadd.f32 %v797, %v840
        %842 = vmatmul.f32.gmra.mxu0 %v803
        %v843 = vpop.f32.mrf.mxu0
        %v844 = vadd.f32 %v797, %v843
        %845 = vmatmul.f32.gmra.mxu0 %v806
        %v846 = vpop.f32.mrf.mxu0
        %v847 = vadd.f32 %v797, %v846
        %848 = vmatmul.f32.gmra.mxu0 %v809
        %v849 = vpop.f32.mrf.mxu0
        %v850 = vadd.f32 %v797, %v849
        %851 = vmatmul.f32.gmra.mxu0 %v812
        %v852 = vpop.f32.mrf.mxu0
        %v853 = vadd.f32 %v797, %v852
        %854 = vmatmul.f32.gmra.mxu0 %v815
        %v855 = vpop.f32.mrf.mxu0
        %v856 = vadd.f32 %v797, %v855
        %857 = vmatmul.f32.gmra.mxu0 %v818
        %v858 = vpop.f32.mrf.mxu0
        %v859 = vadd.f32 %v797, %v858
        %860 = vmatmul.f32.gmra.mxu0 %v821
        %v861 = vpop.f32.mrf.mxu0
        %v862 = vadd.f32 %v797, %v861
        %863 = vdwg.mxu0
        %864 = vxpose.xlu0.b32.start [1/16] %v770, 128
        %865 = vxpose.xlu0.b32.cont [2/16] %v773, 128
        %866 = vxpose.xlu0.b32.cont [3/16] %v776, 128
        %867 = vxpose.xlu0.b32.cont [4/16] %v779, 128
        %868 = vxpose.xlu0.b32.cont [5/16] %v782, 128
        %869 = vxpose.xlu0.b32.cont [6/16] %v785, 128
        %870 = vxpose.xlu0.b32.cont [7/16] %v788, 128
        %871 = vxpose.xlu0.b32.cont [8/16] %v791, 128
        %872 = vxpose.xlu0.b32.cont [9/16] 0.0, 128
        %873 = vxpose.xlu0.b32.cont [10/16] 0.0, 128
        %874 = vxpose.xlu0.b32.cont [11/16] 0.0, 128
        %875 = vxpose.xlu0.b32.cont [12/16] 0.0, 128
        %876 = vxpose.xlu0.b32.cont [13/16] 0.0, 128
        %877 = vxpose.xlu0.b32.cont [14/16] 0.0, 128
        %878 = vxpose.xlu0.b32.cont [15/16] 0.0, 128
        %879 = vxpose.xlu0.b32.end [16/16] 0.0, 128
        %v880 = vpop.trf.xlu0
        %v881 = vpop.trf.xlu0
        %v882 = vpop.trf.xlu0
        %v883 = vpop.trf.xlu0
        %v884 = vpop.trf.xlu0
        %v885 = vpop.trf.xlu0
        %v886 = vpop.trf.xlu0
        %v887 = vpop.trf.xlu0
        %v888 = vpop.trf.xlu0
        %v889 = vpop.trf.xlu0
        %v890 = vpop.trf.xlu0
        %v891 = vpop.trf.xlu0
        %v892 = vpop.trf.xlu0
        %v893 = vpop.trf.xlu0
        %v894 = vpop.trf.xlu0
        %v895 = vpop.trf.xlu0
        %v896 = vld [vmem:[%s11] sm:$0xff]
        %v897 = vld [vmem:[%s11 + $0x8] sm:$0xff]
        %v898 = vld [vmem:[%s11 + $0x10] sm:$0xff]
        %v899 = vld [vmem:[%s11 + $0x18] sm:$0xff]
        %v900 = vld [vmem:[%s11 + $0x20] sm:$0xff]
        %v901 = vld [vmem:[%s11 + $0x28] sm:$0xff]
        %v902 = vld [vmem:[%s11 + $0x30] sm:$0xff]
        %v903 = vld [vmem:[%s11 + $0x38] sm:$0xff]
        %v904 = vld [vmem:[%s11 + $0x40] sm:$0xff]
        %v905 = vld [vmem:[%s11 + $0x48] sm:$0xff]
        %vm906 = vcmask 654336
        %v908 = vsel %vm906, %v841, 0
        %v911 = vsel %vm906, %v844, 0
        %v914 = vsel %vm906, %v847, 0
        %v917 = vsel %vm906, %v850, 0
        %v920 = vsel %vm906, %v853, 0
        %v923 = vsel %vm906, %v856, 0
        %v926 = vsel %vm906, %v859, 0
        %v929 = vsel %vm906, %v862, 0
        %931 = vmatpush.msra.mxu0 0.0
        %932 = vmatpush.msra.mxu0 0.0
        %933 = vmatpush.msra.mxu0 0.0
        %934 = vmatpush.msra.mxu0 0.0
        %935 = vmatpush.msra.mxu0 0.0
        %936 = vmatpush.msra.mxu0 0.0
        %937 = vmatpush.msra.mxu0 %v905
        %938 = vmatpush.msra.mxu0 %v904
        %939 = vmatpush.msra.mxu0 %v903
        %940 = vmatpush.msra.mxu0 %v902
        %941 = vmatpush.msra.mxu0 %v901
        %942 = vmatpush.msra.mxu0 %v900
        %943 = vmatpush.msra.mxu0 %v899
        %944 = vmatpush.msra.mxu0 %v898
        %945 = vmatpush.msra.mxu0 %v897
        %946 = vmatpush.msra.mxu0 %v896
        %947 = vmatmul.f32.gmra.mxu0 %v908
        %v948 = vpop.f32.mrf.mxu0
        %v949 = vadd.f32 0.0, %v948
        %950 = vmatmul.f32.gmra.mxu0 %v911
        %v951 = vpop.f32.mrf.mxu0
        %v952 = vadd.f32 0.0, %v951
        %953 = vmatmul.f32.gmra.mxu0 %v914
        %v954 = vpop.f32.mrf.mxu0
        %v955 = vadd.f32 0.0, %v954
        %956 = vmatmul.f32.gmra.mxu0 %v917
        %v957 = vpop.f32.mrf.mxu0
        %v958 = vadd.f32 0.0, %v957
        %959 = vmatmul.f32.gmra.mxu0 %v920
        %v960 = vpop.f32.mrf.mxu0
        %v961 = vadd.f32 0.0, %v960
        %962 = vmatmul.f32.gmra.mxu0 %v923
        %v963 = vpop.f32.mrf.mxu0
        %v964 = vadd.f32 0.0, %v963
        %965 = vmatmul.f32.gmra.mxu0 %v926
        %v966 = vpop.f32.mrf.mxu0
        %v967 = vadd.f32 0.0, %v966
        %968 = vmatmul.f32.gmra.mxu0 %v929
        %v969 = vpop.f32.mrf.mxu0
        %v970 = vadd.f32 0.0, %v969
        %971 = vdwg.mxu0
        %v972 = vld [vmem:[%s12] sm:$0x1f]
        %v974 = vsel %vm906, %v972, 0
        %976 = vmatpush.msra.mxu0 0.0
        %977 = vmatpush.msra.mxu0 0.0
        %978 = vmatpush.msra.mxu0 0.0
        %979 = vmatpush.msra.mxu0 0.0
        %980 = vmatpush.msra.mxu0 0.0
        %981 = vmatpush.msra.mxu0 0.0
        %982 = vmatpush.msra.mxu0 %v889
        %983 = vmatpush.msra.mxu0 %v888
        %984 = vmatpush.msra.mxu0 %v887
        %985 = vmatpush.msra.mxu0 %v886
        %986 = vmatpush.msra.mxu0 %v885
        %987 = vmatpush.msra.mxu0 %v884
        %988 = vmatpush.msra.mxu0 %v883
        %989 = vmatpush.msra.mxu0 %v882
        %990 = vmatpush.msra.mxu0 %v881
        %991 = vmatpush.msra.mxu0 %v880
        %992 = vmatmul.f32.gmra.mxu0 %v974
        %v993 = vpop.f32.mrf.mxu0
        %v994 = vadd.f32 0.0, %v993
        %995 = vdwg.mxu0
        %v996 = vld [vmem:[%s526] sm:$0xf]
        %v997 = vld [vmem:[%s526 + $0x4] sm:$0xf]
        %v998 = vld [vmem:[%s526 + $0x8] sm:$0xf]
        %v999 = vld [vmem:[%s526 + $0xc] sm:$0xf]
        %v1000 = vld [vmem:[%s526 + $0x10] sm:$0xf]
        %v1001 = vld [vmem:[%s526 + $0x14] sm:$0xf]
        %v1002 = vld [vmem:[%s526 + $0x18] sm:$0xf]
        %v1003 = vld [vmem:[%s526 + $0x1c] sm:$0xf]
        %v1004 = vunpack.c.l.bf16 %v996
        %v1005 = vunpack.c.l.bf16 %v997
        %v1006 = vunpack.c.l.bf16 %v998
        %v1007 = vunpack.c.l.bf16 %v999
        %v1008 = vunpack.c.l.bf16 %v1000
        %v1009 = vunpack.c.l.bf16 %v1001
        %v1010 = vunpack.c.l.bf16 %v1002
        %v1011 = vunpack.c.l.bf16 %v1003
        %vm1012 = vcmp.gt.f32.partialorder %v1004, 0.0
        %vm1013 = vcmp.gt.f32.partialorder %v1005, 0.0
        %vm1014 = vcmp.gt.f32.partialorder %v1006, 0.0
        %vm1015 = vcmp.gt.f32.partialorder %v1007, 0.0
        %vm1016 = vcmp.gt.f32.partialorder %v1008, 0.0
        %vm1017 = vcmp.gt.f32.partialorder %v1009, 0.0
        %vm1018 = vcmp.gt.f32.partialorder %v1010, 0.0
        %vm1019 = vcmp.gt.f32.partialorder %v1011, 0.0
        %v1020 = vsel %vm1012, 1, 0
        %v1021 = vsel %vm1013, 1, 0
        %v1022 = vsel %vm1014, 1, 0
        %v1023 = vsel %vm1015, 1, 0
        %v1024 = vsel %vm1016, 1, 0
        %v1025 = vsel %vm1017, 1, 0
        %v1026 = vsel %vm1018, 1, 0
        %v1027 = vsel %vm1019, 1, 0
        %v1028 = vcvt.s32.f32 %v1020
        %v1029 = vcvt.s32.f32 %v1021
        %v1030 = vcvt.s32.f32 %v1022
        %v1031 = vcvt.s32.f32 %v1023
        %v1032 = vcvt.s32.f32 %v1024
        %v1033 = vcvt.s32.f32 %v1025
        %v1034 = vcvt.s32.f32 %v1026
        %v1035 = vcvt.s32.f32 %v1027
        %1036 = vst.msk [vmem:[%s532] sm:$0xff] %vm727, %v713
        %1037 = vst.msk [vmem:[%s532 + $0x8] sm:$0xff] %vm727, %v714
        %1038 = vst.msk [vmem:[%s532 + $0x10] sm:$0xff] %vm727, %v715
        %1039 = vst.msk [vmem:[%s532 + $0x18] sm:$0xff] %vm727, %v716
        %1040 = vst.msk [vmem:[%s532 + $0x20] sm:$0xff] %vm727, %v717
        %1041 = vst.msk [vmem:[%s532 + $0x28] sm:$0xff] %vm727, %v718
        %1042 = vst.msk [vmem:[%s532 + $0x30] sm:$0xff] %vm727, %v719
        %1043 = vst.msk [vmem:[%s532 + $0x38] sm:$0xff] %vm727, %v720
        %1045 = vset.pattern.permute.xlu0 0
        %1046 = vperm.xlu0 %1045, %v949
        %v1047 = vpop.permute.xlu0 %1046
        %1050 = vset.pattern.permute.xlu0 0
        %1051 = vperm.xlu0 %1050, %v952
        %v1052 = vpop.permute.xlu0 %1051
        %1055 = vset.pattern.permute.xlu0 0
        %1056 = vperm.xlu0 %1055, %v955
        %v1057 = vpop.permute.xlu0 %1056
        %1060 = vset.pattern.permute.xlu0 0
        %1061 = vperm.xlu0 %1060, %v958
        %v1062 = vpop.permute.xlu0 %1061
        %1065 = vset.pattern.permute.xlu0 0
        %1066 = vperm.xlu0 %1065, %v961
        %v1067 = vpop.permute.xlu0 %1066
        %1070 = vset.pattern.permute.xlu0 0
        %1071 = vperm.xlu0 %1070, %v964
        %v1072 = vpop.permute.xlu0 %1071
        %1075 = vset.pattern.permute.xlu0 0
        %1076 = vperm.xlu0 %1075, %v967
        %v1077 = vpop.permute.xlu0 %1076
        %1080 = vset.pattern.permute.xlu0 0
        %1081 = vperm.xlu0 %1080, %v970
        %v1082 = vpop.permute.xlu0 %1081
        %v1084 = vperm.slane %v994, 0
        %v1085 = vadd.f32 %v1047, %v1084
        %v1086 = vadd.f32 %v1052, %v1084
        %v1087 = vadd.f32 %v1057, %v1084
        %v1088 = vadd.f32 %v1062, %v1084
        %v1089 = vadd.f32 %v1067, %v1084
        %v1090 = vadd.f32 %v1072, %v1084
        %v1091 = vadd.f32 %v1077, %v1084
        %v1092 = vadd.f32 %v1082, %v1084
        %s1093 = sld [smem:[#allocation2]]
        %1094 = vset.pattern.permute.xlu0 0
        %1095 = vperm.xlu0 %1094, %v841
        %v1096 = vpop.permute.xlu0 %1095
        %1098 = vset.pattern.permute.xlu0 0
        %1099 = vperm.xlu0 %1098, %v844
        %v1100 = vpop.permute.xlu0 %1099
        %1102 = vset.pattern.permute.xlu0 0
        %1103 = vperm.xlu0 %1102, %v847
        %v1104 = vpop.permute.xlu0 %1103
        %1106 = vset.pattern.permute.xlu0 0
        %1107 = vperm.xlu0 %1106, %v850
        %v1108 = vpop.permute.xlu0 %1107
        %1110 = vset.pattern.permute.xlu0 0
        %1111 = vperm.xlu0 %1110, %v853
        %v1112 = vpop.permute.xlu0 %1111
        %1114 = vset.pattern.permute.xlu0 0
        %1115 = vperm.xlu0 %1114, %v856
        %v1116 = vpop.permute.xlu0 %1115
        %1118 = vset.pattern.permute.xlu0 0
        %1119 = vperm.xlu0 %1118, %v859
        %v1120 = vpop.permute.xlu0 %1119
        %1122 = vset.pattern.permute.xlu0 0
        %1123 = vperm.xlu0 %1122, %v862
        %v1124 = vpop.permute.xlu0 %1123
        %v1126 = vperm.slane %v880, 0
        %v1127 = vadd.f32 %v1096, %v1126
        %v1128 = vadd.f32 %v1100, %v1126
        %v1129 = vadd.f32 %v1104, %v1126
        %v1130 = vadd.f32 %v1108, %v1126
        %v1131 = vadd.f32 %v1112, %v1126
        %v1132 = vadd.f32 %v1116, %v1126
        %v1133 = vadd.f32 %v1120, %v1126
        %v1134 = vadd.f32 %v1124, %v1126
        %v1135 = vmax.f32 %v1127, 0.0
        %v1136 = vmax.f32 %v1128, 0.0
        %v1137 = vmax.f32 %v1129, 0.0
        %v1138 = vmax.f32 %v1130, 0.0
        %v1139 = vmax.f32 %v1131, 0.0
        %v1140 = vmax.f32 %v1132, 0.0
        %v1141 = vmax.f32 %v1133, 0.0
        %v1142 = vmax.f32 %v1134, 0.0
        %v1143 = vstv %s1093
        %v1144 = vmul.f32 %v1143, %v1135
        %v1145 = vmul.f32 %v1143, %v1136
        %v1146 = vmul.f32 %v1143, %v1137
        %v1147 = vmul.f32 %v1143, %v1138
        %v1148 = vmul.f32 %v1143, %v1139
        %v1149 = vmul.f32 %v1143, %v1140
        %v1150 = vmul.f32 %v1143, %v1141
        %v1151 = vmul.f32 %v1143, %v1142
        %v1152 = vadd.f32 %v1085, %v1144
        %v1153 = vadd.f32 %v1086, %v1145
        %v1154 = vadd.f32 %v1087, %v1146
        %v1155 = vadd.f32 %v1088, %v1147
        %v1156 = vadd.f32 %v1089, %v1148
        %v1157 = vadd.f32 %v1090, %v1149
        %v1158 = vadd.f32 %v1091, %v1150
        %v1159 = vadd.f32 %v1092, %v1151
        %s1160 = sld [smem:[#allocation2 + $0x1]]
        %1161 = vset.pattern.permute.xlu0 1
        %1162 = vperm.xlu0 %1161, %v841
        %v1163 = vpop.permute.xlu0 %1162
        %1165 = vset.pattern.permute.xlu0 1
        %1166 = vperm.xlu0 %1165, %v844
        %v1167 = vpop.permute.xlu0 %1166
        %1169 = vset.pattern.permute.xlu0 1
        %1170 = vperm.xlu0 %1169, %v847
        %v1171 = vpop.permute.xlu0 %1170
        %1173 = vset.pattern.permute.xlu0 1
        %1174 = vperm.xlu0 %1173, %v850
        %v1175 = vpop.permute.xlu0 %1174
        %1177 = vset.pattern.permute.xlu0 1
        %1178 = vperm.xlu0 %1177, %v853
        %v1179 = vpop.permute.xlu0 %1178
        %1181 = vset.pattern.permute.xlu0 1
        %1182 = vperm.xlu0 %1181, %v856
        %v1183 = vpop.permute.xlu0 %1182
        %1185 = vset.pattern.permute.xlu0 1
        %1186 = vperm.xlu0 %1185, %v859
        %v1187 = vpop.permute.xlu0 %1186
        %1189 = vset.pattern.permute.xlu0 1
        %1190 = vperm.xlu0 %1189, %v862
        %v1191 = vpop.permute.xlu0 %1190
        %v1193 = vperm.slane %v880, 1
        %v1194 = vadd.f32 %v1163, %v1193
        %v1195 = vadd.f32 %v1167, %v1193
        %v1196 = vadd.f32 %v1171, %v1193
        %v1197 = vadd.f32 %v1175, %v1193
        %v1198 = vadd.f32 %v1179, %v1193
        %v1199 = vadd.f32 %v1183, %v1193
        %v1200 = vadd.f32 %v1187, %v1193
        %v1201 = vadd.f32 %v1191, %v1193
        %v1202 = vmax.f32 %v1194, 0.0
        %v1203 = vmax.f32 %v1195, 0.0
        %v1204 = vmax.f32 %v1196, 0.0
        %v1205 = vmax.f32 %v1197, 0.0
        %v1206 = vmax.f32 %v1198, 0.0
        %v1207 = vmax.f32 %v1199, 0.0
        %v1208 = vmax.f32 %v1200, 0.0
        %v1209 = vmax.f32 %v1201, 0.0
        %v1210 = vstv %s1160
        %v1211 = vmul.f32 %v1210, %v1202
        %v1212 = vmul.f32 %v1210, %v1203
        %v1213 = vmul.f32 %v1210, %v1204
        %v1214 = vmul.f32 %v1210, %v1205
        %v1215 = vmul.f32 %v1210, %v1206
        %v1216 = vmul.f32 %v1210, %v1207
        %v1217 = vmul.f32 %v1210, %v1208
        %v1218 = vmul.f32 %v1210, %v1209
        %v1219 = vadd.f32 %v1152, %v1211
        %v1220 = vadd.f32 %v1153, %v1212
        %v1221 = vadd.f32 %v1154, %v1213
        %v1222 = vadd.f32 %v1155, %v1214
        %v1223 = vadd.f32 %v1156, %v1215
        %v1224 = vadd.f32 %v1157, %v1216
        %v1225 = vadd.f32 %v1158, %v1217
        %v1226 = vadd.f32 %v1159, %v1218
        %s1227 = sld [smem:[#allocation2 + $0x2]]
        %1228 = vset.pattern.permute.xlu0 2
        %1229 = vperm.xlu0 %1228, %v841
        %v1230 = vpop.permute.xlu0 %1229
        %1232 = vset.pattern.permute.xlu0 2
        %1233 = vperm.xlu0 %1232, %v844
        %v1234 = vpop.permute.xlu0 %1233
        %1236 = vset.pattern.permute.xlu0 2
        %1237 = vperm.xlu0 %1236, %v847
        %v1238 = vpop.permute.xlu0 %1237
        %1240 = vset.pattern.permute.xlu0 2
        %1241 = vperm.xlu0 %1240, %v850
        %v1242 = vpop.permute.xlu0 %1241
        %1244 = vset.pattern.permute.xlu0 2
        %1245 = vperm.xlu0 %1244, %v853
        %v1246 = vpop.permute.xlu0 %1245
        %1248 = vset.pattern.permute.xlu0 2
        %1249 = vperm.xlu0 %1248, %v856
        %v1250 = vpop.permute.xlu0 %1249
        %1252 = vset.pattern.permute.xlu0 2
        %1253 = vperm.xlu0 %1252, %v859
        %v1254 = vpop.permute.xlu0 %1253
        %1256 = vset.pattern.permute.xlu0 2
        %1257 = vperm.xlu0 %1256, %v862
        %v1258 = vpop.permute.xlu0 %1257
        %v1260 = vperm.slane %v880, 2
        %v1261 = vadd.f32 %v1230, %v1260
        %v1262 = vadd.f32 %v1234, %v1260
        %v1263 = vadd.f32 %v1238, %v1260
        %v1264 = vadd.f32 %v1242, %v1260
        %v1265 = vadd.f32 %v1246, %v1260
        %v1266 = vadd.f32 %v1250, %v1260
        %v1267 = vadd.f32 %v1254, %v1260
        %v1268 = vadd.f32 %v1258, %v1260
        %v1269 = vmax.f32 %v1261, 0.0
        %v1270 = vmax.f32 %v1262, 0.0
        %v1271 = vmax.f32 %v1263, 0.0
        %v1272 = vmax.f32 %v1264, 0.0
        %v1273 = vmax.f32 %v1265, 0.0
        %v1274 = vmax.f32 %v1266, 0.0
        %v1275 = vmax.f32 %v1267, 0.0
        %v1276 = vmax.f32 %v1268, 0.0
        %v1277 = vstv %s1227
        %v1278 = vmul.f32 %v1277, %v1269
        %v1279 = vmul.f32 %v1277, %v1270
        %v1280 = vmul.f32 %v1277, %v1271
        %v1281 = vmul.f32 %v1277, %v1272
        %v1282 = vmul.f32 %v1277, %v1273
        %v1283 = vmul.f32 %v1277, %v1274
        %v1284 = vmul.f32 %v1277, %v1275
        %v1285 = vmul.f32 %v1277, %v1276
        %v1286 = vadd.f32 %v1219, %v1278
        %v1287 = vadd.f32 %v1220, %v1279
        %v1288 = vadd.f32 %v1221, %v1280
        %v1289 = vadd.f32 %v1222, %v1281
        %v1290 = vadd.f32 %v1223, %v1282
        %v1291 = vadd.f32 %v1224, %v1283
        %v1292 = vadd.f32 %v1225, %v1284
        %v1293 = vadd.f32 %v1226, %v1285
        %s1294 = sld [smem:[#allocation2 + $0x3]]
        %1295 = vset.pattern.permute.xlu0 3
        %1296 = vperm.xlu0 %1295, %v841
        %v1297 = vpop.permute.xlu0 %1296
        %1299 = vset.pattern.permute.xlu0 3
        %1300 = vperm.xlu0 %1299, %v844
        %v1301 = vpop.permute.xlu0 %1300
        %1303 = vset.pattern.permute.xlu0 3
        %1304 = vperm.xlu0 %1303, %v847
        %v1305 = vpop.permute.xlu0 %1304
        %1307 = vset.pattern.permute.xlu0 3
        %1308 = vperm.xlu0 %1307, %v850
        %v1309 = vpop.permute.xlu0 %1308
        %1311 = vset.pattern.permute.xlu0 3
        %1312 = vperm.xlu0 %1311, %v853
        %v1313 = vpop.permute.xlu0 %1312
        %1315 = vset.pattern.permute.xlu0 3
        %1316 = vperm.xlu0 %1315, %v856
        %v1317 = vpop.permute.xlu0 %1316
        %1319 = vset.pattern.permute.xlu0 3
        %1320 = vperm.xlu0 %1319, %v859
        %v1321 = vpop.permute.xlu0 %1320
        %1323 = vset.pattern.permute.xlu0 3
        %1324 = vperm.xlu0 %1323, %v862
        %v1325 = vpop.permute.xlu0 %1324
        %v1327 = vperm.slane %v880, 3
        %v1328 = vadd.f32 %v1297, %v1327
        %v1329 = vadd.f32 %v1301, %v1327
        %v1330 = vadd.f32 %v1305, %v1327
        %v1331 = vadd.f32 %v1309, %v1327
        %v1332 = vadd.f32 %v1313, %v1327
        %v1333 = vadd.f32 %v1317, %v1327
        %v1334 = vadd.f32 %v1321, %v1327
        %v1335 = vadd.f32 %v1325, %v1327
        %v1336 = vmax.f32 %v1328, 0.0
        %v1337 = vmax.f32 %v1329, 0.0
        %v1338 = vmax.f32 %v1330, 0.0
        %v1339 = vmax.f32 %v1331, 0.0
        %v1340 = vmax.f32 %v1332, 0.0
        %v1341 = vmax.f32 %v1333, 0.0
        %v1342 = vmax.f32 %v1334, 0.0
        %v1343 = vmax.f32 %v1335, 0.0
        %v1344 = vstv %s1294
        %v1345 = vmul.f32 %v1344, %v1336
        %v1346 = vmul.f32 %v1344, %v1337
        %v1347 = vmul.f32 %v1344, %v1338
        %v1348 = vmul.f32 %v1344, %v1339
        %v1349 = vmul.f32 %v1344, %v1340
        %v1350 = vmul.f32 %v1344, %v1341
        %v1351 = vmul.f32 %v1344, %v1342
        %v1352 = vmul.f32 %v1344, %v1343
        %v1353 = vadd.f32 %v1286, %v1345
        %v1354 = vadd.f32 %v1287, %v1346
        %v1355 = vadd.f32 %v1288, %v1347
        %v1356 = vadd.f32 %v1289, %v1348
        %v1357 = vadd.f32 %v1290, %v1349
        %v1358 = vadd.f32 %v1291, %v1350
        %v1359 = vadd.f32 %v1292, %v1351
        %v1360 = vadd.f32 %v1293, %v1352
        %s1361 = sld [smem:[#allocation2 + $0x4]]
        %1362 = vset.pattern.permute.xlu0 4
        %1363 = vperm.xlu0 %1362, %v841
        %v1364 = vpop.permute.xlu0 %1363
        %1366 = vset.pattern.permute.xlu0 4
        %1367 = vperm.xlu0 %1366, %v844
        %v1368 = vpop.permute.xlu0 %1367
        %1370 = vset.pattern.permute.xlu0 4
        %1371 = vperm.xlu0 %1370, %v847
        %v1372 = vpop.permute.xlu0 %1371
        %1374 = vset.pattern.permute.xlu0 4
        %1375 = vperm.xlu0 %1374, %v850
        %v1376 = vpop.permute.xlu0 %1375
        %1378 = vset.pattern.permute.xlu0 4
        %1379 = vperm.xlu0 %1378, %v853
        %v1380 = vpop.permute.xlu0 %1379
        %1382 = vset.pattern.permute.xlu0 4
        %1383 = vperm.xlu0 %1382, %v856
        %v1384 = vpop.permute.xlu0 %1383
        %1386 = vset.pattern.permute.xlu0 4
        %1387 = vperm.xlu0 %1386, %v859
        %v1388 = vpop.permute.xlu0 %1387
        %1390 = vset.pattern.permute.xlu0 4
        %1391 = vperm.xlu0 %1390, %v862
        %v1392 = vpop.permute.xlu0 %1391
        %v1394 = vperm.slane %v880, 4
        %v1395 = vadd.f32 %v1364, %v1394
        %v1396 = vadd.f32 %v1368, %v1394
        %v1397 = vadd.f32 %v1372, %v1394
        %v1398 = vadd.f32 %v1376, %v1394
        %v1399 = vadd.f32 %v1380, %v1394
        %v1400 = vadd.f32 %v1384, %v1394
        %v1401 = vadd.f32 %v1388, %v1394
        %v1402 = vadd.f32 %v1392, %v1394
        %v1403 = vmax.f32 %v1395, 0.0
        %v1404 = vmax.f32 %v1396, 0.0
        %v1405 = vmax.f32 %v1397, 0.0
        %v1406 = vmax.f32 %v1398, 0.0
        %v1407 = vmax.f32 %v1399, 0.0
        %v1408 = vmax.f32 %v1400, 0.0
        %v1409 = vmax.f32 %v1401, 0.0
        %v1410 = vmax.f32 %v1402, 0.0
        %v1411 = vstv %s1361
        %v1412 = vmul.f32 %v1411, %v1403
        %v1413 = vmul.f32 %v1411, %v1404
        %v1414 = vmul.f32 %v1411, %v1405
        %v1415 = vmul.f32 %v1411, %v1406
        %v1416 = vmul.f32 %v1411, %v1407
        %v1417 = vmul.f32 %v1411, %v1408
        %v1418 = vmul.f32 %v1411, %v1409
        %v1419 = vmul.f32 %v1411, %v1410
        %v1420 = vadd.f32 %v1353, %v1412
        %v1421 = vadd.f32 %v1354, %v1413
        %v1422 = vadd.f32 %v1355, %v1414
        %v1423 = vadd.f32 %v1356, %v1415
        %v1424 = vadd.f32 %v1357, %v1416
        %v1425 = vadd.f32 %v1358, %v1417
        %v1426 = vadd.f32 %v1359, %v1418
        %v1427 = vadd.f32 %v1360, %v1419
        %s1428 = sld [smem:[#allocation2 + $0x5]]
        %1429 = vset.pattern.permute.xlu0 5
        %1430 = vperm.xlu0 %1429, %v841
        %v1431 = vpop.permute.xlu0 %1430
        %1433 = vset.pattern.permute.xlu0 5
        %1434 = vperm.xlu0 %1433, %v844
        %v1435 = vpop.permute.xlu0 %1434
        %1437 = vset.pattern.permute.xlu0 5
        %1438 = vperm.xlu0 %1437, %v847
        %v1439 = vpop.permute.xlu0 %1438
        %1441 = vset.pattern.permute.xlu0 5
        %1442 = vperm.xlu0 %1441, %v850
        %v1443 = vpop.permute.xlu0 %1442
        %1445 = vset.pattern.permute.xlu0 5
        %1446 = vperm.xlu0 %1445, %v853
        %v1447 = vpop.permute.xlu0 %1446
        %1449 = vset.pattern.permute.xlu0 5
        %1450 = vperm.xlu0 %1449, %v856
        %v1451 = vpop.permute.xlu0 %1450
        %1453 = vset.pattern.permute.xlu0 5
        %1454 = vperm.xlu0 %1453, %v859
        %v1455 = vpop.permute.xlu0 %1454
        %1457 = vset.pattern.permute.xlu0 5
        %1458 = vperm.xlu0 %1457, %v862
        %v1459 = vpop.permute.xlu0 %1458
        %v1461 = vperm.slane %v880, 5
        %v1462 = vadd.f32 %v1431, %v1461
        %v1463 = vadd.f32 %v1435, %v1461
        %v1464 = vadd.f32 %v1439, %v1461
        %v1465 = vadd.f32 %v1443, %v1461
        %v1466 = vadd.f32 %v1447, %v1461
        %v1467 = vadd.f32 %v1451, %v1461
        %v1468 = vadd.f32 %v1455, %v1461
        %v1469 = vadd.f32 %v1459, %v1461
        %v1470 = vmax.f32 %v1462, 0.0
        %v1471 = vmax.f32 %v1463, 0.0
        %v1472 = vmax.f32 %v1464, 0.0
        %v1473 = vmax.f32 %v1465, 0.0
        %v1474 = vmax.f32 %v1466, 0.0
        %v1475 = vmax.f32 %v1467, 0.0
        %v1476 = vmax.f32 %v1468, 0.0
        %v1477 = vmax.f32 %v1469, 0.0
        %v1478 = vstv %s1428
        %v1479 = vmul.f32 %v1478, %v1470
        %v1480 = vmul.f32 %v1478, %v1471
        %v1481 = vmul.f32 %v1478, %v1472
        %v1482 = vmul.f32 %v1478, %v1473
        %v1483 = vmul.f32 %v1478, %v1474
        %v1484 = vmul.f32 %v1478, %v1475
        %v1485 = vmul.f32 %v1478, %v1476
        %v1486 = vmul.f32 %v1478, %v1477
        %v1487 = vadd.f32 %v1420, %v1479
        %v1488 = vadd.f32 %v1421, %v1480
        %v1489 = vadd.f32 %v1422, %v1481
        %v1490 = vadd.f32 %v1423, %v1482
        %v1491 = vadd.f32 %v1424, %v1483
        %v1492 = vadd.f32 %v1425, %v1484
        %v1493 = vadd.f32 %v1426, %v1485
        %v1494 = vadd.f32 %v1427, %v1486
        %s1495 = sld [smem:[#allocation2 + $0x6]]
        %1496 = vset.pattern.permute.xlu0 6
        %1497 = vperm.xlu0 %1496, %v841
        %v1498 = vpop.permute.xlu0 %1497
        %1500 = vset.pattern.permute.xlu0 6
        %1501 = vperm.xlu0 %1500, %v844
        %v1502 = vpop.permute.xlu0 %1501
        %1504 = vset.pattern.permute.xlu0 6
        %1505 = vperm.xlu0 %1504, %v847
        %v1506 = vpop.permute.xlu0 %1505
        %1508 = vset.pattern.permute.xlu0 6
        %1509 = vperm.xlu0 %1508, %v850
        %v1510 = vpop.permute.xlu0 %1509
        %1512 = vset.pattern.permute.xlu0 6
        %1513 = vperm.xlu0 %1512, %v853
        %v1514 = vpop.permute.xlu0 %1513
        %1516 = vset.pattern.permute.xlu0 6
        %1517 = vperm.xlu0 %1516, %v856
        %v1518 = vpop.permute.xlu0 %1517
        %1520 = vset.pattern.permute.xlu0 6
        %1521 = vperm.xlu0 %1520, %v859
        %v1522 = vpop.permute.xlu0 %1521
        %1524 = vset.pattern.permute.xlu0 6
        %1525 = vperm.xlu0 %1524, %v862
        %v1526 = vpop.permute.xlu0 %1525
        %v1528 = vperm.slane %v880, 6
        %v1529 = vadd.f32 %v1498, %v1528
        %v1530 = vadd.f32 %v1502, %v1528
        %v1531 = vadd.f32 %v1506, %v1528
        %v1532 = vadd.f32 %v1510, %v1528
        %v1533 = vadd.f32 %v1514, %v1528
        %v1534 = vadd.f32 %v1518, %v1528
        %v1535 = vadd.f32 %v1522, %v1528
        %v1536 = vadd.f32 %v1526, %v1528
        %v1537 = vmax.f32 %v1529, 0.0
        %v1538 = vmax.f32 %v1530, 0.0
        %v1539 = vmax.f32 %v1531, 0.0
        %v1540 = vmax.f32 %v1532, 0.0
        %v1541 = vmax.f32 %v1533, 0.0
        %v1542 = vmax.f32 %v1534, 0.0
        %v1543 = vmax.f32 %v1535, 0.0
        %v1544 = vmax.f32 %v1536, 0.0
        %v1545 = vstv %s1495
        %v1546 = vmul.f32 %v1545, %v1537
        %v1547 = vmul.f32 %v1545, %v1538
        %v1548 = vmul.f32 %v1545, %v1539
        %v1549 = vmul.f32 %v1545, %v1540
        %v1550 = vmul.f32 %v1545, %v1541
        %v1551 = vmul.f32 %v1545, %v1542
        %v1552 = vmul.f32 %v1545, %v1543
        %v1553 = vmul.f32 %v1545, %v1544
        %v1554 = vadd.f32 %v1487, %v1546
        %v1555 = vadd.f32 %v1488, %v1547
        %v1556 = vadd.f32 %v1489, %v1548
        %v1557 = vadd.f32 %v1490, %v1549
        %v1558 = vadd.f32 %v1491, %v1550
        %v1559 = vadd.f32 %v1492, %v1551
        %v1560 = vadd.f32 %v1493, %v1552
        %v1561 = vadd.f32 %v1494, %v1553
        %s1562 = sld [smem:[#allocation2 + $0x7]]
        %1563 = vset.pattern.permute.xlu0 7
        %1564 = vperm.xlu0 %1563, %v841
        %v1565 = vpop.permute.xlu0 %1564
        %1567 = vset.pattern.permute.xlu0 7
        %1568 = vperm.xlu0 %1567, %v844
        %v1569 = vpop.permute.xlu0 %1568
        %1571 = vset.pattern.permute.xlu0 7
        %1572 = vperm.xlu0 %1571, %v847
        %v1573 = vpop.permute.xlu0 %1572
        %1575 = vset.pattern.permute.xlu0 7
        %1576 = vperm.xlu0 %1575, %v850
        %v1577 = vpop.permute.xlu0 %1576
        %1579 = vset.pattern.permute.xlu0 7
        %1580 = vperm.xlu0 %1579, %v853
        %v1581 = vpop.permute.xlu0 %1580
        %1583 = vset.pattern.permute.xlu0 7
        %1584 = vperm.xlu0 %1583, %v856
        %v1585 = vpop.permute.xlu0 %1584
        %1587 = vset.pattern.permute.xlu0 7
        %1588 = vperm.xlu0 %1587, %v859
        %v1589 = vpop.permute.xlu0 %1588
        %1591 = vset.pattern.permute.xlu0 7
        %1592 = vperm.xlu0 %1591, %v862
        %v1593 = vpop.permute.xlu0 %1592
        %v1595 = vperm.slane %v880, 7
        %v1596 = vadd.f32 %v1565, %v1595
        %v1597 = vadd.f32 %v1569, %v1595
        %v1598 = vadd.f32 %v1573, %v1595
        %v1599 = vadd.f32 %v1577, %v1595
        %v1600 = vadd.f32 %v1581, %v1595
        %v1601 = vadd.f32 %v1585, %v1595
        %v1602 = vadd.f32 %v1589, %v1595
        %v1603 = vadd.f32 %v1593, %v1595
        %v1604 = vmax.f32 %v1596, 0.0
        %v1605 = vmax.f32 %v1597, 0.0
        %v1606 = vmax.f32 %v1598, 0.0
        %v1607 = vmax.f32 %v1599, 0.0
        %v1608 = vmax.f32 %v1600, 0.0
        %v1609 = vmax.f32 %v1601, 0.0
        %v1610 = vmax.f32 %v1602, 0.0
        %v1611 = vmax.f32 %v1603, 0.0
        %v1612 = vstv %s1562
        %v1613 = vmul.f32 %v1612, %v1604
        %v1614 = vmul.f32 %v1612, %v1605
        %v1615 = vmul.f32 %v1612, %v1606
        %v1616 = vmul.f32 %v1612, %v1607
        %v1617 = vmul.f32 %v1612, %v1608
        %v1618 = vmul.f32 %v1612, %v1609
        %v1619 = vmul.f32 %v1612, %v1610
        %v1620 = vmul.f32 %v1612, %v1611
        %v1621 = vadd.f32 %v1554, %v1613
        %v1622 = vadd.f32 %v1555, %v1614
        %v1623 = vadd.f32 %v1556, %v1615
        %v1624 = vadd.f32 %v1557, %v1616
        %v1625 = vadd.f32 %v1558, %v1617
        %v1626 = vadd.f32 %v1559, %v1618
        %v1627 = vadd.f32 %v1560, %v1619
        %v1628 = vadd.f32 %v1561, %v1620
        %s1629 = sld [smem:[#allocation2 + $0x8]]
        %1630 = vset.pattern.permute.xlu0 8
        %1631 = vperm.xlu0 %1630, %v841
        %v1632 = vpop.permute.xlu0 %1631
        %1634 = vset.pattern.permute.xlu0 8
        %1635 = vperm.xlu0 %1634, %v844
        %v1636 = vpop.permute.xlu0 %1635
        %1638 = vset.pattern.permute.xlu0 8
        %1639 = vperm.xlu0 %1638, %v847
        %v1640 = vpop.permute.xlu0 %1639
        %1642 = vset.pattern.permute.xlu0 8
        %1643 = vperm.xlu0 %1642, %v850
        %v1644 = vpop.permute.xlu0 %1643
        %1646 = vset.pattern.permute.xlu0 8
        %1647 = vperm.xlu0 %1646, %v853
        %v1648 = vpop.permute.xlu0 %1647
        %1650 = vset.pattern.permute.xlu0 8
        %1651 = vperm.xlu0 %1650, %v856
        %v1652 = vpop.permute.xlu0 %1651
        %1654 = vset.pattern.permute.xlu0 8
        %1655 = vperm.xlu0 %1654, %v859
        %v1656 = vpop.permute.xlu0 %1655
        %1658 = vset.pattern.permute.xlu0 8
        %1659 = vperm.xlu0 %1658, %v862
        %v1660 = vpop.permute.xlu0 %1659
        %v1662 = vperm.slane %v881, 0
        %v1663 = vadd.f32 %v1632, %v1662
        %v1664 = vadd.f32 %v1636, %v1662
        %v1665 = vadd.f32 %v1640, %v1662
        %v1666 = vadd.f32 %v1644, %v1662
        %v1667 = vadd.f32 %v1648, %v1662
        %v1668 = vadd.f32 %v1652, %v1662
        %v1669 = vadd.f32 %v1656, %v1662
        %v1670 = vadd.f32 %v1660, %v1662
        %v1671 = vmax.f32 %v1663, 0.0
        %v1672 = vmax.f32 %v1664, 0.0
        %v1673 = vmax.f32 %v1665, 0.0
        %v1674 = vmax.f32 %v1666, 0.0
        %v1675 = vmax.f32 %v1667, 0.0
        %v1676 = vmax.f32 %v1668, 0.0
        %v1677 = vmax.f32 %v1669, 0.0
        %v1678 = vmax.f32 %v1670, 0.0
        %v1679 = vstv %s1629
        %v1680 = vmul.f32 %v1679, %v1671
        %v1681 = vmul.f32 %v1679, %v1672
        %v1682 = vmul.f32 %v1679, %v1673
        %v1683 = vmul.f32 %v1679, %v1674
        %v1684 = vmul.f32 %v1679, %v1675
        %v1685 = vmul.f32 %v1679, %v1676
        %v1686 = vmul.f32 %v1679, %v1677
        %v1687 = vmul.f32 %v1679, %v1678
        %v1688 = vadd.f32 %v1621, %v1680
        %v1689 = vadd.f32 %v1622, %v1681
        %v1690 = vadd.f32 %v1623, %v1682
        %v1691 = vadd.f32 %v1624, %v1683
        %v1692 = vadd.f32 %v1625, %v1684
        %v1693 = vadd.f32 %v1626, %v1685
        %v1694 = vadd.f32 %v1627, %v1686
        %v1695 = vadd.f32 %v1628, %v1687
        %s1696 = sld [smem:[#allocation2 + $0x9]]
        %1697 = vset.pattern.permute.xlu0 9
        %1698 = vperm.xlu0 %1697, %v841
        %v1699 = vpop.permute.xlu0 %1698
        %1701 = vset.pattern.permute.xlu0 9
        %1702 = vperm.xlu0 %1701, %v844
        %v1703 = vpop.permute.xlu0 %1702
        %1705 = vset.pattern.permute.xlu0 9
        %1706 = vperm.xlu0 %1705, %v847
        %v1707 = vpop.permute.xlu0 %1706
        %1709 = vset.pattern.permute.xlu0 9
        %1710 = vperm.xlu0 %1709, %v850
        %v1711 = vpop.permute.xlu0 %1710
        %1713 = vset.pattern.permute.xlu0 9
        %1714 = vperm.xlu0 %1713, %v853
        %v1715 = vpop.permute.xlu0 %1714
        %1717 = vset.pattern.permute.xlu0 9
        %1718 = vperm.xlu0 %1717, %v856
        %v1719 = vpop.permute.xlu0 %1718
        %1721 = vset.pattern.permute.xlu0 9
        %1722 = vperm.xlu0 %1721, %v859
        %v1723 = vpop.permute.xlu0 %1722
        %1725 = vset.pattern.permute.xlu0 9
        %1726 = vperm.xlu0 %1725, %v862
        %v1727 = vpop.permute.xlu0 %1726
        %v1729 = vperm.slane %v881, 1
        %v1730 = vadd.f32 %v1699, %v1729
        %v1731 = vadd.f32 %v1703, %v1729
        %v1732 = vadd.f32 %v1707, %v1729
        %v1733 = vadd.f32 %v1711, %v1729
        %v1734 = vadd.f32 %v1715, %v1729
        %v1735 = vadd.f32 %v1719, %v1729
        %v1736 = vadd.f32 %v1723, %v1729
        %v1737 = vadd.f32 %v1727, %v1729
        %v1738 = vmax.f32 %v1730, 0.0
        %v1739 = vmax.f32 %v1731, 0.0
        %v1740 = vmax.f32 %v1732, 0.0
        %v1741 = vmax.f32 %v1733, 0.0
        %v1742 = vmax.f32 %v1734, 0.0
        %v1743 = vmax.f32 %v1735, 0.0
        %v1744 = vmax.f32 %v1736, 0.0
        %v1745 = vmax.f32 %v1737, 0.0
        %v1746 = vstv %s1696
        %v1747 = vmul.f32 %v1746, %v1738
        %v1748 = vmul.f32 %v1746, %v1739
        %v1749 = vmul.f32 %v1746, %v1740
        %v1750 = vmul.f32 %v1746, %v1741
        %v1751 = vmul.f32 %v1746, %v1742
        %v1752 = vmul.f32 %v1746, %v1743
        %v1753 = vmul.f32 %v1746, %v1744
        %v1754 = vmul.f32 %v1746, %v1745
        %v1755 = vadd.f32 %v1688, %v1747
        %v1756 = vadd.f32 %v1689, %v1748
        %v1757 = vadd.f32 %v1690, %v1749
        %v1758 = vadd.f32 %v1691, %v1750
        %v1759 = vadd.f32 %v1692, %v1751
        %v1760 = vadd.f32 %v1693, %v1752
        %v1761 = vadd.f32 %v1694, %v1753
        %v1762 = vadd.f32 %v1695, %v1754
        %s1763 = sld [smem:[#allocation2 + $0xa]]
        %1764 = vset.pattern.permute.xlu0 10
        %1765 = vperm.xlu0 %1764, %v841
        %v1766 = vpop.permute.xlu0 %1765
        %1768 = vset.pattern.permute.xlu0 10
        %1769 = vperm.xlu0 %1768, %v844
        %v1770 = vpop.permute.xlu0 %1769
        %1772 = vset.pattern.permute.xlu0 10
        %1773 = vperm.xlu0 %1772, %v847
        %v1774 = vpop.permute.xlu0 %1773
        %1776 = vset.pattern.permute.xlu0 10
        %1777 = vperm.xlu0 %1776, %v850
        %v1778 = vpop.permute.xlu0 %1777
        %1780 = vset.pattern.permute.xlu0 10
        %1781 = vperm.xlu0 %1780, %v853
        %v1782 = vpop.permute.xlu0 %1781
        %1784 = vset.pattern.permute.xlu0 10
        %1785 = vperm.xlu0 %1784, %v856
        %v1786 = vpop.permute.xlu0 %1785
        %1788 = vset.pattern.permute.xlu0 10
        %1789 = vperm.xlu0 %1788, %v859
        %v1790 = vpop.permute.xlu0 %1789
        %1792 = vset.pattern.permute.xlu0 10
        %1793 = vperm.xlu0 %1792, %v862
        %v1794 = vpop.permute.xlu0 %1793
        %v1796 = vperm.slane %v881, 2
        %v1797 = vadd.f32 %v1766, %v1796
        %v1798 = vadd.f32 %v1770, %v1796
        %v1799 = vadd.f32 %v1774, %v1796
        %v1800 = vadd.f32 %v1778, %v1796
        %v1801 = vadd.f32 %v1782, %v1796
        %v1802 = vadd.f32 %v1786, %v1796
        %v1803 = vadd.f32 %v1790, %v1796
        %v1804 = vadd.f32 %v1794, %v1796
        %v1805 = vmax.f32 %v1797, 0.0
        %v1806 = vmax.f32 %v1798, 0.0
        %v1807 = vmax.f32 %v1799, 0.0
        %v1808 = vmax.f32 %v1800, 0.0
        %v1809 = vmax.f32 %v1801, 0.0
        %v1810 = vmax.f32 %v1802, 0.0
        %v1811 = vmax.f32 %v1803, 0.0
        %v1812 = vmax.f32 %v1804, 0.0
        %v1813 = vstv %s1763
        %v1814 = vmul.f32 %v1813, %v1805
        %v1815 = vmul.f32 %v1813, %v1806
        %v1816 = vmul.f32 %v1813, %v1807
        %v1817 = vmul.f32 %v1813, %v1808
        %v1818 = vmul.f32 %v1813, %v1809
        %v1819 = vmul.f32 %v1813, %v1810
        %v1820 = vmul.f32 %v1813, %v1811
        %v1821 = vmul.f32 %v1813, %v1812
        %v1822 = vadd.f32 %v1755, %v1814
        %v1823 = vadd.f32 %v1756, %v1815
        %v1824 = vadd.f32 %v1757, %v1816
        %v1825 = vadd.f32 %v1758, %v1817
        %v1826 = vadd.f32 %v1759, %v1818
        %v1827 = vadd.f32 %v1760, %v1819
        %v1828 = vadd.f32 %v1761, %v1820
        %v1829 = vadd.f32 %v1762, %v1821
        %s1830 = sld [smem:[#allocation2 + $0xb]]
        %1831 = vset.pattern.permute.xlu0 11
        %1832 = vperm.xlu0 %1831, %v841
        %v1833 = vpop.permute.xlu0 %1832
        %1835 = vset.pattern.permute.xlu0 11
        %1836 = vperm.xlu0 %1835, %v844
        %v1837 = vpop.permute.xlu0 %1836
        %1839 = vset.pattern.permute.xlu0 11
        %1840 = vperm.xlu0 %1839, %v847
        %v1841 = vpop.permute.xlu0 %1840
        %1843 = vset.pattern.permute.xlu0 11
        %1844 = vperm.xlu0 %1843, %v850
        %v1845 = vpop.permute.xlu0 %1844
        %1847 = vset.pattern.permute.xlu0 11
        %1848 = vperm.xlu0 %1847, %v853
        %v1849 = vpop.permute.xlu0 %1848
        %1851 = vset.pattern.permute.xlu0 11
        %1852 = vperm.xlu0 %1851, %v856
        %v1853 = vpop.permute.xlu0 %1852
        %1855 = vset.pattern.permute.xlu0 11
        %1856 = vperm.xlu0 %1855, %v859
        %v1857 = vpop.permute.xlu0 %1856
        %1859 = vset.pattern.permute.xlu0 11
        %1860 = vperm.xlu0 %1859, %v862
        %v1861 = vpop.permute.xlu0 %1860
        %v1863 = vperm.slane %v881, 3
        %v1864 = vadd.f32 %v1833, %v1863
        %v1865 = vadd.f32 %v1837, %v1863
        %v1866 = vadd.f32 %v1841, %v1863
        %v1867 = vadd.f32 %v1845, %v1863
        %v1868 = vadd.f32 %v1849, %v1863
        %v1869 = vadd.f32 %v1853, %v1863
        %v1870 = vadd.f32 %v1857, %v1863
        %v1871 = vadd.f32 %v1861, %v1863
        %v1872 = vmax.f32 %v1864, 0.0
        %v1873 = vmax.f32 %v1865, 0.0
        %v1874 = vmax.f32 %v1866, 0.0
        %v1875 = vmax.f32 %v1867, 0.0
        %v1876 = vmax.f32 %v1868, 0.0
        %v1877 = vmax.f32 %v1869, 0.0
        %v1878 = vmax.f32 %v1870, 0.0
        %v1879 = vmax.f32 %v1871, 0.0
        %v1880 = vstv %s1830
        %v1881 = vmul.f32 %v1880, %v1872
        %v1882 = vmul.f32 %v1880, %v1873
        %v1883 = vmul.f32 %v1880, %v1874
        %v1884 = vmul.f32 %v1880, %v1875
        %v1885 = vmul.f32 %v1880, %v1876
        %v1886 = vmul.f32 %v1880, %v1877
        %v1887 = vmul.f32 %v1880, %v1878
        %v1888 = vmul.f32 %v1880, %v1879
        %v1889 = vadd.f32 %v1822, %v1881
        %v1890 = vadd.f32 %v1823, %v1882
        %v1891 = vadd.f32 %v1824, %v1883
        %v1892 = vadd.f32 %v1825, %v1884
        %v1893 = vadd.f32 %v1826, %v1885
        %v1894 = vadd.f32 %v1827, %v1886
        %v1895 = vadd.f32 %v1828, %v1887
        %v1896 = vadd.f32 %v1829, %v1888
        %s1897 = sld [smem:[#allocation2 + $0xc]]
        %1898 = vset.pattern.permute.xlu0 12
        %1899 = vperm.xlu0 %1898, %v841
        %v1900 = vpop.permute.xlu0 %1899
        %1902 = vset.pattern.permute.xlu0 12
        %1903 = vperm.xlu0 %1902, %v844
        %v1904 = vpop.permute.xlu0 %1903
        %1906 = vset.pattern.permute.xlu0 12
        %1907 = vperm.xlu0 %1906, %v847
        %v1908 = vpop.permute.xlu0 %1907
        %1910 = vset.pattern.permute.xlu0 12
        %1911 = vperm.xlu0 %1910, %v850
        %v1912 = vpop.permute.xlu0 %1911
        %1914 = vset.pattern.permute.xlu0 12
        %1915 = vperm.xlu0 %1914, %v853
        %v1916 = vpop.permute.xlu0 %1915
        %1918 = vset.pattern.permute.xlu0 12
        %1919 = vperm.xlu0 %1918, %v856
        %v1920 = vpop.permute.xlu0 %1919
        %1922 = vset.pattern.permute.xlu0 12
        %1923 = vperm.xlu0 %1922, %v859
        %v1924 = vpop.permute.xlu0 %1923
        %1926 = vset.pattern.permute.xlu0 12
        %1927 = vperm.xlu0 %1926, %v862
        %v1928 = vpop.permute.xlu0 %1927
        %v1930 = vperm.slane %v881, 4
        %v1931 = vadd.f32 %v1900, %v1930
        %v1932 = vadd.f32 %v1904, %v1930
        %v1933 = vadd.f32 %v1908, %v1930
        %v1934 = vadd.f32 %v1912, %v1930
        %v1935 = vadd.f32 %v1916, %v1930
        %v1936 = vadd.f32 %v1920, %v1930
        %v1937 = vadd.f32 %v1924, %v1930
        %v1938 = vadd.f32 %v1928, %v1930
        %v1939 = vmax.f32 %v1931, 0.0
        %v1940 = vmax.f32 %v1932, 0.0
        %v1941 = vmax.f32 %v1933, 0.0
        %v1942 = vmax.f32 %v1934, 0.0
        %v1943 = vmax.f32 %v1935, 0.0
        %v1944 = vmax.f32 %v1936, 0.0
        %v1945 = vmax.f32 %v1937, 0.0
        %v1946 = vmax.f32 %v1938, 0.0
        %v1947 = vstv %s1897
        %v1948 = vmul.f32 %v1947, %v1939
        %v1949 = vmul.f32 %v1947, %v1940
        %v1950 = vmul.f32 %v1947, %v1941
        %v1951 = vmul.f32 %v1947, %v1942
        %v1952 = vmul.f32 %v1947, %v1943
        %v1953 = vmul.f32 %v1947, %v1944
        %v1954 = vmul.f32 %v1947, %v1945
        %v1955 = vmul.f32 %v1947, %v1946
        %v1956 = vadd.f32 %v1889, %v1948
        %v1957 = vadd.f32 %v1890, %v1949
        %v1958 = vadd.f32 %v1891, %v1950
        %v1959 = vadd.f32 %v1892, %v1951
        %v1960 = vadd.f32 %v1893, %v1952
        %v1961 = vadd.f32 %v1894, %v1953
        %v1962 = vadd.f32 %v1895, %v1954
        %v1963 = vadd.f32 %v1896, %v1955
        %s1964 = sld [smem:[#allocation2 + $0xd]]
        %1965 = vset.pattern.permute.xlu0 13
        %1966 = vperm.xlu0 %1965, %v841
        %v1967 = vpop.permute.xlu0 %1966
        %1969 = vset.pattern.permute.xlu0 13
        %1970 = vperm.xlu0 %1969, %v844
        %v1971 = vpop.permute.xlu0 %1970
        %1973 = vset.pattern.permute.xlu0 13
        %1974 = vperm.xlu0 %1973, %v847
        %v1975 = vpop.permute.xlu0 %1974
        %1977 = vset.pattern.permute.xlu0 13
        %1978 = vperm.xlu0 %1977, %v850
        %v1979 = vpop.permute.xlu0 %1978
        %1981 = vset.pattern.permute.xlu0 13
        %1982 = vperm.xlu0 %1981, %v853
        %v1983 = vpop.permute.xlu0 %1982
        %1985 = vset.pattern.permute.xlu0 13
        %1986 = vperm.xlu0 %1985, %v856
        %v1987 = vpop.permute.xlu0 %1986
        %1989 = vset.pattern.permute.xlu0 13
        %1990 = vperm.xlu0 %1989, %v859
        %v1991 = vpop.permute.xlu0 %1990
        %1993 = vset.pattern.permute.xlu0 13
        %1994 = vperm.xlu0 %1993, %v862
        %v1995 = vpop.permute.xlu0 %1994
        %v1997 = vperm.slane %v881, 5
        %v1998 = vadd.f32 %v1967, %v1997
        %v1999 = vadd.f32 %v1971, %v1997
        %v2000 = vadd.f32 %v1975, %v1997
        %v2001 = vadd.f32 %v1979, %v1997
        %v2002 = vadd.f32 %v1983, %v1997
        %v2003 = vadd.f32 %v1987, %v1997
        %v2004 = vadd.f32 %v1991, %v1997
        %v2005 = vadd.f32 %v1995, %v1997
        %v2006 = vmax.f32 %v1998, 0.0
        %v2007 = vmax.f32 %v1999, 0.0
        %v2008 = vmax.f32 %v2000, 0.0
        %v2009 = vmax.f32 %v2001, 0.0
        %v2010 = vmax.f32 %v2002, 0.0
        %v2011 = vmax.f32 %v2003, 0.0
        %v2012 = vmax.f32 %v2004, 0.0
        %v2013 = vmax.f32 %v2005, 0.0
        %v2014 = vstv %s1964
        %v2015 = vmul.f32 %v2014, %v2006
        %v2016 = vmul.f32 %v2014, %v2007
        %v2017 = vmul.f32 %v2014, %v2008
        %v2018 = vmul.f32 %v2014, %v2009
        %v2019 = vmul.f32 %v2014, %v2010
        %v2020 = vmul.f32 %v2014, %v2011
        %v2021 = vmul.f32 %v2014, %v2012
        %v2022 = vmul.f32 %v2014, %v2013
        %v2023 = vadd.f32 %v1956, %v2015
        %v2024 = vadd.f32 %v1957, %v2016
        %v2025 = vadd.f32 %v1958, %v2017
        %v2026 = vadd.f32 %v1959, %v2018
        %v2027 = vadd.f32 %v1960, %v2019
        %v2028 = vadd.f32 %v1961, %v2020
        %v2029 = vadd.f32 %v1962, %v2021
        %v2030 = vadd.f32 %v1963, %v2022
        %s2031 = sld [smem:[#allocation2 + $0xe]]
        %2032 = vset.pattern.permute.xlu0 14
        %2033 = vperm.xlu0 %2032, %v841
        %v2034 = vpop.permute.xlu0 %2033
        %2036 = vset.pattern.permute.xlu0 14
        %2037 = vperm.xlu0 %2036, %v844
        %v2038 = vpop.permute.xlu0 %2037
        %2040 = vset.pattern.permute.xlu0 14
        %2041 = vperm.xlu0 %2040, %v847
        %v2042 = vpop.permute.xlu0 %2041
        %2044 = vset.pattern.permute.xlu0 14
        %2045 = vperm.xlu0 %2044, %v850
        %v2046 = vpop.permute.xlu0 %2045
        %2048 = vset.pattern.permute.xlu0 14
        %2049 = vperm.xlu0 %2048, %v853
        %v2050 = vpop.permute.xlu0 %2049
        %2052 = vset.pattern.permute.xlu0 14
        %2053 = vperm.xlu0 %2052, %v856
        %v2054 = vpop.permute.xlu0 %2053
        %2056 = vset.pattern.permute.xlu0 14
        %2057 = vperm.xlu0 %2056, %v859
        %v2058 = vpop.permute.xlu0 %2057
        %2060 = vset.pattern.permute.xlu0 14
        %2061 = vperm.xlu0 %2060, %v862
        %v2062 = vpop.permute.xlu0 %2061
        %v2064 = vperm.slane %v881, 6
        %v2065 = vadd.f32 %v2034, %v2064
        %v2066 = vadd.f32 %v2038, %v2064
        %v2067 = vadd.f32 %v2042, %v2064
        %v2068 = vadd.f32 %v2046, %v2064
        %v2069 = vadd.f32 %v2050, %v2064
        %v2070 = vadd.f32 %v2054, %v2064
        %v2071 = vadd.f32 %v2058, %v2064
        %v2072 = vadd.f32 %v2062, %v2064
        %v2073 = vmax.f32 %v2065, 0.0
        %v2074 = vmax.f32 %v2066, 0.0
        %v2075 = vmax.f32 %v2067, 0.0
        %v2076 = vmax.f32 %v2068, 0.0
        %v2077 = vmax.f32 %v2069, 0.0
        %v2078 = vmax.f32 %v2070, 0.0
        %v2079 = vmax.f32 %v2071, 0.0
        %v2080 = vmax.f32 %v2072, 0.0
        %v2081 = vstv %s2031
        %v2082 = vmul.f32 %v2081, %v2073
        %v2083 = vmul.f32 %v2081, %v2074
        %v2084 = vmul.f32 %v2081, %v2075
        %v2085 = vmul.f32 %v2081, %v2076
        %v2086 = vmul.f32 %v2081, %v2077
        %v2087 = vmul.f32 %v2081, %v2078
        %v2088 = vmul.f32 %v2081, %v2079
        %v2089 = vmul.f32 %v2081, %v2080
        %v2090 = vadd.f32 %v2023, %v2082
        %v2091 = vadd.f32 %v2024, %v2083
        %v2092 = vadd.f32 %v2025, %v2084
        %v2093 = vadd.f32 %v2026, %v2085
        %v2094 = vadd.f32 %v2027, %v2086
        %v2095 = vadd.f32 %v2028, %v2087
        %v2096 = vadd.f32 %v2029, %v2088
        %v2097 = vadd.f32 %v2030, %v2089
        %s2098 = sld [smem:[#allocation2 + $0xf]]
        %2099 = vset.pattern.permute.xlu0 15
        %2100 = vperm.xlu0 %2099, %v841
        %v2101 = vpop.permute.xlu0 %2100
        %2103 = vset.pattern.permute.xlu0 15
        %2104 = vperm.xlu0 %2103, %v844
        %v2105 = vpop.permute.xlu0 %2104
        %2107 = vset.pattern.permute.xlu0 15
        %2108 = vperm.xlu0 %2107, %v847
        %v2109 = vpop.permute.xlu0 %2108
        %2111 = vset.pattern.permute.xlu0 15
        %2112 = vperm.xlu0 %2111, %v850
        %v2113 = vpop.permute.xlu0 %2112
        %2115 = vset.pattern.permute.xlu0 15
        %2116 = vperm.xlu0 %2115, %v853
        %v2117 = vpop.permute.xlu0 %2116
        %2119 = vset.pattern.permute.xlu0 15
        %2120 = vperm.xlu0 %2119, %v856
        %v2121 = vpop.permute.xlu0 %2120
        %2123 = vset.pattern.permute.xlu0 15
        %2124 = vperm.xlu0 %2123, %v859
        %v2125 = vpop.permute.xlu0 %2124
        %2127 = vset.pattern.permute.xlu0 15
        %2128 = vperm.xlu0 %2127, %v862
        %v2129 = vpop.permute.xlu0 %2128
        %v2131 = vperm.slane %v881, 7
        %v2132 = vadd.f32 %v2101, %v2131
        %v2133 = vadd.f32 %v2105, %v2131
        %v2134 = vadd.f32 %v2109, %v2131
        %v2135 = vadd.f32 %v2113, %v2131
        %v2136 = vadd.f32 %v2117, %v2131
        %v2137 = vadd.f32 %v2121, %v2131
        %v2138 = vadd.f32 %v2125, %v2131
        %v2139 = vadd.f32 %v2129, %v2131
        %v2140 = vmax.f32 %v2132, 0.0
        %v2141 = vmax.f32 %v2133, 0.0
        %v2142 = vmax.f32 %v2134, 0.0
        %v2143 = vmax.f32 %v2135, 0.0
        %v2144 = vmax.f32 %v2136, 0.0
        %v2145 = vmax.f32 %v2137, 0.0
        %v2146 = vmax.f32 %v2138, 0.0
        %v2147 = vmax.f32 %v2139, 0.0
        %v2148 = vstv %s2098
        %v2149 = vmul.f32 %v2148, %v2140
        %v2150 = vmul.f32 %v2148, %v2141
        %v2151 = vmul.f32 %v2148, %v2142
        %v2152 = vmul.f32 %v2148, %v2143
        %v2153 = vmul.f32 %v2148, %v2144
        %v2154 = vmul.f32 %v2148, %v2145
        %v2155 = vmul.f32 %v2148, %v2146
        %v2156 = vmul.f32 %v2148, %v2147
        %v2157 = vadd.f32 %v2090, %v2149
        %v2158 = vadd.f32 %v2091, %v2150
        %v2159 = vadd.f32 %v2092, %v2151
        %v2160 = vadd.f32 %v2093, %v2152
        %v2161 = vadd.f32 %v2094, %v2153
        %v2162 = vadd.f32 %v2095, %v2154
        %v2163 = vadd.f32 %v2096, %v2155
        %v2164 = vadd.f32 %v2097, %v2156
        %v2165 = vsel %vm1012, %v2157, -1e+30
        %v2166 = vsel %vm1013, %v2158, -1e+30
        %v2167 = vsel %vm1014, %v2159, -1e+30
        %v2168 = vsel %vm1015, %v2160, -1e+30
        %v2169 = vsel %vm1016, %v2161, -1e+30
        %v2170 = vsel %vm1017, %v2162, -1e+30
        %v2171 = vsel %vm1018, %v2163, -1e+30
        %v2172 = vsel %vm1019, %v2164, -1e+30
        %vm2173 = vcmask 523264
        %v2174 = vsel %vm2173, %v2165, -inf
        %2175 = vmax.xlane.f32.xlu0 %v2174
        %v2176 = vpop.xlane.xlu0 %2175
        %v2177 = vsel %vm2173, %v2166, -inf
        %2178 = vmax.xlane.f32.xlu0 %v2177
        %v2179 = vpop.xlane.xlu0 %2178
        %v2180 = vsel %vm2173, %v2167, -inf
        %2181 = vmax.xlane.f32.xlu0 %v2180
        %v2182 = vpop.xlane.xlu0 %2181
        %v2183 = vsel %vm2173, %v2168, -inf
        %2184 = vmax.xlane.f32.xlu0 %v2183
        %v2185 = vpop.xlane.xlu0 %2184
        %v2186 = vsel %vm2173, %v2169, -inf
        %2187 = vmax.xlane.f32.xlu0 %v2186
        %v2188 = vpop.xlane.xlu0 %2187
        %v2189 = vsel %vm2173, %v2170, -inf
        %2190 = vmax.xlane.f32.xlu0 %v2189
        %v2191 = vpop.xlane.xlu0 %2190
        %v2192 = vsel %vm2173, %v2171, -inf
        %2193 = vmax.xlane.f32.xlu0 %v2192
        %v2194 = vpop.xlane.xlu0 %2193
        %v2195 = vsel %vm2173, %v2172, -inf
        %2196 = vmax.xlane.f32.xlu0 %v2195
        %v2197 = vpop.xlane.xlu0 %2196
        %v2198 = vsub.f32 %v2165, %v2176
        %v2199 = vsub.f32 %v2166, %v2179
        %v2200 = vsub.f32 %v2167, %v2182
        %v2201 = vsub.f32 %v2168, %v2185
        %v2202 = vsub.f32 %v2169, %v2188
        %v2203 = vsub.f32 %v2170, %v2191
        %v2204 = vsub.f32 %v2171, %v2194
        %v2205 = vsub.f32 %v2172, %v2197
        %v2206 = vmul.f32 %v2198, 1.442695
        %v2207 = vpow.pop %v2206
        %v2208 = vmul.f32 %v2199, 1.442695
        %v2209 = vpow.pop %v2208
        %v2210 = vmul.f32 %v2200, 1.442695
        %v2211 = vpow.pop %v2210
        %v2212 = vmul.f32 %v2201, 1.442695
        %v2213 = vpow.pop %v2212
        %v2214 = vmul.f32 %v2202, 1.442695
        %v2215 = vpow.pop %v2214
        %v2216 = vmul.f32 %v2203, 1.442695
        %v2217 = vpow.pop %v2216
        %v2218 = vmul.f32 %v2204, 1.442695
        %v2219 = vpow.pop %v2218
        %v2220 = vmul.f32 %v2205, 1.442695
        %v2221 = vpow.pop %v2220
        %v2222 = vmul.f32 %v2207, %v1028
        %v2223 = vmul.f32 %v2209, %v1029
        %v2224 = vmul.f32 %v2211, %v1030
        %v2225 = vmul.f32 %v2213, %v1031
        %v2226 = vmul.f32 %v2215, %v1032
        %v2227 = vmul.f32 %v2217, %v1033
        %v2228 = vmul.f32 %v2219, %v1034
        %v2229 = vmul.f32 %v2221, %v1035
        %v2230 = vsel %vm2173, %v2222, 0.0
        %2231 = vadd.xlane.f32.xlu0 %v2230
        %v2232 = vpop.xlane.xlu0 %2231
        %v2233 = vsel %vm2173, %v2223, 0.0
        %2234 = vadd.xlane.f32.xlu0 %v2233
        %v2235 = vpop.xlane.xlu0 %2234
        %v2236 = vsel %vm2173, %v2224, 0.0
        %2237 = vadd.xlane.f32.xlu0 %v2236
        %v2238 = vpop.xlane.xlu0 %2237
        %v2239 = vsel %vm2173, %v2225, 0.0
        %2240 = vadd.xlane.f32.xlu0 %v2239
        %v2241 = vpop.xlane.xlu0 %2240
        %v2242 = vsel %vm2173, %v2226, 0.0
        %2243 = vadd.xlane.f32.xlu0 %v2242
        %v2244 = vpop.xlane.xlu0 %2243
        %v2245 = vsel %vm2173, %v2227, 0.0
        %2246 = vadd.xlane.f32.xlu0 %v2245
        %v2247 = vpop.xlane.xlu0 %2246
        %v2248 = vsel %vm2173, %v2228, 0.0
        %2249 = vadd.xlane.f32.xlu0 %v2248
        %v2250 = vpop.xlane.xlu0 %2249
        %v2251 = vsel %vm2173, %v2229, 0.0
        %2252 = vadd.xlane.f32.xlu0 %v2251
        %v2253 = vpop.xlane.xlu0 %2252
        %v2254 = vmax.f32 %v2232, 1e-16
        %v2255 = vmax.f32 %v2235, 1e-16
        %v2256 = vmax.f32 %v2238, 1e-16
        %v2257 = vmax.f32 %v2241, 1e-16
        %v2258 = vmax.f32 %v2244, 1e-16
        %v2259 = vmax.f32 %v2247, 1e-16
        %v2260 = vmax.f32 %v2250, 1e-16
        %v2261 = vmax.f32 %v2253, 1e-16
        %v2262 = vrcp.pop %v2254
        %v2263 = vmul.f32 %v2254, %v2262
        %v2264 = vsub.f32 1.0, %v2263
        %v2265 = vmul.f32 %v2262, %v2264
        %v2266 = vadd.f32 %v2262, %v2265
        %vm2267 = vweird.f32 %v2254
        %vm2268 = vweird.f32 %v2262
        %vm2269 = vmor %vm2267, %vm2268
        %v2270 = vsel %vm2269, %v2262, %v2266
        %v2271 = vand.u32 2147483647, %v2254
        %vm2272 = vcmp.eq.f32.partialorder %v2271, 8.507059e+37
        %v2273 = vand.u32 %v2254, 2147483648
        %v2274 = vor.u32 1.1754944e-38, %v2273
        %v2275 = vsel %vm2272, %v2274, %v2270
        %v2276 = vmul.f32 %v2222, %v2275
        %v2277 = vrcp.pop %v2255
        %v2278 = vmul.f32 %v2255, %v2277
        %v2279 = vsub.f32 1.0, %v2278
        %v2280 = vmul.f32 %v2277, %v2279
        %v2281 = vadd.f32 %v2277, %v2280
        %vm2282 = vweird.f32 %v2255
        %vm2283 = vweird.f32 %v2277
        %vm2284 = vmor %vm2282, %vm2283
        %v2285 = vsel %vm2284, %v2277, %v2281
        %v2286 = vand.u32 2147483647, %v2255
        %vm2287 = vcmp.eq.f32.partialorder %v2286, 8.507059e+37
        %v2288 = vand.u32 %v2255, 2147483648
        %v2289 = vor.u32 1.1754944e-38, %v2288
        %v2290 = vsel %vm2287, %v2289, %v2285
        %v2291 = vmul.f32 %v2223, %v2290
        %v2292 = vrcp.pop %v2256
        %v2293 = vmul.f32 %v2256, %v2292
        %v2294 = vsub.f32 1.0, %v2293
        %v2295 = vmul.f32 %v2292, %v2294
        %v2296 = vadd.f32 %v2292, %v2295
        %vm2297 = vweird.f32 %v2256
        %vm2298 = vweird.f32 %v2292
        %vm2299 = vmor %vm2297, %vm2298
        %v2300 = vsel %vm2299, %v2292, %v2296
        %v2301 = vand.u32 2147483647, %v2256
        %vm2302 = vcmp.eq.f32.partialorder %v2301, 8.507059e+37
        %v2303 = vand.u32 %v2256, 2147483648
        %v2304 = vor.u32 1.1754944e-38, %v2303
        %v2305 = vsel %vm2302, %v2304, %v2300
        %v2306 = vmul.f32 %v2224, %v2305
        %v2307 = vrcp.pop %v2257
        %v2308 = vmul.f32 %v2257, %v2307
        %v2309 = vsub.f32 1.0, %v2308
        %v2310 = vmul.f32 %v2307, %v2309
        %v2311 = vadd.f32 %v2307, %v2310
        %vm2312 = vweird.f32 %v2257
        %vm2313 = vweird.f32 %v2307
        %vm2314 = vmor %vm2312, %vm2313
        %v2315 = vsel %vm2314, %v2307, %v2311
        %v2316 = vand.u32 2147483647, %v2257
        %vm2317 = vcmp.eq.f32.partialorder %v2316, 8.507059e+37
        %v2318 = vand.u32 %v2257, 2147483648
        %v2319 = vor.u32 1.1754944e-38, %v2318
        %v2320 = vsel %vm2317, %v2319, %v2315
        %v2321 = vmul.f32 %v2225, %v2320
        %v2322 = vrcp.pop %v2258
        %v2323 = vmul.f32 %v2258, %v2322
        %v2324 = vsub.f32 1.0, %v2323
        %v2325 = vmul.f32 %v2322, %v2324
        %v2326 = vadd.f32 %v2322, %v2325
        %vm2327 = vweird.f32 %v2258
        %vm2328 = vweird.f32 %v2322
        %vm2329 = vmor %vm2327, %vm2328
        %v2330 = vsel %vm2329, %v2322, %v2326
        %v2331 = vand.u32 2147483647, %v2258
        %vm2332 = vcmp.eq.f32.partialorder %v2331, 8.507059e+37
        %v2333 = vand.u32 %v2258, 2147483648
        %v2334 = vor.u32 1.1754944e-38, %v2333
        %v2335 = vsel %vm2332, %v2334, %v2330
        %v2336 = vmul.f32 %v2226, %v2335
        %v2337 = vrcp.pop %v2259
        %v2338 = vmul.f32 %v2259, %v2337
        %v2339 = vsub.f32 1.0, %v2338
        %v2340 = vmul.f32 %v2337, %v2339
        %v2341 = vadd.f32 %v2337, %v2340
        %vm2342 = vweird.f32 %v2259
        %vm2343 = vweird.f32 %v2337
        %vm2344 = vmor %vm2342, %vm2343
        %v2345 = vsel %vm2344, %v2337, %v2341
        %v2346 = vand.u32 2147483647, %v2259
        %vm2347 = vcmp.eq.f32.partialorder %v2346, 8.507059e+37
        %v2348 = vand.u32 %v2259, 2147483648
        %v2349 = vor.u32 1.1754944e-38, %v2348
        %v2350 = vsel %vm2347, %v2349, %v2345
        %v2351 = vmul.f32 %v2227, %v2350
        %v2352 = vrcp.pop %v2260
        %v2353 = vmul.f32 %v2260, %v2352
        %v2354 = vsub.f32 1.0, %v2353
        %v2355 = vmul.f32 %v2352, %v2354
        %v2356 = vadd.f32 %v2352, %v2355
        %vm2357 = vweird.f32 %v2260
        %vm2358 = vweird.f32 %v2352
        %vm2359 = vmor %vm2357, %vm2358
        %v2360 = vsel %vm2359, %v2352, %v2356
        %v2361 = vand.u32 2147483647, %v2260
        %vm2362 = vcmp.eq.f32.partialorder %v2361, 8.507059e+37
        %v2363 = vand.u32 %v2260, 2147483648
        %v2364 = vor.u32 1.1754944e-38, %v2363
        %v2365 = vsel %vm2362, %v2364, %v2360
        %v2366 = vmul.f32 %v2228, %v2365
        %v2367 = vrcp.pop %v2261
        %v2368 = vmul.f32 %v2261, %v2367
        %v2369 = vsub.f32 1.0, %v2368
        %v2370 = vmul.f32 %v2367, %v2369
        %v2371 = vadd.f32 %v2367, %v2370
        %vm2372 = vweird.f32 %v2261
        %vm2373 = vweird.f32 %v2367
        %vm2374 = vmor %vm2372, %vm2373
        %v2375 = vsel %vm2374, %v2367, %v2371
        %v2376 = vand.u32 2147483647, %v2261
        %vm2377 = vcmp.eq.f32.partialorder %v2376, 8.507059e+37
        %v2378 = vand.u32 %v2261, 2147483648
        %v2379 = vor.u32 1.1754944e-38, %v2378
        %v2380 = vsel %vm2377, %v2379, %v2375
        %v2381 = vmul.f32 %v2229, %v2380
        %v2382 = vld [vmem:[%s13] sm:$0x1]
        %v2384 = vperm.slane %v2382, 0
        %v2387 = vsel %vm2173, %v2276, 0
        %v2390 = vsel %vm2173, %v2291, 0
        %v2393 = vsel %vm2173, %v2306, 0
        %v2396 = vsel %vm2173, %v2321, 0
        %v2399 = vsel %vm2173, %v2336, 0
        %v2402 = vsel %vm2173, %v2351, 0
        %v2405 = vsel %vm2173, %v2366, 0
        %v2408 = vsel %vm2173, %v2381, 0
        %2410 = vmatpush.msra.mxu0 0.0
        %2411 = vmatpush.msra.mxu0 0.0
        %2412 = vmatpush.msra.mxu0 0.0
        %2413 = vmatpush.msra.mxu0 0.0
        %2414 = vmatpush.msra.mxu0 0.0
        %2415 = vmatpush.msra.mxu0 0.0
        %2416 = vmatpush.msra.mxu0 0.0
        %2417 = vmatpush.msra.mxu0 0.0
        %2418 = vmatpush.msra.mxu0 %v791
        %2419 = vmatpush.msra.mxu0 %v788
        %2420 = vmatpush.msra.mxu0 %v785
        %2421 = vmatpush.msra.mxu0 %v782
        %2422 = vmatpush.msra.mxu0 %v779
        %2423 = vmatpush.msra.mxu0 %v776
        %2424 = vmatpush.msra.mxu0 %v773
        %2425 = vmatpush.msra.mxu0 %v770
        %2426 = vmatmul.f32.gmra.mxu0 %v2387
        %v2427 = vpop.f32.mrf.mxu0
        %v2428 = vadd.f32 %v2384, %v2427
        %2429 = vmatmul.f32.gmra.mxu0 %v2390
        %v2430 = vpop.f32.mrf.mxu0
        %v2431 = vadd.f32 %v2384, %v2430
        %2432 = vmatmul.f32.gmra.mxu0 %v2393
        %v2433 = vpop.f32.mrf.mxu0
        %v2434 = vadd.f32 %v2384, %v2433
        %2435 = vmatmul.f32.gmra.mxu0 %v2396
        %v2436 = vpop.f32.mrf.mxu0
        %v2437 = vadd.f32 %v2384, %v2436
        %2438 = vmatmul.f32.gmra.mxu0 %v2399
        %v2439 = vpop.f32.mrf.mxu0
        %v2440 = vadd.f32 %v2384, %v2439
        %2441 = vmatmul.f32.gmra.mxu0 %v2402
        %v2442 = vpop.f32.mrf.mxu0
        %v2443 = vadd.f32 %v2384, %v2442
        %2444 = vmatmul.f32.gmra.mxu0 %v2405
        %v2445 = vpop.f32.mrf.mxu0
        %v2446 = vadd.f32 %v2384, %v2445
        %2447 = vmatmul.f32.gmra.mxu0 %v2408
        %v2448 = vpop.f32.mrf.mxu0
        %v2449 = vadd.f32 %v2384, %v2448
        %2450 = vdwg.mxu0
        %v2451 = vmax.f32 %v2428, 0.0
        %v2452 = vmax.f32 %v2431, 0.0
        %v2453 = vmax.f32 %v2434, 0.0
        %v2454 = vmax.f32 %v2437, 0.0
        %v2455 = vmax.f32 %v2440, 0.0
        %v2456 = vmax.f32 %v2443, 0.0
        %v2457 = vmax.f32 %v2446, 0.0
        %v2458 = vmax.f32 %v2449, 0.0
        %2467 = vrot.lane.b32.xlu0 %v2451, 16
        %v2468 = vpop.permute.xlu0 %2467
        %2469 = vrot.lane.b32.xlu0 %v2452, 16
        %v2470 = vpop.permute.xlu0 %2469
        %2471 = vrot.lane.b32.xlu0 %v2453, 16
        %v2472 = vpop.permute.xlu0 %2471
        %2473 = vrot.lane.b32.xlu0 %v2454, 16
        %v2474 = vpop.permute.xlu0 %2473
        %2475 = vrot.lane.b32.xlu0 %v2455, 16
        %v2476 = vpop.permute.xlu0 %2475
        %2477 = vrot.lane.b32.xlu0 %v2456, 16
        %v2478 = vpop.permute.xlu0 %2477
        %2479 = vrot.lane.b32.xlu0 %v2457, 16
        %v2480 = vpop.permute.xlu0 %2479
        %2481 = vrot.lane.b32.xlu0 %v2458, 16
        %v2482 = vpop.permute.xlu0 %2481
        %vm2491 = vcmask 261248
        %2492 = vst.msk [vmem:[%s532] sm:$0xff] %vm2491, %v2468
        %2493 = vst.msk [vmem:[%s532 + $0x8] sm:$0xff] %vm2491, %v2470
        %2494 = vst.msk [vmem:[%s532 + $0x10] sm:$0xff] %vm2491, %v2472
        %2495 = vst.msk [vmem:[%s532 + $0x18] sm:$0xff] %vm2491, %v2474
        %2496 = vst.msk [vmem:[%s532 + $0x20] sm:$0xff] %vm2491, %v2476
        %2497 = vst.msk [vmem:[%s532 + $0x28] sm:$0xff] %vm2491, %v2478
        %2498 = vst.msk [vmem:[%s532 + $0x30] sm:$0xff] %vm2491, %v2480
        %2499 = vst.msk [vmem:[%s532 + $0x38] sm:$0xff] %vm2491, %v2482
        %2500 = vset.pattern.permute.xlu0 1
        %2501 = vperm.xlu0 %2500, %v949
        %v2502 = vpop.permute.xlu0 %2501
        %2504 = vset.pattern.permute.xlu0 1
        %2505 = vperm.xlu0 %2504, %v952
        %v2506 = vpop.permute.xlu0 %2505
        %2508 = vset.pattern.permute.xlu0 1
        %2509 = vperm.xlu0 %2508, %v955
        %v2510 = vpop.permute.xlu0 %2509
        %2512 = vset.pattern.permute.xlu0 1
        %2513 = vperm.xlu0 %2512, %v958
        %v2514 = vpop.permute.xlu0 %2513
        %2516 = vset.pattern.permute.xlu0 1
        %2517 = vperm.xlu0 %2516, %v961
        %v2518 = vpop.permute.xlu0 %2517
        %2520 = vset.pattern.permute.xlu0 1
        %2521 = vperm.xlu0 %2520, %v964
        %v2522 = vpop.permute.xlu0 %2521
        %2524 = vset.pattern.permute.xlu0 1
        %2525 = vperm.xlu0 %2524, %v967
        %v2526 = vpop.permute.xlu0 %2525
        %2528 = vset.pattern.permute.xlu0 1
        %2529 = vperm.xlu0 %2528, %v970
        %v2530 = vpop.permute.xlu0 %2529
        %v2532 = vperm.slane %v994, 1
        %v2533 = vadd.f32 %v2502, %v2532
        %v2534 = vadd.f32 %v2506, %v2532
        %v2535 = vadd.f32 %v2510, %v2532
        %v2536 = vadd.f32 %v2514, %v2532
        %v2537 = vadd.f32 %v2518, %v2532
        %v2538 = vadd.f32 %v2522, %v2532
        %v2539 = vadd.f32 %v2526, %v2532
        %v2540 = vadd.f32 %v2530, %v2532
        %s2541 = sld [smem:[#allocation2 + $0x80]]
        %2542 = vset.pattern.permute.xlu0 16
        %2543 = vperm.xlu0 %2542, %v841
        %v2544 = vpop.permute.xlu0 %2543
        %2546 = vset.pattern.permute.xlu0 16
        %2547 = vperm.xlu0 %2546, %v844
        %v2548 = vpop.permute.xlu0 %2547
        %2550 = vset.pattern.permute.xlu0 16
        %2551 = vperm.xlu0 %2550, %v847
        %v2552 = vpop.permute.xlu0 %2551
        %2554 = vset.pattern.permute.xlu0 16
        %2555 = vperm.xlu0 %2554, %v850
        %v2556 = vpop.permute.xlu0 %2555
        %2558 = vset.pattern.permute.xlu0 16
        %2559 = vperm.xlu0 %2558, %v853
        %v2560 = vpop.permute.xlu0 %2559
        %2562 = vset.pattern.permute.xlu0 16
        %2563 = vperm.xlu0 %2562, %v856
        %v2564 = vpop.permute.xlu0 %2563
        %2566 = vset.pattern.permute.xlu0 16
        %2567 = vperm.xlu0 %2566, %v859
        %v2568 = vpop.permute.xlu0 %2567
        %2570 = vset.pattern.permute.xlu0 16
        %2571 = vperm.xlu0 %2570, %v862
        %v2572 = vpop.permute.xlu0 %2571
        %v2574 = vperm.slane %v882, 0
        %v2575 = vadd.f32 %v2544, %v2574
        %v2576 = vadd.f32 %v2548, %v2574
        %v2577 = vadd.f32 %v2552, %v2574
        %v2578 = vadd.f32 %v2556, %v2574
        %v2579 = vadd.f32 %v2560, %v2574
        %v2580 = vadd.f32 %v2564, %v2574
        %v2581 = vadd.f32 %v2568, %v2574
        %v2582 = vadd.f32 %v2572, %v2574
        %v2583 = vmax.f32 %v2575, 0.0
        %v2584 = vmax.f32 %v2576, 0.0
        %v2585 = vmax.f32 %v2577, 0.0
        %v2586 = vmax.f32 %v2578, 0.0
        %v2587 = vmax.f32 %v2579, 0.0
        %v2588 = vmax.f32 %v2580, 0.0
        %v2589 = vmax.f32 %v2581, 0.0
        %v2590 = vmax.f32 %v2582, 0.0
        %v2591 = vstv %s2541
        %v2592 = vmul.f32 %v2591, %v2583
        %v2593 = vmul.f32 %v2591, %v2584
        %v2594 = vmul.f32 %v2591, %v2585
        %v2595 = vmul.f32 %v2591, %v2586
        %v2596 = vmul.f32 %v2591, %v2587
        %v2597 = vmul.f32 %v2591, %v2588
        %v2598 = vmul.f32 %v2591, %v2589
        %v2599 = vmul.f32 %v2591, %v2590
        %v2600 = vadd.f32 %v2533, %v2592
        %v2601 = vadd.f32 %v2534, %v2593
        %v2602 = vadd.f32 %v2535, %v2594
        %v2603 = vadd.f32 %v2536, %v2595
        %v2604 = vadd.f32 %v2537, %v2596
        %v2605 = vadd.f32 %v2538, %v2597
        %v2606 = vadd.f32 %v2539, %v2598
        %v2607 = vadd.f32 %v2540, %v2599
        %s2608 = sld [smem:[#allocation2 + $0x81]]
        %2609 = vset.pattern.permute.xlu0 17
        %2610 = vperm.xlu0 %2609, %v841
        %v2611 = vpop.permute.xlu0 %2610
        %2613 = vset.pattern.permute.xlu0 17
        %2614 = vperm.xlu0 %2613, %v844
        %v2615 = vpop.permute.xlu0 %2614
        %2617 = vset.pattern.permute.xlu0 17
        %2618 = vperm.xlu0 %2617, %v847
        %v2619 = vpop.permute.xlu0 %2618
        %2621 = vset.pattern.permute.xlu0 17
        %2622 = vperm.xlu0 %2621, %v850
        %v2623 = vpop.permute.xlu0 %2622
        %2625 = vset.pattern.permute.xlu0 17
        %2626 = vperm.xlu0 %2625, %v853
        %v2627 = vpop.permute.xlu0 %2626
        %2629 = vset.pattern.permute.xlu0 17
        %2630 = vperm.xlu0 %2629, %v856
        %v2631 = vpop.permute.xlu0 %2630
        %2633 = vset.pattern.permute.xlu0 17
        %2634 = vperm.xlu0 %2633, %v859
        %v2635 = vpop.permute.xlu0 %2634
        %2637 = vset.pattern.permute.xlu0 17
        %2638 = vperm.xlu0 %2637, %v862
        %v2639 = vpop.permute.xlu0 %2638
        %v2641 = vperm.slane %v882, 1
        %v2642 = vadd.f32 %v2611, %v2641
        %v2643 = vadd.f32 %v2615, %v2641
        %v2644 = vadd.f32 %v2619, %v2641
        %v2645 = vadd.f32 %v2623, %v2641
        %v2646 = vadd.f32 %v2627, %v2641
        %v2647 = vadd.f32 %v2631, %v2641
        %v2648 = vadd.f32 %v2635, %v2641
        %v2649 = vadd.f32 %v2639, %v2641
        %v2650 = vmax.f32 %v2642, 0.0
        %v2651 = vmax.f32 %v2643, 0.0
        %v2652 = vmax.f32 %v2644, 0.0
        %v2653 = vmax.f32 %v2645, 0.0
        %v2654 = vmax.f32 %v2646, 0.0
        %v2655 = vmax.f32 %v2647, 0.0
        %v2656 = vmax.f32 %v2648, 0.0
        %v2657 = vmax.f32 %v2649, 0.0
        %v2658 = vstv %s2608
        %v2659 = vmul.f32 %v2658, %v2650
        %v2660 = vmul.f32 %v2658, %v2651
        %v2661 = vmul.f32 %v2658, %v2652
        %v2662 = vmul.f32 %v2658, %v2653
        %v2663 = vmul.f32 %v2658, %v2654
        %v2664 = vmul.f32 %v2658, %v2655
        %v2665 = vmul.f32 %v2658, %v2656
        %v2666 = vmul.f32 %v2658, %v2657
        %v2667 = vadd.f32 %v2600, %v2659
        %v2668 = vadd.f32 %v2601, %v2660
        %v2669 = vadd.f32 %v2602, %v2661
        %v2670 = vadd.f32 %v2603, %v2662
        %v2671 = vadd.f32 %v2604, %v2663
        %v2672 = vadd.f32 %v2605, %v2664
        %v2673 = vadd.f32 %v2606, %v2665
        %v2674 = vadd.f32 %v2607, %v2666
        %s2675 = sld [smem:[#allocation2 + $0x82]]
        %2676 = vset.pattern.permute.xlu0 18
        %2677 = vperm.xlu0 %2676, %v841
        %v2678 = vpop.permute.xlu0 %2677
        %2680 = vset.pattern.permute.xlu0 18
        %2681 = vperm.xlu0 %2680, %v844
        %v2682 = vpop.permute.xlu0 %2681
        %2684 = vset.pattern.permute.xlu0 18
        %2685 = vperm.xlu0 %2684, %v847
        %v2686 = vpop.permute.xlu0 %2685
        %2688 = vset.pattern.permute.xlu0 18
        %2689 = vperm.xlu0 %2688, %v850
        %v2690 = vpop.permute.xlu0 %2689
        %2692 = vset.pattern.permute.xlu0 18
        %2693 = vperm.xlu0 %2692, %v853
        %v2694 = vpop.permute.xlu0 %2693
        %2696 = vset.pattern.permute.xlu0 18
        %2697 = vperm.xlu0 %2696, %v856
        %v2698 = vpop.permute.xlu0 %2697
        %2700 = vset.pattern.permute.xlu0 18
        %2701 = vperm.xlu0 %2700, %v859
        %v2702 = vpop.permute.xlu0 %2701
        %2704 = vset.pattern.permute.xlu0 18
        %2705 = vperm.xlu0 %2704, %v862
        %v2706 = vpop.permute.xlu0 %2705
        %v2708 = vperm.slane %v882, 2
        %v2709 = vadd.f32 %v2678, %v2708
        %v2710 = vadd.f32 %v2682, %v2708
        %v2711 = vadd.f32 %v2686, %v2708
        %v2712 = vadd.f32 %v2690, %v2708
        %v2713 = vadd.f32 %v2694, %v2708
        %v2714 = vadd.f32 %v2698, %v2708
        %v2715 = vadd.f32 %v2702, %v2708
        %v2716 = vadd.f32 %v2706, %v2708
        %v2717 = vmax.f32 %v2709, 0.0
        %v2718 = vmax.f32 %v2710, 0.0
        %v2719 = vmax.f32 %v2711, 0.0
        %v2720 = vmax.f32 %v2712, 0.0
        %v2721 = vmax.f32 %v2713, 0.0
        %v2722 = vmax.f32 %v2714, 0.0
        %v2723 = vmax.f32 %v2715, 0.0
        %v2724 = vmax.f32 %v2716, 0.0
        %v2725 = vstv %s2675
        %v2726 = vmul.f32 %v2725, %v2717
        %v2727 = vmul.f32 %v2725, %v2718
        %v2728 = vmul.f32 %v2725, %v2719
        %v2729 = vmul.f32 %v2725, %v2720
        %v2730 = vmul.f32 %v2725, %v2721
        %v2731 = vmul.f32 %v2725, %v2722
        %v2732 = vmul.f32 %v2725, %v2723
        %v2733 = vmul.f32 %v2725, %v2724
        %v2734 = vadd.f32 %v2667, %v2726
        %v2735 = vadd.f32 %v2668, %v2727
        %v2736 = vadd.f32 %v2669, %v2728
        %v2737 = vadd.f32 %v2670, %v2729
        %v2738 = vadd.f32 %v2671, %v2730
        %v2739 = vadd.f32 %v2672, %v2731
        %v2740 = vadd.f32 %v2673, %v2732
        %v2741 = vadd.f32 %v2674, %v2733
        %s2742 = sld [smem:[#allocation2 + $0x83]]
        %2743 = vset.pattern.permute.xlu0 19
        %2744 = vperm.xlu0 %2743, %v841
        %v2745 = vpop.permute.xlu0 %2744
        %2747 = vset.pattern.permute.xlu0 19
        %2748 = vperm.xlu0 %2747, %v844
        %v2749 = vpop.permute.xlu0 %2748
        %2751 = vset.pattern.permute.xlu0 19
        %2752 = vperm.xlu0 %2751, %v847
        %v2753 = vpop.permute.xlu0 %2752
        %2755 = vset.pattern.permute.xlu0 19
        %2756 = vperm.xlu0 %2755, %v850
        %v2757 = vpop.permute.xlu0 %2756
        %2759 = vset.pattern.permute.xlu0 19
        %2760 = vperm.xlu0 %2759, %v853
        %v2761 = vpop.permute.xlu0 %2760
        %2763 = vset.pattern.permute.xlu0 19
        %2764 = vperm.xlu0 %2763, %v856
        %v2765 = vpop.permute.xlu0 %2764
        %2767 = vset.pattern.permute.xlu0 19
        %2768 = vperm.xlu0 %2767, %v859
        %v2769 = vpop.permute.xlu0 %2768
        %2771 = vset.pattern.permute.xlu0 19
        %2772 = vperm.xlu0 %2771, %v862
        %v2773 = vpop.permute.xlu0 %2772
        %v2775 = vperm.slane %v882, 3
        %v2776 = vadd.f32 %v2745, %v2775
        %v2777 = vadd.f32 %v2749, %v2775
        %v2778 = vadd.f32 %v2753, %v2775
        %v2779 = vadd.f32 %v2757, %v2775
        %v2780 = vadd.f32 %v2761, %v2775
        %v2781 = vadd.f32 %v2765, %v2775
        %v2782 = vadd.f32 %v2769, %v2775
        %v2783 = vadd.f32 %v2773, %v2775
        %v2784 = vmax.f32 %v2776, 0.0
        %v2785 = vmax.f32 %v2777, 0.0
        %v2786 = vmax.f32 %v2778, 0.0
        %v2787 = vmax.f32 %v2779, 0.0
        %v2788 = vmax.f32 %v2780, 0.0
        %v2789 = vmax.f32 %v2781, 0.0
        %v2790 = vmax.f32 %v2782, 0.0
        %v2791 = vmax.f32 %v2783, 0.0
        %v2792 = vstv %s2742
        %v2793 = vmul.f32 %v2792, %v2784
        %v2794 = vmul.f32 %v2792, %v2785
        %v2795 = vmul.f32 %v2792, %v2786
        %v2796 = vmul.f32 %v2792, %v2787
        %v2797 = vmul.f32 %v2792, %v2788
        %v2798 = vmul.f32 %v2792, %v2789
        %v2799 = vmul.f32 %v2792, %v2790
        %v2800 = vmul.f32 %v2792, %v2791
        %v2801 = vadd.f32 %v2734, %v2793
        %v2802 = vadd.f32 %v2735, %v2794
        %v2803 = vadd.f32 %v2736, %v2795
        %v2804 = vadd.f32 %v2737, %v2796
        %v2805 = vadd.f32 %v2738, %v2797
        %v2806 = vadd.f32 %v2739, %v2798
        %v2807 = vadd.f32 %v2740, %v2799
        %v2808 = vadd.f32 %v2741, %v2800
        %s2809 = sld [smem:[#allocation2 + $0x84]]
        %2810 = vset.pattern.permute.xlu0 20
        %2811 = vperm.xlu0 %2810, %v841
        %v2812 = vpop.permute.xlu0 %2811
        %2814 = vset.pattern.permute.xlu0 20
        %2815 = vperm.xlu0 %2814, %v844
        %v2816 = vpop.permute.xlu0 %2815
        %2818 = vset.pattern.permute.xlu0 20
        %2819 = vperm.xlu0 %2818, %v847
        %v2820 = vpop.permute.xlu0 %2819
        %2822 = vset.pattern.permute.xlu0 20
        %2823 = vperm.xlu0 %2822, %v850
        %v2824 = vpop.permute.xlu0 %2823
        %2826 = vset.pattern.permute.xlu0 20
        %2827 = vperm.xlu0 %2826, %v853
        %v2828 = vpop.permute.xlu0 %2827
        %2830 = vset.pattern.permute.xlu0 20
        %2831 = vperm.xlu0 %2830, %v856
        %v2832 = vpop.permute.xlu0 %2831
        %2834 = vset.pattern.permute.xlu0 20
        %2835 = vperm.xlu0 %2834, %v859
        %v2836 = vpop.permute.xlu0 %2835
        %2838 = vset.pattern.permute.xlu0 20
        %2839 = vperm.xlu0 %2838, %v862
        %v2840 = vpop.permute.xlu0 %2839
        %v2842 = vperm.slane %v882, 4
        %v2843 = vadd.f32 %v2812, %v2842
        %v2844 = vadd.f32 %v2816, %v2842
        %v2845 = vadd.f32 %v2820, %v2842
        %v2846 = vadd.f32 %v2824, %v2842
        %v2847 = vadd.f32 %v2828, %v2842
        %v2848 = vadd.f32 %v2832, %v2842
        %v2849 = vadd.f32 %v2836, %v2842
        %v2850 = vadd.f32 %v2840, %v2842
        %v2851 = vmax.f32 %v2843, 0.0
        %v2852 = vmax.f32 %v2844, 0.0
        %v2853 = vmax.f32 %v2845, 0.0
        %v2854 = vmax.f32 %v2846, 0.0
        %v2855 = vmax.f32 %v2847, 0.0
        %v2856 = vmax.f32 %v2848, 0.0
        %v2857 = vmax.f32 %v2849, 0.0
        %v2858 = vmax.f32 %v2850, 0.0
        %v2859 = vstv %s2809
        %v2860 = vmul.f32 %v2859, %v2851
        %v2861 = vmul.f32 %v2859, %v2852
        %v2862 = vmul.f32 %v2859, %v2853
        %v2863 = vmul.f32 %v2859, %v2854
        %v2864 = vmul.f32 %v2859, %v2855
        %v2865 = vmul.f32 %v2859, %v2856
        %v2866 = vmul.f32 %v2859, %v2857
        %v2867 = vmul.f32 %v2859, %v2858
        %v2868 = vadd.f32 %v2801, %v2860
        %v2869 = vadd.f32 %v2802, %v2861
        %v2870 = vadd.f32 %v2803, %v2862
        %v2871 = vadd.f32 %v2804, %v2863
        %v2872 = vadd.f32 %v2805, %v2864
        %v2873 = vadd.f32 %v2806, %v2865
        %v2874 = vadd.f32 %v2807, %v2866
        %v2875 = vadd.f32 %v2808, %v2867
        %s2876 = sld [smem:[#allocation2 + $0x85]]
        %2877 = vset.pattern.permute.xlu0 21
        %2878 = vperm.xlu0 %2877, %v841
        %v2879 = vpop.permute.xlu0 %2878
        %2881 = vset.pattern.permute.xlu0 21
        %2882 = vperm.xlu0 %2881, %v844
        %v2883 = vpop.permute.xlu0 %2882
        %2885 = vset.pattern.permute.xlu0 21
        %2886 = vperm.xlu0 %2885, %v847
        %v2887 = vpop.permute.xlu0 %2886
        %2889 = vset.pattern.permute.xlu0 21
        %2890 = vperm.xlu0 %2889, %v850
        %v2891 = vpop.permute.xlu0 %2890
        %2893 = vset.pattern.permute.xlu0 21
        %2894 = vperm.xlu0 %2893, %v853
        %v2895 = vpop.permute.xlu0 %2894
        %2897 = vset.pattern.permute.xlu0 21
        %2898 = vperm.xlu0 %2897, %v856
        %v2899 = vpop.permute.xlu0 %2898
        %2901 = vset.pattern.permute.xlu0 21
        %2902 = vperm.xlu0 %2901, %v859
        %v2903 = vpop.permute.xlu0 %2902
        %2905 = vset.pattern.permute.xlu0 21
        %2906 = vperm.xlu0 %2905, %v862
        %v2907 = vpop.permute.xlu0 %2906
        %v2909 = vperm.slane %v882, 5
        %v2910 = vadd.f32 %v2879, %v2909
        %v2911 = vadd.f32 %v2883, %v2909
        %v2912 = vadd.f32 %v2887, %v2909
        %v2913 = vadd.f32 %v2891, %v2909
        %v2914 = vadd.f32 %v2895, %v2909
        %v2915 = vadd.f32 %v2899, %v2909
        %v2916 = vadd.f32 %v2903, %v2909
        %v2917 = vadd.f32 %v2907, %v2909
        %v2918 = vmax.f32 %v2910, 0.0
        %v2919 = vmax.f32 %v2911, 0.0
        %v2920 = vmax.f32 %v2912, 0.0
        %v2921 = vmax.f32 %v2913, 0.0
        %v2922 = vmax.f32 %v2914, 0.0
        %v2923 = vmax.f32 %v2915, 0.0
        %v2924 = vmax.f32 %v2916, 0.0
        %v2925 = vmax.f32 %v2917, 0.0
        %v2926 = vstv %s2876
        %v2927 = vmul.f32 %v2926, %v2918
        %v2928 = vmul.f32 %v2926, %v2919
        %v2929 = vmul.f32 %v2926, %v2920
        %v2930 = vmul.f32 %v2926, %v2921
        %v2931 = vmul.f32 %v2926, %v2922
        %v2932 = vmul.f32 %v2926, %v2923
        %v2933 = vmul.f32 %v2926, %v2924
        %v2934 = vmul.f32 %v2926, %v2925
        %v2935 = vadd.f32 %v2868, %v2927
        %v2936 = vadd.f32 %v2869, %v2928
        %v2937 = vadd.f32 %v2870, %v2929
        %v2938 = vadd.f32 %v2871, %v2930
        %v2939 = vadd.f32 %v2872, %v2931
        %v2940 = vadd.f32 %v2873, %v2932
        %v2941 = vadd.f32 %v2874, %v2933
        %v2942 = vadd.f32 %v2875, %v2934
        %s2943 = sld [smem:[#allocation2 + $0x86]]
        %2944 = vset.pattern.permute.xlu0 22
        %2945 = vperm.xlu0 %2944, %v841
        %v2946 = vpop.permute.xlu0 %2945
        %2948 = vset.pattern.permute.xlu0 22
        %2949 = vperm.xlu0 %2948, %v844
        %v2950 = vpop.permute.xlu0 %2949
        %2952 = vset.pattern.permute.xlu0 22
        %2953 = vperm.xlu0 %2952, %v847
        %v2954 = vpop.permute.xlu0 %2953
        %2956 = vset.pattern.permute.xlu0 22
        %2957 = vperm.xlu0 %2956, %v850
        %v2958 = vpop.permute.xlu0 %2957
        %2960 = vset.pattern.permute.xlu0 22
        %2961 = vperm.xlu0 %2960, %v853
        %v2962 = vpop.permute.xlu0 %2961
        %2964 = vset.pattern.permute.xlu0 22
        %2965 = vperm.xlu0 %2964, %v856
        %v2966 = vpop.permute.xlu0 %2965
        %2968 = vset.pattern.permute.xlu0 22
        %2969 = vperm.xlu0 %2968, %v859
        %v2970 = vpop.permute.xlu0 %2969
        %2972 = vset.pattern.permute.xlu0 22
        %2973 = vperm.xlu0 %2972, %v862
        %v2974 = vpop.permute.xlu0 %2973
        %v2976 = vperm.slane %v882, 6
        %v2977 = vadd.f32 %v2946, %v2976
        %v2978 = vadd.f32 %v2950, %v2976
        %v2979 = vadd.f32 %v2954, %v2976
        %v2980 = vadd.f32 %v2958, %v2976
        %v2981 = vadd.f32 %v2962, %v2976
        %v2982 = vadd.f32 %v2966, %v2976
        %v2983 = vadd.f32 %v2970, %v2976
        %v2984 = vadd.f32 %v2974, %v2976
        %v2985 = vmax.f32 %v2977, 0.0
        %v2986 = vmax.f32 %v2978, 0.0
        %v2987 = vmax.f32 %v2979, 0.0
        %v2988 = vmax.f32 %v2980, 0.0
        %v2989 = vmax.f32 %v2981, 0.0
        %v2990 = vmax.f32 %v2982, 0.0
        %v2991 = vmax.f32 %v2983, 0.0
        %v2992 = vmax.f32 %v2984, 0.0
        %v2993 = vstv %s2943
        %v2994 = vmul.f32 %v2993, %v2985
        %v2995 = vmul.f32 %v2993, %v2986
        %v2996 = vmul.f32 %v2993, %v2987
        %v2997 = vmul.f32 %v2993, %v2988
        %v2998 = vmul.f32 %v2993, %v2989
        %v2999 = vmul.f32 %v2993, %v2990
        %v3000 = vmul.f32 %v2993, %v2991
        %v3001 = vmul.f32 %v2993, %v2992
        %v3002 = vadd.f32 %v2935, %v2994
        %v3003 = vadd.f32 %v2936, %v2995
        %v3004 = vadd.f32 %v2937, %v2996
        %v3005 = vadd.f32 %v2938, %v2997
        %v3006 = vadd.f32 %v2939, %v2998
        %v3007 = vadd.f32 %v2940, %v2999
        %v3008 = vadd.f32 %v2941, %v3000
        %v3009 = vadd.f32 %v2942, %v3001
        %s3010 = sld [smem:[#allocation2 + $0x87]]
        %3011 = vset.pattern.permute.xlu0 23
        %3012 = vperm.xlu0 %3011, %v841
        %v3013 = vpop.permute.xlu0 %3012
        %3015 = vset.pattern.permute.xlu0 23
        %3016 = vperm.xlu0 %3015, %v844
        %v3017 = vpop.permute.xlu0 %3016
        %3019 = vset.pattern.permute.xlu0 23
        %3020 = vperm.xlu0 %3019, %v847
        %v3021 = vpop.permute.xlu0 %3020
        %3023 = vset.pattern.permute.xlu0 23
        %3024 = vperm.xlu0 %3023, %v850
        %v3025 = vpop.permute.xlu0 %3024
        %3027 = vset.pattern.permute.xlu0 23
        %3028 = vperm.xlu0 %3027, %v853
        %v3029 = vpop.permute.xlu0 %3028
        %3031 = vset.pattern.permute.xlu0 23
        %3032 = vperm.xlu0 %3031, %v856
        %v3033 = vpop.permute.xlu0 %3032
        %3035 = vset.pattern.permute.xlu0 23
        %3036 = vperm.xlu0 %3035, %v859
        %v3037 = vpop.permute.xlu0 %3036
        %3039 = vset.pattern.permute.xlu0 23
        %3040 = vperm.xlu0 %3039, %v862
        %v3041 = vpop.permute.xlu0 %3040
        %v3043 = vperm.slane %v882, 7
        %v3044 = vadd.f32 %v3013, %v3043
        %v3045 = vadd.f32 %v3017, %v3043
        %v3046 = vadd.f32 %v3021, %v3043
        %v3047 = vadd.f32 %v3025, %v3043
        %v3048 = vadd.f32 %v3029, %v3043
        %v3049 = vadd.f32 %v3033, %v3043
        %v3050 = vadd.f32 %v3037, %v3043
        %v3051 = vadd.f32 %v3041, %v3043
        %v3052 = vmax.f32 %v3044, 0.0
        %v3053 = vmax.f32 %v3045, 0.0
        %v3054 = vmax.f32 %v3046, 0.0
        %v3055 = vmax.f32 %v3047, 0.0
        %v3056 = vmax.f32 %v3048, 0.0
        %v3057 = vmax.f32 %v3049, 0.0
        %v3058 = vmax.f32 %v3050, 0.0
        %v3059 = vmax.f32 %v3051, 0.0
        %v3060 = vstv %s3010
        %v3061 = vmul.f32 %v3060, %v3052
        %v3062 = vmul.f32 %v3060, %v3053
        %v3063 = vmul.f32 %v3060, %v3054
        %v3064 = vmul.f32 %v3060, %v3055
        %v3065 = vmul.f32 %v3060, %v3056
        %v3066 = vmul.f32 %v3060, %v3057
        %v3067 = vmul.f32 %v3060, %v3058
        %v3068 = vmul.f32 %v3060, %v3059
        %v3069 = vadd.f32 %v3002, %v3061
        %v3070 = vadd.f32 %v3003, %v3062
        %v3071 = vadd.f32 %v3004, %v3063
        %v3072 = vadd.f32 %v3005, %v3064
        %v3073 = vadd.f32 %v3006, %v3065
        %v3074 = vadd.f32 %v3007, %v3066
        %v3075 = vadd.f32 %v3008, %v3067
        %v3076 = vadd.f32 %v3009, %v3068
        %s3077 = sld [smem:[#allocation2 + $0x88]]
        %3078 = vset.pattern.permute.xlu0 24
        %3079 = vperm.xlu0 %3078, %v841
        %v3080 = vpop.permute.xlu0 %3079
        %3082 = vset.pattern.permute.xlu0 24
        %3083 = vperm.xlu0 %3082, %v844
        %v3084 = vpop.permute.xlu0 %3083
        %3086 = vset.pattern.permute.xlu0 24
        %3087 = vperm.xlu0 %3086, %v847
        %v3088 = vpop.permute.xlu0 %3087
        %3090 = vset.pattern.permute.xlu0 24
        %3091 = vperm.xlu0 %3090, %v850
        %v3092 = vpop.permute.xlu0 %3091
        %3094 = vset.pattern.permute.xlu0 24
        %3095 = vperm.xlu0 %3094, %v853
        %v3096 = vpop.permute.xlu0 %3095
        %3098 = vset.pattern.permute.xlu0 24
        %3099 = vperm.xlu0 %3098, %v856
        %v3100 = vpop.permute.xlu0 %3099
        %3102 = vset.pattern.permute.xlu0 24
        %3103 = vperm.xlu0 %3102, %v859
        %v3104 = vpop.permute.xlu0 %3103
        %3106 = vset.pattern.permute.xlu0 24
        %3107 = vperm.xlu0 %3106, %v862
        %v3108 = vpop.permute.xlu0 %3107
        %v3110 = vperm.slane %v883, 0
        %v3111 = vadd.f32 %v3080, %v3110
        %v3112 = vadd.f32 %v3084, %v3110
        %v3113 = vadd.f32 %v3088, %v3110
        %v3114 = vadd.f32 %v3092, %v3110
        %v3115 = vadd.f32 %v3096, %v3110
        %v3116 = vadd.f32 %v3100, %v3110
        %v3117 = vadd.f32 %v3104, %v3110
        %v3118 = vadd.f32 %v3108, %v3110
        %v3119 = vmax.f32 %v3111, 0.0
        %v3120 = vmax.f32 %v3112, 0.0
        %v3121 = vmax.f32 %v3113, 0.0
        %v3122 = vmax.f32 %v3114, 0.0
        %v3123 = vmax.f32 %v3115, 0.0
        %v3124 = vmax.f32 %v3116, 0.0
        %v3125 = vmax.f32 %v3117, 0.0
        %v3126 = vmax.f32 %v3118, 0.0
        %v3127 = vstv %s3077
        %v3128 = vmul.f32 %v3127, %v3119
        %v3129 = vmul.f32 %v3127, %v3120
        %v3130 = vmul.f32 %v3127, %v3121
        %v3131 = vmul.f32 %v3127, %v3122
        %v3132 = vmul.f32 %v3127, %v3123
        %v3133 = vmul.f32 %v3127, %v3124
        %v3134 = vmul.f32 %v3127, %v3125
        %v3135 = vmul.f32 %v3127, %v3126
        %v3136 = vadd.f32 %v3069, %v3128
        %v3137 = vadd.f32 %v3070, %v3129
        %v3138 = vadd.f32 %v3071, %v3130
        %v3139 = vadd.f32 %v3072, %v3131
        %v3140 = vadd.f32 %v3073, %v3132
        %v3141 = vadd.f32 %v3074, %v3133
        %v3142 = vadd.f32 %v3075, %v3134
        %v3143 = vadd.f32 %v3076, %v3135
        %s3144 = sld [smem:[#allocation2 + $0x89]]
        %3145 = vset.pattern.permute.xlu0 25
        %3146 = vperm.xlu0 %3145, %v841
        %v3147 = vpop.permute.xlu0 %3146
        %3149 = vset.pattern.permute.xlu0 25
        %3150 = vperm.xlu0 %3149, %v844
        %v3151 = vpop.permute.xlu0 %3150
        %3153 = vset.pattern.permute.xlu0 25
        %3154 = vperm.xlu0 %3153, %v847
        %v3155 = vpop.permute.xlu0 %3154
        %3157 = vset.pattern.permute.xlu0 25
        %3158 = vperm.xlu0 %3157, %v850
        %v3159 = vpop.permute.xlu0 %3158
        %3161 = vset.pattern.permute.xlu0 25
        %3162 = vperm.xlu0 %3161, %v853
        %v3163 = vpop.permute.xlu0 %3162
        %3165 = vset.pattern.permute.xlu0 25
        %3166 = vperm.xlu0 %3165, %v856
        %v3167 = vpop.permute.xlu0 %3166
        %3169 = vset.pattern.permute.xlu0 25
        %3170 = vperm.xlu0 %3169, %v859
        %v3171 = vpop.permute.xlu0 %3170
        %3173 = vset.pattern.permute.xlu0 25
        %3174 = vperm.xlu0 %3173, %v862
        %v3175 = vpop.permute.xlu0 %3174
        %v3177 = vperm.slane %v883, 1
        %v3178 = vadd.f32 %v3147, %v3177
        %v3179 = vadd.f32 %v3151, %v3177
        %v3180 = vadd.f32 %v3155, %v3177
        %v3181 = vadd.f32 %v3159, %v3177
        %v3182 = vadd.f32 %v3163, %v3177
        %v3183 = vadd.f32 %v3167, %v3177
        %v3184 = vadd.f32 %v3171, %v3177
        %v3185 = vadd.f32 %v3175, %v3177
        %v3186 = vmax.f32 %v3178, 0.0
        %v3187 = vmax.f32 %v3179, 0.0
        %v3188 = vmax.f32 %v3180, 0.0
        %v3189 = vmax.f32 %v3181, 0.0
        %v3190 = vmax.f32 %v3182, 0.0
        %v3191 = vmax.f32 %v3183, 0.0
        %v3192 = vmax.f32 %v3184, 0.0
        %v3193 = vmax.f32 %v3185, 0.0
        %v3194 = vstv %s3144
        %v3195 = vmul.f32 %v3194, %v3186
        %v3196 = vmul.f32 %v3194, %v3187
        %v3197 = vmul.f32 %v3194, %v3188
        %v3198 = vmul.f32 %v3194, %v3189
        %v3199 = vmul.f32 %v3194, %v3190
        %v3200 = vmul.f32 %v3194, %v3191
        %v3201 = vmul.f32 %v3194, %v3192
        %v3202 = vmul.f32 %v3194, %v3193
        %v3203 = vadd.f32 %v3136, %v3195
        %v3204 = vadd.f32 %v3137, %v3196
        %v3205 = vadd.f32 %v3138, %v3197
        %v3206 = vadd.f32 %v3139, %v3198
        %v3207 = vadd.f32 %v3140, %v3199
        %v3208 = vadd.f32 %v3141, %v3200
        %v3209 = vadd.f32 %v3142, %v3201
        %v3210 = vadd.f32 %v3143, %v3202
        %s3211 = sld [smem:[#allocation2 + $0x8a]]
        %3212 = vset.pattern.permute.xlu0 26
        %3213 = vperm.xlu0 %3212, %v841
        %v3214 = vpop.permute.xlu0 %3213
        %3216 = vset.pattern.permute.xlu0 26
        %3217 = vperm.xlu0 %3216, %v844
        %v3218 = vpop.permute.xlu0 %3217
        %3220 = vset.pattern.permute.xlu0 26
        %3221 = vperm.xlu0 %3220, %v847
        %v3222 = vpop.permute.xlu0 %3221
        %3224 = vset.pattern.permute.xlu0 26
        %3225 = vperm.xlu0 %3224, %v850
        %v3226 = vpop.permute.xlu0 %3225
        %3228 = vset.pattern.permute.xlu0 26
        %3229 = vperm.xlu0 %3228, %v853
        %v3230 = vpop.permute.xlu0 %3229
        %3232 = vset.pattern.permute.xlu0 26
        %3233 = vperm.xlu0 %3232, %v856
        %v3234 = vpop.permute.xlu0 %3233
        %3236 = vset.pattern.permute.xlu0 26
        %3237 = vperm.xlu0 %3236, %v859
        %v3238 = vpop.permute.xlu0 %3237
        %3240 = vset.pattern.permute.xlu0 26
        %3241 = vperm.xlu0 %3240, %v862
        %v3242 = vpop.permute.xlu0 %3241
        %v3244 = vperm.slane %v883, 2
        %v3245 = vadd.f32 %v3214, %v3244
        %v3246 = vadd.f32 %v3218, %v3244
        %v3247 = vadd.f32 %v3222, %v3244
        %v3248 = vadd.f32 %v3226, %v3244
        %v3249 = vadd.f32 %v3230, %v3244
        %v3250 = vadd.f32 %v3234, %v3244
        %v3251 = vadd.f32 %v3238, %v3244
        %v3252 = vadd.f32 %v3242, %v3244
        %v3253 = vmax.f32 %v3245, 0.0
        %v3254 = vmax.f32 %v3246, 0.0
        %v3255 = vmax.f32 %v3247, 0.0
        %v3256 = vmax.f32 %v3248, 0.0
        %v3257 = vmax.f32 %v3249, 0.0
        %v3258 = vmax.f32 %v3250, 0.0
        %v3259 = vmax.f32 %v3251, 0.0
        %v3260 = vmax.f32 %v3252, 0.0
        %v3261 = vstv %s3211
        %v3262 = vmul.f32 %v3261, %v3253
        %v3263 = vmul.f32 %v3261, %v3254
        %v3264 = vmul.f32 %v3261, %v3255
        %v3265 = vmul.f32 %v3261, %v3256
        %v3266 = vmul.f32 %v3261, %v3257
        %v3267 = vmul.f32 %v3261, %v3258
        %v3268 = vmul.f32 %v3261, %v3259
        %v3269 = vmul.f32 %v3261, %v3260
        %v3270 = vadd.f32 %v3203, %v3262
        %v3271 = vadd.f32 %v3204, %v3263
        %v3272 = vadd.f32 %v3205, %v3264
        %v3273 = vadd.f32 %v3206, %v3265
        %v3274 = vadd.f32 %v3207, %v3266
        %v3275 = vadd.f32 %v3208, %v3267
        %v3276 = vadd.f32 %v3209, %v3268
        %v3277 = vadd.f32 %v3210, %v3269
        %s3278 = sld [smem:[#allocation2 + $0x8b]]
        %3279 = vset.pattern.permute.xlu0 27
        %3280 = vperm.xlu0 %3279, %v841
        %v3281 = vpop.permute.xlu0 %3280
        %3283 = vset.pattern.permute.xlu0 27
        %3284 = vperm.xlu0 %3283, %v844
        %v3285 = vpop.permute.xlu0 %3284
        %3287 = vset.pattern.permute.xlu0 27
        %3288 = vperm.xlu0 %3287, %v847
        %v3289 = vpop.permute.xlu0 %3288
        %3291 = vset.pattern.permute.xlu0 27
        %3292 = vperm.xlu0 %3291, %v850
        %v3293 = vpop.permute.xlu0 %3292
        %3295 = vset.pattern.permute.xlu0 27
        %3296 = vperm.xlu0 %3295, %v853
        %v3297 = vpop.permute.xlu0 %3296
        %3299 = vset.pattern.permute.xlu0 27
        %3300 = vperm.xlu0 %3299, %v856
        %v3301 = vpop.permute.xlu0 %3300
        %3303 = vset.pattern.permute.xlu0 27
        %3304 = vperm.xlu0 %3303, %v859
        %v3305 = vpop.permute.xlu0 %3304
        %3307 = vset.pattern.permute.xlu0 27
        %3308 = vperm.xlu0 %3307, %v862
        %v3309 = vpop.permute.xlu0 %3308
        %v3311 = vperm.slane %v883, 3
        %v3312 = vadd.f32 %v3281, %v3311
        %v3313 = vadd.f32 %v3285, %v3311
        %v3314 = vadd.f32 %v3289, %v3311
        %v3315 = vadd.f32 %v3293, %v3311
        %v3316 = vadd.f32 %v3297, %v3311
        %v3317 = vadd.f32 %v3301, %v3311
        %v3318 = vadd.f32 %v3305, %v3311
        %v3319 = vadd.f32 %v3309, %v3311
        %v3320 = vmax.f32 %v3312, 0.0
        %v3321 = vmax.f32 %v3313, 0.0
        %v3322 = vmax.f32 %v3314, 0.0
        %v3323 = vmax.f32 %v3315, 0.0
        %v3324 = vmax.f32 %v3316, 0.0
        %v3325 = vmax.f32 %v3317, 0.0
        %v3326 = vmax.f32 %v3318, 0.0
        %v3327 = vmax.f32 %v3319, 0.0
        %v3328 = vstv %s3278
        %v3329 = vmul.f32 %v3328, %v3320
        %v3330 = vmul.f32 %v3328, %v3321
        %v3331 = vmul.f32 %v3328, %v3322
        %v3332 = vmul.f32 %v3328, %v3323
        %v3333 = vmul.f32 %v3328, %v3324
        %v3334 = vmul.f32 %v3328, %v3325
        %v3335 = vmul.f32 %v3328, %v3326
        %v3336 = vmul.f32 %v3328, %v3327
        %v3337 = vadd.f32 %v3270, %v3329
        %v3338 = vadd.f32 %v3271, %v3330
        %v3339 = vadd.f32 %v3272, %v3331
        %v3340 = vadd.f32 %v3273, %v3332
        %v3341 = vadd.f32 %v3274, %v3333
        %v3342 = vadd.f32 %v3275, %v3334
        %v3343 = vadd.f32 %v3276, %v3335
        %v3344 = vadd.f32 %v3277, %v3336
        %s3345 = sld [smem:[#allocation2 + $0x8c]]
        %3346 = vset.pattern.permute.xlu0 28
        %3347 = vperm.xlu0 %3346, %v841
        %v3348 = vpop.permute.xlu0 %3347
        %3350 = vset.pattern.permute.xlu0 28
        %3351 = vperm.xlu0 %3350, %v844
        %v3352 = vpop.permute.xlu0 %3351
        %3354 = vset.pattern.permute.xlu0 28
        %3355 = vperm.xlu0 %3354, %v847
        %v3356 = vpop.permute.xlu0 %3355
        %3358 = vset.pattern.permute.xlu0 28
        %3359 = vperm.xlu0 %3358, %v850
        %v3360 = vpop.permute.xlu0 %3359
        %3362 = vset.pattern.permute.xlu0 28
        %3363 = vperm.xlu0 %3362, %v853
        %v3364 = vpop.permute.xlu0 %3363
        %3366 = vset.pattern.permute.xlu0 28
        %3367 = vperm.xlu0 %3366, %v856
        %v3368 = vpop.permute.xlu0 %3367
        %3370 = vset.pattern.permute.xlu0 28
        %3371 = vperm.xlu0 %3370, %v859
        %v3372 = vpop.permute.xlu0 %3371
        %3374 = vset.pattern.permute.xlu0 28
        %3375 = vperm.xlu0 %3374, %v862
        %v3376 = vpop.permute.xlu0 %3375
        %v3378 = vperm.slane %v883, 4
        %v3379 = vadd.f32 %v3348, %v3378
        %v3380 = vadd.f32 %v3352, %v3378
        %v3381 = vadd.f32 %v3356, %v3378
        %v3382 = vadd.f32 %v3360, %v3378
        %v3383 = vadd.f32 %v3364, %v3378
        %v3384 = vadd.f32 %v3368, %v3378
        %v3385 = vadd.f32 %v3372, %v3378
        %v3386 = vadd.f32 %v3376, %v3378
        %v3387 = vmax.f32 %v3379, 0.0
        %v3388 = vmax.f32 %v3380, 0.0
        %v3389 = vmax.f32 %v3381, 0.0
        %v3390 = vmax.f32 %v3382, 0.0
        %v3391 = vmax.f32 %v3383, 0.0
        %v3392 = vmax.f32 %v3384, 0.0
        %v3393 = vmax.f32 %v3385, 0.0
        %v3394 = vmax.f32 %v3386, 0.0
        %v3395 = vstv %s3345
        %v3396 = vmul.f32 %v3395, %v3387
        %v3397 = vmul.f32 %v3395, %v3388
        %v3398 = vmul.f32 %v3395, %v3389
        %v3399 = vmul.f32 %v3395, %v3390
        %v3400 = vmul.f32 %v3395, %v3391
        %v3401 = vmul.f32 %v3395, %v3392
        %v3402 = vmul.f32 %v3395, %v3393
        %v3403 = vmul.f32 %v3395, %v3394
        %v3404 = vadd.f32 %v3337, %v3396
        %v3405 = vadd.f32 %v3338, %v3397
        %v3406 = vadd.f32 %v3339, %v3398
        %v3407 = vadd.f32 %v3340, %v3399
        %v3408 = vadd.f32 %v3341, %v3400
        %v3409 = vadd.f32 %v3342, %v3401
        %v3410 = vadd.f32 %v3343, %v3402
        %v3411 = vadd.f32 %v3344, %v3403
        %s3412 = sld [smem:[#allocation2 + $0x8d]]
        %3413 = vset.pattern.permute.xlu0 29
        %3414 = vperm.xlu0 %3413, %v841
        %v3415 = vpop.permute.xlu0 %3414
        %3417 = vset.pattern.permute.xlu0 29
        %3418 = vperm.xlu0 %3417, %v844
        %v3419 = vpop.permute.xlu0 %3418
        %3421 = vset.pattern.permute.xlu0 29
        %3422 = vperm.xlu0 %3421, %v847
        %v3423 = vpop.permute.xlu0 %3422
        %3425 = vset.pattern.permute.xlu0 29
        %3426 = vperm.xlu0 %3425, %v850
        %v3427 = vpop.permute.xlu0 %3426
        %3429 = vset.pattern.permute.xlu0 29
        %3430 = vperm.xlu0 %3429, %v853
        %v3431 = vpop.permute.xlu0 %3430
        %3433 = vset.pattern.permute.xlu0 29
        %3434 = vperm.xlu0 %3433, %v856
        %v3435 = vpop.permute.xlu0 %3434
        %3437 = vset.pattern.permute.xlu0 29
        %3438 = vperm.xlu0 %3437, %v859
        %v3439 = vpop.permute.xlu0 %3438
        %3441 = vset.pattern.permute.xlu0 29
        %3442 = vperm.xlu0 %3441, %v862
        %v3443 = vpop.permute.xlu0 %3442
        %v3445 = vperm.slane %v883, 5
        %v3446 = vadd.f32 %v3415, %v3445
        %v3447 = vadd.f32 %v3419, %v3445
        %v3448 = vadd.f32 %v3423, %v3445
        %v3449 = vadd.f32 %v3427, %v3445
        %v3450 = vadd.f32 %v3431, %v3445
        %v3451 = vadd.f32 %v3435, %v3445
        %v3452 = vadd.f32 %v3439, %v3445
        %v3453 = vadd.f32 %v3443, %v3445
        %v3454 = vmax.f32 %v3446, 0.0
        %v3455 = vmax.f32 %v3447, 0.0
        %v3456 = vmax.f32 %v3448, 0.0
        %v3457 = vmax.f32 %v3449, 0.0
        %v3458 = vmax.f32 %v3450, 0.0
        %v3459 = vmax.f32 %v3451, 0.0
        %v3460 = vmax.f32 %v3452, 0.0
        %v3461 = vmax.f32 %v3453, 0.0
        %v3462 = vstv %s3412
        %v3463 = vmul.f32 %v3462, %v3454
        %v3464 = vmul.f32 %v3462, %v3455
        %v3465 = vmul.f32 %v3462, %v3456
        %v3466 = vmul.f32 %v3462, %v3457
        %v3467 = vmul.f32 %v3462, %v3458
        %v3468 = vmul.f32 %v3462, %v3459
        %v3469 = vmul.f32 %v3462, %v3460
        %v3470 = vmul.f32 %v3462, %v3461
        %v3471 = vadd.f32 %v3404, %v3463
        %v3472 = vadd.f32 %v3405, %v3464
        %v3473 = vadd.f32 %v3406, %v3465
        %v3474 = vadd.f32 %v3407, %v3466
        %v3475 = vadd.f32 %v3408, %v3467
        %v3476 = vadd.f32 %v3409, %v3468
        %v3477 = vadd.f32 %v3410, %v3469
        %v3478 = vadd.f32 %v3411, %v3470
        %s3479 = sld [smem:[#allocation2 + $0x8e]]
        %3480 = vset.pattern.permute.xlu0 30
        %3481 = vperm.xlu0 %3480, %v841
        %v3482 = vpop.permute.xlu0 %3481
        %3484 = vset.pattern.permute.xlu0 30
        %3485 = vperm.xlu0 %3484, %v844
        %v3486 = vpop.permute.xlu0 %3485
        %3488 = vset.pattern.permute.xlu0 30
        %3489 = vperm.xlu0 %3488, %v847
        %v3490 = vpop.permute.xlu0 %3489
        %3492 = vset.pattern.permute.xlu0 30
        %3493 = vperm.xlu0 %3492, %v850
        %v3494 = vpop.permute.xlu0 %3493
        %3496 = vset.pattern.permute.xlu0 30
        %3497 = vperm.xlu0 %3496, %v853
        %v3498 = vpop.permute.xlu0 %3497
        %3500 = vset.pattern.permute.xlu0 30
        %3501 = vperm.xlu0 %3500, %v856
        %v3502 = vpop.permute.xlu0 %3501
        %3504 = vset.pattern.permute.xlu0 30
        %3505 = vperm.xlu0 %3504, %v859
        %v3506 = vpop.permute.xlu0 %3505
        %3508 = vset.pattern.permute.xlu0 30
        %3509 = vperm.xlu0 %3508, %v862
        %v3510 = vpop.permute.xlu0 %3509
        %v3512 = vperm.slane %v883, 6
        %v3513 = vadd.f32 %v3482, %v3512
        %v3514 = vadd.f32 %v3486, %v3512
        %v3515 = vadd.f32 %v3490, %v3512
        %v3516 = vadd.f32 %v3494, %v3512
        %v3517 = vadd.f32 %v3498, %v3512
        %v3518 = vadd.f32 %v3502, %v3512
        %v3519 = vadd.f32 %v3506, %v3512
        %v3520 = vadd.f32 %v3510, %v3512
        %v3521 = vmax.f32 %v3513, 0.0
        %v3522 = vmax.f32 %v3514, 0.0
        %v3523 = vmax.f32 %v3515, 0.0
        %v3524 = vmax.f32 %v3516, 0.0
        %v3525 = vmax.f32 %v3517, 0.0
        %v3526 = vmax.f32 %v3518, 0.0
        %v3527 = vmax.f32 %v3519, 0.0
        %v3528 = vmax.f32 %v3520, 0.0
        %v3529 = vstv %s3479
        %v3530 = vmul.f32 %v3529, %v3521
        %v3531 = vmul.f32 %v3529, %v3522
        %v3532 = vmul.f32 %v3529, %v3523
        %v3533 = vmul.f32 %v3529, %v3524
        %v3534 = vmul.f32 %v3529, %v3525
        %v3535 = vmul.f32 %v3529, %v3526
        %v3536 = vmul.f32 %v3529, %v3527
        %v3537 = vmul.f32 %v3529, %v3528
        %v3538 = vadd.f32 %v3471, %v3530
        %v3539 = vadd.f32 %v3472, %v3531
        %v3540 = vadd.f32 %v3473, %v3532
        %v3541 = vadd.f32 %v3474, %v3533
        %v3542 = vadd.f32 %v3475, %v3534
        %v3543 = vadd.f32 %v3476, %v3535
        %v3544 = vadd.f32 %v3477, %v3536
        %v3545 = vadd.f32 %v3478, %v3537
        %s3546 = sld [smem:[#allocation2 + $0x8f]]
        %3547 = vset.pattern.permute.xlu0 31
        %3548 = vperm.xlu0 %3547, %v841
        %v3549 = vpop.permute.xlu0 %3548
        %3551 = vset.pattern.permute.xlu0 31
        %3552 = vperm.xlu0 %3551, %v844
        %v3553 = vpop.permute.xlu0 %3552
        %3555 = vset.pattern.permute.xlu0 31
        %3556 = vperm.xlu0 %3555, %v847
        %v3557 = vpop.permute.xlu0 %3556
        %3559 = vset.pattern.permute.xlu0 31
        %3560 = vperm.xlu0 %3559, %v850
        %v3561 = vpop.permute.xlu0 %3560
        %3563 = vset.pattern.permute.xlu0 31
        %3564 = vperm.xlu0 %3563, %v853
        %v3565 = vpop.permute.xlu0 %3564
        %3567 = vset.pattern.permute.xlu0 31
        %3568 = vperm.xlu0 %3567, %v856
        %v3569 = vpop.permute.xlu0 %3568
        %3571 = vset.pattern.permute.xlu0 31
        %3572 = vperm.xlu0 %3571, %v859
        %v3573 = vpop.permute.xlu0 %3572
        %3575 = vset.pattern.permute.xlu0 31
        %3576 = vperm.xlu0 %3575, %v862
        %v3577 = vpop.permute.xlu0 %3576
        %v3579 = vperm.slane %v883, 7
        %v3580 = vadd.f32 %v3549, %v3579
        %v3581 = vadd.f32 %v3553, %v3579
        %v3582 = vadd.f32 %v3557, %v3579
        %v3583 = vadd.f32 %v3561, %v3579
        %v3584 = vadd.f32 %v3565, %v3579
        %v3585 = vadd.f32 %v3569, %v3579
        %v3586 = vadd.f32 %v3573, %v3579
        %v3587 = vadd.f32 %v3577, %v3579
        %v3588 = vmax.f32 %v3580, 0.0
        %v3589 = vmax.f32 %v3581, 0.0
        %v3590 = vmax.f32 %v3582, 0.0
        %v3591 = vmax.f32 %v3583, 0.0
        %v3592 = vmax.f32 %v3584, 0.0
        %v3593 = vmax.f32 %v3585, 0.0
        %v3594 = vmax.f32 %v3586, 0.0
        %v3595 = vmax.f32 %v3587, 0.0
        %v3596 = vstv %s3546
        %v3597 = vmul.f32 %v3596, %v3588
        %v3598 = vmul.f32 %v3596, %v3589
        %v3599 = vmul.f32 %v3596, %v3590
        %v3600 = vmul.f32 %v3596, %v3591
        %v3601 = vmul.f32 %v3596, %v3592
        %v3602 = vmul.f32 %v3596, %v3593
        %v3603 = vmul.f32 %v3596, %v3594
        %v3604 = vmul.f32 %v3596, %v3595
        %v3605 = vadd.f32 %v3538, %v3597
        %v3606 = vadd.f32 %v3539, %v3598
        %v3607 = vadd.f32 %v3540, %v3599
        %v3608 = vadd.f32 %v3541, %v3600
        %v3609 = vadd.f32 %v3542, %v3601
        %v3610 = vadd.f32 %v3543, %v3602
        %v3611 = vadd.f32 %v3544, %v3603
        %v3612 = vadd.f32 %v3545, %v3604
        %v3613 = vsel %vm1012, %v3605, -1e+30
        %v3614 = vsel %vm1013, %v3606, -1e+30
        %v3615 = vsel %vm1014, %v3607, -1e+30
        %v3616 = vsel %vm1015, %v3608, -1e+30
        %v3617 = vsel %vm1016, %v3609, -1e+30
        %v3618 = vsel %vm1017, %v3610, -1e+30
        %v3619 = vsel %vm1018, %v3611, -1e+30
        %v3620 = vsel %vm1019, %v3612, -1e+30
        %v3621 = vsel %vm2173, %v3613, -inf
        %3622 = vmax.xlane.f32.xlu0 %v3621
        %v3623 = vpop.xlane.xlu0 %3622
        %v3624 = vsel %vm2173, %v3614, -inf
        %3625 = vmax.xlane.f32.xlu0 %v3624
        %v3626 = vpop.xlane.xlu0 %3625
        %v3627 = vsel %vm2173, %v3615, -inf
        %3628 = vmax.xlane.f32.xlu0 %v3627
        %v3629 = vpop.xlane.xlu0 %3628
        %v3630 = vsel %vm2173, %v3616, -inf
        %3631 = vmax.xlane.f32.xlu0 %v3630
        %v3632 = vpop.xlane.xlu0 %3631
        %v3633 = vsel %vm2173, %v3617, -inf
        %3634 = vmax.xlane.f32.xlu0 %v3633
        %v3635 = vpop.xlane.xlu0 %3634
        %v3636 = vsel %vm2173, %v3618, -inf
        %3637 = vmax.xlane.f32.xlu0 %v3636
        %v3638 = vpop.xlane.xlu0 %3637
        %v3639 = vsel %vm2173, %v3619, -inf
        %3640 = vmax.xlane.f32.xlu0 %v3639
        %v3641 = vpop.xlane.xlu0 %3640
        %v3642 = vsel %vm2173, %v3620, -inf
        %3643 = vmax.xlane.f32.xlu0 %v3642
        %v3644 = vpop.xlane.xlu0 %3643
        %v3645 = vsub.f32 %v3613, %v3623
        %v3646 = vsub.f32 %v3614, %v3626
        %v3647 = vsub.f32 %v3615, %v3629
        %v3648 = vsub.f32 %v3616, %v3632
        %v3649 = vsub.f32 %v3617, %v3635
        %v3650 = vsub.f32 %v3618, %v3638
        %v3651 = vsub.f32 %v3619, %v3641
        %v3652 = vsub.f32 %v3620, %v3644
        %v3653 = vmul.f32 %v3645, 1.442695
        %v3654 = vpow.pop %v3653
        %v3655 = vmul.f32 %v3646, 1.442695
        %v3656 = vpow.pop %v3655
        %v3657 = vmul.f32 %v3647, 1.442695
        %v3658 = vpow.pop %v3657
        %v3659 = vmul.f32 %v3648, 1.442695
        %v3660 = vpow.pop %v3659
        %v3661 = vmul.f32 %v3649, 1.442695
        %v3662 = vpow.pop %v3661
        %v3663 = vmul.f32 %v3650, 1.442695
        %v3664 = vpow.pop %v3663
        %v3665 = vmul.f32 %v3651, 1.442695
        %v3666 = vpow.pop %v3665
        %v3667 = vmul.f32 %v3652, 1.442695
        %v3668 = vpow.pop %v3667
        %v3669 = vmul.f32 %v3654, %v1028
        %v3670 = vmul.f32 %v3656, %v1029
        %v3671 = vmul.f32 %v3658, %v1030
        %v3672 = vmul.f32 %v3660, %v1031
        %v3673 = vmul.f32 %v3662, %v1032
        %v3674 = vmul.f32 %v3664, %v1033
        %v3675 = vmul.f32 %v3666, %v1034
        %v3676 = vmul.f32 %v3668, %v1035
        %v3677 = vsel %vm2173, %v3669, 0.0
        %3678 = vadd.xlane.f32.xlu0 %v3677
        %v3679 = vpop.xlane.xlu0 %3678
        %v3680 = vsel %vm2173, %v3670, 0.0
        %3681 = vadd.xlane.f32.xlu0 %v3680
        %v3682 = vpop.xlane.xlu0 %3681
        %v3683 = vsel %vm2173, %v3671, 0.0
        %3684 = vadd.xlane.f32.xlu0 %v3683
        %v3685 = vpop.xlane.xlu0 %3684
        %v3686 = vsel %vm2173, %v3672, 0.0
        %3687 = vadd.xlane.f32.xlu0 %v3686
        %v3688 = vpop.xlane.xlu0 %3687
        %v3689 = vsel %vm2173, %v3673, 0.0
        %3690 = vadd.xlane.f32.xlu0 %v3689
        %v3691 = vpop.xlane.xlu0 %3690
        %v3692 = vsel %vm2173, %v3674, 0.0
        %3693 = vadd.xlane.f32.xlu0 %v3692
        %v3694 = vpop.xlane.xlu0 %3693
        %v3695 = vsel %vm2173, %v3675, 0.0
        %3696 = vadd.xlane.f32.xlu0 %v3695
        %v3697 = vpop.xlane.xlu0 %3696
        %v3698 = vsel %vm2173, %v3676, 0.0
        %3699 = vadd.xlane.f32.xlu0 %v3698
        %v3700 = vpop.xlane.xlu0 %3699
        %v3701 = vmax.f32 %v3679, 1e-16
        %v3702 = vmax.f32 %v3682, 1e-16
        %v3703 = vmax.f32 %v3685, 1e-16
        %v3704 = vmax.f32 %v3688, 1e-16
        %v3705 = vmax.f32 %v3691, 1e-16
        %v3706 = vmax.f32 %v3694, 1e-16
        %v3707 = vmax.f32 %v3697, 1e-16
        %v3708 = vmax.f32 %v3700, 1e-16
        %v3709 = vrcp.pop %v3701
        %v3710 = vmul.f32 %v3701, %v3709
        %v3711 = vsub.f32 1.0, %v3710
        %v3712 = vmul.f32 %v3709, %v3711
        %v3713 = vadd.f32 %v3709, %v3712
        %vm3714 = vweird.f32 %v3701
        %vm3715 = vweird.f32 %v3709
        %vm3716 = vmor %vm3714, %vm3715
        %v3717 = vsel %vm3716, %v3709, %v3713
        %v3718 = vand.u32 2147483647, %v3701
        %vm3719 = vcmp.eq.f32.partialorder %v3718, 8.507059e+37
        %v3720 = vand.u32 %v3701, 2147483648
        %v3721 = vor.u32 1.1754944e-38, %v3720
        %v3722 = vsel %vm3719, %v3721, %v3717
        %v3723 = vmul.f32 %v3669, %v3722
        %v3724 = vrcp.pop %v3702
        %v3725 = vmul.f32 %v3702, %v3724
        %v3726 = vsub.f32 1.0, %v3725
        %v3727 = vmul.f32 %v3724, %v3726
        %v3728 = vadd.f32 %v3724, %v3727
        %vm3729 = vweird.f32 %v3702
        %vm3730 = vweird.f32 %v3724
        %vm3731 = vmor %vm3729, %vm3730
        %v3732 = vsel %vm3731, %v3724, %v3728
        %v3733 = vand.u32 2147483647, %v3702
        %vm3734 = vcmp.eq.f32.partialorder %v3733, 8.507059e+37
        %v3735 = vand.u32 %v3702, 2147483648
        %v3736 = vor.u32 1.1754944e-38, %v3735
        %v3737 = vsel %vm3734, %v3736, %v3732
        %v3738 = vmul.f32 %v3670, %v3737
        %v3739 = vrcp.pop %v3703
        %v3740 = vmul.f32 %v3703, %v3739
        %v3741 = vsub.f32 1.0, %v3740
        %v3742 = vmul.f32 %v3739, %v3741
        %v3743 = vadd.f32 %v3739, %v3742
        %vm3744 = vweird.f32 %v3703
        %vm3745 = vweird.f32 %v3739
        %vm3746 = vmor %vm3744, %vm3745
        %v3747 = vsel %vm3746, %v3739, %v3743
        %v3748 = vand.u32 2147483647, %v3703
        %vm3749 = vcmp.eq.f32.partialorder %v3748, 8.507059e+37
        %v3750 = vand.u32 %v3703, 2147483648
        %v3751 = vor.u32 1.1754944e-38, %v3750
        %v3752 = vsel %vm3749, %v3751, %v3747
        %v3753 = vmul.f32 %v3671, %v3752
        %v3754 = vrcp.pop %v3704
        %v3755 = vmul.f32 %v3704, %v3754
        %v3756 = vsub.f32 1.0, %v3755
        %v3757 = vmul.f32 %v3754, %v3756
        %v3758 = vadd.f32 %v3754, %v3757
        %vm3759 = vweird.f32 %v3704
        %vm3760 = vweird.f32 %v3754
        %vm3761 = vmor %vm3759, %vm3760
        %v3762 = vsel %vm3761, %v3754, %v3758
        %v3763 = vand.u32 2147483647, %v3704
        %vm3764 = vcmp.eq.f32.partialorder %v3763, 8.507059e+37
        %v3765 = vand.u32 %v3704, 2147483648
        %v3766 = vor.u32 1.1754944e-38, %v3765
        %v3767 = vsel %vm3764, %v3766, %v3762
        %v3768 = vmul.f32 %v3672, %v3767
        %v3769 = vrcp.pop %v3705
        %v3770 = vmul.f32 %v3705, %v3769
        %v3771 = vsub.f32 1.0, %v3770
        %v3772 = vmul.f32 %v3769, %v3771
        %v3773 = vadd.f32 %v3769, %v3772
        %vm3774 = vweird.f32 %v3705
        %vm3775 = vweird.f32 %v3769
        %vm3776 = vmor %vm3774, %vm3775
        %v3777 = vsel %vm3776, %v3769, %v3773
        %v3778 = vand.u32 2147483647, %v3705
        %vm3779 = vcmp.eq.f32.partialorder %v3778, 8.507059e+37
        %v3780 = vand.u32 %v3705, 2147483648
        %v3781 = vor.u32 1.1754944e-38, %v3780
        %v3782 = vsel %vm3779, %v3781, %v3777
        %v3783 = vmul.f32 %v3673, %v3782
        %v3784 = vrcp.pop %v3706
        %v3785 = vmul.f32 %v3706, %v3784
        %v3786 = vsub.f32 1.0, %v3785
        %v3787 = vmul.f32 %v3784, %v3786
        %v3788 = vadd.f32 %v3784, %v3787
        %vm3789 = vweird.f32 %v3706
        %vm3790 = vweird.f32 %v3784
        %vm3791 = vmor %vm3789, %vm3790
        %v3792 = vsel %vm3791, %v3784, %v3788
        %v3793 = vand.u32 2147483647, %v3706
        %vm3794 = vcmp.eq.f32.partialorder %v3793, 8.507059e+37
        %v3795 = vand.u32 %v3706, 2147483648
        %v3796 = vor.u32 1.1754944e-38, %v3795
        %v3797 = vsel %vm3794, %v3796, %v3792
        %v3798 = vmul.f32 %v3674, %v3797
        %v3799 = vrcp.pop %v3707
        %v3800 = vmul.f32 %v3707, %v3799
        %v3801 = vsub.f32 1.0, %v3800
        %v3802 = vmul.f32 %v3799, %v3801
        %v3803 = vadd.f32 %v3799, %v3802
        %vm3804 = vweird.f32 %v3707
        %vm3805 = vweird.f32 %v3799
        %vm3806 = vmor %vm3804, %vm3805
        %v3807 = vsel %vm3806, %v3799, %v3803
        %v3808 = vand.u32 2147483647, %v3707
        %vm3809 = vcmp.eq.f32.partialorder %v3808, 8.507059e+37
        %v3810 = vand.u32 %v3707, 2147483648
        %v3811 = vor.u32 1.1754944e-38, %v3810
        %v3812 = vsel %vm3809, %v3811, %v3807
        %v3813 = vmul.f32 %v3675, %v3812
        %v3814 = vrcp.pop %v3708
        %v3815 = vmul.f32 %v3708, %v3814
        %v3816 = vsub.f32 1.0, %v3815
        %v3817 = vmul.f32 %v3814, %v3816
        %v3818 = vadd.f32 %v3814, %v3817
        %vm3819 = vweird.f32 %v3708
        %vm3820 = vweird.f32 %v3814
        %vm3821 = vmor %vm3819, %vm3820
        %v3822 = vsel %vm3821, %v3814, %v3818
        %v3823 = vand.u32 2147483647, %v3708
        %vm3824 = vcmp.eq.f32.partialorder %v3823, 8.507059e+37
        %v3825 = vand.u32 %v3708, 2147483648
        %v3826 = vor.u32 1.1754944e-38, %v3825
        %v3827 = vsel %vm3824, %v3826, %v3822
        %v3828 = vmul.f32 %v3676, %v3827
        %v3829 = vld [vmem:[%s13] sm:$0x1]
        %v3831 = vperm.slane %v3829, 0
        %3840 = vrot.lane.b32.xlu0 %v770, 112
        %v3841 = vpop.permute.xlu0 %3840
        %3842 = vrot.lane.b32.xlu0 %v773, 112
        %v3843 = vpop.permute.xlu0 %3842
        %3844 = vrot.lane.b32.xlu0 %v776, 112
        %v3845 = vpop.permute.xlu0 %3844
        %3846 = vrot.lane.b32.xlu0 %v779, 112
        %v3847 = vpop.permute.xlu0 %3846
        %3848 = vrot.lane.b32.xlu0 %v782, 112
        %v3849 = vpop.permute.xlu0 %3848
        %3850 = vrot.lane.b32.xlu0 %v785, 112
        %v3851 = vpop.permute.xlu0 %3850
        %3852 = vrot.lane.b32.xlu0 %v788, 112
        %v3853 = vpop.permute.xlu0 %3852
        %3854 = vrot.lane.b32.xlu0 %v791, 112
        %v3855 = vpop.permute.xlu0 %3854
        %3864 = vrot.lane.b32.xlu0 %v3831, 112
        %v3865 = vpop.permute.xlu0 %3864
        %v3868 = vsel %vm2173, %v3723, 0
        %v3871 = vsel %vm2173, %v3738, 0
        %v3874 = vsel %vm2173, %v3753, 0
        %v3877 = vsel %vm2173, %v3768, 0
        %v3880 = vsel %vm2173, %v3783, 0
        %v3883 = vsel %vm2173, %v3798, 0
        %v3886 = vsel %vm2173, %v3813, 0
        %v3889 = vsel %vm2173, %v3828, 0
        %3891 = vmatpush.msra.mxu0 0.0
        %3892 = vmatpush.msra.mxu0 0.0
        %3893 = vmatpush.msra.mxu0 0.0
        %3894 = vmatpush.msra.mxu0 0.0
        %3895 = vmatpush.msra.mxu0 0.0
        %3896 = vmatpush.msra.mxu0 0.0
        %3897 = vmatpush.msra.mxu0 0.0
        %3898 = vmatpush.msra.mxu0 0.0
        %3899 = vmatpush.msra.mxu0 %v3855
        %3900 = vmatpush.msra.mxu0 %v3853
        %3901 = vmatpush.msra.mxu0 %v3851
        %3902 = vmatpush.msra.mxu0 %v3849
        %3903 = vmatpush.msra.mxu0 %v3847
        %3904 = vmatpush.msra.mxu0 %v3845
        %3905 = vmatpush.msra.mxu0 %v3843
        %3906 = vmatpush.msra.mxu0 %v3841
        %3907 = vmatmul.f32.gmra.mxu0 %v3868
        %v3908 = vpop.f32.mrf.mxu0
        %v3909 = vadd.f32 %v3865, %v3908
        %3910 = vmatmul.f32.gmra.mxu0 %v3871
        %v3911 = vpop.f32.mrf.mxu0
        %v3912 = vadd.f32 %v3865, %v3911
        %3913 = vmatmul.f32.gmra.mxu0 %v3874
        %v3914 = vpop.f32.mrf.mxu0
        %v3915 = vadd.f32 %v3865, %v3914
        %3916 = vmatmul.f32.gmra.mxu0 %v3877
        %v3917 = vpop.f32.mrf.mxu0
        %v3918 = vadd.f32 %v3865, %v3917
        %3919 = vmatmul.f32.gmra.mxu0 %v3880
        %v3920 = vpop.f32.mrf.mxu0
        %v3921 = vadd.f32 %v3865, %v3920
        %3922 = vmatmul.f32.gmra.mxu0 %v3883
        %v3923 = vpop.f32.mrf.mxu0
        %v3924 = vadd.f32 %v3865, %v3923
        %3925 = vmatmul.f32.gmra.mxu0 %v3886
        %v3926 = vpop.f32.mrf.mxu0
        %v3927 = vadd.f32 %v3865, %v3926
        %3928 = vmatmul.f32.gmra.mxu0 %v3889
        %v3929 = vpop.f32.mrf.mxu0
        %v3930 = vadd.f32 %v3865, %v3929
        %3931 = vdwg.mxu0
        %v3932 = vmax.f32 %v3909, 0.0
        %v3933 = vmax.f32 %v3912, 0.0
        %v3934 = vmax.f32 %v3915, 0.0
        %v3935 = vmax.f32 %v3918, 0.0
        %v3936 = vmax.f32 %v3921, 0.0
        %v3937 = vmax.f32 %v3924, 0.0
        %v3938 = vmax.f32 %v3927, 0.0
        %v3939 = vmax.f32 %v3930, 0.0
        %3948 = vrot.lane.b32.xlu0 %v3932, 32
        %v3949 = vpop.permute.xlu0 %3948
        %3950 = vrot.lane.b32.xlu0 %v3933, 32
        %v3951 = vpop.permute.xlu0 %3950
        %3952 = vrot.lane.b32.xlu0 %v3934, 32
        %v3953 = vpop.permute.xlu0 %3952
        %3954 = vrot.lane.b32.xlu0 %v3935, 32
        %v3955 = vpop.permute.xlu0 %3954
        %3956 = vrot.lane.b32.xlu0 %v3936, 32
        %v3957 = vpop.permute.xlu0 %3956
        %3958 = vrot.lane.b32.xlu0 %v3937, 32
        %v3959 = vpop.permute.xlu0 %3958
        %3960 = vrot.lane.b32.xlu0 %v3938, 32
        %v3961 = vpop.permute.xlu0 %3960
        %3962 = vrot.lane.b32.xlu0 %v3939, 32
        %v3963 = vpop.permute.xlu0 %3962
        %vm3972 = vcmask 392448
        %3973 = vst.msk [vmem:[%s532] sm:$0xff] %vm3972, %v3949
        %3974 = vst.msk [vmem:[%s532 + $0x8] sm:$0xff] %vm3972, %v3951
        %3975 = vst.msk [vmem:[%s532 + $0x10] sm:$0xff] %vm3972, %v3953
        %3976 = vst.msk [vmem:[%s532 + $0x18] sm:$0xff] %vm3972, %v3955
        %3977 = vst.msk [vmem:[%s532 + $0x20] sm:$0xff] %vm3972, %v3957
        %3978 = vst.msk [vmem:[%s532 + $0x28] sm:$0xff] %vm3972, %v3959
        %3979 = vst.msk [vmem:[%s532 + $0x30] sm:$0xff] %vm3972, %v3961
        %3980 = vst.msk [vmem:[%s532 + $0x38] sm:$0xff] %vm3972, %v3963
        %3981 = vset.pattern.permute.xlu0 2
        %3982 = vperm.xlu0 %3981, %v949
        %v3983 = vpop.permute.xlu0 %3982
        %3985 = vset.pattern.permute.xlu0 2
        %3986 = vperm.xlu0 %3985, %v952
        %v3987 = vpop.permute.xlu0 %3986
        %3989 = vset.pattern.permute.xlu0 2
        %3990 = vperm.xlu0 %3989, %v955
        %v3991 = vpop.permute.xlu0 %3990
        %3993 = vset.pattern.permute.xlu0 2
        %3994 = vperm.xlu0 %3993, %v958
        %v3995 = vpop.permute.xlu0 %3994
        %3997 = vset.pattern.permute.xlu0 2
        %3998 = vperm.xlu0 %3997, %v961
        %v3999 = vpop.permute.xlu0 %3998
        %4001 = vset.pattern.permute.xlu0 2
        %4002 = vperm.xlu0 %4001, %v964
        %v4003 = vpop.permute.xlu0 %4002
        %4005 = vset.pattern.permute.xlu0 2
        %4006 = vperm.xlu0 %4005, %v967
        %v4007 = vpop.permute.xlu0 %4006
        %4009 = vset.pattern.permute.xlu0 2
        %4010 = vperm.xlu0 %4009, %v970
        %v4011 = vpop.permute.xlu0 %4010
        %v4013 = vperm.slane %v994, 2
        %v4014 = vadd.f32 %v3983, %v4013
        %v4015 = vadd.f32 %v3987, %v4013
        %v4016 = vadd.f32 %v3991, %v4013
        %v4017 = vadd.f32 %v3995, %v4013
        %v4018 = vadd.f32 %v3999, %v4013
        %v4019 = vadd.f32 %v4003, %v4013
        %v4020 = vadd.f32 %v4007, %v4013
        %v4021 = vadd.f32 %v4011, %v4013
        %s4022 = sld [smem:[#allocation2 + $0x100]]
        %4023 = vset.pattern.permute.xlu0 32
        %4024 = vperm.xlu0 %4023, %v841
        %v4025 = vpop.permute.xlu0 %4024
        %4027 = vset.pattern.permute.xlu0 32
        %4028 = vperm.xlu0 %4027, %v844
        %v4029 = vpop.permute.xlu0 %4028
        %4031 = vset.pattern.permute.xlu0 32
        %4032 = vperm.xlu0 %4031, %v847
        %v4033 = vpop.permute.xlu0 %4032
        %4035 = vset.pattern.permute.xlu0 32
        %4036 = vperm.xlu0 %4035, %v850
        %v4037 = vpop.permute.xlu0 %4036
        %4039 = vset.pattern.permute.xlu0 32
        %4040 = vperm.xlu0 %4039, %v853
        %v4041 = vpop.permute.xlu0 %4040
        %4043 = vset.pattern.permute.xlu0 32
        %4044 = vperm.xlu0 %4043, %v856
        %v4045 = vpop.permute.xlu0 %4044
        %4047 = vset.pattern.permute.xlu0 32
        %4048 = vperm.xlu0 %4047, %v859
        %v4049 = vpop.permute.xlu0 %4048
        %4051 = vset.pattern.permute.xlu0 32
        %4052 = vperm.xlu0 %4051, %v862
        %v4053 = vpop.permute.xlu0 %4052
        %v4055 = vperm.slane %v884, 0
        %v4056 = vadd.f32 %v4025, %v4055
        %v4057 = vadd.f32 %v4029, %v4055
        %v4058 = vadd.f32 %v4033, %v4055
        %v4059 = vadd.f32 %v4037, %v4055
        %v4060 = vadd.f32 %v4041, %v4055
        %v4061 = vadd.f32 %v4045, %v4055
        %v4062 = vadd.f32 %v4049, %v4055
        %v4063 = vadd.f32 %v4053, %v4055
        %v4064 = vmax.f32 %v4056, 0.0
        %v4065 = vmax.f32 %v4057, 0.0
        %v4066 = vmax.f32 %v4058, 0.0
        %v4067 = vmax.f32 %v4059, 0.0
        %v4068 = vmax.f32 %v4060, 0.0
        %v4069 = vmax.f32 %v4061, 0.0
        %v4070 = vmax.f32 %v4062, 0.0
        %v4071 = vmax.f32 %v4063, 0.0
        %v4072 = vstv %s4022
        %v4073 = vmul.f32 %v4072, %v4064
        %v4074 = vmul.f32 %v4072, %v4065
        %v4075 = vmul.f32 %v4072, %v4066
        %v4076 = vmul.f32 %v4072, %v4067
        %v4077 = vmul.f32 %v4072, %v4068
        %v4078 = vmul.f32 %v4072, %v4069
        %v4079 = vmul.f32 %v4072, %v4070
        %v4080 = vmul.f32 %v4072, %v4071
        %v4081 = vadd.f32 %v4014, %v4073
        %v4082 = vadd.f32 %v4015, %v4074
        %v4083 = vadd.f32 %v4016, %v4075
        %v4084 = vadd.f32 %v4017, %v4076
        %v4085 = vadd.f32 %v4018, %v4077
        %v4086 = vadd.f32 %v4019, %v4078
        %v4087 = vadd.f32 %v4020, %v4079
        %v4088 = vadd.f32 %v4021, %v4080
        %s4089 = sld [smem:[#allocation2 + $0x101]]
        %4090 = vset.pattern.permute.xlu0 33
        %4091 = vperm.xlu0 %4090, %v841
        %v4092 = vpop.permute.xlu0 %4091
        %4094 = vset.pattern.permute.xlu0 33
        %4095 = vperm.xlu0 %4094, %v844
        %v4096 = vpop.permute.xlu0 %4095
        %4098 = vset.pattern.permute.xlu0 33
        %4099 = vperm.xlu0 %4098, %v847
        %v4100 = vpop.permute.xlu0 %4099
        %4102 = vset.pattern.permute.xlu0 33
        %4103 = vperm.xlu0 %4102, %v850
        %v4104 = vpop.permute.xlu0 %4103
        %4106 = vset.pattern.permute.xlu0 33
        %4107 = vperm.xlu0 %4106, %v853
        %v4108 = vpop.permute.xlu0 %4107
        %4110 = vset.pattern.permute.xlu0 33
        %4111 = vperm.xlu0 %4110, %v856
        %v4112 = vpop.permute.xlu0 %4111
        %4114 = vset.pattern.permute.xlu0 33
        %4115 = vperm.xlu0 %4114, %v859
        %v4116 = vpop.permute.xlu0 %4115
        %4118 = vset.pattern.permute.xlu0 33
        %4119 = vperm.xlu0 %4118, %v862
        %v4120 = vpop.permute.xlu0 %4119
        %v4122 = vperm.slane %v884, 1
        %v4123 = vadd.f32 %v4092, %v4122
        %v4124 = vadd.f32 %v4096, %v4122
        %v4125 = vadd.f32 %v4100, %v4122
        %v4126 = vadd.f32 %v4104, %v4122
        %v4127 = vadd.f32 %v4108, %v4122
        %v4128 = vadd.f32 %v4112, %v4122
        %v4129 = vadd.f32 %v4116, %v4122
        %v4130 = vadd.f32 %v4120, %v4122
        %v4131 = vmax.f32 %v4123, 0.0
        %v4132 = vmax.f32 %v4124, 0.0
        %v4133 = vmax.f32 %v4125, 0.0
        %v4134 = vmax.f32 %v4126, 0.0
        %v4135 = vmax.f32 %v4127, 0.0
        %v4136 = vmax.f32 %v4128, 0.0
        %v4137 = vmax.f32 %v4129, 0.0
        %v4138 = vmax.f32 %v4130, 0.0
        %v4139 = vstv %s4089
        %v4140 = vmul.f32 %v4139, %v4131
        %v4141 = vmul.f32 %v4139, %v4132
        %v4142 = vmul.f32 %v4139, %v4133
        %v4143 = vmul.f32 %v4139, %v4134
        %v4144 = vmul.f32 %v4139, %v4135
        %v4145 = vmul.f32 %v4139, %v4136
        %v4146 = vmul.f32 %v4139, %v4137
        %v4147 = vmul.f32 %v4139, %v4138
        %v4148 = vadd.f32 %v4081, %v4140
        %v4149 = vadd.f32 %v4082, %v4141
        %v4150 = vadd.f32 %v4083, %v4142
        %v4151 = vadd.f32 %v4084, %v4143
        %v4152 = vadd.f32 %v4085, %v4144
        %v4153 = vadd.f32 %v4086, %v4145
        %v4154 = vadd.f32 %v4087, %v4146
        %v4155 = vadd.f32 %v4088, %v4147
        %s4156 = sld [smem:[#allocation2 + $0x102]]
        %4157 = vset.pattern.permute.xlu0 34
        %4158 = vperm.xlu0 %4157, %v841
        %v4159 = vpop.permute.xlu0 %4158
        %4161 = vset.pattern.permute.xlu0 34
        %4162 = vperm.xlu0 %4161, %v844
        %v4163 = vpop.permute.xlu0 %4162
        %4165 = vset.pattern.permute.xlu0 34
        %4166 = vperm.xlu0 %4165, %v847
        %v4167 = vpop.permute.xlu0 %4166
        %4169 = vset.pattern.permute.xlu0 34
        %4170 = vperm.xlu0 %4169, %v850
        %v4171 = vpop.permute.xlu0 %4170
        %4173 = vset.pattern.permute.xlu0 34
        %4174 = vperm.xlu0 %4173, %v853
        %v4175 = vpop.permute.xlu0 %4174
        %4177 = vset.pattern.permute.xlu0 34
        %4178 = vperm.xlu0 %4177, %v856
        %v4179 = vpop.permute.xlu0 %4178
        %4181 = vset.pattern.permute.xlu0 34
        %4182 = vperm.xlu0 %4181, %v859
        %v4183 = vpop.permute.xlu0 %4182
        %4185 = vset.pattern.permute.xlu0 34
        %4186 = vperm.xlu0 %4185, %v862
        %v4187 = vpop.permute.xlu0 %4186
        %v4189 = vperm.slane %v884, 2
        %v4190 = vadd.f32 %v4159, %v4189
        %v4191 = vadd.f32 %v4163, %v4189
        %v4192 = vadd.f32 %v4167, %v4189
        %v4193 = vadd.f32 %v4171, %v4189
        %v4194 = vadd.f32 %v4175, %v4189
        %v4195 = vadd.f32 %v4179, %v4189
        %v4196 = vadd.f32 %v4183, %v4189
        %v4197 = vadd.f32 %v4187, %v4189
        %v4198 = vmax.f32 %v4190, 0.0
        %v4199 = vmax.f32 %v4191, 0.0
        %v4200 = vmax.f32 %v4192, 0.0
        %v4201 = vmax.f32 %v4193, 0.0
        %v4202 = vmax.f32 %v4194, 0.0
        %v4203 = vmax.f32 %v4195, 0.0
        %v4204 = vmax.f32 %v4196, 0.0
        %v4205 = vmax.f32 %v4197, 0.0
        %v4206 = vstv %s4156
        %v4207 = vmul.f32 %v4206, %v4198
        %v4208 = vmul.f32 %v4206, %v4199
        %v4209 = vmul.f32 %v4206, %v4200
        %v4210 = vmul.f32 %v4206, %v4201
        %v4211 = vmul.f32 %v4206, %v4202
        %v4212 = vmul.f32 %v4206, %v4203
        %v4213 = vmul.f32 %v4206, %v4204
        %v4214 = vmul.f32 %v4206, %v4205
        %v4215 = vadd.f32 %v4148, %v4207
        %v4216 = vadd.f32 %v4149, %v4208
        %v4217 = vadd.f32 %v4150, %v4209
        %v4218 = vadd.f32 %v4151, %v4210
        %v4219 = vadd.f32 %v4152, %v4211
        %v4220 = vadd.f32 %v4153, %v4212
        %v4221 = vadd.f32 %v4154, %v4213
        %v4222 = vadd.f32 %v4155, %v4214
        %s4223 = sld [smem:[#allocation2 + $0x103]]
        %4224 = vset.pattern.permute.xlu0 35
        %4225 = vperm.xlu0 %4224, %v841
        %v4226 = vpop.permute.xlu0 %4225
        %4228 = vset.pattern.permute.xlu0 35
        %4229 = vperm.xlu0 %4228, %v844
        %v4230 = vpop.permute.xlu0 %4229
        %4232 = vset.pattern.permute.xlu0 35
        %4233 = vperm.xlu0 %4232, %v847
        %v4234 = vpop.permute.xlu0 %4233
        %4236 = vset.pattern.permute.xlu0 35
        %4237 = vperm.xlu0 %4236, %v850
        %v4238 = vpop.permute.xlu0 %4237
        %4240 = vset.pattern.permute.xlu0 35
        %4241 = vperm.xlu0 %4240, %v853
        %v4242 = vpop.permute.xlu0 %4241
        %4244 = vset.pattern.permute.xlu0 35
        %4245 = vperm.xlu0 %4244, %v856
        %v4246 = vpop.permute.xlu0 %4245
        %4248 = vset.pattern.permute.xlu0 35
        %4249 = vperm.xlu0 %4248, %v859
        %v4250 = vpop.permute.xlu0 %4249
        %4252 = vset.pattern.permute.xlu0 35
        %4253 = vperm.xlu0 %4252, %v862
        %v4254 = vpop.permute.xlu0 %4253
        %v4256 = vperm.slane %v884, 3
        %v4257 = vadd.f32 %v4226, %v4256
        %v4258 = vadd.f32 %v4230, %v4256
        %v4259 = vadd.f32 %v4234, %v4256
        %v4260 = vadd.f32 %v4238, %v4256
        %v4261 = vadd.f32 %v4242, %v4256
        %v4262 = vadd.f32 %v4246, %v4256
        %v4263 = vadd.f32 %v4250, %v4256
        %v4264 = vadd.f32 %v4254, %v4256
        %v4265 = vmax.f32 %v4257, 0.0
        %v4266 = vmax.f32 %v4258, 0.0
        %v4267 = vmax.f32 %v4259, 0.0
        %v4268 = vmax.f32 %v4260, 0.0
        %v4269 = vmax.f32 %v4261, 0.0
        %v4270 = vmax.f32 %v4262, 0.0
        %v4271 = vmax.f32 %v4263, 0.0
        %v4272 = vmax.f32 %v4264, 0.0
        %v4273 = vstv %s4223
        %v4274 = vmul.f32 %v4273, %v4265
        %v4275 = vmul.f32 %v4273, %v4266
        %v4276 = vmul.f32 %v4273, %v4267
        %v4277 = vmul.f32 %v4273, %v4268
        %v4278 = vmul.f32 %v4273, %v4269
        %v4279 = vmul.f32 %v4273, %v4270
        %v4280 = vmul.f32 %v4273, %v4271
        %v4281 = vmul.f32 %v4273, %v4272
        %v4282 = vadd.f32 %v4215, %v4274
        %v4283 = vadd.f32 %v4216, %v4275
        %v4284 = vadd.f32 %v4217, %v4276
        %v4285 = vadd.f32 %v4218, %v4277
        %v4286 = vadd.f32 %v4219, %v4278
        %v4287 = vadd.f32 %v4220, %v4279
        %v4288 = vadd.f32 %v4221, %v4280
        %v4289 = vadd.f32 %v4222, %v4281
        %s4290 = sld [smem:[#allocation2 + $0x104]]
        %4291 = vset.pattern.permute.xlu0 36
        %4292 = vperm.xlu0 %4291, %v841
        %v4293 = vpop.permute.xlu0 %4292
        %4295 = vset.pattern.permute.xlu0 36
        %4296 = vperm.xlu0 %4295, %v844
        %v4297 = vpop.permute.xlu0 %4296
        %4299 = vset.pattern.permute.xlu0 36
        %4300 = vperm.xlu0 %4299, %v847
        %v4301 = vpop.permute.xlu0 %4300
        %4303 = vset.pattern.permute.xlu0 36
        %4304 = vperm.xlu0 %4303, %v850
        %v4305 = vpop.permute.xlu0 %4304
        %4307 = vset.pattern.permute.xlu0 36
        %4308 = vperm.xlu0 %4307, %v853
        %v4309 = vpop.permute.xlu0 %4308
        %4311 = vset.pattern.permute.xlu0 36
        %4312 = vperm.xlu0 %4311, %v856
        %v4313 = vpop.permute.xlu0 %4312
        %4315 = vset.pattern.permute.xlu0 36
        %4316 = vperm.xlu0 %4315, %v859
        %v4317 = vpop.permute.xlu0 %4316
        %4319 = vset.pattern.permute.xlu0 36
        %4320 = vperm.xlu0 %4319, %v862
        %v4321 = vpop.permute.xlu0 %4320
        %v4323 = vperm.slane %v884, 4
        %v4324 = vadd.f32 %v4293, %v4323
        %v4325 = vadd.f32 %v4297, %v4323
        %v4326 = vadd.f32 %v4301, %v4323
        %v4327 = vadd.f32 %v4305, %v4323
        %v4328 = vadd.f32 %v4309, %v4323
        %v4329 = vadd.f32 %v4313, %v4323
        %v4330 = vadd.f32 %v4317, %v4323
        %v4331 = vadd.f32 %v4321, %v4323
        %v4332 = vmax.f32 %v4324, 0.0
        %v4333 = vmax.f32 %v4325, 0.0
        %v4334 = vmax.f32 %v4326, 0.0
        %v4335 = vmax.f32 %v4327, 0.0
        %v4336 = vmax.f32 %v4328, 0.0
        %v4337 = vmax.f32 %v4329, 0.0
        %v4338 = vmax.f32 %v4330, 0.0
        %v4339 = vmax.f32 %v4331, 0.0
        %v4340 = vstv %s4290
        %v4341 = vmul.f32 %v4340, %v4332
        %v4342 = vmul.f32 %v4340, %v4333
        %v4343 = vmul.f32 %v4340, %v4334
        %v4344 = vmul.f32 %v4340, %v4335
        %v4345 = vmul.f32 %v4340, %v4336
        %v4346 = vmul.f32 %v4340, %v4337
        %v4347 = vmul.f32 %v4340, %v4338
        %v4348 = vmul.f32 %v4340, %v4339
        %v4349 = vadd.f32 %v4282, %v4341
        %v4350 = vadd.f32 %v4283, %v4342
        %v4351 = vadd.f32 %v4284, %v4343
        %v4352 = vadd.f32 %v4285, %v4344
        %v4353 = vadd.f32 %v4286, %v4345
        %v4354 = vadd.f32 %v4287, %v4346
        %v4355 = vadd.f32 %v4288, %v4347
        %v4356 = vadd.f32 %v4289, %v4348
        %s4357 = sld [smem:[#allocation2 + $0x105]]
        %4358 = vset.pattern.permute.xlu0 37
        %4359 = vperm.xlu0 %4358, %v841
        %v4360 = vpop.permute.xlu0 %4359
        %4362 = vset.pattern.permute.xlu0 37
        %4363 = vperm.xlu0 %4362, %v844
        %v4364 = vpop.permute.xlu0 %4363
        %4366 = vset.pattern.permute.xlu0 37
        %4367 = vperm.xlu0 %4366, %v847
        %v4368 = vpop.permute.xlu0 %4367
        %4370 = vset.pattern.permute.xlu0 37
        %4371 = vperm.xlu0 %4370, %v850
        %v4372 = vpop.permute.xlu0 %4371
        %4374 = vset.pattern.permute.xlu0 37
        %4375 = vperm.xlu0 %4374, %v853
        %v4376 = vpop.permute.xlu0 %4375
        %4378 = vset.pattern.permute.xlu0 37
        %4379 = vperm.xlu0 %4378, %v856
        %v4380 = vpop.permute.xlu0 %4379
        %4382 = vset.pattern.permute.xlu0 37
        %4383 = vperm.xlu0 %4382, %v859
        %v4384 = vpop.permute.xlu0 %4383
        %4386 = vset.pattern.permute.xlu0 37
        %4387 = vperm.xlu0 %4386, %v862
        %v4388 = vpop.permute.xlu0 %4387
        %v4390 = vperm.slane %v884, 5
        %v4391 = vadd.f32 %v4360, %v4390
        %v4392 = vadd.f32 %v4364, %v4390
        %v4393 = vadd.f32 %v4368, %v4390
        %v4394 = vadd.f32 %v4372, %v4390
        %v4395 = vadd.f32 %v4376, %v4390
        %v4396 = vadd.f32 %v4380, %v4390
        %v4397 = vadd.f32 %v4384, %v4390
        %v4398 = vadd.f32 %v4388, %v4390
        %v4399 = vmax.f32 %v4391, 0.0
        %v4400 = vmax.f32 %v4392, 0.0
        %v4401 = vmax.f32 %v4393, 0.0
        %v4402 = vmax.f32 %v4394, 0.0
        %v4403 = vmax.f32 %v4395, 0.0
        %v4404 = vmax.f32 %v4396, 0.0
        %v4405 = vmax.f32 %v4397, 0.0
        %v4406 = vmax.f32 %v4398, 0.0
        %v4407 = vstv %s4357
        %v4408 = vmul.f32 %v4407, %v4399
        %v4409 = vmul.f32 %v4407, %v4400
        %v4410 = vmul.f32 %v4407, %v4401
        %v4411 = vmul.f32 %v4407, %v4402
        %v4412 = vmul.f32 %v4407, %v4403
        %v4413 = vmul.f32 %v4407, %v4404
        %v4414 = vmul.f32 %v4407, %v4405
        %v4415 = vmul.f32 %v4407, %v4406
        %v4416 = vadd.f32 %v4349, %v4408
        %v4417 = vadd.f32 %v4350, %v4409
        %v4418 = vadd.f32 %v4351, %v4410
        %v4419 = vadd.f32 %v4352, %v4411
        %v4420 = vadd.f32 %v4353, %v4412
        %v4421 = vadd.f32 %v4354, %v4413
        %v4422 = vadd.f32 %v4355, %v4414
        %v4423 = vadd.f32 %v4356, %v4415
        %s4424 = sld [smem:[#allocation2 + $0x106]]
        %4425 = vset.pattern.permute.xlu0 38
        %4426 = vperm.xlu0 %4425, %v841
        %v4427 = vpop.permute.xlu0 %4426
        %4429 = vset.pattern.permute.xlu0 38
        %4430 = vperm.xlu0 %4429, %v844
        %v4431 = vpop.permute.xlu0 %4430
        %4433 = vset.pattern.permute.xlu0 38
        %4434 = vperm.xlu0 %4433, %v847
        %v4435 = vpop.permute.xlu0 %4434
        %4437 = vset.pattern.permute.xlu0 38
        %4438 = vperm.xlu0 %4437, %v850
        %v4439 = vpop.permute.xlu0 %4438
        %4441 = vset.pattern.permute.xlu0 38
        %4442 = vperm.xlu0 %4441, %v853
        %v4443 = vpop.permute.xlu0 %4442
        %4445 = vset.pattern.permute.xlu0 38
        %4446 = vperm.xlu0 %4445, %v856
        %v4447 = vpop.permute.xlu0 %4446
        %4449 = vset.pattern.permute.xlu0 38
        %4450 = vperm.xlu0 %4449, %v859
        %v4451 = vpop.permute.xlu0 %4450
        %4453 = vset.pattern.permute.xlu0 38
        %4454 = vperm.xlu0 %4453, %v862
        %v4455 = vpop.permute.xlu0 %4454
        %v4457 = vperm.slane %v884, 6
        %v4458 = vadd.f32 %v4427, %v4457
        %v4459 = vadd.f32 %v4431, %v4457
        %v4460 = vadd.f32 %v4435, %v4457
        %v4461 = vadd.f32 %v4439, %v4457
        %v4462 = vadd.f32 %v4443, %v4457
        %v4463 = vadd.f32 %v4447, %v4457
        %v4464 = vadd.f32 %v4451, %v4457
        %v4465 = vadd.f32 %v4455, %v4457
        %v4466 = vmax.f32 %v4458, 0.0
        %v4467 = vmax.f32 %v4459, 0.0
        %v4468 = vmax.f32 %v4460, 0.0
        %v4469 = vmax.f32 %v4461, 0.0
        %v4470 = vmax.f32 %v4462, 0.0
        %v4471 = vmax.f32 %v4463, 0.0
        %v4472 = vmax.f32 %v4464, 0.0
        %v4473 = vmax.f32 %v4465, 0.0
        %v4474 = vstv %s4424
        %v4475 = vmul.f32 %v4474, %v4466
        %v4476 = vmul.f32 %v4474, %v4467
        %v4477 = vmul.f32 %v4474, %v4468
        %v4478 = vmul.f32 %v4474, %v4469
        %v4479 = vmul.f32 %v4474, %v4470
        %v4480 = vmul.f32 %v4474, %v4471
        %v4481 = vmul.f32 %v4474, %v4472
        %v4482 = vmul.f32 %v4474, %v4473
        %v4483 = vadd.f32 %v4416, %v4475
        %v4484 = vadd.f32 %v4417, %v4476
        %v4485 = vadd.f32 %v4418, %v4477
        %v4486 = vadd.f32 %v4419, %v4478
        %v4487 = vadd.f32 %v4420, %v4479
        %v4488 = vadd.f32 %v4421, %v4480
        %v4489 = vadd.f32 %v4422, %v4481
        %v4490 = vadd.f32 %v4423, %v4482
        %s4491 = sld [smem:[#allocation2 + $0x107]]
        %4492 = vset.pattern.permute.xlu0 39
        %4493 = vperm.xlu0 %4492, %v841
        %v4494 = vpop.permute.xlu0 %4493
        %4496 = vset.pattern.permute.xlu0 39
        %4497 = vperm.xlu0 %4496, %v844
        %v4498 = vpop.permute.xlu0 %4497
        %4500 = vset.pattern.permute.xlu0 39
        %4501 = vperm.xlu0 %4500, %v847
        %v4502 = vpop.permute.xlu0 %4501
        %4504 = vset.pattern.permute.xlu0 39
        %4505 = vperm.xlu0 %4504, %v850
        %v4506 = vpop.permute.xlu0 %4505
        %4508 = vset.pattern.permute.xlu0 39
        %4509 = vperm.xlu0 %4508, %v853
        %v4510 = vpop.permute.xlu0 %4509
        %4512 = vset.pattern.permute.xlu0 39
        %4513 = vperm.xlu0 %4512, %v856
        %v4514 = vpop.permute.xlu0 %4513
        %4516 = vset.pattern.permute.xlu0 39
        %4517 = vperm.xlu0 %4516, %v859
        %v4518 = vpop.permute.xlu0 %4517
        %4520 = vset.pattern.permute.xlu0 39
        %4521 = vperm.xlu0 %4520, %v862
        %v4522 = vpop.permute.xlu0 %4521
        %v4524 = vperm.slane %v884, 7
        %v4525 = vadd.f32 %v4494, %v4524
        %v4526 = vadd.f32 %v4498, %v4524
        %v4527 = vadd.f32 %v4502, %v4524
        %v4528 = vadd.f32 %v4506, %v4524
        %v4529 = vadd.f32 %v4510, %v4524
        %v4530 = vadd.f32 %v4514, %v4524
        %v4531 = vadd.f32 %v4518, %v4524
        %v4532 = vadd.f32 %v4522, %v4524
        %v4533 = vmax.f32 %v4525, 0.0
        %v4534 = vmax.f32 %v4526, 0.0
        %v4535 = vmax.f32 %v4527, 0.0
        %v4536 = vmax.f32 %v4528, 0.0
        %v4537 = vmax.f32 %v4529, 0.0
        %v4538 = vmax.f32 %v4530, 0.0
        %v4539 = vmax.f32 %v4531, 0.0
        %v4540 = vmax.f32 %v4532, 0.0
        %v4541 = vstv %s4491
        %v4542 = vmul.f32 %v4541, %v4533
        %v4543 = vmul.f32 %v4541, %v4534
        %v4544 = vmul.f32 %v4541, %v4535
        %v4545 = vmul.f32 %v4541, %v4536
        %v4546 = vmul.f32 %v4541, %v4537
        %v4547 = vmul.f32 %v4541, %v4538
        %v4548 = vmul.f32 %v4541, %v4539
        %v4549 = vmul.f32 %v4541, %v4540
        %v4550 = vadd.f32 %v4483, %v4542
        %v4551 = vadd.f32 %v4484, %v4543
        %v4552 = vadd.f32 %v4485, %v4544
        %v4553 = vadd.f32 %v4486, %v4545
        %v4554 = vadd.f32 %v4487, %v4546
        %v4555 = vadd.f32 %v4488, %v4547
        %v4556 = vadd.f32 %v4489, %v4548
        %v4557 = vadd.f32 %v4490, %v4549
        %s4558 = sld [smem:[#allocation2 + $0x108]]
        %4559 = vset.pattern.permute.xlu0 40
        %4560 = vperm.xlu0 %4559, %v841
        %v4561 = vpop.permute.xlu0 %4560
        %4563 = vset.pattern.permute.xlu0 40
        %4564 = vperm.xlu0 %4563, %v844
        %v4565 = vpop.permute.xlu0 %4564
        %4567 = vset.pattern.permute.xlu0 40
        %4568 = vperm.xlu0 %4567, %v847
        %v4569 = vpop.permute.xlu0 %4568
        %4571 = vset.pattern.permute.xlu0 40
        %4572 = vperm.xlu0 %4571, %v850
        %v4573 = vpop.permute.xlu0 %4572
        %4575 = vset.pattern.permute.xlu0 40
        %4576 = vperm.xlu0 %4575, %v853
        %v4577 = vpop.permute.xlu0 %4576
        %4579 = vset.pattern.permute.xlu0 40
        %4580 = vperm.xlu0 %4579, %v856
        %v4581 = vpop.permute.xlu0 %4580
        %4583 = vset.pattern.permute.xlu0 40
        %4584 = vperm.xlu0 %4583, %v859
        %v4585 = vpop.permute.xlu0 %4584
        %4587 = vset.pattern.permute.xlu0 40
        %4588 = vperm.xlu0 %4587, %v862
        %v4589 = vpop.permute.xlu0 %4588
        %v4591 = vperm.slane %v885, 0
        %v4592 = vadd.f32 %v4561, %v4591
        %v4593 = vadd.f32 %v4565, %v4591
        %v4594 = vadd.f32 %v4569, %v4591
        %v4595 = vadd.f32 %v4573, %v4591
        %v4596 = vadd.f32 %v4577, %v4591
        %v4597 = vadd.f32 %v4581, %v4591
        %v4598 = vadd.f32 %v4585, %v4591
        %v4599 = vadd.f32 %v4589, %v4591
        %v4600 = vmax.f32 %v4592, 0.0
        %v4601 = vmax.f32 %v4593, 0.0
        %v4602 = vmax.f32 %v4594, 0.0
        %v4603 = vmax.f32 %v4595, 0.0
        %v4604 = vmax.f32 %v4596, 0.0
        %v4605 = vmax.f32 %v4597, 0.0
        %v4606 = vmax.f32 %v4598, 0.0
        %v4607 = vmax.f32 %v4599, 0.0
        %v4608 = vstv %s4558
        %v4609 = vmul.f32 %v4608, %v4600
        %v4610 = vmul.f32 %v4608, %v4601
        %v4611 = vmul.f32 %v4608, %v4602
        %v4612 = vmul.f32 %v4608, %v4603
        %v4613 = vmul.f32 %v4608, %v4604
        %v4614 = vmul.f32 %v4608, %v4605
        %v4615 = vmul.f32 %v4608, %v4606
        %v4616 = vmul.f32 %v4608, %v4607
        %v4617 = vadd.f32 %v4550, %v4609
        %v4618 = vadd.f32 %v4551, %v4610
        %v4619 = vadd.f32 %v4552, %v4611
        %v4620 = vadd.f32 %v4553, %v4612
        %v4621 = vadd.f32 %v4554, %v4613
        %v4622 = vadd.f32 %v4555, %v4614
        %v4623 = vadd.f32 %v4556, %v4615
        %v4624 = vadd.f32 %v4557, %v4616
        %s4625 = sld [smem:[#allocation2 + $0x109]]
        %4626 = vset.pattern.permute.xlu0 41
        %4627 = vperm.xlu0 %4626, %v841
        %v4628 = vpop.permute.xlu0 %4627
        %4630 = vset.pattern.permute.xlu0 41
        %4631 = vperm.xlu0 %4630, %v844
        %v4632 = vpop.permute.xlu0 %4631
        %4634 = vset.pattern.permute.xlu0 41
        %4635 = vperm.xlu0 %4634, %v847
        %v4636 = vpop.permute.xlu0 %4635
        %4638 = vset.pattern.permute.xlu0 41
        %4639 = vperm.xlu0 %4638, %v850
        %v4640 = vpop.permute.xlu0 %4639
        %4642 = vset.pattern.permute.xlu0 41
        %4643 = vperm.xlu0 %4642, %v853
        %v4644 = vpop.permute.xlu0 %4643
        %4646 = vset.pattern.permute.xlu0 41
        %4647 = vperm.xlu0 %4646, %v856
        %v4648 = vpop.permute.xlu0 %4647
        %4650 = vset.pattern.permute.xlu0 41
        %4651 = vperm.xlu0 %4650, %v859
        %v4652 = vpop.permute.xlu0 %4651
        %4654 = vset.pattern.permute.xlu0 41
        %4655 = vperm.xlu0 %4654, %v862
        %v4656 = vpop.permute.xlu0 %4655
        %v4658 = vperm.slane %v885, 1
        %v4659 = vadd.f32 %v4628, %v4658
        %v4660 = vadd.f32 %v4632, %v4658
        %v4661 = vadd.f32 %v4636, %v4658
        %v4662 = vadd.f32 %v4640, %v4658
        %v4663 = vadd.f32 %v4644, %v4658
        %v4664 = vadd.f32 %v4648, %v4658
        %v4665 = vadd.f32 %v4652, %v4658
        %v4666 = vadd.f32 %v4656, %v4658
        %v4667 = vmax.f32 %v4659, 0.0
        %v4668 = vmax.f32 %v4660, 0.0
        %v4669 = vmax.f32 %v4661, 0.0
        %v4670 = vmax.f32 %v4662, 0.0
        %v4671 = vmax.f32 %v4663, 0.0
        %v4672 = vmax.f32 %v4664, 0.0
        %v4673 = vmax.f32 %v4665, 0.0
        %v4674 = vmax.f32 %v4666, 0.0
        %v4675 = vstv %s4625
        %v4676 = vmul.f32 %v4675, %v4667
        %v4677 = vmul.f32 %v4675, %v4668
        %v4678 = vmul.f32 %v4675, %v4669
        %v4679 = vmul.f32 %v4675, %v4670
        %v4680 = vmul.f32 %v4675, %v4671
        %v4681 = vmul.f32 %v4675, %v4672
        %v4682 = vmul.f32 %v4675, %v4673
        %v4683 = vmul.f32 %v4675, %v4674
        %v4684 = vadd.f32 %v4617, %v4676
        %v4685 = vadd.f32 %v4618, %v4677
        %v4686 = vadd.f32 %v4619, %v4678
        %v4687 = vadd.f32 %v4620, %v4679
        %v4688 = vadd.f32 %v4621, %v4680
        %v4689 = vadd.f32 %v4622, %v4681
        %v4690 = vadd.f32 %v4623, %v4682
        %v4691 = vadd.f32 %v4624, %v4683
        %s4692 = sld [smem:[#allocation2 + $0x10a]]
        %4693 = vset.pattern.permute.xlu0 42
        %4694 = vperm.xlu0 %4693, %v841
        %v4695 = vpop.permute.xlu0 %4694
        %4697 = vset.pattern.permute.xlu0 42
        %4698 = vperm.xlu0 %4697, %v844
        %v4699 = vpop.permute.xlu0 %4698
        %4701 = vset.pattern.permute.xlu0 42
        %4702 = vperm.xlu0 %4701, %v847
        %v4703 = vpop.permute.xlu0 %4702
        %4705 = vset.pattern.permute.xlu0 42
        %4706 = vperm.xlu0 %4705, %v850
        %v4707 = vpop.permute.xlu0 %4706
        %4709 = vset.pattern.permute.xlu0 42
        %4710 = vperm.xlu0 %4709, %v853
        %v4711 = vpop.permute.xlu0 %4710
        %4713 = vset.pattern.permute.xlu0 42
        %4714 = vperm.xlu0 %4713, %v856
        %v4715 = vpop.permute.xlu0 %4714
        %4717 = vset.pattern.permute.xlu0 42
        %4718 = vperm.xlu0 %4717, %v859
        %v4719 = vpop.permute.xlu0 %4718
        %4721 = vset.pattern.permute.xlu0 42
        %4722 = vperm.xlu0 %4721, %v862
        %v4723 = vpop.permute.xlu0 %4722
        %v4725 = vperm.slane %v885, 2
        %v4726 = vadd.f32 %v4695, %v4725
        %v4727 = vadd.f32 %v4699, %v4725
        %v4728 = vadd.f32 %v4703, %v4725
        %v4729 = vadd.f32 %v4707, %v4725
        %v4730 = vadd.f32 %v4711, %v4725
        %v4731 = vadd.f32 %v4715, %v4725
        %v4732 = vadd.f32 %v4719, %v4725
        %v4733 = vadd.f32 %v4723, %v4725
        %v4734 = vmax.f32 %v4726, 0.0
        %v4735 = vmax.f32 %v4727, 0.0
        %v4736 = vmax.f32 %v4728, 0.0
        %v4737 = vmax.f32 %v4729, 0.0
        %v4738 = vmax.f32 %v4730, 0.0
        %v4739 = vmax.f32 %v4731, 0.0
        %v4740 = vmax.f32 %v4732, 0.0
        %v4741 = vmax.f32 %v4733, 0.0
        %v4742 = vstv %s4692
        %v4743 = vmul.f32 %v4742, %v4734
        %v4744 = vmul.f32 %v4742, %v4735
        %v4745 = vmul.f32 %v4742, %v4736
        %v4746 = vmul.f32 %v4742, %v4737
        %v4747 = vmul.f32 %v4742, %v4738
        %v4748 = vmul.f32 %v4742, %v4739
        %v4749 = vmul.f32 %v4742, %v4740
        %v4750 = vmul.f32 %v4742, %v4741
        %v4751 = vadd.f32 %v4684, %v4743
        %v4752 = vadd.f32 %v4685, %v4744
        %v4753 = vadd.f32 %v4686, %v4745
        %v4754 = vadd.f32 %v4687, %v4746
        %v4755 = vadd.f32 %v4688, %v4747
        %v4756 = vadd.f32 %v4689, %v4748
        %v4757 = vadd.f32 %v4690, %v4749
        %v4758 = vadd.f32 %v4691, %v4750
        %s4759 = sld [smem:[#allocation2 + $0x10b]]
        %4760 = vset.pattern.permute.xlu0 43
        %4761 = vperm.xlu0 %4760, %v841
        %v4762 = vpop.permute.xlu0 %4761
        %4764 = vset.pattern.permute.xlu0 43
        %4765 = vperm.xlu0 %4764, %v844
        %v4766 = vpop.permute.xlu0 %4765
        %4768 = vset.pattern.permute.xlu0 43
        %4769 = vperm.xlu0 %4768, %v847
        %v4770 = vpop.permute.xlu0 %4769
        %4772 = vset.pattern.permute.xlu0 43
        %4773 = vperm.xlu0 %4772, %v850
        %v4774 = vpop.permute.xlu0 %4773
        %4776 = vset.pattern.permute.xlu0 43
        %4777 = vperm.xlu0 %4776, %v853
        %v4778 = vpop.permute.xlu0 %4777
        %4780 = vset.pattern.permute.xlu0 43
        %4781 = vperm.xlu0 %4780, %v856
        %v4782 = vpop.permute.xlu0 %4781
        %4784 = vset.pattern.permute.xlu0 43
        %4785 = vperm.xlu0 %4784, %v859
        %v4786 = vpop.permute.xlu0 %4785
        %4788 = vset.pattern.permute.xlu0 43
        %4789 = vperm.xlu0 %4788, %v862
        %v4790 = vpop.permute.xlu0 %4789
        %v4792 = vperm.slane %v885, 3
        %v4793 = vadd.f32 %v4762, %v4792
        %v4794 = vadd.f32 %v4766, %v4792
        %v4795 = vadd.f32 %v4770, %v4792
        %v4796 = vadd.f32 %v4774, %v4792
        %v4797 = vadd.f32 %v4778, %v4792
        %v4798 = vadd.f32 %v4782, %v4792
        %v4799 = vadd.f32 %v4786, %v4792
        %v4800 = vadd.f32 %v4790, %v4792
        %v4801 = vmax.f32 %v4793, 0.0
        %v4802 = vmax.f32 %v4794, 0.0
        %v4803 = vmax.f32 %v4795, 0.0
        %v4804 = vmax.f32 %v4796, 0.0
        %v4805 = vmax.f32 %v4797, 0.0
        %v4806 = vmax.f32 %v4798, 0.0
        %v4807 = vmax.f32 %v4799, 0.0
        %v4808 = vmax.f32 %v4800, 0.0
        %v4809 = vstv %s4759
        %v4810 = vmul.f32 %v4809, %v4801
        %v4811 = vmul.f32 %v4809, %v4802
        %v4812 = vmul.f32 %v4809, %v4803
        %v4813 = vmul.f32 %v4809, %v4804
        %v4814 = vmul.f32 %v4809, %v4805
        %v4815 = vmul.f32 %v4809, %v4806
        %v4816 = vmul.f32 %v4809, %v4807
        %v4817 = vmul.f32 %v4809, %v4808
        %v4818 = vadd.f32 %v4751, %v4810
        %v4819 = vadd.f32 %v4752, %v4811
        %v4820 = vadd.f32 %v4753, %v4812
        %v4821 = vadd.f32 %v4754, %v4813
        %v4822 = vadd.f32 %v4755, %v4814
        %v4823 = vadd.f32 %v4756, %v4815
        %v4824 = vadd.f32 %v4757, %v4816
        %v4825 = vadd.f32 %v4758, %v4817
        %s4826 = sld [smem:[#allocation2 + $0x10c]]
        %4827 = vset.pattern.permute.xlu0 44
        %4828 = vperm.xlu0 %4827, %v841
        %v4829 = vpop.permute.xlu0 %4828
        %4831 = vset.pattern.permute.xlu0 44
        %4832 = vperm.xlu0 %4831, %v844
        %v4833 = vpop.permute.xlu0 %4832
        %4835 = vset.pattern.permute.xlu0 44
        %4836 = vperm.xlu0 %4835, %v847
        %v4837 = vpop.permute.xlu0 %4836
        %4839 = vset.pattern.permute.xlu0 44
        %4840 = vperm.xlu0 %4839, %v850
        %v4841 = vpop.permute.xlu0 %4840
        %4843 = vset.pattern.permute.xlu0 44
        %4844 = vperm.xlu0 %4843, %v853
        %v4845 = vpop.permute.xlu0 %4844
        %4847 = vset.pattern.permute.xlu0 44
        %4848 = vperm.xlu0 %4847, %v856
        %v4849 = vpop.permute.xlu0 %4848
        %4851 = vset.pattern.permute.xlu0 44
        %4852 = vperm.xlu0 %4851, %v859
        %v4853 = vpop.permute.xlu0 %4852
        %4855 = vset.pattern.permute.xlu0 44
        %4856 = vperm.xlu0 %4855, %v862
        %v4857 = vpop.permute.xlu0 %4856
        %v4859 = vperm.slane %v885, 4
        %v4860 = vadd.f32 %v4829, %v4859
        %v4861 = vadd.f32 %v4833, %v4859
        %v4862 = vadd.f32 %v4837, %v4859
        %v4863 = vadd.f32 %v4841, %v4859
        %v4864 = vadd.f32 %v4845, %v4859
        %v4865 = vadd.f32 %v4849, %v4859
        %v4866 = vadd.f32 %v4853, %v4859
        %v4867 = vadd.f32 %v4857, %v4859
        %v4868 = vmax.f32 %v4860, 0.0
        %v4869 = vmax.f32 %v4861, 0.0
        %v4870 = vmax.f32 %v4862, 0.0
        %v4871 = vmax.f32 %v4863, 0.0
        %v4872 = vmax.f32 %v4864, 0.0
        %v4873 = vmax.f32 %v4865, 0.0
        %v4874 = vmax.f32 %v4866, 0.0
        %v4875 = vmax.f32 %v4867, 0.0
        %v4876 = vstv %s4826
        %v4877 = vmul.f32 %v4876, %v4868
        %v4878 = vmul.f32 %v4876, %v4869
        %v4879 = vmul.f32 %v4876, %v4870
        %v4880 = vmul.f32 %v4876, %v4871
        %v4881 = vmul.f32 %v4876, %v4872
        %v4882 = vmul.f32 %v4876, %v4873
        %v4883 = vmul.f32 %v4876, %v4874
        %v4884 = vmul.f32 %v4876, %v4875
        %v4885 = vadd.f32 %v4818, %v4877
        %v4886 = vadd.f32 %v4819, %v4878
        %v4887 = vadd.f32 %v4820, %v4879
        %v4888 = vadd.f32 %v4821, %v4880
        %v4889 = vadd.f32 %v4822, %v4881
        %v4890 = vadd.f32 %v4823, %v4882
        %v4891 = vadd.f32 %v4824, %v4883
        %v4892 = vadd.f32 %v4825, %v4884
        %s4893 = sld [smem:[#allocation2 + $0x10d]]
        %4894 = vset.pattern.permute.xlu0 45
        %4895 = vperm.xlu0 %4894, %v841
        %v4896 = vpop.permute.xlu0 %4895
        %4898 = vset.pattern.permute.xlu0 45
        %4899 = vperm.xlu0 %4898, %v844
        %v4900 = vpop.permute.xlu0 %4899
        %4902 = vset.pattern.permute.xlu0 45
        %4903 = vperm.xlu0 %4902, %v847
        %v4904 = vpop.permute.xlu0 %4903
        %4906 = vset.pattern.permute.xlu0 45
        %4907 = vperm.xlu0 %4906, %v850
        %v4908 = vpop.permute.xlu0 %4907
        %4910 = vset.pattern.permute.xlu0 45
        %4911 = vperm.xlu0 %4910, %v853
        %v4912 = vpop.permute.xlu0 %4911
        %4914 = vset.pattern.permute.xlu0 45
        %4915 = vperm.xlu0 %4914, %v856
        %v4916 = vpop.permute.xlu0 %4915
        %4918 = vset.pattern.permute.xlu0 45
        %4919 = vperm.xlu0 %4918, %v859
        %v4920 = vpop.permute.xlu0 %4919
        %4922 = vset.pattern.permute.xlu0 45
        %4923 = vperm.xlu0 %4922, %v862
        %v4924 = vpop.permute.xlu0 %4923
        %v4926 = vperm.slane %v885, 5
        %v4927 = vadd.f32 %v4896, %v4926
        %v4928 = vadd.f32 %v4900, %v4926
        %v4929 = vadd.f32 %v4904, %v4926
        %v4930 = vadd.f32 %v4908, %v4926
        %v4931 = vadd.f32 %v4912, %v4926
        %v4932 = vadd.f32 %v4916, %v4926
        %v4933 = vadd.f32 %v4920, %v4926
        %v4934 = vadd.f32 %v4924, %v4926
        %v4935 = vmax.f32 %v4927, 0.0
        %v4936 = vmax.f32 %v4928, 0.0
        %v4937 = vmax.f32 %v4929, 0.0
        %v4938 = vmax.f32 %v4930, 0.0
        %v4939 = vmax.f32 %v4931, 0.0
        %v4940 = vmax.f32 %v4932, 0.0
        %v4941 = vmax.f32 %v4933, 0.0
        %v4942 = vmax.f32 %v4934, 0.0
        %v4943 = vstv %s4893
        %v4944 = vmul.f32 %v4943, %v4935
        %v4945 = vmul.f32 %v4943, %v4936
        %v4946 = vmul.f32 %v4943, %v4937
        %v4947 = vmul.f32 %v4943, %v4938
        %v4948 = vmul.f32 %v4943, %v4939
        %v4949 = vmul.f32 %v4943, %v4940
        %v4950 = vmul.f32 %v4943, %v4941
        %v4951 = vmul.f32 %v4943, %v4942
        %v4952 = vadd.f32 %v4885, %v4944
        %v4953 = vadd.f32 %v4886, %v4945
        %v4954 = vadd.f32 %v4887, %v4946
        %v4955 = vadd.f32 %v4888, %v4947
        %v4956 = vadd.f32 %v4889, %v4948
        %v4957 = vadd.f32 %v4890, %v4949
        %v4958 = vadd.f32 %v4891, %v4950
        %v4959 = vadd.f32 %v4892, %v4951
        %s4960 = sld [smem:[#allocation2 + $0x10e]]
        %4961 = vset.pattern.permute.xlu0 46
        %4962 = vperm.xlu0 %4961, %v841
        %v4963 = vpop.permute.xlu0 %4962
        %4965 = vset.pattern.permute.xlu0 46
        %4966 = vperm.xlu0 %4965, %v844
        %v4967 = vpop.permute.xlu0 %4966
        %4969 = vset.pattern.permute.xlu0 46
        %4970 = vperm.xlu0 %4969, %v847
        %v4971 = vpop.permute.xlu0 %4970
        %4973 = vset.pattern.permute.xlu0 46
        %4974 = vperm.xlu0 %4973, %v850
        %v4975 = vpop.permute.xlu0 %4974
        %4977 = vset.pattern.permute.xlu0 46
        %4978 = vperm.xlu0 %4977, %v853
        %v4979 = vpop.permute.xlu0 %4978
        %4981 = vset.pattern.permute.xlu0 46
        %4982 = vperm.xlu0 %4981, %v856
        %v4983 = vpop.permute.xlu0 %4982
        %4985 = vset.pattern.permute.xlu0 46
        %4986 = vperm.xlu0 %4985, %v859
        %v4987 = vpop.permute.xlu0 %4986
        %4989 = vset.pattern.permute.xlu0 46
        %4990 = vperm.xlu0 %4989, %v862
        %v4991 = vpop.permute.xlu0 %4990
        %v4993 = vperm.slane %v885, 6
        %v4994 = vadd.f32 %v4963, %v4993
        %v4995 = vadd.f32 %v4967, %v4993
        %v4996 = vadd.f32 %v4971, %v4993
        %v4997 = vadd.f32 %v4975, %v4993
        %v4998 = vadd.f32 %v4979, %v4993
        %v4999 = vadd.f32 %v4983, %v4993
        %v5000 = vadd.f32 %v4987, %v4993
        %v5001 = vadd.f32 %v4991, %v4993
        %v5002 = vmax.f32 %v4994, 0.0
        %v5003 = vmax.f32 %v4995, 0.0
        %v5004 = vmax.f32 %v4996, 0.0
        %v5005 = vmax.f32 %v4997, 0.0
        %v5006 = vmax.f32 %v4998, 0.0
        %v5007 = vmax.f32 %v4999, 0.0
        %v5008 = vmax.f32 %v5000, 0.0
        %v5009 = vmax.f32 %v5001, 0.0
        %v5010 = vstv %s4960
        %v5011 = vmul.f32 %v5010, %v5002
        %v5012 = vmul.f32 %v5010, %v5003
        %v5013 = vmul.f32 %v5010, %v5004
        %v5014 = vmul.f32 %v5010, %v5005
        %v5015 = vmul.f32 %v5010, %v5006
        %v5016 = vmul.f32 %v5010, %v5007
        %v5017 = vmul.f32 %v5010, %v5008
        %v5018 = vmul.f32 %v5010, %v5009
        %v5019 = vadd.f32 %v4952, %v5011
        %v5020 = vadd.f32 %v4953, %v5012
        %v5021 = vadd.f32 %v4954, %v5013
        %v5022 = vadd.f32 %v4955, %v5014
        %v5023 = vadd.f32 %v4956, %v5015
        %v5024 = vadd.f32 %v4957, %v5016
        %v5025 = vadd.f32 %v4958, %v5017
        %v5026 = vadd.f32 %v4959, %v5018
        %s5027 = sld [smem:[#allocation2 + $0x10f]]
        %5028 = vset.pattern.permute.xlu0 47
        %5029 = vperm.xlu0 %5028, %v841
        %v5030 = vpop.permute.xlu0 %5029
        %5032 = vset.pattern.permute.xlu0 47
        %5033 = vperm.xlu0 %5032, %v844
        %v5034 = vpop.permute.xlu0 %5033
        %5036 = vset.pattern.permute.xlu0 47
        %5037 = vperm.xlu0 %5036, %v847
        %v5038 = vpop.permute.xlu0 %5037
        %5040 = vset.pattern.permute.xlu0 47
        %5041 = vperm.xlu0 %5040, %v850
        %v5042 = vpop.permute.xlu0 %5041
        %5044 = vset.pattern.permute.xlu0 47
        %5045 = vperm.xlu0 %5044, %v853
        %v5046 = vpop.permute.xlu0 %5045
        %5048 = vset.pattern.permute.xlu0 47
        %5049 = vperm.xlu0 %5048, %v856
        %v5050 = vpop.permute.xlu0 %5049
        %5052 = vset.pattern.permute.xlu0 47
        %5053 = vperm.xlu0 %5052, %v859
        %v5054 = vpop.permute.xlu0 %5053
        %5056 = vset.pattern.permute.xlu0 47
        %5057 = vperm.xlu0 %5056, %v862
        %v5058 = vpop.permute.xlu0 %5057
        %v5060 = vperm.slane %v885, 7
        %v5061 = vadd.f32 %v5030, %v5060
        %v5062 = vadd.f32 %v5034, %v5060
        %v5063 = vadd.f32 %v5038, %v5060
        %v5064 = vadd.f32 %v5042, %v5060
        %v5065 = vadd.f32 %v5046, %v5060
        %v5066 = vadd.f32 %v5050, %v5060
        %v5067 = vadd.f32 %v5054, %v5060
        %v5068 = vadd.f32 %v5058, %v5060
        %v5069 = vmax.f32 %v5061, 0.0
        %v5070 = vmax.f32 %v5062, 0.0
        %v5071 = vmax.f32 %v5063, 0.0
        %v5072 = vmax.f32 %v5064, 0.0
        %v5073 = vmax.f32 %v5065, 0.0
        %v5074 = vmax.f32 %v5066, 0.0
        %v5075 = vmax.f32 %v5067, 0.0
        %v5076 = vmax.f32 %v5068, 0.0
        %v5077 = vstv %s5027
        %v5078 = vmul.f32 %v5077, %v5069
        %v5079 = vmul.f32 %v5077, %v5070
        %v5080 = vmul.f32 %v5077, %v5071
        %v5081 = vmul.f32 %v5077, %v5072
        %v5082 = vmul.f32 %v5077, %v5073
        %v5083 = vmul.f32 %v5077, %v5074
        %v5084 = vmul.f32 %v5077, %v5075
        %v5085 = vmul.f32 %v5077, %v5076
        %v5086 = vadd.f32 %v5019, %v5078
        %v5087 = vadd.f32 %v5020, %v5079
        %v5088 = vadd.f32 %v5021, %v5080
        %v5089 = vadd.f32 %v5022, %v5081
        %v5090 = vadd.f32 %v5023, %v5082
        %v5091 = vadd.f32 %v5024, %v5083
        %v5092 = vadd.f32 %v5025, %v5084
        %v5093 = vadd.f32 %v5026, %v5085
        %v5094 = vsel %vm1012, %v5086, -1e+30
        %v5095 = vsel %vm1013, %v5087, -1e+30
        %v5096 = vsel %vm1014, %v5088, -1e+30
        %v5097 = vsel %vm1015, %v5089, -1e+30
        %v5098 = vsel %vm1016, %v5090, -1e+30
        %v5099 = vsel %vm1017, %v5091, -1e+30
        %v5100 = vsel %vm1018, %v5092, -1e+30
        %v5101 = vsel %vm1019, %v5093, -1e+30
        %v5102 = vsel %vm2173, %v5094, -inf
        %5103 = vmax.xlane.f32.xlu0 %v5102
        %v5104 = vpop.xlane.xlu0 %5103
        %v5105 = vsel %vm2173, %v5095, -inf
        %5106 = vmax.xlane.f32.xlu0 %v5105
        %v5107 = vpop.xlane.xlu0 %5106
        %v5108 = vsel %vm2173, %v5096, -inf
        %5109 = vmax.xlane.f32.xlu0 %v5108
        %v5110 = vpop.xlane.xlu0 %5109
        %v5111 = vsel %vm2173, %v5097, -inf
        %5112 = vmax.xlane.f32.xlu0 %v5111
        %v5113 = vpop.xlane.xlu0 %5112
        %v5114 = vsel %vm2173, %v5098, -inf
        %5115 = vmax.xlane.f32.xlu0 %v5114
        %v5116 = vpop.xlane.xlu0 %5115
        %v5117 = vsel %vm2173, %v5099, -inf
        %5118 = vmax.xlane.f32.xlu0 %v5117
        %v5119 = vpop.xlane.xlu0 %5118
        %v5120 = vsel %vm2173, %v5100, -inf
        %5121 = vmax.xlane.f32.xlu0 %v5120
        %v5122 = vpop.xlane.xlu0 %5121
        %v5123 = vsel %vm2173, %v5101, -inf
        %5124 = vmax.xlane.f32.xlu0 %v5123
        %v5125 = vpop.xlane.xlu0 %5124
        %v5126 = vsub.f32 %v5094, %v5104
        %v5127 = vsub.f32 %v5095, %v5107
        %v5128 = vsub.f32 %v5096, %v5110
        %v5129 = vsub.f32 %v5097, %v5113
        %v5130 = vsub.f32 %v5098, %v5116
        %v5131 = vsub.f32 %v5099, %v5119
        %v5132 = vsub.f32 %v5100, %v5122
        %v5133 = vsub.f32 %v5101, %v5125
        %v5134 = vmul.f32 %v5126, 1.442695
        %v5135 = vpow.pop %v5134
        %v5136 = vmul.f32 %v5127, 1.442695
        %v5137 = vpow.pop %v5136
        %v5138 = vmul.f32 %v5128, 1.442695
        %v5139 = vpow.pop %v5138
        %v5140 = vmul.f32 %v5129, 1.442695
        %v5141 = vpow.pop %v5140
        %v5142 = vmul.f32 %v5130, 1.442695
        %v5143 = vpow.pop %v5142
        %v5144 = vmul.f32 %v5131, 1.442695
        %v5145 = vpow.pop %v5144
        %v5146 = vmul.f32 %v5132, 1.442695
        %v5147 = vpow.pop %v5146
        %v5148 = vmul.f32 %v5133, 1.442695
        %v5149 = vpow.pop %v5148
        %v5150 = vmul.f32 %v5135, %v1028
        %v5151 = vmul.f32 %v5137, %v1029
        %v5152 = vmul.f32 %v5139, %v1030
        %v5153 = vmul.f32 %v5141, %v1031
        %v5154 = vmul.f32 %v5143, %v1032
        %v5155 = vmul.f32 %v5145, %v1033
        %v5156 = vmul.f32 %v5147, %v1034
        %v5157 = vmul.f32 %v5149, %v1035
        %v5158 = vsel %vm2173, %v5150, 0.0
        %5159 = vadd.xlane.f32.xlu0 %v5158
        %v5160 = vpop.xlane.xlu0 %5159
        %v5161 = vsel %vm2173, %v5151, 0.0
        %5162 = vadd.xlane.f32.xlu0 %v5161
        %v5163 = vpop.xlane.xlu0 %5162
        %v5164 = vsel %vm2173, %v5152, 0.0
        %5165 = vadd.xlane.f32.xlu0 %v5164
        %v5166 = vpop.xlane.xlu0 %5165
        %v5167 = vsel %vm2173, %v5153, 0.0
        %5168 = vadd.xlane.f32.xlu0 %v5167
        %v5169 = vpop.xlane.xlu0 %5168
        %v5170 = vsel %vm2173, %v5154, 0.0
        %5171 = vadd.xlane.f32.xlu0 %v5170
        %v5172 = vpop.xlane.xlu0 %5171
        %v5173 = vsel %vm2173, %v5155, 0.0
        %5174 = vadd.xlane.f32.xlu0 %v5173
        %v5175 = vpop.xlane.xlu0 %5174
        %v5176 = vsel %vm2173, %v5156, 0.0
        %5177 = vadd.xlane.f32.xlu0 %v5176
        %v5178 = vpop.xlane.xlu0 %5177
        %v5179 = vsel %vm2173, %v5157, 0.0
        %5180 = vadd.xlane.f32.xlu0 %v5179
        %v5181 = vpop.xlane.xlu0 %5180
        %v5182 = vmax.f32 %v5160, 1e-16
        %v5183 = vmax.f32 %v5163, 1e-16
        %v5184 = vmax.f32 %v5166, 1e-16
        %v5185 = vmax.f32 %v5169, 1e-16
        %v5186 = vmax.f32 %v5172, 1e-16
        %v5187 = vmax.f32 %v5175, 1e-16
        %v5188 = vmax.f32 %v5178, 1e-16
        %v5189 = vmax.f32 %v5181, 1e-16
        %v5190 = vrcp.pop %v5182
        %v5191 = vmul.f32 %v5182, %v5190
        %v5192 = vsub.f32 1.0, %v5191
        %v5193 = vmul.f32 %v5190, %v5192
        %v5194 = vadd.f32 %v5190, %v5193
        %vm5195 = vweird.f32 %v5182
        %vm5196 = vweird.f32 %v5190
        %vm5197 = vmor %vm5195, %vm5196
        %v5198 = vsel %vm5197, %v5190, %v5194
        %v5199 = vand.u32 2147483647, %v5182
        %vm5200 = vcmp.eq.f32.partialorder %v5199, 8.507059e+37
        %v5201 = vand.u32 %v5182, 2147483648
        %v5202 = vor.u32 1.1754944e-38, %v5201
        %v5203 = vsel %vm5200, %v5202, %v5198
        %v5204 = vmul.f32 %v5150, %v5203
        %v5205 = vrcp.pop %v5183
        %v5206 = vmul.f32 %v5183, %v5205
        %v5207 = vsub.f32 1.0, %v5206
        %v5208 = vmul.f32 %v5205, %v5207
        %v5209 = vadd.f32 %v5205, %v5208
        %vm5210 = vweird.f32 %v5183
        %vm5211 = vweird.f32 %v5205
        %vm5212 = vmor %vm5210, %vm5211
        %v5213 = vsel %vm5212, %v5205, %v5209
        %v5214 = vand.u32 2147483647, %v5183
        %vm5215 = vcmp.eq.f32.partialorder %v5214, 8.507059e+37
        %v5216 = vand.u32 %v5183, 2147483648
        %v5217 = vor.u32 1.1754944e-38, %v5216
        %v5218 = vsel %vm5215, %v5217, %v5213
        %v5219 = vmul.f32 %v5151, %v5218
        %v5220 = vrcp.pop %v5184
        %v5221 = vmul.f32 %v5184, %v5220
        %v5222 = vsub.f32 1.0, %v5221
        %v5223 = vmul.f32 %v5220, %v5222
        %v5224 = vadd.f32 %v5220, %v5223
        %vm5225 = vweird.f32 %v5184
        %vm5226 = vweird.f32 %v5220
        %vm5227 = vmor %vm5225, %vm5226
        %v5228 = vsel %vm5227, %v5220, %v5224
        %v5229 = vand.u32 2147483647, %v5184
        %vm5230 = vcmp.eq.f32.partialorder %v5229, 8.507059e+37
        %v5231 = vand.u32 %v5184, 2147483648
        %v5232 = vor.u32 1.1754944e-38, %v5231
        %v5233 = vsel %vm5230, %v5232, %v5228
        %v5234 = vmul.f32 %v5152, %v5233
        %v5235 = vrcp.pop %v5185
        %v5236 = vmul.f32 %v5185, %v5235
        %v5237 = vsub.f32 1.0, %v5236
        %v5238 = vmul.f32 %v5235, %v5237
        %v5239 = vadd.f32 %v5235, %v5238
        %vm5240 = vweird.f32 %v5185
        %vm5241 = vweird.f32 %v5235
        %vm5242 = vmor %vm5240, %vm5241
        %v5243 = vsel %vm5242, %v5235, %v5239
        %v5244 = vand.u32 2147483647, %v5185
        %vm5245 = vcmp.eq.f32.partialorder %v5244, 8.507059e+37
        %v5246 = vand.u32 %v5185, 2147483648
        %v5247 = vor.u32 1.1754944e-38, %v5246
        %v5248 = vsel %vm5245, %v5247, %v5243
        %v5249 = vmul.f32 %v5153, %v5248
        %v5250 = vrcp.pop %v5186
        %v5251 = vmul.f32 %v5186, %v5250
        %v5252 = vsub.f32 1.0, %v5251
        %v5253 = vmul.f32 %v5250, %v5252
        %v5254 = vadd.f32 %v5250, %v5253
        %vm5255 = vweird.f32 %v5186
        %vm5256 = vweird.f32 %v5250
        %vm5257 = vmor %vm5255, %vm5256
        %v5258 = vsel %vm5257, %v5250, %v5254
        %v5259 = vand.u32 2147483647, %v5186
        %vm5260 = vcmp.eq.f32.partialorder %v5259, 8.507059e+37
        %v5261 = vand.u32 %v5186, 2147483648
        %v5262 = vor.u32 1.1754944e-38, %v5261
        %v5263 = vsel %vm5260, %v5262, %v5258
        %v5264 = vmul.f32 %v5154, %v5263
        %v5265 = vrcp.pop %v5187
        %v5266 = vmul.f32 %v5187, %v5265
        %v5267 = vsub.f32 1.0, %v5266
        %v5268 = vmul.f32 %v5265, %v5267
        %v5269 = vadd.f32 %v5265, %v5268
        %vm5270 = vweird.f32 %v5187
        %vm5271 = vweird.f32 %v5265
        %vm5272 = vmor %vm5270, %vm5271
        %v5273 = vsel %vm5272, %v5265, %v5269
        %v5274 = vand.u32 2147483647, %v5187
        %vm5275 = vcmp.eq.f32.partialorder %v5274, 8.507059e+37
        %v5276 = vand.u32 %v5187, 2147483648
        %v5277 = vor.u32 1.1754944e-38, %v5276
        %v5278 = vsel %vm5275, %v5277, %v5273
        %v5279 = vmul.f32 %v5155, %v5278
        %v5280 = vrcp.pop %v5188
        %v5281 = vmul.f32 %v5188, %v5280
        %v5282 = vsub.f32 1.0, %v5281
        %v5283 = vmul.f32 %v5280, %v5282
        %v5284 = vadd.f32 %v5280, %v5283
        %vm5285 = vweird.f32 %v5188
        %vm5286 = vweird.f32 %v5280
        %vm5287 = vmor %vm5285, %vm5286
        %v5288 = vsel %vm5287, %v5280, %v5284
        %v5289 = vand.u32 2147483647, %v5188
        %vm5290 = vcmp.eq.f32.partialorder %v5289, 8.507059e+37
        %v5291 = vand.u32 %v5188, 2147483648
        %v5292 = vor.u32 1.1754944e-38, %v5291
        %v5293 = vsel %vm5290, %v5292, %v5288
        %v5294 = vmul.f32 %v5156, %v5293
        %v5295 = vrcp.pop %v5189
        %v5296 = vmul.f32 %v5189, %v5295
        %v5297 = vsub.f32 1.0, %v5296
        %v5298 = vmul.f32 %v5295, %v5297
        %v5299 = vadd.f32 %v5295, %v5298
        %vm5300 = vweird.f32 %v5189
        %vm5301 = vweird.f32 %v5295
        %vm5302 = vmor %vm5300, %vm5301
        %v5303 = vsel %vm5302, %v5295, %v5299
        %v5304 = vand.u32 2147483647, %v5189
        %vm5305 = vcmp.eq.f32.partialorder %v5304, 8.507059e+37
        %v5306 = vand.u32 %v5189, 2147483648
        %v5307 = vor.u32 1.1754944e-38, %v5306
        %v5308 = vsel %vm5305, %v5307, %v5303
        %v5309 = vmul.f32 %v5157, %v5308
        %v5310 = vld [vmem:[%s13] sm:$0x1]
        %v5312 = vperm.slane %v5310, 0
        %5313 = vrot.lane.b32.xlu0 %v770, 96
        %v5314 = vpop.permute.xlu0 %5313
        %5315 = vrot.lane.b32.xlu0 %v773, 96
        %v5316 = vpop.permute.xlu0 %5315
        %5317 = vrot.lane.b32.xlu0 %v776, 96
        %v5318 = vpop.permute.xlu0 %5317
        %5319 = vrot.lane.b32.xlu0 %v779, 96
        %v5320 = vpop.permute.xlu0 %5319
        %5321 = vrot.lane.b32.xlu0 %v782, 96
        %v5322 = vpop.permute.xlu0 %5321
        %5323 = vrot.lane.b32.xlu0 %v785, 96
        %v5324 = vpop.permute.xlu0 %5323
        %5325 = vrot.lane.b32.xlu0 %v788, 96
        %v5326 = vpop.permute.xlu0 %5325
        %5327 = vrot.lane.b32.xlu0 %v791, 96
        %v5328 = vpop.permute.xlu0 %5327
        %5337 = vrot.lane.b32.xlu0 %v5312, 96
        %v5338 = vpop.permute.xlu0 %5337
        %v5341 = vsel %vm2173, %v5204, 0
        %v5344 = vsel %vm2173, %v5219, 0
        %v5347 = vsel %vm2173, %v5234, 0
        %v5350 = vsel %vm2173, %v5249, 0
        %v5353 = vsel %vm2173, %v5264, 0
        %v5356 = vsel %vm2173, %v5279, 0
        %v5359 = vsel %vm2173, %v5294, 0
        %v5362 = vsel %vm2173, %v5309, 0
        %5364 = vmatpush.msra.mxu0 0.0
        %5365 = vmatpush.msra.mxu0 0.0
        %5366 = vmatpush.msra.mxu0 0.0
        %5367 = vmatpush.msra.mxu0 0.0
        %5368 = vmatpush.msra.mxu0 0.0
        %5369 = vmatpush.msra.mxu0 0.0
        %5370 = vmatpush.msra.mxu0 0.0
        %5371 = vmatpush.msra.mxu0 0.0
        %5372 = vmatpush.msra.mxu0 %v5328
        %5373 = vmatpush.msra.mxu0 %v5326
        %5374 = vmatpush.msra.mxu0 %v5324
        %5375 = vmatpush.msra.mxu0 %v5322
        %5376 = vmatpush.msra.mxu0 %v5320
        %5377 = vmatpush.msra.mxu0 %v5318
        %5378 = vmatpush.msra.mxu0 %v5316
        %5379 = vmatpush.msra.mxu0 %v5314
        %5380 = vmatmul.f32.gmra.mxu0 %v5341
        %v5381 = vpop.f32.mrf.mxu0
        %v5382 = vadd.f32 %v5338, %v5381
        %5383 = vmatmul.f32.gmra.mxu0 %v5344
        %v5384 = vpop.f32.mrf.mxu0
        %v5385 = vadd.f32 %v5338, %v5384
        %5386 = vmatmul.f32.gmra.mxu0 %v5347
        %v5387 = vpop.f32.mrf.mxu0
        %v5388 = vadd.f32 %v5338, %v5387
        %5389 = vmatmul.f32.gmra.mxu0 %v5350
        %v5390 = vpop.f32.mrf.mxu0
        %v5391 = vadd.f32 %v5338, %v5390
        %5392 = vmatmul.f32.gmra.mxu0 %v5353
        %v5393 = vpop.f32.mrf.mxu0
        %v5394 = vadd.f32 %v5338, %v5393
        %5395 = vmatmul.f32.gmra.mxu0 %v5356
        %v5396 = vpop.f32.mrf.mxu0
        %v5397 = vadd.f32 %v5338, %v5396
        %5398 = vmatmul.f32.gmra.mxu0 %v5359
        %v5399 = vpop.f32.mrf.mxu0
        %v5400 = vadd.f32 %v5338, %v5399
        %5401 = vmatmul.f32.gmra.mxu0 %v5362
        %v5402 = vpop.f32.mrf.mxu0
        %v5403 = vadd.f32 %v5338, %v5402
        %5404 = vdwg.mxu0
        %v5405 = vmax.f32 %v5382, 0.0
        %v5406 = vmax.f32 %v5385, 0.0
        %v5407 = vmax.f32 %v5388, 0.0
        %v5408 = vmax.f32 %v5391, 0.0
        %v5409 = vmax.f32 %v5394, 0.0
        %v5410 = vmax.f32 %v5397, 0.0
        %v5411 = vmax.f32 %v5400, 0.0
        %v5412 = vmax.f32 %v5403, 0.0
        %5421 = vrot.lane.b32.xlu0 %v5405, 48
        %v5422 = vpop.permute.xlu0 %5421
        %5423 = vrot.lane.b32.xlu0 %v5406, 48
        %v5424 = vpop.permute.xlu0 %5423
        %5425 = vrot.lane.b32.xlu0 %v5407, 48
        %v5426 = vpop.permute.xlu0 %5425
        %5427 = vrot.lane.b32.xlu0 %v5408, 48
        %v5428 = vpop.permute.xlu0 %5427
        %5429 = vrot.lane.b32.xlu0 %v5409, 48
        %v5430 = vpop.permute.xlu0 %5429
        %5431 = vrot.lane.b32.xlu0 %v5410, 48
        %v5432 = vpop.permute.xlu0 %5431
        %5433 = vrot.lane.b32.xlu0 %v5411, 48
        %v5434 = vpop.permute.xlu0 %5433
        %5435 = vrot.lane.b32.xlu0 %v5412, 48
        %v5436 = vpop.permute.xlu0 %5435
        %vm5445 = vcmask 523648
        %5446 = vst.msk [vmem:[%s532] sm:$0xff] %vm5445, %v5422
        %5447 = vst.msk [vmem:[%s532 + $0x8] sm:$0xff] %vm5445, %v5424
        %5448 = vst.msk [vmem:[%s532 + $0x10] sm:$0xff] %vm5445, %v5426
        %5449 = vst.msk [vmem:[%s532 + $0x18] sm:$0xff] %vm5445, %v5428
        %5450 = vst.msk [vmem:[%s532 + $0x20] sm:$0xff] %vm5445, %v5430
        %5451 = vst.msk [vmem:[%s532 + $0x28] sm:$0xff] %vm5445, %v5432
        %5452 = vst.msk [vmem:[%s532 + $0x30] sm:$0xff] %vm5445, %v5434
        %5453 = vst.msk [vmem:[%s532 + $0x38] sm:$0xff] %vm5445, %v5436
        %5454 = vset.pattern.permute.xlu0 3
        %5455 = vperm.xlu0 %5454, %v949
        %v5456 = vpop.permute.xlu0 %5455
        %5458 = vset.pattern.permute.xlu0 3
        %5459 = vperm.xlu0 %5458, %v952
        %v5460 = vpop.permute.xlu0 %5459
        %5462 = vset.pattern.permute.xlu0 3
        %5463 = vperm.xlu0 %5462, %v955
        %v5464 = vpop.permute.xlu0 %5463
        %5466 = vset.pattern.permute.xlu0 3
        %5467 = vperm.xlu0 %5466, %v958
        %v5468 = vpop.permute.xlu0 %5467
        %5470 = vset.pattern.permute.xlu0 3
        %5471 = vperm.xlu0 %5470, %v961
        %v5472 = vpop.permute.xlu0 %5471
        %5474 = vset.pattern.permute.xlu0 3
        %5475 = vperm.xlu0 %5474, %v964
        %v5476 = vpop.permute.xlu0 %5475
        %5478 = vset.pattern.permute.xlu0 3
        %5479 = vperm.xlu0 %5478, %v967
        %v5480 = vpop.permute.xlu0 %5479
        %5482 = vset.pattern.permute.xlu0 3
        %5483 = vperm.xlu0 %5482, %v970
        %v5484 = vpop.permute.xlu0 %5483
        %v5486 = vperm.slane %v994, 3
        %v5487 = vadd.f32 %v5456, %v5486
        %v5488 = vadd.f32 %v5460, %v5486
        %v5489 = vadd.f32 %v5464, %v5486
        %v5490 = vadd.f32 %v5468, %v5486
        %v5491 = vadd.f32 %v5472, %v5486
        %v5492 = vadd.f32 %v5476, %v5486
        %v5493 = vadd.f32 %v5480, %v5486
        %v5494 = vadd.f32 %v5484, %v5486
        %s5495 = sld [smem:[#allocation2 + $0x180]]
        %5496 = vset.pattern.permute.xlu0 48
        %5497 = vperm.xlu0 %5496, %v841
        %v5498 = vpop.permute.xlu0 %5497
        %5500 = vset.pattern.permute.xlu0 48
        %5501 = vperm.xlu0 %5500, %v844
        %v5502 = vpop.permute.xlu0 %5501
        %5504 = vset.pattern.permute.xlu0 48
        %5505 = vperm.xlu0 %5504, %v847
        %v5506 = vpop.permute.xlu0 %5505
        %5508 = vset.pattern.permute.xlu0 48
        %5509 = vperm.xlu0 %5508, %v850
        %v5510 = vpop.permute.xlu0 %5509
        %5512 = vset.pattern.permute.xlu0 48
        %5513 = vperm.xlu0 %5512, %v853
        %v5514 = vpop.permute.xlu0 %5513
        %5516 = vset.pattern.permute.xlu0 48
        %5517 = vperm.xlu0 %5516, %v856
        %v5518 = vpop.permute.xlu0 %5517
        %5520 = vset.pattern.permute.xlu0 48
        %5521 = vperm.xlu0 %5520, %v859
        %v5522 = vpop.permute.xlu0 %5521
        %5524 = vset.pattern.permute.xlu0 48
        %5525 = vperm.xlu0 %5524, %v862
        %v5526 = vpop.permute.xlu0 %5525
        %v5528 = vperm.slane %v886, 0
        %v5529 = vadd.f32 %v5498, %v5528
        %v5530 = vadd.f32 %v5502, %v5528
        %v5531 = vadd.f32 %v5506, %v5528
        %v5532 = vadd.f32 %v5510, %v5528
        %v5533 = vadd.f32 %v5514, %v5528
        %v5534 = vadd.f32 %v5518, %v5528
        %v5535 = vadd.f32 %v5522, %v5528
        %v5536 = vadd.f32 %v5526, %v5528
        %v5537 = vmax.f32 %v5529, 0.0
        %v5538 = vmax.f32 %v5530, 0.0
        %v5539 = vmax.f32 %v5531, 0.0
        %v5540 = vmax.f32 %v5532, 0.0
        %v5541 = vmax.f32 %v5533, 0.0
        %v5542 = vmax.f32 %v5534, 0.0
        %v5543 = vmax.f32 %v5535, 0.0
        %v5544 = vmax.f32 %v5536, 0.0
        %v5545 = vstv %s5495
        %v5546 = vmul.f32 %v5545, %v5537
        %v5547 = vmul.f32 %v5545, %v5538
        %v5548 = vmul.f32 %v5545, %v5539
        %v5549 = vmul.f32 %v5545, %v5540
        %v5550 = vmul.f32 %v5545, %v5541
        %v5551 = vmul.f32 %v5545, %v5542
        %v5552 = vmul.f32 %v5545, %v5543
        %v5553 = vmul.f32 %v5545, %v5544
        %v5554 = vadd.f32 %v5487, %v5546
        %v5555 = vadd.f32 %v5488, %v5547
        %v5556 = vadd.f32 %v5489, %v5548
        %v5557 = vadd.f32 %v5490, %v5549
        %v5558 = vadd.f32 %v5491, %v5550
        %v5559 = vadd.f32 %v5492, %v5551
        %v5560 = vadd.f32 %v5493, %v5552
        %v5561 = vadd.f32 %v5494, %v5553
        %s5562 = sld [smem:[#allocation2 + $0x181]]
        %5563 = vset.pattern.permute.xlu0 49
        %5564 = vperm.xlu0 %5563, %v841
        %v5565 = vpop.permute.xlu0 %5564
        %5567 = vset.pattern.permute.xlu0 49
        %5568 = vperm.xlu0 %5567, %v844
        %v5569 = vpop.permute.xlu0 %5568
        %5571 = vset.pattern.permute.xlu0 49
        %5572 = vperm.xlu0 %5571, %v847
        %v5573 = vpop.permute.xlu0 %5572
        %5575 = vset.pattern.permute.xlu0 49
        %5576 = vperm.xlu0 %5575, %v850
        %v5577 = vpop.permute.xlu0 %5576
        %5579 = vset.pattern.permute.xlu0 49
        %5580 = vperm.xlu0 %5579, %v853
        %v5581 = vpop.permute.xlu0 %5580
        %5583 = vset.pattern.permute.xlu0 49
        %5584 = vperm.xlu0 %5583, %v856
        %v5585 = vpop.permute.xlu0 %5584
        %5587 = vset.pattern.permute.xlu0 49
        %5588 = vperm.xlu0 %5587, %v859
        %v5589 = vpop.permute.xlu0 %5588
        %5591 = vset.pattern.permute.xlu0 49
        %5592 = vperm.xlu0 %5591, %v862
        %v5593 = vpop.permute.xlu0 %5592
        %v5595 = vperm.slane %v886, 1
        %v5596 = vadd.f32 %v5565, %v5595
        %v5597 = vadd.f32 %v5569, %v5595
        %v5598 = vadd.f32 %v5573, %v5595
        %v5599 = vadd.f32 %v5577, %v5595
        %v5600 = vadd.f32 %v5581, %v5595
        %v5601 = vadd.f32 %v5585, %v5595
        %v5602 = vadd.f32 %v5589, %v5595
        %v5603 = vadd.f32 %v5593, %v5595
        %v5604 = vmax.f32 %v5596, 0.0
        %v5605 = vmax.f32 %v5597, 0.0
        %v5606 = vmax.f32 %v5598, 0.0
        %v5607 = vmax.f32 %v5599, 0.0
        %v5608 = vmax.f32 %v5600, 0.0
        %v5609 = vmax.f32 %v5601, 0.0
        %v5610 = vmax.f32 %v5602, 0.0
        %v5611 = vmax.f32 %v5603, 0.0
        %v5612 = vstv %s5562
        %v5613 = vmul.f32 %v5612, %v5604
        %v5614 = vmul.f32 %v5612, %v5605
        %v5615 = vmul.f32 %v5612, %v5606
        %v5616 = vmul.f32 %v5612, %v5607
        %v5617 = vmul.f32 %v5612, %v5608
        %v5618 = vmul.f32 %v5612, %v5609
        %v5619 = vmul.f32 %v5612, %v5610
        %v5620 = vmul.f32 %v5612, %v5611
        %v5621 = vadd.f32 %v5554, %v5613
        %v5622 = vadd.f32 %v5555, %v5614
        %v5623 = vadd.f32 %v5556, %v5615
        %v5624 = vadd.f32 %v5557, %v5616
        %v5625 = vadd.f32 %v5558, %v5617
        %v5626 = vadd.f32 %v5559, %v5618
        %v5627 = vadd.f32 %v5560, %v5619
        %v5628 = vadd.f32 %v5561, %v5620
        %s5629 = sld [smem:[#allocation2 + $0x182]]
        %5630 = vset.pattern.permute.xlu0 50
        %5631 = vperm.xlu0 %5630, %v841
        %v5632 = vpop.permute.xlu0 %5631
        %5634 = vset.pattern.permute.xlu0 50
        %5635 = vperm.xlu0 %5634, %v844
        %v5636 = vpop.permute.xlu0 %5635
        %5638 = vset.pattern.permute.xlu0 50
        %5639 = vperm.xlu0 %5638, %v847
        %v5640 = vpop.permute.xlu0 %5639
        %5642 = vset.pattern.permute.xlu0 50
        %5643 = vperm.xlu0 %5642, %v850
        %v5644 = vpop.permute.xlu0 %5643
        %5646 = vset.pattern.permute.xlu0 50
        %5647 = vperm.xlu0 %5646, %v853
        %v5648 = vpop.permute.xlu0 %5647
        %5650 = vset.pattern.permute.xlu0 50
        %5651 = vperm.xlu0 %5650, %v856
        %v5652 = vpop.permute.xlu0 %5651
        %5654 = vset.pattern.permute.xlu0 50
        %5655 = vperm.xlu0 %5654, %v859
        %v5656 = vpop.permute.xlu0 %5655
        %5658 = vset.pattern.permute.xlu0 50
        %5659 = vperm.xlu0 %5658, %v862
        %v5660 = vpop.permute.xlu0 %5659
        %v5662 = vperm.slane %v886, 2
        %v5663 = vadd.f32 %v5632, %v5662
        %v5664 = vadd.f32 %v5636, %v5662
        %v5665 = vadd.f32 %v5640, %v5662
        %v5666 = vadd.f32 %v5644, %v5662
        %v5667 = vadd.f32 %v5648, %v5662
        %v5668 = vadd.f32 %v5652, %v5662
        %v5669 = vadd.f32 %v5656, %v5662
        %v5670 = vadd.f32 %v5660, %v5662
        %v5671 = vmax.f32 %v5663, 0.0
        %v5672 = vmax.f32 %v5664, 0.0
        %v5673 = vmax.f32 %v5665, 0.0
        %v5674 = vmax.f32 %v5666, 0.0
        %v5675 = vmax.f32 %v5667, 0.0
        %v5676 = vmax.f32 %v5668, 0.0
        %v5677 = vmax.f32 %v5669, 0.0
        %v5678 = vmax.f32 %v5670, 0.0
        %v5679 = vstv %s5629
        %v5680 = vmul.f32 %v5679, %v5671
        %v5681 = vmul.f32 %v5679, %v5672
        %v5682 = vmul.f32 %v5679, %v5673
        %v5683 = vmul.f32 %v5679, %v5674
        %v5684 = vmul.f32 %v5679, %v5675
        %v5685 = vmul.f32 %v5679, %v5676
        %v5686 = vmul.f32 %v5679, %v5677
        %v5687 = vmul.f32 %v5679, %v5678
        %v5688 = vadd.f32 %v5621, %v5680
        %v5689 = vadd.f32 %v5622, %v5681
        %v5690 = vadd.f32 %v5623, %v5682
        %v5691 = vadd.f32 %v5624, %v5683
        %v5692 = vadd.f32 %v5625, %v5684
        %v5693 = vadd.f32 %v5626, %v5685
        %v5694 = vadd.f32 %v5627, %v5686
        %v5695 = vadd.f32 %v5628, %v5687
        %s5696 = sld [smem:[#allocation2 + $0x183]]
        %5697 = vset.pattern.permute.xlu0 51
        %5698 = vperm.xlu0 %5697, %v841
        %v5699 = vpop.permute.xlu0 %5698
        %5701 = vset.pattern.permute.xlu0 51
        %5702 = vperm.xlu0 %5701, %v844
        %v5703 = vpop.permute.xlu0 %5702
        %5705 = vset.pattern.permute.xlu0 51
        %5706 = vperm.xlu0 %5705, %v847
        %v5707 = vpop.permute.xlu0 %5706
        %5709 = vset.pattern.permute.xlu0 51
        %5710 = vperm.xlu0 %5709, %v850
        %v5711 = vpop.permute.xlu0 %5710
        %5713 = vset.pattern.permute.xlu0 51
        %5714 = vperm.xlu0 %5713, %v853
        %v5715 = vpop.permute.xlu0 %5714
        %5717 = vset.pattern.permute.xlu0 51
        %5718 = vperm.xlu0 %5717, %v856
        %v5719 = vpop.permute.xlu0 %5718
        %5721 = vset.pattern.permute.xlu0 51
        %5722 = vperm.xlu0 %5721, %v859
        %v5723 = vpop.permute.xlu0 %5722
        %5725 = vset.pattern.permute.xlu0 51
        %5726 = vperm.xlu0 %5725, %v862
        %v5727 = vpop.permute.xlu0 %5726
        %v5729 = vperm.slane %v886, 3
        %v5730 = vadd.f32 %v5699, %v5729
        %v5731 = vadd.f32 %v5703, %v5729
        %v5732 = vadd.f32 %v5707, %v5729
        %v5733 = vadd.f32 %v5711, %v5729
        %v5734 = vadd.f32 %v5715, %v5729
        %v5735 = vadd.f32 %v5719, %v5729
        %v5736 = vadd.f32 %v5723, %v5729
        %v5737 = vadd.f32 %v5727, %v5729
        %v5738 = vmax.f32 %v5730, 0.0
        %v5739 = vmax.f32 %v5731, 0.0
        %v5740 = vmax.f32 %v5732, 0.0
        %v5741 = vmax.f32 %v5733, 0.0
        %v5742 = vmax.f32 %v5734, 0.0
        %v5743 = vmax.f32 %v5735, 0.0
        %v5744 = vmax.f32 %v5736, 0.0
        %v5745 = vmax.f32 %v5737, 0.0
        %v5746 = vstv %s5696
        %v5747 = vmul.f32 %v5746, %v5738
        %v5748 = vmul.f32 %v5746, %v5739
        %v5749 = vmul.f32 %v5746, %v5740
        %v5750 = vmul.f32 %v5746, %v5741
        %v5751 = vmul.f32 %v5746, %v5742
        %v5752 = vmul.f32 %v5746, %v5743
        %v5753 = vmul.f32 %v5746, %v5744
        %v5754 = vmul.f32 %v5746, %v5745
        %v5755 = vadd.f32 %v5688, %v5747
        %v5756 = vadd.f32 %v5689, %v5748
        %v5757 = vadd.f32 %v5690, %v5749
        %v5758 = vadd.f32 %v5691, %v5750
        %v5759 = vadd.f32 %v5692, %v5751
        %v5760 = vadd.f32 %v5693, %v5752
        %v5761 = vadd.f32 %v5694, %v5753
        %v5762 = vadd.f32 %v5695, %v5754
        %s5763 = sld [smem:[#allocation2 + $0x184]]
        %5764 = vset.pattern.permute.xlu0 52
        %5765 = vperm.xlu0 %5764, %v841
        %v5766 = vpop.permute.xlu0 %5765
        %5768 = vset.pattern.permute.xlu0 52
        %5769 = vperm.xlu0 %5768, %v844
        %v5770 = vpop.permute.xlu0 %5769
        %5772 = vset.pattern.permute.xlu0 52
        %5773 = vperm.xlu0 %5772, %v847
        %v5774 = vpop.permute.xlu0 %5773
        %5776 = vset.pattern.permute.xlu0 52
        %5777 = vperm.xlu0 %5776, %v850
        %v5778 = vpop.permute.xlu0 %5777
        %5780 = vset.pattern.permute.xlu0 52
        %5781 = vperm.xlu0 %5780, %v853
        %v5782 = vpop.permute.xlu0 %5781
        %5784 = vset.pattern.permute.xlu0 52
        %5785 = vperm.xlu0 %5784, %v856
        %v5786 = vpop.permute.xlu0 %5785
        %5788 = vset.pattern.permute.xlu0 52
        %5789 = vperm.xlu0 %5788, %v859
        %v5790 = vpop.permute.xlu0 %5789
        %5792 = vset.pattern.permute.xlu0 52
        %5793 = vperm.xlu0 %5792, %v862
        %v5794 = vpop.permute.xlu0 %5793
        %v5796 = vperm.slane %v886, 4
        %v5797 = vadd.f32 %v5766, %v5796
        %v5798 = vadd.f32 %v5770, %v5796
        %v5799 = vadd.f32 %v5774, %v5796
        %v5800 = vadd.f32 %v5778, %v5796
        %v5801 = vadd.f32 %v5782, %v5796
        %v5802 = vadd.f32 %v5786, %v5796
        %v5803 = vadd.f32 %v5790, %v5796
        %v5804 = vadd.f32 %v5794, %v5796
        %v5805 = vmax.f32 %v5797, 0.0
        %v5806 = vmax.f32 %v5798, 0.0
        %v5807 = vmax.f32 %v5799, 0.0
        %v5808 = vmax.f32 %v5800, 0.0
        %v5809 = vmax.f32 %v5801, 0.0
        %v5810 = vmax.f32 %v5802, 0.0
        %v5811 = vmax.f32 %v5803, 0.0
        %v5812 = vmax.f32 %v5804, 0.0
        %v5813 = vstv %s5763
        %v5814 = vmul.f32 %v5813, %v5805
        %v5815 = vmul.f32 %v5813, %v5806
        %v5816 = vmul.f32 %v5813, %v5807
        %v5817 = vmul.f32 %v5813, %v5808
        %v5818 = vmul.f32 %v5813, %v5809
        %v5819 = vmul.f32 %v5813, %v5810
        %v5820 = vmul.f32 %v5813, %v5811
        %v5821 = vmul.f32 %v5813, %v5812
        %v5822 = vadd.f32 %v5755, %v5814
        %v5823 = vadd.f32 %v5756, %v5815
        %v5824 = vadd.f32 %v5757, %v5816
        %v5825 = vadd.f32 %v5758, %v5817
        %v5826 = vadd.f32 %v5759, %v5818
        %v5827 = vadd.f32 %v5760, %v5819
        %v5828 = vadd.f32 %v5761, %v5820
        %v5829 = vadd.f32 %v5762, %v5821
        %s5830 = sld [smem:[#allocation2 + $0x185]]
        %5831 = vset.pattern.permute.xlu0 53
        %5832 = vperm.xlu0 %5831, %v841
        %v5833 = vpop.permute.xlu0 %5832
        %5835 = vset.pattern.permute.xlu0 53
        %5836 = vperm.xlu0 %5835, %v844
        %v5837 = vpop.permute.xlu0 %5836
        %5839 = vset.pattern.permute.xlu0 53
        %5840 = vperm.xlu0 %5839, %v847
        %v5841 = vpop.permute.xlu0 %5840
        %5843 = vset.pattern.permute.xlu0 53
        %5844 = vperm.xlu0 %5843, %v850
        %v5845 = vpop.permute.xlu0 %5844
        %5847 = vset.pattern.permute.xlu0 53
        %5848 = vperm.xlu0 %5847, %v853
        %v5849 = vpop.permute.xlu0 %5848
        %5851 = vset.pattern.permute.xlu0 53
        %5852 = vperm.xlu0 %5851, %v856
        %v5853 = vpop.permute.xlu0 %5852
        %5855 = vset.pattern.permute.xlu0 53
        %5856 = vperm.xlu0 %5855, %v859
        %v5857 = vpop.permute.xlu0 %5856
        %5859 = vset.pattern.permute.xlu0 53
        %5860 = vperm.xlu0 %5859, %v862
        %v5861 = vpop.permute.xlu0 %5860
        %v5863 = vperm.slane %v886, 5
        %v5864 = vadd.f32 %v5833, %v5863
        %v5865 = vadd.f32 %v5837, %v5863
        %v5866 = vadd.f32 %v5841, %v5863
        %v5867 = vadd.f32 %v5845, %v5863
        %v5868 = vadd.f32 %v5849, %v5863
        %v5869 = vadd.f32 %v5853, %v5863
        %v5870 = vadd.f32 %v5857, %v5863
        %v5871 = vadd.f32 %v5861, %v5863
        %v5872 = vmax.f32 %v5864, 0.0
        %v5873 = vmax.f32 %v5865, 0.0
        %v5874 = vmax.f32 %v5866, 0.0
        %v5875 = vmax.f32 %v5867, 0.0
        %v5876 = vmax.f32 %v5868, 0.0
        %v5877 = vmax.f32 %v5869, 0.0
        %v5878 = vmax.f32 %v5870, 0.0
        %v5879 = vmax.f32 %v5871, 0.0
        %v5880 = vstv %s5830
        %v5881 = vmul.f32 %v5880, %v5872
        %v5882 = vmul.f32 %v5880, %v5873
        %v5883 = vmul.f32 %v5880, %v5874
        %v5884 = vmul.f32 %v5880, %v5875
        %v5885 = vmul.f32 %v5880, %v5876
        %v5886 = vmul.f32 %v5880, %v5877
        %v5887 = vmul.f32 %v5880, %v5878
        %v5888 = vmul.f32 %v5880, %v5879
        %v5889 = vadd.f32 %v5822, %v5881
        %v5890 = vadd.f32 %v5823, %v5882
        %v5891 = vadd.f32 %v5824, %v5883
        %v5892 = vadd.f32 %v5825, %v5884
        %v5893 = vadd.f32 %v5826, %v5885
        %v5894 = vadd.f32 %v5827, %v5886
        %v5895 = vadd.f32 %v5828, %v5887
        %v5896 = vadd.f32 %v5829, %v5888
        %s5897 = sld [smem:[#allocation2 + $0x186]]
        %5898 = vset.pattern.permute.xlu0 54
        %5899 = vperm.xlu0 %5898, %v841
        %v5900 = vpop.permute.xlu0 %5899
        %5902 = vset.pattern.permute.xlu0 54
        %5903 = vperm.xlu0 %5902, %v844
        %v5904 = vpop.permute.xlu0 %5903
        %5906 = vset.pattern.permute.xlu0 54
        %5907 = vperm.xlu0 %5906, %v847
        %v5908 = vpop.permute.xlu0 %5907
        %5910 = vset.pattern.permute.xlu0 54
        %5911 = vperm.xlu0 %5910, %v850
        %v5912 = vpop.permute.xlu0 %5911
        %5914 = vset.pattern.permute.xlu0 54
        %5915 = vperm.xlu0 %5914, %v853
        %v5916 = vpop.permute.xlu0 %5915
        %5918 = vset.pattern.permute.xlu0 54
        %5919 = vperm.xlu0 %5918, %v856
        %v5920 = vpop.permute.xlu0 %5919
        %5922 = vset.pattern.permute.xlu0 54
        %5923 = vperm.xlu0 %5922, %v859
        %v5924 = vpop.permute.xlu0 %5923
        %5926 = vset.pattern.permute.xlu0 54
        %5927 = vperm.xlu0 %5926, %v862
        %v5928 = vpop.permute.xlu0 %5927
        %v5930 = vperm.slane %v886, 6
        %v5931 = vadd.f32 %v5900, %v5930
        %v5932 = vadd.f32 %v5904, %v5930
        %v5933 = vadd.f32 %v5908, %v5930
        %v5934 = vadd.f32 %v5912, %v5930
        %v5935 = vadd.f32 %v5916, %v5930
        %v5936 = vadd.f32 %v5920, %v5930
        %v5937 = vadd.f32 %v5924, %v5930
        %v5938 = vadd.f32 %v5928, %v5930
        %v5939 = vmax.f32 %v5931, 0.0
        %v5940 = vmax.f32 %v5932, 0.0
        %v5941 = vmax.f32 %v5933, 0.0
        %v5942 = vmax.f32 %v5934, 0.0
        %v5943 = vmax.f32 %v5935, 0.0
        %v5944 = vmax.f32 %v5936, 0.0
        %v5945 = vmax.f32 %v5937, 0.0
        %v5946 = vmax.f32 %v5938, 0.0
        %v5947 = vstv %s5897
        %v5948 = vmul.f32 %v5947, %v5939
        %v5949 = vmul.f32 %v5947, %v5940
        %v5950 = vmul.f32 %v5947, %v5941
        %v5951 = vmul.f32 %v5947, %v5942
        %v5952 = vmul.f32 %v5947, %v5943
        %v5953 = vmul.f32 %v5947, %v5944
        %v5954 = vmul.f32 %v5947, %v5945
        %v5955 = vmul.f32 %v5947, %v5946
        %v5956 = vadd.f32 %v5889, %v5948
        %v5957 = vadd.f32 %v5890, %v5949
        %v5958 = vadd.f32 %v5891, %v5950
        %v5959 = vadd.f32 %v5892, %v5951
        %v5960 = vadd.f32 %v5893, %v5952
        %v5961 = vadd.f32 %v5894, %v5953
        %v5962 = vadd.f32 %v5895, %v5954
        %v5963 = vadd.f32 %v5896, %v5955
        %s5964 = sld [smem:[#allocation2 + $0x187]]
        %5965 = vset.pattern.permute.xlu0 55
        %5966 = vperm.xlu0 %5965, %v841
        %v5967 = vpop.permute.xlu0 %5966
        %5969 = vset.pattern.permute.xlu0 55
        %5970 = vperm.xlu0 %5969, %v844
        %v5971 = vpop.permute.xlu0 %5970
        %5973 = vset.pattern.permute.xlu0 55
        %5974 = vperm.xlu0 %5973, %v847
        %v5975 = vpop.permute.xlu0 %5974
        %5977 = vset.pattern.permute.xlu0 55
        %5978 = vperm.xlu0 %5977, %v850
        %v5979 = vpop.permute.xlu0 %5978
        %5981 = vset.pattern.permute.xlu0 55
        %5982 = vperm.xlu0 %5981, %v853
        %v5983 = vpop.permute.xlu0 %5982
        %5985 = vset.pattern.permute.xlu0 55
        %5986 = vperm.xlu0 %5985, %v856
        %v5987 = vpop.permute.xlu0 %5986
        %5989 = vset.pattern.permute.xlu0 55
        %5990 = vperm.xlu0 %5989, %v859
        %v5991 = vpop.permute.xlu0 %5990
        %5993 = vset.pattern.permute.xlu0 55
        %5994 = vperm.xlu0 %5993, %v862
        %v5995 = vpop.permute.xlu0 %5994
        %v5997 = vperm.slane %v886, 7
        %v5998 = vadd.f32 %v5967, %v5997
        %v5999 = vadd.f32 %v5971, %v5997
        %v6000 = vadd.f32 %v5975, %v5997
        %v6001 = vadd.f32 %v5979, %v5997
        %v6002 = vadd.f32 %v5983, %v5997
        %v6003 = vadd.f32 %v5987, %v5997
        %v6004 = vadd.f32 %v5991, %v5997
        %v6005 = vadd.f32 %v5995, %v5997
        %v6006 = vmax.f32 %v5998, 0.0
        %v6007 = vmax.f32 %v5999, 0.0
        %v6008 = vmax.f32 %v6000, 0.0
        %v6009 = vmax.f32 %v6001, 0.0
        %v6010 = vmax.f32 %v6002, 0.0
        %v6011 = vmax.f32 %v6003, 0.0
        %v6012 = vmax.f32 %v6004, 0.0
        %v6013 = vmax.f32 %v6005, 0.0
        %v6014 = vstv %s5964
        %v6015 = vmul.f32 %v6014, %v6006
        %v6016 = vmul.f32 %v6014, %v6007
        %v6017 = vmul.f32 %v6014, %v6008
        %v6018 = vmul.f32 %v6014, %v6009
        %v6019 = vmul.f32 %v6014, %v6010
        %v6020 = vmul.f32 %v6014, %v6011
        %v6021 = vmul.f32 %v6014, %v6012
        %v6022 = vmul.f32 %v6014, %v6013
        %v6023 = vadd.f32 %v5956, %v6015
        %v6024 = vadd.f32 %v5957, %v6016
        %v6025 = vadd.f32 %v5958, %v6017
        %v6026 = vadd.f32 %v5959, %v6018
        %v6027 = vadd.f32 %v5960, %v6019
        %v6028 = vadd.f32 %v5961, %v6020
        %v6029 = vadd.f32 %v5962, %v6021
        %v6030 = vadd.f32 %v5963, %v6022
        %s6031 = sld [smem:[#allocation2 + $0x188]]
        %6032 = vset.pattern.permute.xlu0 56
        %6033 = vperm.xlu0 %6032, %v841
        %v6034 = vpop.permute.xlu0 %6033
        %6036 = vset.pattern.permute.xlu0 56
        %6037 = vperm.xlu0 %6036, %v844
        %v6038 = vpop.permute.xlu0 %6037
        %6040 = vset.pattern.permute.xlu0 56
        %6041 = vperm.xlu0 %6040, %v847
        %v6042 = vpop.permute.xlu0 %6041
        %6044 = vset.pattern.permute.xlu0 56
        %6045 = vperm.xlu0 %6044, %v850
        %v6046 = vpop.permute.xlu0 %6045
        %6048 = vset.pattern.permute.xlu0 56
        %6049 = vperm.xlu0 %6048, %v853
        %v6050 = vpop.permute.xlu0 %6049
        %6052 = vset.pattern.permute.xlu0 56
        %6053 = vperm.xlu0 %6052, %v856
        %v6054 = vpop.permute.xlu0 %6053
        %6056 = vset.pattern.permute.xlu0 56
        %6057 = vperm.xlu0 %6056, %v859
        %v6058 = vpop.permute.xlu0 %6057
        %6060 = vset.pattern.permute.xlu0 56
        %6061 = vperm.xlu0 %6060, %v862
        %v6062 = vpop.permute.xlu0 %6061
        %v6064 = vperm.slane %v887, 0
        %v6065 = vadd.f32 %v6034, %v6064
        %v6066 = vadd.f32 %v6038, %v6064
        %v6067 = vadd.f32 %v6042, %v6064
        %v6068 = vadd.f32 %v6046, %v6064
        %v6069 = vadd.f32 %v6050, %v6064
        %v6070 = vadd.f32 %v6054, %v6064
        %v6071 = vadd.f32 %v6058, %v6064
        %v6072 = vadd.f32 %v6062, %v6064
        %v6073 = vmax.f32 %v6065, 0.0
        %v6074 = vmax.f32 %v6066, 0.0
        %v6075 = vmax.f32 %v6067, 0.0
        %v6076 = vmax.f32 %v6068, 0.0
        %v6077 = vmax.f32 %v6069, 0.0
        %v6078 = vmax.f32 %v6070, 0.0
        %v6079 = vmax.f32 %v6071, 0.0
        %v6080 = vmax.f32 %v6072, 0.0
        %v6081 = vstv %s6031
        %v6082 = vmul.f32 %v6081, %v6073
        %v6083 = vmul.f32 %v6081, %v6074
        %v6084 = vmul.f32 %v6081, %v6075
        %v6085 = vmul.f32 %v6081, %v6076
        %v6086 = vmul.f32 %v6081, %v6077
        %v6087 = vmul.f32 %v6081, %v6078
        %v6088 = vmul.f32 %v6081, %v6079
        %v6089 = vmul.f32 %v6081, %v6080
        %v6090 = vadd.f32 %v6023, %v6082
        %v6091 = vadd.f32 %v6024, %v6083
        %v6092 = vadd.f32 %v6025, %v6084
        %v6093 = vadd.f32 %v6026, %v6085
        %v6094 = vadd.f32 %v6027, %v6086
        %v6095 = vadd.f32 %v6028, %v6087
        %v6096 = vadd.f32 %v6029, %v6088
        %v6097 = vadd.f32 %v6030, %v6089
        %s6098 = sld [smem:[#allocation2 + $0x189]]
        %6099 = vset.pattern.permute.xlu0 57
        %6100 = vperm.xlu0 %6099, %v841
        %v6101 = vpop.permute.xlu0 %6100
        %6103 = vset.pattern.permute.xlu0 57
        %6104 = vperm.xlu0 %6103, %v844
        %v6105 = vpop.permute.xlu0 %6104
        %6107 = vset.pattern.permute.xlu0 57
        %6108 = vperm.xlu0 %6107, %v847
        %v6109 = vpop.permute.xlu0 %6108
        %6111 = vset.pattern.permute.xlu0 57
        %6112 = vperm.xlu0 %6111, %v850
        %v6113 = vpop.permute.xlu0 %6112
        %6115 = vset.pattern.permute.xlu0 57
        %6116 = vperm.xlu0 %6115, %v853
        %v6117 = vpop.permute.xlu0 %6116
        %6119 = vset.pattern.permute.xlu0 57
        %6120 = vperm.xlu0 %6119, %v856
        %v6121 = vpop.permute.xlu0 %6120
        %6123 = vset.pattern.permute.xlu0 57
        %6124 = vperm.xlu0 %6123, %v859
        %v6125 = vpop.permute.xlu0 %6124
        %6127 = vset.pattern.permute.xlu0 57
        %6128 = vperm.xlu0 %6127, %v862
        %v6129 = vpop.permute.xlu0 %6128
        %v6131 = vperm.slane %v887, 1
        %v6132 = vadd.f32 %v6101, %v6131
        %v6133 = vadd.f32 %v6105, %v6131
        %v6134 = vadd.f32 %v6109, %v6131
        %v6135 = vadd.f32 %v6113, %v6131
        %v6136 = vadd.f32 %v6117, %v6131
        %v6137 = vadd.f32 %v6121, %v6131
        %v6138 = vadd.f32 %v6125, %v6131
        %v6139 = vadd.f32 %v6129, %v6131
        %v6140 = vmax.f32 %v6132, 0.0
        %v6141 = vmax.f32 %v6133, 0.0
        %v6142 = vmax.f32 %v6134, 0.0
        %v6143 = vmax.f32 %v6135, 0.0
        %v6144 = vmax.f32 %v6136, 0.0
        %v6145 = vmax.f32 %v6137, 0.0
        %v6146 = vmax.f32 %v6138, 0.0
        %v6147 = vmax.f32 %v6139, 0.0
        %v6148 = vstv %s6098
        %v6149 = vmul.f32 %v6148, %v6140
        %v6150 = vmul.f32 %v6148, %v6141
        %v6151 = vmul.f32 %v6148, %v6142
        %v6152 = vmul.f32 %v6148, %v6143
        %v6153 = vmul.f32 %v6148, %v6144
        %v6154 = vmul.f32 %v6148, %v6145
        %v6155 = vmul.f32 %v6148, %v6146
        %v6156 = vmul.f32 %v6148, %v6147
        %v6157 = vadd.f32 %v6090, %v6149
        %v6158 = vadd.f32 %v6091, %v6150
        %v6159 = vadd.f32 %v6092, %v6151
        %v6160 = vadd.f32 %v6093, %v6152
        %v6161 = vadd.f32 %v6094, %v6153
        %v6162 = vadd.f32 %v6095, %v6154
        %v6163 = vadd.f32 %v6096, %v6155
        %v6164 = vadd.f32 %v6097, %v6156
        %s6165 = sld [smem:[#allocation2 + $0x18a]]
        %6166 = vset.pattern.permute.xlu0 58
        %6167 = vperm.xlu0 %6166, %v841
        %v6168 = vpop.permute.xlu0 %6167
        %6170 = vset.pattern.permute.xlu0 58
        %6171 = vperm.xlu0 %6170, %v844
        %v6172 = vpop.permute.xlu0 %6171
        %6174 = vset.pattern.permute.xlu0 58
        %6175 = vperm.xlu0 %6174, %v847
        %v6176 = vpop.permute.xlu0 %6175
        %6178 = vset.pattern.permute.xlu0 58
        %6179 = vperm.xlu0 %6178, %v850
        %v6180 = vpop.permute.xlu0 %6179
        %6182 = vset.pattern.permute.xlu0 58
        %6183 = vperm.xlu0 %6182, %v853
        %v6184 = vpop.permute.xlu0 %6183
        %6186 = vset.pattern.permute.xlu0 58
        %6187 = vperm.xlu0 %6186, %v856
        %v6188 = vpop.permute.xlu0 %6187
        %6190 = vset.pattern.permute.xlu0 58
        %6191 = vperm.xlu0 %6190, %v859
        %v6192 = vpop.permute.xlu0 %6191
        %6194 = vset.pattern.permute.xlu0 58
        %6195 = vperm.xlu0 %6194, %v862
        %v6196 = vpop.permute.xlu0 %6195
        %v6198 = vperm.slane %v887, 2
        %v6199 = vadd.f32 %v6168, %v6198
        %v6200 = vadd.f32 %v6172, %v6198
        %v6201 = vadd.f32 %v6176, %v6198
        %v6202 = vadd.f32 %v6180, %v6198
        %v6203 = vadd.f32 %v6184, %v6198
        %v6204 = vadd.f32 %v6188, %v6198
        %v6205 = vadd.f32 %v6192, %v6198
        %v6206 = vadd.f32 %v6196, %v6198
        %v6207 = vmax.f32 %v6199, 0.0
        %v6208 = vmax.f32 %v6200, 0.0
        %v6209 = vmax.f32 %v6201, 0.0
        %v6210 = vmax.f32 %v6202, 0.0
        %v6211 = vmax.f32 %v6203, 0.0
        %v6212 = vmax.f32 %v6204, 0.0
        %v6213 = vmax.f32 %v6205, 0.0
        %v6214 = vmax.f32 %v6206, 0.0
        %v6215 = vstv %s6165
        %v6216 = vmul.f32 %v6215, %v6207
        %v6217 = vmul.f32 %v6215, %v6208
        %v6218 = vmul.f32 %v6215, %v6209
        %v6219 = vmul.f32 %v6215, %v6210
        %v6220 = vmul.f32 %v6215, %v6211
        %v6221 = vmul.f32 %v6215, %v6212
        %v6222 = vmul.f32 %v6215, %v6213
        %v6223 = vmul.f32 %v6215, %v6214
        %v6224 = vadd.f32 %v6157, %v6216
        %v6225 = vadd.f32 %v6158, %v6217
        %v6226 = vadd.f32 %v6159, %v6218
        %v6227 = vadd.f32 %v6160, %v6219
        %v6228 = vadd.f32 %v6161, %v6220
        %v6229 = vadd.f32 %v6162, %v6221
        %v6230 = vadd.f32 %v6163, %v6222
        %v6231 = vadd.f32 %v6164, %v6223
        %s6232 = sld [smem:[#allocation2 + $0x18b]]
        %6233 = vset.pattern.permute.xlu0 59
        %6234 = vperm.xlu0 %6233, %v841
        %v6235 = vpop.permute.xlu0 %6234
        %6237 = vset.pattern.permute.xlu0 59
        %6238 = vperm.xlu0 %6237, %v844
        %v6239 = vpop.permute.xlu0 %6238
        %6241 = vset.pattern.permute.xlu0 59
        %6242 = vperm.xlu0 %6241, %v847
        %v6243 = vpop.permute.xlu0 %6242
        %6245 = vset.pattern.permute.xlu0 59
        %6246 = vperm.xlu0 %6245, %v850
        %v6247 = vpop.permute.xlu0 %6246
        %6249 = vset.pattern.permute.xlu0 59
        %6250 = vperm.xlu0 %6249, %v853
        %v6251 = vpop.permute.xlu0 %6250
        %6253 = vset.pattern.permute.xlu0 59
        %6254 = vperm.xlu0 %6253, %v856
        %v6255 = vpop.permute.xlu0 %6254
        %6257 = vset.pattern.permute.xlu0 59
        %6258 = vperm.xlu0 %6257, %v859
        %v6259 = vpop.permute.xlu0 %6258
        %6261 = vset.pattern.permute.xlu0 59
        %6262 = vperm.xlu0 %6261, %v862
        %v6263 = vpop.permute.xlu0 %6262
        %v6265 = vperm.slane %v887, 3
        %v6266 = vadd.f32 %v6235, %v6265
        %v6267 = vadd.f32 %v6239, %v6265
        %v6268 = vadd.f32 %v6243, %v6265
        %v6269 = vadd.f32 %v6247, %v6265
        %v6270 = vadd.f32 %v6251, %v6265
        %v6271 = vadd.f32 %v6255, %v6265
        %v6272 = vadd.f32 %v6259, %v6265
        %v6273 = vadd.f32 %v6263, %v6265
        %v6274 = vmax.f32 %v6266, 0.0
        %v6275 = vmax.f32 %v6267, 0.0
        %v6276 = vmax.f32 %v6268, 0.0
        %v6277 = vmax.f32 %v6269, 0.0
        %v6278 = vmax.f32 %v6270, 0.0
        %v6279 = vmax.f32 %v6271, 0.0
        %v6280 = vmax.f32 %v6272, 0.0
        %v6281 = vmax.f32 %v6273, 0.0
        %v6282 = vstv %s6232
        %v6283 = vmul.f32 %v6282, %v6274
        %v6284 = vmul.f32 %v6282, %v6275
        %v6285 = vmul.f32 %v6282, %v6276
        %v6286 = vmul.f32 %v6282, %v6277
        %v6287 = vmul.f32 %v6282, %v6278
        %v6288 = vmul.f32 %v6282, %v6279
        %v6289 = vmul.f32 %v6282, %v6280
        %v6290 = vmul.f32 %v6282, %v6281
        %v6291 = vadd.f32 %v6224, %v6283
        %v6292 = vadd.f32 %v6225, %v6284
        %v6293 = vadd.f32 %v6226, %v6285
        %v6294 = vadd.f32 %v6227, %v6286
        %v6295 = vadd.f32 %v6228, %v6287
        %v6296 = vadd.f32 %v6229, %v6288
        %v6297 = vadd.f32 %v6230, %v6289
        %v6298 = vadd.f32 %v6231, %v6290
        %s6299 = sld [smem:[#allocation2 + $0x18c]]
        %6300 = vset.pattern.permute.xlu0 60
        %6301 = vperm.xlu0 %6300, %v841
        %v6302 = vpop.permute.xlu0 %6301
        %6304 = vset.pattern.permute.xlu0 60
        %6305 = vperm.xlu0 %6304, %v844
        %v6306 = vpop.permute.xlu0 %6305
        %6308 = vset.pattern.permute.xlu0 60
        %6309 = vperm.xlu0 %6308, %v847
        %v6310 = vpop.permute.xlu0 %6309
        %6312 = vset.pattern.permute.xlu0 60
        %6313 = vperm.xlu0 %6312, %v850
        %v6314 = vpop.permute.xlu0 %6313
        %6316 = vset.pattern.permute.xlu0 60
        %6317 = vperm.xlu0 %6316, %v853
        %v6318 = vpop.permute.xlu0 %6317
        %6320 = vset.pattern.permute.xlu0 60
        %6321 = vperm.xlu0 %6320, %v856
        %v6322 = vpop.permute.xlu0 %6321
        %6324 = vset.pattern.permute.xlu0 60
        %6325 = vperm.xlu0 %6324, %v859
        %v6326 = vpop.permute.xlu0 %6325
        %6328 = vset.pattern.permute.xlu0 60
        %6329 = vperm.xlu0 %6328, %v862
        %v6330 = vpop.permute.xlu0 %6329
        %v6332 = vperm.slane %v887, 4
        %v6333 = vadd.f32 %v6302, %v6332
        %v6334 = vadd.f32 %v6306, %v6332
        %v6335 = vadd.f32 %v6310, %v6332
        %v6336 = vadd.f32 %v6314, %v6332
        %v6337 = vadd.f32 %v6318, %v6332
        %v6338 = vadd.f32 %v6322, %v6332
        %v6339 = vadd.f32 %v6326, %v6332
        %v6340 = vadd.f32 %v6330, %v6332
        %v6341 = vmax.f32 %v6333, 0.0
        %v6342 = vmax.f32 %v6334, 0.0
        %v6343 = vmax.f32 %v6335, 0.0
        %v6344 = vmax.f32 %v6336, 0.0
        %v6345 = vmax.f32 %v6337, 0.0
        %v6346 = vmax.f32 %v6338, 0.0
        %v6347 = vmax.f32 %v6339, 0.0
        %v6348 = vmax.f32 %v6340, 0.0
        %v6349 = vstv %s6299
        %v6350 = vmul.f32 %v6349, %v6341
        %v6351 = vmul.f32 %v6349, %v6342
        %v6352 = vmul.f32 %v6349, %v6343
        %v6353 = vmul.f32 %v6349, %v6344
        %v6354 = vmul.f32 %v6349, %v6345
        %v6355 = vmul.f32 %v6349, %v6346
        %v6356 = vmul.f32 %v6349, %v6347
        %v6357 = vmul.f32 %v6349, %v6348
        %v6358 = vadd.f32 %v6291, %v6350
        %v6359 = vadd.f32 %v6292, %v6351
        %v6360 = vadd.f32 %v6293, %v6352
        %v6361 = vadd.f32 %v6294, %v6353
        %v6362 = vadd.f32 %v6295, %v6354
        %v6363 = vadd.f32 %v6296, %v6355
        %v6364 = vadd.f32 %v6297, %v6356
        %v6365 = vadd.f32 %v6298, %v6357
        %s6366 = sld [smem:[#allocation2 + $0x18d]]
        %6367 = vset.pattern.permute.xlu0 61
        %6368 = vperm.xlu0 %6367, %v841
        %v6369 = vpop.permute.xlu0 %6368
        %6371 = vset.pattern.permute.xlu0 61
        %6372 = vperm.xlu0 %6371, %v844
        %v6373 = vpop.permute.xlu0 %6372
        %6375 = vset.pattern.permute.xlu0 61
        %6376 = vperm.xlu0 %6375, %v847
        %v6377 = vpop.permute.xlu0 %6376
        %6379 = vset.pattern.permute.xlu0 61
        %6380 = vperm.xlu0 %6379, %v850
        %v6381 = vpop.permute.xlu0 %6380
        %6383 = vset.pattern.permute.xlu0 61
        %6384 = vperm.xlu0 %6383, %v853
        %v6385 = vpop.permute.xlu0 %6384
        %6387 = vset.pattern.permute.xlu0 61
        %6388 = vperm.xlu0 %6387, %v856
        %v6389 = vpop.permute.xlu0 %6388
        %6391 = vset.pattern.permute.xlu0 61
        %6392 = vperm.xlu0 %6391, %v859
        %v6393 = vpop.permute.xlu0 %6392
        %6395 = vset.pattern.permute.xlu0 61
        %6396 = vperm.xlu0 %6395, %v862
        %v6397 = vpop.permute.xlu0 %6396
        %v6399 = vperm.slane %v887, 5
        %v6400 = vadd.f32 %v6369, %v6399
        %v6401 = vadd.f32 %v6373, %v6399
        %v6402 = vadd.f32 %v6377, %v6399
        %v6403 = vadd.f32 %v6381, %v6399
        %v6404 = vadd.f32 %v6385, %v6399
        %v6405 = vadd.f32 %v6389, %v6399
        %v6406 = vadd.f32 %v6393, %v6399
        %v6407 = vadd.f32 %v6397, %v6399
        %v6408 = vmax.f32 %v6400, 0.0
        %v6409 = vmax.f32 %v6401, 0.0
        %v6410 = vmax.f32 %v6402, 0.0
        %v6411 = vmax.f32 %v6403, 0.0
        %v6412 = vmax.f32 %v6404, 0.0
        %v6413 = vmax.f32 %v6405, 0.0
        %v6414 = vmax.f32 %v6406, 0.0
        %v6415 = vmax.f32 %v6407, 0.0
        %v6416 = vstv %s6366
        %v6417 = vmul.f32 %v6416, %v6408
        %v6418 = vmul.f32 %v6416, %v6409
        %v6419 = vmul.f32 %v6416, %v6410
        %v6420 = vmul.f32 %v6416, %v6411
        %v6421 = vmul.f32 %v6416, %v6412
        %v6422 = vmul.f32 %v6416, %v6413
        %v6423 = vmul.f32 %v6416, %v6414
        %v6424 = vmul.f32 %v6416, %v6415
        %v6425 = vadd.f32 %v6358, %v6417
        %v6426 = vadd.f32 %v6359, %v6418
        %v6427 = vadd.f32 %v6360, %v6419
        %v6428 = vadd.f32 %v6361, %v6420
        %v6429 = vadd.f32 %v6362, %v6421
        %v6430 = vadd.f32 %v6363, %v6422
        %v6431 = vadd.f32 %v6364, %v6423
        %v6432 = vadd.f32 %v6365, %v6424
        %s6433 = sld [smem:[#allocation2 + $0x18e]]
        %6434 = vset.pattern.permute.xlu0 62
        %6435 = vperm.xlu0 %6434, %v841
        %v6436 = vpop.permute.xlu0 %6435
        %6438 = vset.pattern.permute.xlu0 62
        %6439 = vperm.xlu0 %6438, %v844
        %v6440 = vpop.permute.xlu0 %6439
        %6442 = vset.pattern.permute.xlu0 62
        %6443 = vperm.xlu0 %6442, %v847
        %v6444 = vpop.permute.xlu0 %6443
        %6446 = vset.pattern.permute.xlu0 62
        %6447 = vperm.xlu0 %6446, %v850
        %v6448 = vpop.permute.xlu0 %6447
        %6450 = vset.pattern.permute.xlu0 62
        %6451 = vperm.xlu0 %6450, %v853
        %v6452 = vpop.permute.xlu0 %6451
        %6454 = vset.pattern.permute.xlu0 62
        %6455 = vperm.xlu0 %6454, %v856
        %v6456 = vpop.permute.xlu0 %6455
        %6458 = vset.pattern.permute.xlu0 62
        %6459 = vperm.xlu0 %6458, %v859
        %v6460 = vpop.permute.xlu0 %6459
        %6462 = vset.pattern.permute.xlu0 62
        %6463 = vperm.xlu0 %6462, %v862
        %v6464 = vpop.permute.xlu0 %6463
        %v6466 = vperm.slane %v887, 6
        %v6467 = vadd.f32 %v6436, %v6466
        %v6468 = vadd.f32 %v6440, %v6466
        %v6469 = vadd.f32 %v6444, %v6466
        %v6470 = vadd.f32 %v6448, %v6466
        %v6471 = vadd.f32 %v6452, %v6466
        %v6472 = vadd.f32 %v6456, %v6466
        %v6473 = vadd.f32 %v6460, %v6466
        %v6474 = vadd.f32 %v6464, %v6466
        %v6475 = vmax.f32 %v6467, 0.0
        %v6476 = vmax.f32 %v6468, 0.0
        %v6477 = vmax.f32 %v6469, 0.0
        %v6478 = vmax.f32 %v6470, 0.0
        %v6479 = vmax.f32 %v6471, 0.0
        %v6480 = vmax.f32 %v6472, 0.0
        %v6481 = vmax.f32 %v6473, 0.0
        %v6482 = vmax.f32 %v6474, 0.0
        %v6483 = vstv %s6433
        %v6484 = vmul.f32 %v6483, %v6475
        %v6485 = vmul.f32 %v6483, %v6476
        %v6486 = vmul.f32 %v6483, %v6477
        %v6487 = vmul.f32 %v6483, %v6478
        %v6488 = vmul.f32 %v6483, %v6479
        %v6489 = vmul.f32 %v6483, %v6480
        %v6490 = vmul.f32 %v6483, %v6481
        %v6491 = vmul.f32 %v6483, %v6482
        %v6492 = vadd.f32 %v6425, %v6484
        %v6493 = vadd.f32 %v6426, %v6485
        %v6494 = vadd.f32 %v6427, %v6486
        %v6495 = vadd.f32 %v6428, %v6487
        %v6496 = vadd.f32 %v6429, %v6488
        %v6497 = vadd.f32 %v6430, %v6489
        %v6498 = vadd.f32 %v6431, %v6490
        %v6499 = vadd.f32 %v6432, %v6491
        %s6500 = sld [smem:[#allocation2 + $0x18f]]
        %6501 = vset.pattern.permute.xlu0 63
        %6502 = vperm.xlu0 %6501, %v841
        %v6503 = vpop.permute.xlu0 %6502
        %6505 = vset.pattern.permute.xlu0 63
        %6506 = vperm.xlu0 %6505, %v844
        %v6507 = vpop.permute.xlu0 %6506
        %6509 = vset.pattern.permute.xlu0 63
        %6510 = vperm.xlu0 %6509, %v847
        %v6511 = vpop.permute.xlu0 %6510
        %6513 = vset.pattern.permute.xlu0 63
        %6514 = vperm.xlu0 %6513, %v850
        %v6515 = vpop.permute.xlu0 %6514
        %6517 = vset.pattern.permute.xlu0 63
        %6518 = vperm.xlu0 %6517, %v853
        %v6519 = vpop.permute.xlu0 %6518
        %6521 = vset.pattern.permute.xlu0 63
        %6522 = vperm.xlu0 %6521, %v856
        %v6523 = vpop.permute.xlu0 %6522
        %6525 = vset.pattern.permute.xlu0 63
        %6526 = vperm.xlu0 %6525, %v859
        %v6527 = vpop.permute.xlu0 %6526
        %6529 = vset.pattern.permute.xlu0 63
        %6530 = vperm.xlu0 %6529, %v862
        %v6531 = vpop.permute.xlu0 %6530
        %v6533 = vperm.slane %v887, 7
        %v6534 = vadd.f32 %v6503, %v6533
        %v6535 = vadd.f32 %v6507, %v6533
        %v6536 = vadd.f32 %v6511, %v6533
        %v6537 = vadd.f32 %v6515, %v6533
        %v6538 = vadd.f32 %v6519, %v6533
        %v6539 = vadd.f32 %v6523, %v6533
        %v6540 = vadd.f32 %v6527, %v6533
        %v6541 = vadd.f32 %v6531, %v6533
        %v6542 = vmax.f32 %v6534, 0.0
        %v6543 = vmax.f32 %v6535, 0.0
        %v6544 = vmax.f32 %v6536, 0.0
        %v6545 = vmax.f32 %v6537, 0.0
        %v6546 = vmax.f32 %v6538, 0.0
        %v6547 = vmax.f32 %v6539, 0.0
        %v6548 = vmax.f32 %v6540, 0.0
        %v6549 = vmax.f32 %v6541, 0.0
        %v6550 = vstv %s6500
        %v6551 = vmul.f32 %v6550, %v6542
        %v6552 = vmul.f32 %v6550, %v6543
        %v6553 = vmul.f32 %v6550, %v6544
        %v6554 = vmul.f32 %v6550, %v6545
        %v6555 = vmul.f32 %v6550, %v6546
        %v6556 = vmul.f32 %v6550, %v6547
        %v6557 = vmul.f32 %v6550, %v6548
        %v6558 = vmul.f32 %v6550, %v6549
        %v6559 = vadd.f32 %v6492, %v6551
        %v6560 = vadd.f32 %v6493, %v6552
        %v6561 = vadd.f32 %v6494, %v6553
        %v6562 = vadd.f32 %v6495, %v6554
        %v6563 = vadd.f32 %v6496, %v6555
        %v6564 = vadd.f32 %v6497, %v6556
        %v6565 = vadd.f32 %v6498, %v6557
        %v6566 = vadd.f32 %v6499, %v6558
        %v6567 = vsel %vm1012, %v6559, -1e+30
        %v6568 = vsel %vm1013, %v6560, -1e+30
        %v6569 = vsel %vm1014, %v6561, -1e+30
        %v6570 = vsel %vm1015, %v6562, -1e+30
        %v6571 = vsel %vm1016, %v6563, -1e+30
        %v6572 = vsel %vm1017, %v6564, -1e+30
        %v6573 = vsel %vm1018, %v6565, -1e+30
        %v6574 = vsel %vm1019, %v6566, -1e+30
        %v6575 = vsel %vm2173, %v6567, -inf
        %6576 = vmax.xlane.f32.xlu0 %v6575
        %v6577 = vpop.xlane.xlu0 %6576
        %v6578 = vsel %vm2173, %v6568, -inf
        %6579 = vmax.xlane.f32.xlu0 %v6578
        %v6580 = vpop.xlane.xlu0 %6579
        %v6581 = vsel %vm2173, %v6569, -inf
        %6582 = vmax.xlane.f32.xlu0 %v6581
        %v6583 = vpop.xlane.xlu0 %6582
        %v6584 = vsel %vm2173, %v6570, -inf
        %6585 = vmax.xlane.f32.xlu0 %v6584
        %v6586 = vpop.xlane.xlu0 %6585
        %v6587 = vsel %vm2173, %v6571, -inf
        %6588 = vmax.xlane.f32.xlu0 %v6587
        %v6589 = vpop.xlane.xlu0 %6588
        %v6590 = vsel %vm2173, %v6572, -inf
        %6591 = vmax.xlane.f32.xlu0 %v6590
        %v6592 = vpop.xlane.xlu0 %6591
        %v6593 = vsel %vm2173, %v6573, -inf
        %6594 = vmax.xlane.f32.xlu0 %v6593
        %v6595 = vpop.xlane.xlu0 %6594
        %v6596 = vsel %vm2173, %v6574, -inf
        %6597 = vmax.xlane.f32.xlu0 %v6596
        %v6598 = vpop.xlane.xlu0 %6597
        %v6599 = vsub.f32 %v6567, %v6577
        %v6600 = vsub.f32 %v6568, %v6580
        %v6601 = vsub.f32 %v6569, %v6583
        %v6602 = vsub.f32 %v6570, %v6586
        %v6603 = vsub.f32 %v6571, %v6589
        %v6604 = vsub.f32 %v6572, %v6592
        %v6605 = vsub.f32 %v6573, %v6595
        %v6606 = vsub.f32 %v6574, %v6598
        %v6607 = vmul.f32 %v6599, 1.442695
        %v6608 = vpow.pop %v6607
        %v6609 = vmul.f32 %v6600, 1.442695
        %v6610 = vpow.pop %v6609
        %v6611 = vmul.f32 %v6601, 1.442695
        %v6612 = vpow.pop %v6611
        %v6613 = vmul.f32 %v6602, 1.442695
        %v6614 = vpow.pop %v6613
        %v6615 = vmul.f32 %v6603, 1.442695
        %v6616 = vpow.pop %v6615
        %v6617 = vmul.f32 %v6604, 1.442695
        %v6618 = vpow.pop %v6617
        %v6619 = vmul.f32 %v6605, 1.442695
        %v6620 = vpow.pop %v6619
        %v6621 = vmul.f32 %v6606, 1.442695
        %v6622 = vpow.pop %v6621
        %v6623 = vmul.f32 %v6608, %v1028
        %v6624 = vmul.f32 %v6610, %v1029
        %v6625 = vmul.f32 %v6612, %v1030
        %v6626 = vmul.f32 %v6614, %v1031
        %v6627 = vmul.f32 %v6616, %v1032
        %v6628 = vmul.f32 %v6618, %v1033
        %v6629 = vmul.f32 %v6620, %v1034
        %v6630 = vmul.f32 %v6622, %v1035
        %v6631 = vsel %vm2173, %v6623, 0.0
        %6632 = vadd.xlane.f32.xlu0 %v6631
        %v6633 = vpop.xlane.xlu0 %6632
        %v6634 = vsel %vm2173, %v6624, 0.0
        %6635 = vadd.xlane.f32.xlu0 %v6634
        %v6636 = vpop.xlane.xlu0 %6635
        %v6637 = vsel %vm2173, %v6625, 0.0
        %6638 = vadd.xlane.f32.xlu0 %v6637
        %v6639 = vpop.xlane.xlu0 %6638
        %v6640 = vsel %vm2173, %v6626, 0.0
        %6641 = vadd.xlane.f32.xlu0 %v6640
        %v6642 = vpop.xlane.xlu0 %6641
        %v6643 = vsel %vm2173, %v6627, 0.0
        %6644 = vadd.xlane.f32.xlu0 %v6643
        %v6645 = vpop.xlane.xlu0 %6644
        %v6646 = vsel %vm2173, %v6628, 0.0
        %6647 = vadd.xlane.f32.xlu0 %v6646
        %v6648 = vpop.xlane.xlu0 %6647
        %v6649 = vsel %vm2173, %v6629, 0.0
        %6650 = vadd.xlane.f32.xlu0 %v6649
        %v6651 = vpop.xlane.xlu0 %6650
        %v6652 = vsel %vm2173, %v6630, 0.0
        %6653 = vadd.xlane.f32.xlu0 %v6652
        %v6654 = vpop.xlane.xlu0 %6653
        %v6655 = vmax.f32 %v6633, 1e-16
        %v6656 = vmax.f32 %v6636, 1e-16
        %v6657 = vmax.f32 %v6639, 1e-16
        %v6658 = vmax.f32 %v6642, 1e-16
        %v6659 = vmax.f32 %v6645, 1e-16
        %v6660 = vmax.f32 %v6648, 1e-16
        %v6661 = vmax.f32 %v6651, 1e-16
        %v6662 = vmax.f32 %v6654, 1e-16
        %v6663 = vrcp.pop %v6655
        %v6664 = vmul.f32 %v6655, %v6663
        %v6665 = vsub.f32 1.0, %v6664
        %v6666 = vmul.f32 %v6663, %v6665
        %v6667 = vadd.f32 %v6663, %v6666
        %vm6668 = vweird.f32 %v6655
        %vm6669 = vweird.f32 %v6663
        %vm6670 = vmor %vm6668, %vm6669
        %v6671 = vsel %vm6670, %v6663, %v6667
        %v6672 = vand.u32 2147483647, %v6655
        %vm6673 = vcmp.eq.f32.partialorder %v6672, 8.507059e+37
        %v6674 = vand.u32 %v6655, 2147483648
        %v6675 = vor.u32 1.1754944e-38, %v6674
        %v6676 = vsel %vm6673, %v6675, %v6671
        %v6677 = vmul.f32 %v6623, %v6676
        %v6678 = vrcp.pop %v6656
        %v6679 = vmul.f32 %v6656, %v6678
        %v6680 = vsub.f32 1.0, %v6679
        %v6681 = vmul.f32 %v6678, %v6680
        %v6682 = vadd.f32 %v6678, %v6681
        %vm6683 = vweird.f32 %v6656
        %vm6684 = vweird.f32 %v6678
        %vm6685 = vmor %vm6683, %vm6684
        %v6686 = vsel %vm6685, %v6678, %v6682
        %v6687 = vand.u32 2147483647, %v6656
        %vm6688 = vcmp.eq.f32.partialorder %v6687, 8.507059e+37
        %v6689 = vand.u32 %v6656, 2147483648
        %v6690 = vor.u32 1.1754944e-38, %v6689
        %v6691 = vsel %vm6688, %v6690, %v6686
        %v6692 = vmul.f32 %v6624, %v6691
        %v6693 = vrcp.pop %v6657
        %v6694 = vmul.f32 %v6657, %v6693
        %v6695 = vsub.f32 1.0, %v6694
        %v6696 = vmul.f32 %v6693, %v6695
        %v6697 = vadd.f32 %v6693, %v6696
        %vm6698 = vweird.f32 %v6657
        %vm6699 = vweird.f32 %v6693
        %vm6700 = vmor %vm6698, %vm6699
        %v6701 = vsel %vm6700, %v6693, %v6697
        %v6702 = vand.u32 2147483647, %v6657
        %vm6703 = vcmp.eq.f32.partialorder %v6702, 8.507059e+37
        %v6704 = vand.u32 %v6657, 2147483648
        %v6705 = vor.u32 1.1754944e-38, %v6704
        %v6706 = vsel %vm6703, %v6705, %v6701
        %v6707 = vmul.f32 %v6625, %v6706
        %v6708 = vrcp.pop %v6658
        %v6709 = vmul.f32 %v6658, %v6708
        %v6710 = vsub.f32 1.0, %v6709
        %v6711 = vmul.f32 %v6708, %v6710
        %v6712 = vadd.f32 %v6708, %v6711
        %vm6713 = vweird.f32 %v6658
        %vm6714 = vweird.f32 %v6708
        %vm6715 = vmor %vm6713, %vm6714
        %v6716 = vsel %vm6715, %v6708, %v6712
        %v6717 = vand.u32 2147483647, %v6658
        %vm6718 = vcmp.eq.f32.partialorder %v6717, 8.507059e+37
        %v6719 = vand.u32 %v6658, 2147483648
        %v6720 = vor.u32 1.1754944e-38, %v6719
        %v6721 = vsel %vm6718, %v6720, %v6716
        %v6722 = vmul.f32 %v6626, %v6721
        %v6723 = vrcp.pop %v6659
        %v6724 = vmul.f32 %v6659, %v6723
        %v6725 = vsub.f32 1.0, %v6724
        %v6726 = vmul.f32 %v6723, %v6725
        %v6727 = vadd.f32 %v6723, %v6726
        %vm6728 = vweird.f32 %v6659
        %vm6729 = vweird.f32 %v6723
        %vm6730 = vmor %vm6728, %vm6729
        %v6731 = vsel %vm6730, %v6723, %v6727
        %v6732 = vand.u32 2147483647, %v6659
        %vm6733 = vcmp.eq.f32.partialorder %v6732, 8.507059e+37
        %v6734 = vand.u32 %v6659, 2147483648
        %v6735 = vor.u32 1.1754944e-38, %v6734
        %v6736 = vsel %vm6733, %v6735, %v6731
        %v6737 = vmul.f32 %v6627, %v6736
        %v6738 = vrcp.pop %v6660
        %v6739 = vmul.f32 %v6660, %v6738
        %v6740 = vsub.f32 1.0, %v6739
        %v6741 = vmul.f32 %v6738, %v6740
        %v6742 = vadd.f32 %v6738, %v6741
        %vm6743 = vweird.f32 %v6660
        %vm6744 = vweird.f32 %v6738
        %vm6745 = vmor %vm6743, %vm6744
        %v6746 = vsel %vm6745, %v6738, %v6742
        %v6747 = vand.u32 2147483647, %v6660
        %vm6748 = vcmp.eq.f32.partialorder %v6747, 8.507059e+37
        %v6749 = vand.u32 %v6660, 2147483648
        %v6750 = vor.u32 1.1754944e-38, %v6749
        %v6751 = vsel %vm6748, %v6750, %v6746
        %v6752 = vmul.f32 %v6628, %v6751
        %v6753 = vrcp.pop %v6661
        %v6754 = vmul.f32 %v6661, %v6753
        %v6755 = vsub.f32 1.0, %v6754
        %v6756 = vmul.f32 %v6753, %v6755
        %v6757 = vadd.f32 %v6753, %v6756
        %vm6758 = vweird.f32 %v6661
        %vm6759 = vweird.f32 %v6753
        %vm6760 = vmor %vm6758, %vm6759
        %v6761 = vsel %vm6760, %v6753, %v6757
        %v6762 = vand.u32 2147483647, %v6661
        %vm6763 = vcmp.eq.f32.partialorder %v6762, 8.507059e+37
        %v6764 = vand.u32 %v6661, 2147483648
        %v6765 = vor.u32 1.1754944e-38, %v6764
        %v6766 = vsel %vm6763, %v6765, %v6761
        %v6767 = vmul.f32 %v6629, %v6766
        %v6768 = vrcp.pop %v6662
        %v6769 = vmul.f32 %v6662, %v6768
        %v6770 = vsub.f32 1.0, %v6769
        %v6771 = vmul.f32 %v6768, %v6770
        %v6772 = vadd.f32 %v6768, %v6771
        %vm6773 = vweird.f32 %v6662
        %vm6774 = vweird.f32 %v6768
        %vm6775 = vmor %vm6773, %vm6774
        %v6776 = vsel %vm6775, %v6768, %v6772
        %v6777 = vand.u32 2147483647, %v6662
        %vm6778 = vcmp.eq.f32.partialorder %v6777, 8.507059e+37
        %v6779 = vand.u32 %v6662, 2147483648
        %v6780 = vor.u32 1.1754944e-38, %v6779
        %v6781 = vsel %vm6778, %v6780, %v6776
        %v6782 = vmul.f32 %v6630, %v6781
        %v6783 = vld [vmem:[%s13] sm:$0x1]
        %v6785 = vperm.slane %v6783, 0
        %6786 = vrot.lane.b32.xlu0 %v770, 80
        %v6787 = vpop.permute.xlu0 %6786
        %6788 = vrot.lane.b32.xlu0 %v773, 80
        %v6789 = vpop.permute.xlu0 %6788
        %6790 = vrot.lane.b32.xlu0 %v776, 80
        %v6791 = vpop.permute.xlu0 %6790
        %6792 = vrot.lane.b32.xlu0 %v779, 80
        %v6793 = vpop.permute.xlu0 %6792
        %6794 = vrot.lane.b32.xlu0 %v782, 80
        %v6795 = vpop.permute.xlu0 %6794
        %6796 = vrot.lane.b32.xlu0 %v785, 80
        %v6797 = vpop.permute.xlu0 %6796
        %6798 = vrot.lane.b32.xlu0 %v788, 80
        %v6799 = vpop.permute.xlu0 %6798
        %6800 = vrot.lane.b32.xlu0 %v791, 80
        %v6801 = vpop.permute.xlu0 %6800
        %6810 = vrot.lane.b32.xlu0 %v6785, 80
        %v6811 = vpop.permute.xlu0 %6810
        %v6814 = vsel %vm2173, %v6677, 0
        %v6817 = vsel %vm2173, %v6692, 0
        %v6820 = vsel %vm2173, %v6707, 0
        %v6823 = vsel %vm2173, %v6722, 0
        %v6826 = vsel %vm2173, %v6737, 0
        %v6829 = vsel %vm2173, %v6752, 0
        %v6832 = vsel %vm2173, %v6767, 0
        %v6835 = vsel %vm2173, %v6782, 0
        %6837 = vmatpush.msra.mxu0 0.0
        %6838 = vmatpush.msra.mxu0 0.0
        %6839 = vmatpush.msra.mxu0 0.0
        %6840 = vmatpush.msra.mxu0 0.0
        %6841 = vmatpush.msra.mxu0 0.0
        %6842 = vmatpush.msra.mxu0 0.0
        %6843 = vmatpush.msra.mxu0 0.0
        %6844 = vmatpush.msra.mxu0 0.0
        %6845 = vmatpush.msra.mxu0 %v6801
        %6846 = vmatpush.msra.mxu0 %v6799
        %6847 = vmatpush.msra.mxu0 %v6797
        %6848 = vmatpush.msra.mxu0 %v6795
        %6849 = vmatpush.msra.mxu0 %v6793
        %6850 = vmatpush.msra.mxu0 %v6791
        %6851 = vmatpush.msra.mxu0 %v6789
        %6852 = vmatpush.msra.mxu0 %v6787
        %6853 = vmatmul.f32.gmra.mxu0 %v6814
        %v6854 = vpop.f32.mrf.mxu0
        %v6855 = vadd.f32 %v6811, %v6854
        %6856 = vmatmul.f32.gmra.mxu0 %v6817
        %v6857 = vpop.f32.mrf.mxu0
        %v6858 = vadd.f32 %v6811, %v6857
        %6859 = vmatmul.f32.gmra.mxu0 %v6820
        %v6860 = vpop.f32.mrf.mxu0
        %v6861 = vadd.f32 %v6811, %v6860
        %6862 = vmatmul.f32.gmra.mxu0 %v6823
        %v6863 = vpop.f32.mrf.mxu0
        %v6864 = vadd.f32 %v6811, %v6863
        %6865 = vmatmul.f32.gmra.mxu0 %v6826
        %v6866 = vpop.f32.mrf.mxu0
        %v6867 = vadd.f32 %v6811, %v6866
        %6868 = vmatmul.f32.gmra.mxu0 %v6829
        %v6869 = vpop.f32.mrf.mxu0
        %v6870 = vadd.f32 %v6811, %v6869
        %6871 = vmatmul.f32.gmra.mxu0 %v6832
        %v6872 = vpop.f32.mrf.mxu0
        %v6873 = vadd.f32 %v6811, %v6872
        %6874 = vmatmul.f32.gmra.mxu0 %v6835
        %v6875 = vpop.f32.mrf.mxu0
        %v6876 = vadd.f32 %v6811, %v6875
        %6877 = vdwg.mxu0
        %v6878 = vmax.f32 %v6855, 0.0
        %v6879 = vmax.f32 %v6858, 0.0
        %v6880 = vmax.f32 %v6861, 0.0
        %v6881 = vmax.f32 %v6864, 0.0
        %v6882 = vmax.f32 %v6867, 0.0
        %v6883 = vmax.f32 %v6870, 0.0
        %v6884 = vmax.f32 %v6873, 0.0
        %v6885 = vmax.f32 %v6876, 0.0
        %6894 = vrot.lane.b32.xlu0 %v6878, 64
        %v6895 = vpop.permute.xlu0 %6894
        %6896 = vrot.lane.b32.xlu0 %v6879, 64
        %v6897 = vpop.permute.xlu0 %6896
        %6898 = vrot.lane.b32.xlu0 %v6880, 64
        %v6899 = vpop.permute.xlu0 %6898
        %6900 = vrot.lane.b32.xlu0 %v6881, 64
        %v6901 = vpop.permute.xlu0 %6900
        %6902 = vrot.lane.b32.xlu0 %v6882, 64
        %v6903 = vpop.permute.xlu0 %6902
        %6904 = vrot.lane.b32.xlu0 %v6883, 64
        %v6905 = vpop.permute.xlu0 %6904
        %6906 = vrot.lane.b32.xlu0 %v6884, 64
        %v6907 = vpop.permute.xlu0 %6906
        %6908 = vrot.lane.b32.xlu0 %v6885, 64
        %v6909 = vpop.permute.xlu0 %6908
        %vm6918 = vcmask 654848
        %6919 = vst.msk [vmem:[%s532] sm:$0xff] %vm6918, %v6895
        %6920 = vst.msk [vmem:[%s532 + $0x8] sm:$0xff] %vm6918, %v6897
        %6921 = vst.msk [vmem:[%s532 + $0x10] sm:$0xff] %vm6918, %v6899
        %6922 = vst.msk [vmem:[%s532 + $0x18] sm:$0xff] %vm6918, %v6901
        %6923 = vst.msk [vmem:[%s532 + $0x20] sm:$0xff] %vm6918, %v6903
        %6924 = vst.msk [vmem:[%s532 + $0x28] sm:$0xff] %vm6918, %v6905
        %6925 = vst.msk [vmem:[%s532 + $0x30] sm:$0xff] %vm6918, %v6907
        %6926 = vst.msk [vmem:[%s532 + $0x38] sm:$0xff] %vm6918, %v6909
        %6927 = vset.pattern.permute.xlu0 4
        %6928 = vperm.xlu0 %6927, %v949
        %v6929 = vpop.permute.xlu0 %6928
        %6931 = vset.pattern.permute.xlu0 4
        %6932 = vperm.xlu0 %6931, %v952
        %v6933 = vpop.permute.xlu0 %6932
        %6935 = vset.pattern.permute.xlu0 4
        %6936 = vperm.xlu0 %6935, %v955
        %v6937 = vpop.permute.xlu0 %6936
        %6939 = vset.pattern.permute.xlu0 4
        %6940 = vperm.xlu0 %6939, %v958
        %v6941 = vpop.permute.xlu0 %6940
        %6943 = vset.pattern.permute.xlu0 4
        %6944 = vperm.xlu0 %6943, %v961
        %v6945 = vpop.permute.xlu0 %6944
        %6947 = vset.pattern.permute.xlu0 4
        %6948 = vperm.xlu0 %6947, %v964
        %v6949 = vpop.permute.xlu0 %6948
        %6951 = vset.pattern.permute.xlu0 4
        %6952 = vperm.xlu0 %6951, %v967
        %v6953 = vpop.permute.xlu0 %6952
        %6955 = vset.pattern.permute.xlu0 4
        %6956 = vperm.xlu0 %6955, %v970
        %v6957 = vpop.permute.xlu0 %6956
        %v6959 = vperm.slane %v994, 4
        %v6960 = vadd.f32 %v6929, %v6959
        %v6961 = vadd.f32 %v6933, %v6959
        %v6962 = vadd.f32 %v6937, %v6959
        %v6963 = vadd.f32 %v6941, %v6959
        %v6964 = vadd.f32 %v6945, %v6959
        %v6965 = vadd.f32 %v6949, %v6959
        %v6966 = vadd.f32 %v6953, %v6959
        %v6967 = vadd.f32 %v6957, %v6959
        %s6968 = sld [smem:[#allocation2 + $0x200]]
        %6969 = vset.pattern.permute.xlu0 64
        %6970 = vperm.xlu0 %6969, %v841
        %v6971 = vpop.permute.xlu0 %6970
        %6973 = vset.pattern.permute.xlu0 64
        %6974 = vperm.xlu0 %6973, %v844
        %v6975 = vpop.permute.xlu0 %6974
        %6977 = vset.pattern.permute.xlu0 64
        %6978 = vperm.xlu0 %6977, %v847
        %v6979 = vpop.permute.xlu0 %6978
        %6981 = vset.pattern.permute.xlu0 64
        %6982 = vperm.xlu0 %6981, %v850
        %v6983 = vpop.permute.xlu0 %6982
        %6985 = vset.pattern.permute.xlu0 64
        %6986 = vperm.xlu0 %6985, %v853
        %v6987 = vpop.permute.xlu0 %6986
        %6989 = vset.pattern.permute.xlu0 64
        %6990 = vperm.xlu0 %6989, %v856
        %v6991 = vpop.permute.xlu0 %6990
        %6993 = vset.pattern.permute.xlu0 64
        %6994 = vperm.xlu0 %6993, %v859
        %v6995 = vpop.permute.xlu0 %6994
        %6997 = vset.pattern.permute.xlu0 64
        %6998 = vperm.xlu0 %6997, %v862
        %v6999 = vpop.permute.xlu0 %6998
        %v7001 = vperm.slane %v888, 0
        %v7002 = vadd.f32 %v6971, %v7001
        %v7003 = vadd.f32 %v6975, %v7001
        %v7004 = vadd.f32 %v6979, %v7001
        %v7005 = vadd.f32 %v6983, %v7001
        %v7006 = vadd.f32 %v6987, %v7001
        %v7007 = vadd.f32 %v6991, %v7001
        %v7008 = vadd.f32 %v6995, %v7001
        %v7009 = vadd.f32 %v6999, %v7001
        %v7010 = vmax.f32 %v7002, 0.0
        %v7011 = vmax.f32 %v7003, 0.0
        %v7012 = vmax.f32 %v7004, 0.0
        %v7013 = vmax.f32 %v7005, 0.0
        %v7014 = vmax.f32 %v7006, 0.0
        %v7015 = vmax.f32 %v7007, 0.0
        %v7016 = vmax.f32 %v7008, 0.0
        %v7017 = vmax.f32 %v7009, 0.0
        %v7018 = vstv %s6968
        %v7019 = vmul.f32 %v7018, %v7010
        %v7020 = vmul.f32 %v7018, %v7011
        %v7021 = vmul.f32 %v7018, %v7012
        %v7022 = vmul.f32 %v7018, %v7013
        %v7023 = vmul.f32 %v7018, %v7014
        %v7024 = vmul.f32 %v7018, %v7015
        %v7025 = vmul.f32 %v7018, %v7016
        %v7026 = vmul.f32 %v7018, %v7017
        %v7027 = vadd.f32 %v6960, %v7019
        %v7028 = vadd.f32 %v6961, %v7020
        %v7029 = vadd.f32 %v6962, %v7021
        %v7030 = vadd.f32 %v6963, %v7022
        %v7031 = vadd.f32 %v6964, %v7023
        %v7032 = vadd.f32 %v6965, %v7024
        %v7033 = vadd.f32 %v6966, %v7025
        %v7034 = vadd.f32 %v6967, %v7026
        %s7035 = sld [smem:[#allocation2 + $0x201]]
        %7036 = vset.pattern.permute.xlu0 65
        %7037 = vperm.xlu0 %7036, %v841
        %v7038 = vpop.permute.xlu0 %7037
        %7040 = vset.pattern.permute.xlu0 65
        %7041 = vperm.xlu0 %7040, %v844
        %v7042 = vpop.permute.xlu0 %7041
        %7044 = vset.pattern.permute.xlu0 65
        %7045 = vperm.xlu0 %7044, %v847
        %v7046 = vpop.permute.xlu0 %7045
        %7048 = vset.pattern.permute.xlu0 65
        %7049 = vperm.xlu0 %7048, %v850
        %v7050 = vpop.permute.xlu0 %7049
        %7052 = vset.pattern.permute.xlu0 65
        %7053 = vperm.xlu0 %7052, %v853
        %v7054 = vpop.permute.xlu0 %7053
        %7056 = vset.pattern.permute.xlu0 65
        %7057 = vperm.xlu0 %7056, %v856
        %v7058 = vpop.permute.xlu0 %7057
        %7060 = vset.pattern.permute.xlu0 65
        %7061 = vperm.xlu0 %7060, %v859
        %v7062 = vpop.permute.xlu0 %7061
        %7064 = vset.pattern.permute.xlu0 65
        %7065 = vperm.xlu0 %7064, %v862
        %v7066 = vpop.permute.xlu0 %7065
        %v7068 = vperm.slane %v888, 1
        %v7069 = vadd.f32 %v7038, %v7068
        %v7070 = vadd.f32 %v7042, %v7068
        %v7071 = vadd.f32 %v7046, %v7068
        %v7072 = vadd.f32 %v7050, %v7068
        %v7073 = vadd.f32 %v7054, %v7068
        %v7074 = vadd.f32 %v7058, %v7068
        %v7075 = vadd.f32 %v7062, %v7068
        %v7076 = vadd.f32 %v7066, %v7068
        %v7077 = vmax.f32 %v7069, 0.0
        %v7078 = vmax.f32 %v7070, 0.0
        %v7079 = vmax.f32 %v7071, 0.0
        %v7080 = vmax.f32 %v7072, 0.0
        %v7081 = vmax.f32 %v7073, 0.0
        %v7082 = vmax.f32 %v7074, 0.0
        %v7083 = vmax.f32 %v7075, 0.0
        %v7084 = vmax.f32 %v7076, 0.0
        %v7085 = vstv %s7035
        %v7086 = vmul.f32 %v7085, %v7077
        %v7087 = vmul.f32 %v7085, %v7078
        %v7088 = vmul.f32 %v7085, %v7079
        %v7089 = vmul.f32 %v7085, %v7080
        %v7090 = vmul.f32 %v7085, %v7081
        %v7091 = vmul.f32 %v7085, %v7082
        %v7092 = vmul.f32 %v7085, %v7083
        %v7093 = vmul.f32 %v7085, %v7084
        %v7094 = vadd.f32 %v7027, %v7086
        %v7095 = vadd.f32 %v7028, %v7087
        %v7096 = vadd.f32 %v7029, %v7088
        %v7097 = vadd.f32 %v7030, %v7089
        %v7098 = vadd.f32 %v7031, %v7090
        %v7099 = vadd.f32 %v7032, %v7091
        %v7100 = vadd.f32 %v7033, %v7092
        %v7101 = vadd.f32 %v7034, %v7093
        %s7102 = sld [smem:[#allocation2 + $0x202]]
        %7103 = vset.pattern.permute.xlu0 66
        %7104 = vperm.xlu0 %7103, %v841
        %v7105 = vpop.permute.xlu0 %7104
        %7107 = vset.pattern.permute.xlu0 66
        %7108 = vperm.xlu0 %7107, %v844
        %v7109 = vpop.permute.xlu0 %7108
        %7111 = vset.pattern.permute.xlu0 66
        %7112 = vperm.xlu0 %7111, %v847
        %v7113 = vpop.permute.xlu0 %7112
        %7115 = vset.pattern.permute.xlu0 66
        %7116 = vperm.xlu0 %7115, %v850
        %v7117 = vpop.permute.xlu0 %7116
        %7119 = vset.pattern.permute.xlu0 66
        %7120 = vperm.xlu0 %7119, %v853
        %v7121 = vpop.permute.xlu0 %7120
        %7123 = vset.pattern.permute.xlu0 66
        %7124 = vperm.xlu0 %7123, %v856
        %v7125 = vpop.permute.xlu0 %7124
        %7127 = vset.pattern.permute.xlu0 66
        %7128 = vperm.xlu0 %7127, %v859
        %v7129 = vpop.permute.xlu0 %7128
        %7131 = vset.pattern.permute.xlu0 66
        %7132 = vperm.xlu0 %7131, %v862
        %v7133 = vpop.permute.xlu0 %7132
        %v7135 = vperm.slane %v888, 2
        %v7136 = vadd.f32 %v7105, %v7135
        %v7137 = vadd.f32 %v7109, %v7135
        %v7138 = vadd.f32 %v7113, %v7135
        %v7139 = vadd.f32 %v7117, %v7135
        %v7140 = vadd.f32 %v7121, %v7135
        %v7141 = vadd.f32 %v7125, %v7135
        %v7142 = vadd.f32 %v7129, %v7135
        %v7143 = vadd.f32 %v7133, %v7135
        %v7144 = vmax.f32 %v7136, 0.0
        %v7145 = vmax.f32 %v7137, 0.0
        %v7146 = vmax.f32 %v7138, 0.0
        %v7147 = vmax.f32 %v7139, 0.0
        %v7148 = vmax.f32 %v7140, 0.0
        %v7149 = vmax.f32 %v7141, 0.0
        %v7150 = vmax.f32 %v7142, 0.0
        %v7151 = vmax.f32 %v7143, 0.0
        %v7152 = vstv %s7102
        %v7153 = vmul.f32 %v7152, %v7144
        %v7154 = vmul.f32 %v7152, %v7145
        %v7155 = vmul.f32 %v7152, %v7146
        %v7156 = vmul.f32 %v7152, %v7147
        %v7157 = vmul.f32 %v7152, %v7148
        %v7158 = vmul.f32 %v7152, %v7149
        %v7159 = vmul.f32 %v7152, %v7150
        %v7160 = vmul.f32 %v7152, %v7151
        %v7161 = vadd.f32 %v7094, %v7153
        %v7162 = vadd.f32 %v7095, %v7154
        %v7163 = vadd.f32 %v7096, %v7155
        %v7164 = vadd.f32 %v7097, %v7156
        %v7165 = vadd.f32 %v7098, %v7157
        %v7166 = vadd.f32 %v7099, %v7158
        %v7167 = vadd.f32 %v7100, %v7159
        %v7168 = vadd.f32 %v7101, %v7160
        %s7169 = sld [smem:[#allocation2 + $0x203]]
        %7170 = vset.pattern.permute.xlu0 67
        %7171 = vperm.xlu0 %7170, %v841
        %v7172 = vpop.permute.xlu0 %7171
        %7174 = vset.pattern.permute.xlu0 67
        %7175 = vperm.xlu0 %7174, %v844
        %v7176 = vpop.permute.xlu0 %7175
        %7178 = vset.pattern.permute.xlu0 67
        %7179 = vperm.xlu0 %7178, %v847
        %v7180 = vpop.permute.xlu0 %7179
        %7182 = vset.pattern.permute.xlu0 67
        %7183 = vperm.xlu0 %7182, %v850
        %v7184 = vpop.permute.xlu0 %7183
        %7186 = vset.pattern.permute.xlu0 67
        %7187 = vperm.xlu0 %7186, %v853
        %v7188 = vpop.permute.xlu0 %7187
        %7190 = vset.pattern.permute.xlu0 67
        %7191 = vperm.xlu0 %7190, %v856
        %v7192 = vpop.permute.xlu0 %7191
        %7194 = vset.pattern.permute.xlu0 67
        %7195 = vperm.xlu0 %7194, %v859
        %v7196 = vpop.permute.xlu0 %7195
        %7198 = vset.pattern.permute.xlu0 67
        %7199 = vperm.xlu0 %7198, %v862
        %v7200 = vpop.permute.xlu0 %7199
        %v7202 = vperm.slane %v888, 3
        %v7203 = vadd.f32 %v7172, %v7202
        %v7204 = vadd.f32 %v7176, %v7202
        %v7205 = vadd.f32 %v7180, %v7202
        %v7206 = vadd.f32 %v7184, %v7202
        %v7207 = vadd.f32 %v7188, %v7202
        %v7208 = vadd.f32 %v7192, %v7202
        %v7209 = vadd.f32 %v7196, %v7202
        %v7210 = vadd.f32 %v7200, %v7202
        %v7211 = vmax.f32 %v7203, 0.0
        %v7212 = vmax.f32 %v7204, 0.0
        %v7213 = vmax.f32 %v7205, 0.0
        %v7214 = vmax.f32 %v7206, 0.0
        %v7215 = vmax.f32 %v7207, 0.0
        %v7216 = vmax.f32 %v7208, 0.0
        %v7217 = vmax.f32 %v7209, 0.0
        %v7218 = vmax.f32 %v7210, 0.0
        %v7219 = vstv %s7169
        %v7220 = vmul.f32 %v7219, %v7211
        %v7221 = vmul.f32 %v7219, %v7212
        %v7222 = vmul.f32 %v7219, %v7213
        %v7223 = vmul.f32 %v7219, %v7214
        %v7224 = vmul.f32 %v7219, %v7215
        %v7225 = vmul.f32 %v7219, %v7216
        %v7226 = vmul.f32 %v7219, %v7217
        %v7227 = vmul.f32 %v7219, %v7218
        %v7228 = vadd.f32 %v7161, %v7220
        %v7229 = vadd.f32 %v7162, %v7221
        %v7230 = vadd.f32 %v7163, %v7222
        %v7231 = vadd.f32 %v7164, %v7223
        %v7232 = vadd.f32 %v7165, %v7224
        %v7233 = vadd.f32 %v7166, %v7225
        %v7234 = vadd.f32 %v7167, %v7226
        %v7235 = vadd.f32 %v7168, %v7227
        %s7236 = sld [smem:[#allocation2 + $0x204]]
        %7237 = vset.pattern.permute.xlu0 68
        %7238 = vperm.xlu0 %7237, %v841
        %v7239 = vpop.permute.xlu0 %7238
        %7241 = vset.pattern.permute.xlu0 68
        %7242 = vperm.xlu0 %7241, %v844
        %v7243 = vpop.permute.xlu0 %7242
        %7245 = vset.pattern.permute.xlu0 68
        %7246 = vperm.xlu0 %7245, %v847
        %v7247 = vpop.permute.xlu0 %7246
        %7249 = vset.pattern.permute.xlu0 68
        %7250 = vperm.xlu0 %7249, %v850
        %v7251 = vpop.permute.xlu0 %7250
        %7253 = vset.pattern.permute.xlu0 68
        %7254 = vperm.xlu0 %7253, %v853
        %v7255 = vpop.permute.xlu0 %7254
        %7257 = vset.pattern.permute.xlu0 68
        %7258 = vperm.xlu0 %7257, %v856
        %v7259 = vpop.permute.xlu0 %7258
        %7261 = vset.pattern.permute.xlu0 68
        %7262 = vperm.xlu0 %7261, %v859
        %v7263 = vpop.permute.xlu0 %7262
        %7265 = vset.pattern.permute.xlu0 68
        %7266 = vperm.xlu0 %7265, %v862
        %v7267 = vpop.permute.xlu0 %7266
        %v7269 = vperm.slane %v888, 4
        %v7270 = vadd.f32 %v7239, %v7269
        %v7271 = vadd.f32 %v7243, %v7269
        %v7272 = vadd.f32 %v7247, %v7269
        %v7273 = vadd.f32 %v7251, %v7269
        %v7274 = vadd.f32 %v7255, %v7269
        %v7275 = vadd.f32 %v7259, %v7269
        %v7276 = vadd.f32 %v7263, %v7269
        %v7277 = vadd.f32 %v7267, %v7269
        %v7278 = vmax.f32 %v7270, 0.0
        %v7279 = vmax.f32 %v7271, 0.0
        %v7280 = vmax.f32 %v7272, 0.0
        %v7281 = vmax.f32 %v7273, 0.0
        %v7282 = vmax.f32 %v7274, 0.0
        %v7283 = vmax.f32 %v7275, 0.0
        %v7284 = vmax.f32 %v7276, 0.0
        %v7285 = vmax.f32 %v7277, 0.0
        %v7286 = vstv %s7236
        %v7287 = vmul.f32 %v7286, %v7278
        %v7288 = vmul.f32 %v7286, %v7279
        %v7289 = vmul.f32 %v7286, %v7280
        %v7290 = vmul.f32 %v7286, %v7281
        %v7291 = vmul.f32 %v7286, %v7282
        %v7292 = vmul.f32 %v7286, %v7283
        %v7293 = vmul.f32 %v7286, %v7284
        %v7294 = vmul.f32 %v7286, %v7285
        %v7295 = vadd.f32 %v7228, %v7287
        %v7296 = vadd.f32 %v7229, %v7288
        %v7297 = vadd.f32 %v7230, %v7289
        %v7298 = vadd.f32 %v7231, %v7290
        %v7299 = vadd.f32 %v7232, %v7291
        %v7300 = vadd.f32 %v7233, %v7292
        %v7301 = vadd.f32 %v7234, %v7293
        %v7302 = vadd.f32 %v7235, %v7294
        %s7303 = sld [smem:[#allocation2 + $0x205]]
        %7304 = vset.pattern.permute.xlu0 69
        %7305 = vperm.xlu0 %7304, %v841
        %v7306 = vpop.permute.xlu0 %7305
        %7308 = vset.pattern.permute.xlu0 69
        %7309 = vperm.xlu0 %7308, %v844
        %v7310 = vpop.permute.xlu0 %7309
        %7312 = vset.pattern.permute.xlu0 69
        %7313 = vperm.xlu0 %7312, %v847
        %v7314 = vpop.permute.xlu0 %7313
        %7316 = vset.pattern.permute.xlu0 69
        %7317 = vperm.xlu0 %7316, %v850
        %v7318 = vpop.permute.xlu0 %7317
        %7320 = vset.pattern.permute.xlu0 69
        %7321 = vperm.xlu0 %7320, %v853
        %v7322 = vpop.permute.xlu0 %7321
        %7324 = vset.pattern.permute.xlu0 69
        %7325 = vperm.xlu0 %7324, %v856
        %v7326 = vpop.permute.xlu0 %7325
        %7328 = vset.pattern.permute.xlu0 69
        %7329 = vperm.xlu0 %7328, %v859
        %v7330 = vpop.permute.xlu0 %7329
        %7332 = vset.pattern.permute.xlu0 69
        %7333 = vperm.xlu0 %7332, %v862
        %v7334 = vpop.permute.xlu0 %7333
        %v7336 = vperm.slane %v888, 5
        %v7337 = vadd.f32 %v7306, %v7336
        %v7338 = vadd.f32 %v7310, %v7336
        %v7339 = vadd.f32 %v7314, %v7336
        %v7340 = vadd.f32 %v7318, %v7336
        %v7341 = vadd.f32 %v7322, %v7336
        %v7342 = vadd.f32 %v7326, %v7336
        %v7343 = vadd.f32 %v7330, %v7336
        %v7344 = vadd.f32 %v7334, %v7336
        %v7345 = vmax.f32 %v7337, 0.0
        %v7346 = vmax.f32 %v7338, 0.0
        %v7347 = vmax.f32 %v7339, 0.0
        %v7348 = vmax.f32 %v7340, 0.0
        %v7349 = vmax.f32 %v7341, 0.0
        %v7350 = vmax.f32 %v7342, 0.0
        %v7351 = vmax.f32 %v7343, 0.0
        %v7352 = vmax.f32 %v7344, 0.0
        %v7353 = vstv %s7303
        %v7354 = vmul.f32 %v7353, %v7345
        %v7355 = vmul.f32 %v7353, %v7346
        %v7356 = vmul.f32 %v7353, %v7347
        %v7357 = vmul.f32 %v7353, %v7348
        %v7358 = vmul.f32 %v7353, %v7349
        %v7359 = vmul.f32 %v7353, %v7350
        %v7360 = vmul.f32 %v7353, %v7351
        %v7361 = vmul.f32 %v7353, %v7352
        %v7362 = vadd.f32 %v7295, %v7354
        %v7363 = vadd.f32 %v7296, %v7355
        %v7364 = vadd.f32 %v7297, %v7356
        %v7365 = vadd.f32 %v7298, %v7357
        %v7366 = vadd.f32 %v7299, %v7358
        %v7367 = vadd.f32 %v7300, %v7359
        %v7368 = vadd.f32 %v7301, %v7360
        %v7369 = vadd.f32 %v7302, %v7361
        %s7370 = sld [smem:[#allocation2 + $0x206]]
        %7371 = vset.pattern.permute.xlu0 70
        %7372 = vperm.xlu0 %7371, %v841
        %v7373 = vpop.permute.xlu0 %7372
        %7375 = vset.pattern.permute.xlu0 70
        %7376 = vperm.xlu0 %7375, %v844
        %v7377 = vpop.permute.xlu0 %7376
        %7379 = vset.pattern.permute.xlu0 70
        %7380 = vperm.xlu0 %7379, %v847
        %v7381 = vpop.permute.xlu0 %7380
        %7383 = vset.pattern.permute.xlu0 70
        %7384 = vperm.xlu0 %7383, %v850
        %v7385 = vpop.permute.xlu0 %7384
        %7387 = vset.pattern.permute.xlu0 70
        %7388 = vperm.xlu0 %7387, %v853
        %v7389 = vpop.permute.xlu0 %7388
        %7391 = vset.pattern.permute.xlu0 70
        %7392 = vperm.xlu0 %7391, %v856
        %v7393 = vpop.permute.xlu0 %7392
        %7395 = vset.pattern.permute.xlu0 70
        %7396 = vperm.xlu0 %7395, %v859
        %v7397 = vpop.permute.xlu0 %7396
        %7399 = vset.pattern.permute.xlu0 70
        %7400 = vperm.xlu0 %7399, %v862
        %v7401 = vpop.permute.xlu0 %7400
        %v7403 = vperm.slane %v888, 6
        %v7404 = vadd.f32 %v7373, %v7403
        %v7405 = vadd.f32 %v7377, %v7403
        %v7406 = vadd.f32 %v7381, %v7403
        %v7407 = vadd.f32 %v7385, %v7403
        %v7408 = vadd.f32 %v7389, %v7403
        %v7409 = vadd.f32 %v7393, %v7403
        %v7410 = vadd.f32 %v7397, %v7403
        %v7411 = vadd.f32 %v7401, %v7403
        %v7412 = vmax.f32 %v7404, 0.0
        %v7413 = vmax.f32 %v7405, 0.0
        %v7414 = vmax.f32 %v7406, 0.0
        %v7415 = vmax.f32 %v7407, 0.0
        %v7416 = vmax.f32 %v7408, 0.0
        %v7417 = vmax.f32 %v7409, 0.0
        %v7418 = vmax.f32 %v7410, 0.0
        %v7419 = vmax.f32 %v7411, 0.0
        %v7420 = vstv %s7370
        %v7421 = vmul.f32 %v7420, %v7412
        %v7422 = vmul.f32 %v7420, %v7413
        %v7423 = vmul.f32 %v7420, %v7414
        %v7424 = vmul.f32 %v7420, %v7415
        %v7425 = vmul.f32 %v7420, %v7416
        %v7426 = vmul.f32 %v7420, %v7417
        %v7427 = vmul.f32 %v7420, %v7418
        %v7428 = vmul.f32 %v7420, %v7419
        %v7429 = vadd.f32 %v7362, %v7421
        %v7430 = vadd.f32 %v7363, %v7422
        %v7431 = vadd.f32 %v7364, %v7423
        %v7432 = vadd.f32 %v7365, %v7424
        %v7433 = vadd.f32 %v7366, %v7425
        %v7434 = vadd.f32 %v7367, %v7426
        %v7435 = vadd.f32 %v7368, %v7427
        %v7436 = vadd.f32 %v7369, %v7428
        %s7437 = sld [smem:[#allocation2 + $0x207]]
        %7438 = vset.pattern.permute.xlu0 71
        %7439 = vperm.xlu0 %7438, %v841
        %v7440 = vpop.permute.xlu0 %7439
        %7442 = vset.pattern.permute.xlu0 71
        %7443 = vperm.xlu0 %7442, %v844
        %v7444 = vpop.permute.xlu0 %7443
        %7446 = vset.pattern.permute.xlu0 71
        %7447 = vperm.xlu0 %7446, %v847
        %v7448 = vpop.permute.xlu0 %7447
        %7450 = vset.pattern.permute.xlu0 71
        %7451 = vperm.xlu0 %7450, %v850
        %v7452 = vpop.permute.xlu0 %7451
        %7454 = vset.pattern.permute.xlu0 71
        %7455 = vperm.xlu0 %7454, %v853
        %v7456 = vpop.permute.xlu0 %7455
        %7458 = vset.pattern.permute.xlu0 71
        %7459 = vperm.xlu0 %7458, %v856
        %v7460 = vpop.permute.xlu0 %7459
        %7462 = vset.pattern.permute.xlu0 71
        %7463 = vperm.xlu0 %7462, %v859
        %v7464 = vpop.permute.xlu0 %7463
        %7466 = vset.pattern.permute.xlu0 71
        %7467 = vperm.xlu0 %7466, %v862
        %v7468 = vpop.permute.xlu0 %7467
        %v7470 = vperm.slane %v888, 7
        %v7471 = vadd.f32 %v7440, %v7470
        %v7472 = vadd.f32 %v7444, %v7470
        %v7473 = vadd.f32 %v7448, %v7470
        %v7474 = vadd.f32 %v7452, %v7470
        %v7475 = vadd.f32 %v7456, %v7470
        %v7476 = vadd.f32 %v7460, %v7470
        %v7477 = vadd.f32 %v7464, %v7470
        %v7478 = vadd.f32 %v7468, %v7470
        %v7479 = vmax.f32 %v7471, 0.0
        %v7480 = vmax.f32 %v7472, 0.0
        %v7481 = vmax.f32 %v7473, 0.0
        %v7482 = vmax.f32 %v7474, 0.0
        %v7483 = vmax.f32 %v7475, 0.0
        %v7484 = vmax.f32 %v7476, 0.0
        %v7485 = vmax.f32 %v7477, 0.0
        %v7486 = vmax.f32 %v7478, 0.0
        %v7487 = vstv %s7437
        %v7488 = vmul.f32 %v7487, %v7479
        %v7489 = vmul.f32 %v7487, %v7480
        %v7490 = vmul.f32 %v7487, %v7481
        %v7491 = vmul.f32 %v7487, %v7482
        %v7492 = vmul.f32 %v7487, %v7483
        %v7493 = vmul.f32 %v7487, %v7484
        %v7494 = vmul.f32 %v7487, %v7485
        %v7495 = vmul.f32 %v7487, %v7486
        %v7496 = vadd.f32 %v7429, %v7488
        %v7497 = vadd.f32 %v7430, %v7489
        %v7498 = vadd.f32 %v7431, %v7490
        %v7499 = vadd.f32 %v7432, %v7491
        %v7500 = vadd.f32 %v7433, %v7492
        %v7501 = vadd.f32 %v7434, %v7493
        %v7502 = vadd.f32 %v7435, %v7494
        %v7503 = vadd.f32 %v7436, %v7495
        %s7504 = sld [smem:[#allocation2 + $0x208]]
        %7505 = vset.pattern.permute.xlu0 72
        %7506 = vperm.xlu0 %7505, %v841
        %v7507 = vpop.permute.xlu0 %7506
        %7509 = vset.pattern.permute.xlu0 72
        %7510 = vperm.xlu0 %7509, %v844
        %v7511 = vpop.permute.xlu0 %7510
        %7513 = vset.pattern.permute.xlu0 72
        %7514 = vperm.xlu0 %7513, %v847
        %v7515 = vpop.permute.xlu0 %7514
        %7517 = vset.pattern.permute.xlu0 72
        %7518 = vperm.xlu0 %7517, %v850
        %v7519 = vpop.permute.xlu0 %7518
        %7521 = vset.pattern.permute.xlu0 72
        %7522 = vperm.xlu0 %7521, %v853
        %v7523 = vpop.permute.xlu0 %7522
        %7525 = vset.pattern.permute.xlu0 72
        %7526 = vperm.xlu0 %7525, %v856
        %v7527 = vpop.permute.xlu0 %7526
        %7529 = vset.pattern.permute.xlu0 72
        %7530 = vperm.xlu0 %7529, %v859
        %v7531 = vpop.permute.xlu0 %7530
        %7533 = vset.pattern.permute.xlu0 72
        %7534 = vperm.xlu0 %7533, %v862
        %v7535 = vpop.permute.xlu0 %7534
        %v7537 = vperm.slane %v889, 0
        %v7538 = vadd.f32 %v7507, %v7537
        %v7539 = vadd.f32 %v7511, %v7537
        %v7540 = vadd.f32 %v7515, %v7537
        %v7541 = vadd.f32 %v7519, %v7537
        %v7542 = vadd.f32 %v7523, %v7537
        %v7543 = vadd.f32 %v7527, %v7537
        %v7544 = vadd.f32 %v7531, %v7537
        %v7545 = vadd.f32 %v7535, %v7537
        %v7546 = vmax.f32 %v7538, 0.0
        %v7547 = vmax.f32 %v7539, 0.0
        %v7548 = vmax.f32 %v7540, 0.0
        %v7549 = vmax.f32 %v7541, 0.0
        %v7550 = vmax.f32 %v7542, 0.0
        %v7551 = vmax.f32 %v7543, 0.0
        %v7552 = vmax.f32 %v7544, 0.0
        %v7553 = vmax.f32 %v7545, 0.0
        %v7554 = vstv %s7504
        %v7555 = vmul.f32 %v7554, %v7546
        %v7556 = vmul.f32 %v7554, %v7547
        %v7557 = vmul.f32 %v7554, %v7548
        %v7558 = vmul.f32 %v7554, %v7549
        %v7559 = vmul.f32 %v7554, %v7550
        %v7560 = vmul.f32 %v7554, %v7551
        %v7561 = vmul.f32 %v7554, %v7552
        %v7562 = vmul.f32 %v7554, %v7553
        %v7563 = vadd.f32 %v7496, %v7555
        %v7564 = vadd.f32 %v7497, %v7556
        %v7565 = vadd.f32 %v7498, %v7557
        %v7566 = vadd.f32 %v7499, %v7558
        %v7567 = vadd.f32 %v7500, %v7559
        %v7568 = vadd.f32 %v7501, %v7560
        %v7569 = vadd.f32 %v7502, %v7561
        %v7570 = vadd.f32 %v7503, %v7562
        %s7571 = sld [smem:[#allocation2 + $0x209]]
        %7572 = vset.pattern.permute.xlu0 73
        %7573 = vperm.xlu0 %7572, %v841
        %v7574 = vpop.permute.xlu0 %7573
        %7576 = vset.pattern.permute.xlu0 73
        %7577 = vperm.xlu0 %7576, %v844
        %v7578 = vpop.permute.xlu0 %7577
        %7580 = vset.pattern.permute.xlu0 73
        %7581 = vperm.xlu0 %7580, %v847
        %v7582 = vpop.permute.xlu0 %7581
        %7584 = vset.pattern.permute.xlu0 73
        %7585 = vperm.xlu0 %7584, %v850
        %v7586 = vpop.permute.xlu0 %7585
        %7588 = vset.pattern.permute.xlu0 73
        %7589 = vperm.xlu0 %7588, %v853
        %v7590 = vpop.permute.xlu0 %7589
        %7592 = vset.pattern.permute.xlu0 73
        %7593 = vperm.xlu0 %7592, %v856
        %v7594 = vpop.permute.xlu0 %7593
        %7596 = vset.pattern.permute.xlu0 73
        %7597 = vperm.xlu0 %7596, %v859
        %v7598 = vpop.permute.xlu0 %7597
        %7600 = vset.pattern.permute.xlu0 73
        %7601 = vperm.xlu0 %7600, %v862
        %v7602 = vpop.permute.xlu0 %7601
        %v7604 = vperm.slane %v889, 1
        %v7605 = vadd.f32 %v7574, %v7604
        %v7606 = vadd.f32 %v7578, %v7604
        %v7607 = vadd.f32 %v7582, %v7604
        %v7608 = vadd.f32 %v7586, %v7604
        %v7609 = vadd.f32 %v7590, %v7604
        %v7610 = vadd.f32 %v7594, %v7604
        %v7611 = vadd.f32 %v7598, %v7604
        %v7612 = vadd.f32 %v7602, %v7604
        %v7613 = vmax.f32 %v7605, 0.0
        %v7614 = vmax.f32 %v7606, 0.0
        %v7615 = vmax.f32 %v7607, 0.0
        %v7616 = vmax.f32 %v7608, 0.0
        %v7617 = vmax.f32 %v7609, 0.0
        %v7618 = vmax.f32 %v7610, 0.0
        %v7619 = vmax.f32 %v7611, 0.0
        %v7620 = vmax.f32 %v7612, 0.0
        %v7621 = vstv %s7571
        %v7622 = vmul.f32 %v7621, %v7613
        %v7623 = vmul.f32 %v7621, %v7614
        %v7624 = vmul.f32 %v7621, %v7615
        %v7625 = vmul.f32 %v7621, %v7616
        %v7626 = vmul.f32 %v7621, %v7617
        %v7627 = vmul.f32 %v7621, %v7618
        %v7628 = vmul.f32 %v7621, %v7619
        %v7629 = vmul.f32 %v7621, %v7620
        %v7630 = vadd.f32 %v7563, %v7622
        %v7631 = vadd.f32 %v7564, %v7623
        %v7632 = vadd.f32 %v7565, %v7624
        %v7633 = vadd.f32 %v7566, %v7625
        %v7634 = vadd.f32 %v7567, %v7626
        %v7635 = vadd.f32 %v7568, %v7627
        %v7636 = vadd.f32 %v7569, %v7628
        %v7637 = vadd.f32 %v7570, %v7629
        %s7638 = sld [smem:[#allocation2 + $0x20a]]
        %7639 = vset.pattern.permute.xlu0 74
        %7640 = vperm.xlu0 %7639, %v841
        %v7641 = vpop.permute.xlu0 %7640
        %7643 = vset.pattern.permute.xlu0 74
        %7644 = vperm.xlu0 %7643, %v844
        %v7645 = vpop.permute.xlu0 %7644
        %7647 = vset.pattern.permute.xlu0 74
        %7648 = vperm.xlu0 %7647, %v847
        %v7649 = vpop.permute.xlu0 %7648
        %7651 = vset.pattern.permute.xlu0 74
        %7652 = vperm.xlu0 %7651, %v850
        %v7653 = vpop.permute.xlu0 %7652
        %7655 = vset.pattern.permute.xlu0 74
        %7656 = vperm.xlu0 %7655, %v853
        %v7657 = vpop.permute.xlu0 %7656
        %7659 = vset.pattern.permute.xlu0 74
        %7660 = vperm.xlu0 %7659, %v856
        %v7661 = vpop.permute.xlu0 %7660
        %7663 = vset.pattern.permute.xlu0 74
        %7664 = vperm.xlu0 %7663, %v859
        %v7665 = vpop.permute.xlu0 %7664
        %7667 = vset.pattern.permute.xlu0 74
        %7668 = vperm.xlu0 %7667, %v862
        %v7669 = vpop.permute.xlu0 %7668
        %v7671 = vperm.slane %v889, 2
        %v7672 = vadd.f32 %v7641, %v7671
        %v7673 = vadd.f32 %v7645, %v7671
        %v7674 = vadd.f32 %v7649, %v7671
        %v7675 = vadd.f32 %v7653, %v7671
        %v7676 = vadd.f32 %v7657, %v7671
        %v7677 = vadd.f32 %v7661, %v7671
        %v7678 = vadd.f32 %v7665, %v7671
        %v7679 = vadd.f32 %v7669, %v7671
        %v7680 = vmax.f32 %v7672, 0.0
        %v7681 = vmax.f32 %v7673, 0.0
        %v7682 = vmax.f32 %v7674, 0.0
        %v7683 = vmax.f32 %v7675, 0.0
        %v7684 = vmax.f32 %v7676, 0.0
        %v7685 = vmax.f32 %v7677, 0.0
        %v7686 = vmax.f32 %v7678, 0.0
        %v7687 = vmax.f32 %v7679, 0.0
        %v7688 = vstv %s7638
        %v7689 = vmul.f32 %v7688, %v7680
        %v7690 = vmul.f32 %v7688, %v7681
        %v7691 = vmul.f32 %v7688, %v7682
        %v7692 = vmul.f32 %v7688, %v7683
        %v7693 = vmul.f32 %v7688, %v7684
        %v7694 = vmul.f32 %v7688, %v7685
        %v7695 = vmul.f32 %v7688, %v7686
        %v7696 = vmul.f32 %v7688, %v7687
        %v7697 = vadd.f32 %v7630, %v7689
        %v7698 = vadd.f32 %v7631, %v7690
        %v7699 = vadd.f32 %v7632, %v7691
        %v7700 = vadd.f32 %v7633, %v7692
        %v7701 = vadd.f32 %v7634, %v7693
        %v7702 = vadd.f32 %v7635, %v7694
        %v7703 = vadd.f32 %v7636, %v7695
        %v7704 = vadd.f32 %v7637, %v7696
        %s7705 = sld [smem:[#allocation2 + $0x20b]]
        %7706 = vset.pattern.permute.xlu0 75
        %7707 = vperm.xlu0 %7706, %v841
        %v7708 = vpop.permute.xlu0 %7707
        %7710 = vset.pattern.permute.xlu0 75
        %7711 = vperm.xlu0 %7710, %v844
        %v7712 = vpop.permute.xlu0 %7711
        %7714 = vset.pattern.permute.xlu0 75
        %7715 = vperm.xlu0 %7714, %v847
        %v7716 = vpop.permute.xlu0 %7715
        %7718 = vset.pattern.permute.xlu0 75
        %7719 = vperm.xlu0 %7718, %v850
        %v7720 = vpop.permute.xlu0 %7719
        %7722 = vset.pattern.permute.xlu0 75
        %7723 = vperm.xlu0 %7722, %v853
        %v7724 = vpop.permute.xlu0 %7723
        %7726 = vset.pattern.permute.xlu0 75
        %7727 = vperm.xlu0 %7726, %v856
        %v7728 = vpop.permute.xlu0 %7727
        %7730 = vset.pattern.permute.xlu0 75
        %7731 = vperm.xlu0 %7730, %v859
        %v7732 = vpop.permute.xlu0 %7731
        %7734 = vset.pattern.permute.xlu0 75
        %7735 = vperm.xlu0 %7734, %v862
        %v7736 = vpop.permute.xlu0 %7735
        %v7738 = vperm.slane %v889, 3
        %v7739 = vadd.f32 %v7708, %v7738
        %v7740 = vadd.f32 %v7712, %v7738
        %v7741 = vadd.f32 %v7716, %v7738
        %v7742 = vadd.f32 %v7720, %v7738
        %v7743 = vadd.f32 %v7724, %v7738
        %v7744 = vadd.f32 %v7728, %v7738
        %v7745 = vadd.f32 %v7732, %v7738
        %v7746 = vadd.f32 %v7736, %v7738
        %v7747 = vmax.f32 %v7739, 0.0
        %v7748 = vmax.f32 %v7740, 0.0
        %v7749 = vmax.f32 %v7741, 0.0
        %v7750 = vmax.f32 %v7742, 0.0
        %v7751 = vmax.f32 %v7743, 0.0
        %v7752 = vmax.f32 %v7744, 0.0
        %v7753 = vmax.f32 %v7745, 0.0
        %v7754 = vmax.f32 %v7746, 0.0
        %v7755 = vstv %s7705
        %v7756 = vmul.f32 %v7755, %v7747
        %v7757 = vmul.f32 %v7755, %v7748
        %v7758 = vmul.f32 %v7755, %v7749
        %v7759 = vmul.f32 %v7755, %v7750
        %v7760 = vmul.f32 %v7755, %v7751
        %v7761 = vmul.f32 %v7755, %v7752
        %v7762 = vmul.f32 %v7755, %v7753
        %v7763 = vmul.f32 %v7755, %v7754
        %v7764 = vadd.f32 %v7697, %v7756
        %v7765 = vadd.f32 %v7698, %v7757
        %v7766 = vadd.f32 %v7699, %v7758
        %v7767 = vadd.f32 %v7700, %v7759
        %v7768 = vadd.f32 %v7701, %v7760
        %v7769 = vadd.f32 %v7702, %v7761
        %v7770 = vadd.f32 %v7703, %v7762
        %v7771 = vadd.f32 %v7704, %v7763
        %s7772 = sld [smem:[#allocation2 + $0x20c]]
        %7773 = vset.pattern.permute.xlu0 76
        %7774 = vperm.xlu0 %7773, %v841
        %v7775 = vpop.permute.xlu0 %7774
        %7777 = vset.pattern.permute.xlu0 76
        %7778 = vperm.xlu0 %7777, %v844
        %v7779 = vpop.permute.xlu0 %7778
        %7781 = vset.pattern.permute.xlu0 76
        %7782 = vperm.xlu0 %7781, %v847
        %v7783 = vpop.permute.xlu0 %7782
        %7785 = vset.pattern.permute.xlu0 76
        %7786 = vperm.xlu0 %7785, %v850
        %v7787 = vpop.permute.xlu0 %7786
        %7789 = vset.pattern.permute.xlu0 76
        %7790 = vperm.xlu0 %7789, %v853
        %v7791 = vpop.permute.xlu0 %7790
        %7793 = vset.pattern.permute.xlu0 76
        %7794 = vperm.xlu0 %7793, %v856
        %v7795 = vpop.permute.xlu0 %7794
        %7797 = vset.pattern.permute.xlu0 76
        %7798 = vperm.xlu0 %7797, %v859
        %v7799 = vpop.permute.xlu0 %7798
        %7801 = vset.pattern.permute.xlu0 76
        %7802 = vperm.xlu0 %7801, %v862
        %v7803 = vpop.permute.xlu0 %7802
        %v7805 = vperm.slane %v889, 4
        %v7806 = vadd.f32 %v7775, %v7805
        %v7807 = vadd.f32 %v7779, %v7805
        %v7808 = vadd.f32 %v7783, %v7805
        %v7809 = vadd.f32 %v7787, %v7805
        %v7810 = vadd.f32 %v7791, %v7805
        %v7811 = vadd.f32 %v7795, %v7805
        %v7812 = vadd.f32 %v7799, %v7805
        %v7813 = vadd.f32 %v7803, %v7805
        %v7814 = vmax.f32 %v7806, 0.0
        %v7815 = vmax.f32 %v7807, 0.0
        %v7816 = vmax.f32 %v7808, 0.0
        %v7817 = vmax.f32 %v7809, 0.0
        %v7818 = vmax.f32 %v7810, 0.0
        %v7819 = vmax.f32 %v7811, 0.0
        %v7820 = vmax.f32 %v7812, 0.0
        %v7821 = vmax.f32 %v7813, 0.0
        %v7822 = vstv %s7772
        %v7823 = vmul.f32 %v7822, %v7814
        %v7824 = vmul.f32 %v7822, %v7815
        %v7825 = vmul.f32 %v7822, %v7816
        %v7826 = vmul.f32 %v7822, %v7817
        %v7827 = vmul.f32 %v7822, %v7818
        %v7828 = vmul.f32 %v7822, %v7819
        %v7829 = vmul.f32 %v7822, %v7820
        %v7830 = vmul.f32 %v7822, %v7821
        %v7831 = vadd.f32 %v7764, %v7823
        %v7832 = vadd.f32 %v7765, %v7824
        %v7833 = vadd.f32 %v7766, %v7825
        %v7834 = vadd.f32 %v7767, %v7826
        %v7835 = vadd.f32 %v7768, %v7827
        %v7836 = vadd.f32 %v7769, %v7828
        %v7837 = vadd.f32 %v7770, %v7829
        %v7838 = vadd.f32 %v7771, %v7830
        %s7839 = sld [smem:[#allocation2 + $0x20d]]
        %7840 = vset.pattern.permute.xlu0 77
        %7841 = vperm.xlu0 %7840, %v841
        %v7842 = vpop.permute.xlu0 %7841
        %7844 = vset.pattern.permute.xlu0 77
        %7845 = vperm.xlu0 %7844, %v844
        %v7846 = vpop.permute.xlu0 %7845
        %7848 = vset.pattern.permute.xlu0 77
        %7849 = vperm.xlu0 %7848, %v847
        %v7850 = vpop.permute.xlu0 %7849
        %7852 = vset.pattern.permute.xlu0 77
        %7853 = vperm.xlu0 %7852, %v850
        %v7854 = vpop.permute.xlu0 %7853
        %7856 = vset.pattern.permute.xlu0 77
        %7857 = vperm.xlu0 %7856, %v853
        %v7858 = vpop.permute.xlu0 %7857
        %7860 = vset.pattern.permute.xlu0 77
        %7861 = vperm.xlu0 %7860, %v856
        %v7862 = vpop.permute.xlu0 %7861
        %7864 = vset.pattern.permute.xlu0 77
        %7865 = vperm.xlu0 %7864, %v859
        %v7866 = vpop.permute.xlu0 %7865
        %7868 = vset.pattern.permute.xlu0 77
        %7869 = vperm.xlu0 %7868, %v862
        %v7870 = vpop.permute.xlu0 %7869
        %v7872 = vperm.slane %v889, 5
        %v7873 = vadd.f32 %v7842, %v7872
        %v7874 = vadd.f32 %v7846, %v7872
        %v7875 = vadd.f32 %v7850, %v7872
        %v7876 = vadd.f32 %v7854, %v7872
        %v7877 = vadd.f32 %v7858, %v7872
        %v7878 = vadd.f32 %v7862, %v7872
        %v7879 = vadd.f32 %v7866, %v7872
        %v7880 = vadd.f32 %v7870, %v7872
        %v7881 = vmax.f32 %v7873, 0.0
        %v7882 = vmax.f32 %v7874, 0.0
        %v7883 = vmax.f32 %v7875, 0.0
        %v7884 = vmax.f32 %v7876, 0.0
        %v7885 = vmax.f32 %v7877, 0.0
        %v7886 = vmax.f32 %v7878, 0.0
        %v7887 = vmax.f32 %v7879, 0.0
        %v7888 = vmax.f32 %v7880, 0.0
        %v7889 = vstv %s7839
        %v7890 = vmul.f32 %v7889, %v7881
        %v7891 = vmul.f32 %v7889, %v7882
        %v7892 = vmul.f32 %v7889, %v7883
        %v7893 = vmul.f32 %v7889, %v7884
        %v7894 = vmul.f32 %v7889, %v7885
        %v7895 = vmul.f32 %v7889, %v7886
        %v7896 = vmul.f32 %v7889, %v7887
        %v7897 = vmul.f32 %v7889, %v7888
        %v7898 = vadd.f32 %v7831, %v7890
        %v7899 = vadd.f32 %v7832, %v7891
        %v7900 = vadd.f32 %v7833, %v7892
        %v7901 = vadd.f32 %v7834, %v7893
        %v7902 = vadd.f32 %v7835, %v7894
        %v7903 = vadd.f32 %v7836, %v7895
        %v7904 = vadd.f32 %v7837, %v7896
        %v7905 = vadd.f32 %v7838, %v7897
        %s7906 = sld [smem:[#allocation2 + $0x20e]]
        %7907 = vset.pattern.permute.xlu0 78
        %7908 = vperm.xlu0 %7907, %v841
        %v7909 = vpop.permute.xlu0 %7908
        %7911 = vset.pattern.permute.xlu0 78
        %7912 = vperm.xlu0 %7911, %v844
        %v7913 = vpop.permute.xlu0 %7912
        %7915 = vset.pattern.permute.xlu0 78
        %7916 = vperm.xlu0 %7915, %v847
        %v7917 = vpop.permute.xlu0 %7916
        %7919 = vset.pattern.permute.xlu0 78
        %7920 = vperm.xlu0 %7919, %v850
        %v7921 = vpop.permute.xlu0 %7920
        %7923 = vset.pattern.permute.xlu0 78
        %7924 = vperm.xlu0 %7923, %v853
        %v7925 = vpop.permute.xlu0 %7924
        %7927 = vset.pattern.permute.xlu0 78
        %7928 = vperm.xlu0 %7927, %v856
        %v7929 = vpop.permute.xlu0 %7928
        %7931 = vset.pattern.permute.xlu0 78
        %7932 = vperm.xlu0 %7931, %v859
        %v7933 = vpop.permute.xlu0 %7932
        %7935 = vset.pattern.permute.xlu0 78
        %7936 = vperm.xlu0 %7935, %v862
        %v7937 = vpop.permute.xlu0 %7936
        %v7939 = vperm.slane %v889, 6
        %v7940 = vadd.f32 %v7909, %v7939
        %v7941 = vadd.f32 %v7913, %v7939
        %v7942 = vadd.f32 %v7917, %v7939
        %v7943 = vadd.f32 %v7921, %v7939
        %v7944 = vadd.f32 %v7925, %v7939
        %v7945 = vadd.f32 %v7929, %v7939
        %v7946 = vadd.f32 %v7933, %v7939
        %v7947 = vadd.f32 %v7937, %v7939
        %v7948 = vmax.f32 %v7940, 0.0
        %v7949 = vmax.f32 %v7941, 0.0
        %v7950 = vmax.f32 %v7942, 0.0
        %v7951 = vmax.f32 %v7943, 0.0
        %v7952 = vmax.f32 %v7944, 0.0
        %v7953 = vmax.f32 %v7945, 0.0
        %v7954 = vmax.f32 %v7946, 0.0
        %v7955 = vmax.f32 %v7947, 0.0
        %v7956 = vstv %s7906
        %v7957 = vmul.f32 %v7956, %v7948
        %v7958 = vmul.f32 %v7956, %v7949
        %v7959 = vmul.f32 %v7956, %v7950
        %v7960 = vmul.f32 %v7956, %v7951
        %v7961 = vmul.f32 %v7956, %v7952
        %v7962 = vmul.f32 %v7956, %v7953
        %v7963 = vmul.f32 %v7956, %v7954
        %v7964 = vmul.f32 %v7956, %v7955
        %v7965 = vadd.f32 %v7898, %v7957
        %v7966 = vadd.f32 %v7899, %v7958
        %v7967 = vadd.f32 %v7900, %v7959
        %v7968 = vadd.f32 %v7901, %v7960
        %v7969 = vadd.f32 %v7902, %v7961
        %v7970 = vadd.f32 %v7903, %v7962
        %v7971 = vadd.f32 %v7904, %v7963
        %v7972 = vadd.f32 %v7905, %v7964
        %s7973 = sld [smem:[#allocation2 + $0x20f]]
        %7974 = vset.pattern.permute.xlu0 79
        %7975 = vperm.xlu0 %7974, %v841
        %v7976 = vpop.permute.xlu0 %7975
        %7978 = vset.pattern.permute.xlu0 79
        %7979 = vperm.xlu0 %7978, %v844
        %v7980 = vpop.permute.xlu0 %7979
        %7982 = vset.pattern.permute.xlu0 79
        %7983 = vperm.xlu0 %7982, %v847
        %v7984 = vpop.permute.xlu0 %7983
        %7986 = vset.pattern.permute.xlu0 79
        %7987 = vperm.xlu0 %7986, %v850
        %v7988 = vpop.permute.xlu0 %7987
        %7990 = vset.pattern.permute.xlu0 79
        %7991 = vperm.xlu0 %7990, %v853
        %v7992 = vpop.permute.xlu0 %7991
        %7994 = vset.pattern.permute.xlu0 79
        %7995 = vperm.xlu0 %7994, %v856
        %v7996 = vpop.permute.xlu0 %7995
        %7998 = vset.pattern.permute.xlu0 79
        %7999 = vperm.xlu0 %7998, %v859
        %v8000 = vpop.permute.xlu0 %7999
        %8002 = vset.pattern.permute.xlu0 79
        %8003 = vperm.xlu0 %8002, %v862
        %v8004 = vpop.permute.xlu0 %8003
        %v8006 = vperm.slane %v889, 7
        %v8007 = vadd.f32 %v7976, %v8006
        %v8008 = vadd.f32 %v7980, %v8006
        %v8009 = vadd.f32 %v7984, %v8006
        %v8010 = vadd.f32 %v7988, %v8006
        %v8011 = vadd.f32 %v7992, %v8006
        %v8012 = vadd.f32 %v7996, %v8006
        %v8013 = vadd.f32 %v8000, %v8006
        %v8014 = vadd.f32 %v8004, %v8006
        %v8015 = vmax.f32 %v8007, 0.0
        %v8016 = vmax.f32 %v8008, 0.0
        %v8017 = vmax.f32 %v8009, 0.0
        %v8018 = vmax.f32 %v8010, 0.0
        %v8019 = vmax.f32 %v8011, 0.0
        %v8020 = vmax.f32 %v8012, 0.0
        %v8021 = vmax.f32 %v8013, 0.0
        %v8022 = vmax.f32 %v8014, 0.0
        %v8023 = vstv %s7973
        %v8024 = vmul.f32 %v8023, %v8015
        %v8025 = vmul.f32 %v8023, %v8016
        %v8026 = vmul.f32 %v8023, %v8017
        %v8027 = vmul.f32 %v8023, %v8018
        %v8028 = vmul.f32 %v8023, %v8019
        %v8029 = vmul.f32 %v8023, %v8020
        %v8030 = vmul.f32 %v8023, %v8021
        %v8031 = vmul.f32 %v8023, %v8022
        %v8032 = vadd.f32 %v7965, %v8024
        %v8033 = vadd.f32 %v7966, %v8025
        %v8034 = vadd.f32 %v7967, %v8026
        %v8035 = vadd.f32 %v7968, %v8027
        %v8036 = vadd.f32 %v7969, %v8028
        %v8037 = vadd.f32 %v7970, %v8029
        %v8038 = vadd.f32 %v7971, %v8030
        %v8039 = vadd.f32 %v7972, %v8031
        %v8040 = vsel %vm1012, %v8032, -1e+30
        %v8041 = vsel %vm1013, %v8033, -1e+30
        %v8042 = vsel %vm1014, %v8034, -1e+30
        %v8043 = vsel %vm1015, %v8035, -1e+30
        %v8044 = vsel %vm1016, %v8036, -1e+30
        %v8045 = vsel %vm1017, %v8037, -1e+30
        %v8046 = vsel %vm1018, %v8038, -1e+30
        %v8047 = vsel %vm1019, %v8039, -1e+30
        %v8048 = vsel %vm2173, %v8040, -inf
        %8049 = vmax.xlane.f32.xlu0 %v8048
        %v8050 = vpop.xlane.xlu0 %8049
        %v8051 = vsel %vm2173, %v8041, -inf
        %8052 = vmax.xlane.f32.xlu0 %v8051
        %v8053 = vpop.xlane.xlu0 %8052
        %v8054 = vsel %vm2173, %v8042, -inf
        %8055 = vmax.xlane.f32.xlu0 %v8054
        %v8056 = vpop.xlane.xlu0 %8055
        %v8057 = vsel %vm2173, %v8043, -inf
        %8058 = vmax.xlane.f32.xlu0 %v8057
        %v8059 = vpop.xlane.xlu0 %8058
        %v8060 = vsel %vm2173, %v8044, -inf
        %8061 = vmax.xlane.f32.xlu0 %v8060
        %v8062 = vpop.xlane.xlu0 %8061
        %v8063 = vsel %vm2173, %v8045, -inf
        %8064 = vmax.xlane.f32.xlu0 %v8063
        %v8065 = vpop.xlane.xlu0 %8064
        %v8066 = vsel %vm2173, %v8046, -inf
        %8067 = vmax.xlane.f32.xlu0 %v8066
        %v8068 = vpop.xlane.xlu0 %8067
        %v8069 = vsel %vm2173, %v8047, -inf
        %8070 = vmax.xlane.f32.xlu0 %v8069
        %v8071 = vpop.xlane.xlu0 %8070
        %v8072 = vsub.f32 %v8040, %v8050
        %v8073 = vsub.f32 %v8041, %v8053
        %v8074 = vsub.f32 %v8042, %v8056
        %v8075 = vsub.f32 %v8043, %v8059
        %v8076 = vsub.f32 %v8044, %v8062
        %v8077 = vsub.f32 %v8045, %v8065
        %v8078 = vsub.f32 %v8046, %v8068
        %v8079 = vsub.f32 %v8047, %v8071
        %v8080 = vmul.f32 %v8072, 1.442695
        %v8081 = vpow.pop %v8080
        %v8082 = vmul.f32 %v8073, 1.442695
        %v8083 = vpow.pop %v8082
        %v8084 = vmul.f32 %v8074, 1.442695
        %v8085 = vpow.pop %v8084
        %v8086 = vmul.f32 %v8075, 1.442695
        %v8087 = vpow.pop %v8086
        %v8088 = vmul.f32 %v8076, 1.442695
        %v8089 = vpow.pop %v8088
        %v8090 = vmul.f32 %v8077, 1.442695
        %v8091 = vpow.pop %v8090
        %v8092 = vmul.f32 %v8078, 1.442695
        %v8093 = vpow.pop %v8092
        %v8094 = vmul.f32 %v8079, 1.442695
        %v8095 = vpow.pop %v8094
        %v8096 = vmul.f32 %v8081, %v1028
        %v8097 = vmul.f32 %v8083, %v1029
        %v8098 = vmul.f32 %v8085, %v1030
        %v8099 = vmul.f32 %v8087, %v1031
        %v8100 = vmul.f32 %v8089, %v1032
        %v8101 = vmul.f32 %v8091, %v1033
        %v8102 = vmul.f32 %v8093, %v1034
        %v8103 = vmul.f32 %v8095, %v1035
        %v8104 = vsel %vm2173, %v8096, 0.0
        %8105 = vadd.xlane.f32.xlu0 %v8104
        %v8106 = vpop.xlane.xlu0 %8105
        %v8107 = vsel %vm2173, %v8097, 0.0
        %8108 = vadd.xlane.f32.xlu0 %v8107
        %v8109 = vpop.xlane.xlu0 %8108
        %v8110 = vsel %vm2173, %v8098, 0.0
        %8111 = vadd.xlane.f32.xlu0 %v8110
        %v8112 = vpop.xlane.xlu0 %8111
        %v8113 = vsel %vm2173, %v8099, 0.0
        %8114 = vadd.xlane.f32.xlu0 %v8113
        %v8115 = vpop.xlane.xlu0 %8114
        %v8116 = vsel %vm2173, %v8100, 0.0
        %8117 = vadd.xlane.f32.xlu0 %v8116
        %v8118 = vpop.xlane.xlu0 %8117
        %v8119 = vsel %vm2173, %v8101, 0.0
        %8120 = vadd.xlane.f32.xlu0 %v8119
        %v8121 = vpop.xlane.xlu0 %8120
        %v8122 = vsel %vm2173, %v8102, 0.0
        %8123 = vadd.xlane.f32.xlu0 %v8122
        %v8124 = vpop.xlane.xlu0 %8123
        %v8125 = vsel %vm2173, %v8103, 0.0
        %8126 = vadd.xlane.f32.xlu0 %v8125
        %v8127 = vpop.xlane.xlu0 %8126
        %v8128 = vmax.f32 %v8106, 1e-16
        %v8129 = vmax.f32 %v8109, 1e-16
        %v8130 = vmax.f32 %v8112, 1e-16
        %v8131 = vmax.f32 %v8115, 1e-16
        %v8132 = vmax.f32 %v8118, 1e-16
        %v8133 = vmax.f32 %v8121, 1e-16
        %v8134 = vmax.f32 %v8124, 1e-16
        %v8135 = vmax.f32 %v8127, 1e-16
        %v8136 = vrcp.pop %v8128
        %v8137 = vmul.f32 %v8128, %v8136
        %v8138 = vsub.f32 1.0, %v8137
        %v8139 = vmul.f32 %v8136, %v8138
        %v8140 = vadd.f32 %v8136, %v8139
        %vm8141 = vweird.f32 %v8128
        %vm8142 = vweird.f32 %v8136
        %vm8143 = vmor %vm8141, %vm8142
        %v8144 = vsel %vm8143, %v8136, %v8140
        %v8145 = vand.u32 2147483647, %v8128
        %vm8146 = vcmp.eq.f32.partialorder %v8145, 8.507059e+37
        %v8147 = vand.u32 %v8128, 2147483648
        %v8148 = vor.u32 1.1754944e-38, %v8147
        %v8149 = vsel %vm8146, %v8148, %v8144
        %v8150 = vmul.f32 %v8096, %v8149
        %v8151 = vrcp.pop %v8129
        %v8152 = vmul.f32 %v8129, %v8151
        %v8153 = vsub.f32 1.0, %v8152
        %v8154 = vmul.f32 %v8151, %v8153
        %v8155 = vadd.f32 %v8151, %v8154
        %vm8156 = vweird.f32 %v8129
        %vm8157 = vweird.f32 %v8151
        %vm8158 = vmor %vm8156, %vm8157
        %v8159 = vsel %vm8158, %v8151, %v8155
        %v8160 = vand.u32 2147483647, %v8129
        %vm8161 = vcmp.eq.f32.partialorder %v8160, 8.507059e+37
        %v8162 = vand.u32 %v8129, 2147483648
        %v8163 = vor.u32 1.1754944e-38, %v8162
        %v8164 = vsel %vm8161, %v8163, %v8159
        %v8165 = vmul.f32 %v8097, %v8164
        %v8166 = vrcp.pop %v8130
        %v8167 = vmul.f32 %v8130, %v8166
        %v8168 = vsub.f32 1.0, %v8167
        %v8169 = vmul.f32 %v8166, %v8168
        %v8170 = vadd.f32 %v8166, %v8169
        %vm8171 = vweird.f32 %v8130
        %vm8172 = vweird.f32 %v8166
        %vm8173 = vmor %vm8171, %vm8172
        %v8174 = vsel %vm8173, %v8166, %v8170
        %v8175 = vand.u32 2147483647, %v8130
        %vm8176 = vcmp.eq.f32.partialorder %v8175, 8.507059e+37
        %v8177 = vand.u32 %v8130, 2147483648
        %v8178 = vor.u32 1.1754944e-38, %v8177
        %v8179 = vsel %vm8176, %v8178, %v8174
        %v8180 = vmul.f32 %v8098, %v8179
        %v8181 = vrcp.pop %v8131
        %v8182 = vmul.f32 %v8131, %v8181
        %v8183 = vsub.f32 1.0, %v8182
        %v8184 = vmul.f32 %v8181, %v8183
        %v8185 = vadd.f32 %v8181, %v8184
        %vm8186 = vweird.f32 %v8131
        %vm8187 = vweird.f32 %v8181
        %vm8188 = vmor %vm8186, %vm8187
        %v8189 = vsel %vm8188, %v8181, %v8185
        %v8190 = vand.u32 2147483647, %v8131
        %vm8191 = vcmp.eq.f32.partialorder %v8190, 8.507059e+37
        %v8192 = vand.u32 %v8131, 2147483648
        %v8193 = vor.u32 1.1754944e-38, %v8192
        %v8194 = vsel %vm8191, %v8193, %v8189
        %v8195 = vmul.f32 %v8099, %v8194
        %v8196 = vrcp.pop %v8132
        %v8197 = vmul.f32 %v8132, %v8196
        %v8198 = vsub.f32 1.0, %v8197
        %v8199 = vmul.f32 %v8196, %v8198
        %v8200 = vadd.f32 %v8196, %v8199
        %vm8201 = vweird.f32 %v8132
        %vm8202 = vweird.f32 %v8196
        %vm8203 = vmor %vm8201, %vm8202
        %v8204 = vsel %vm8203, %v8196, %v8200
        %v8205 = vand.u32 2147483647, %v8132
        %vm8206 = vcmp.eq.f32.partialorder %v8205, 8.507059e+37
        %v8207 = vand.u32 %v8132, 2147483648
        %v8208 = vor.u32 1.1754944e-38, %v8207
        %v8209 = vsel %vm8206, %v8208, %v8204
        %v8210 = vmul.f32 %v8100, %v8209
        %v8211 = vrcp.pop %v8133
        %v8212 = vmul.f32 %v8133, %v8211
        %v8213 = vsub.f32 1.0, %v8212
        %v8214 = vmul.f32 %v8211, %v8213
        %v8215 = vadd.f32 %v8211, %v8214
        %vm8216 = vweird.f32 %v8133
        %vm8217 = vweird.f32 %v8211
        %vm8218 = vmor %vm8216, %vm8217
        %v8219 = vsel %vm8218, %v8211, %v8215
        %v8220 = vand.u32 2147483647, %v8133
        %vm8221 = vcmp.eq.f32.partialorder %v8220, 8.507059e+37
        %v8222 = vand.u32 %v8133, 2147483648
        %v8223 = vor.u32 1.1754944e-38, %v8222
        %v8224 = vsel %vm8221, %v8223, %v8219
        %v8225 = vmul.f32 %v8101, %v8224
        %v8226 = vrcp.pop %v8134
        %v8227 = vmul.f32 %v8134, %v8226
        %v8228 = vsub.f32 1.0, %v8227
        %v8229 = vmul.f32 %v8226, %v8228
        %v8230 = vadd.f32 %v8226, %v8229
        %vm8231 = vweird.f32 %v8134
        %vm8232 = vweird.f32 %v8226
        %vm8233 = vmor %vm8231, %vm8232
        %v8234 = vsel %vm8233, %v8226, %v8230
        %v8235 = vand.u32 2147483647, %v8134
        %vm8236 = vcmp.eq.f32.partialorder %v8235, 8.507059e+37
        %v8237 = vand.u32 %v8134, 2147483648
        %v8238 = vor.u32 1.1754944e-38, %v8237
        %v8239 = vsel %vm8236, %v8238, %v8234
        %v8240 = vmul.f32 %v8102, %v8239
        %v8241 = vrcp.pop %v8135
        %v8242 = vmul.f32 %v8135, %v8241
        %v8243 = vsub.f32 1.0, %v8242
        %v8244 = vmul.f32 %v8241, %v8243
        %v8245 = vadd.f32 %v8241, %v8244
        %vm8246 = vweird.f32 %v8135
        %vm8247 = vweird.f32 %v8241
        %vm8248 = vmor %vm8246, %vm8247
        %v8249 = vsel %vm8248, %v8241, %v8245
        %v8250 = vand.u32 2147483647, %v8135
        %vm8251 = vcmp.eq.f32.partialorder %v8250, 8.507059e+37
        %v8252 = vand.u32 %v8135, 2147483648
        %v8253 = vor.u32 1.1754944e-38, %v8252
        %v8254 = vsel %vm8251, %v8253, %v8249
        %v8255 = vmul.f32 %v8103, %v8254
        %v8256 = vld [vmem:[%s13] sm:$0x1]
        %v8258 = vperm.slane %v8256, 0
        %8259 = vrot.lane.b32.xlu0 %v770, 64
        %v8260 = vpop.permute.xlu0 %8259
        %8261 = vrot.lane.b32.xlu0 %v773, 64
        %v8262 = vpop.permute.xlu0 %8261
        %8263 = vrot.lane.b32.xlu0 %v776, 64
        %v8264 = vpop.permute.xlu0 %8263
        %8265 = vrot.lane.b32.xlu0 %v779, 64
        %v8266 = vpop.permute.xlu0 %8265
        %8267 = vrot.lane.b32.xlu0 %v782, 64
        %v8268 = vpop.permute.xlu0 %8267
        %8269 = vrot.lane.b32.xlu0 %v785, 64
        %v8270 = vpop.permute.xlu0 %8269
        %8271 = vrot.lane.b32.xlu0 %v788, 64
        %v8272 = vpop.permute.xlu0 %8271
        %8273 = vrot.lane.b32.xlu0 %v791, 64
        %v8274 = vpop.permute.xlu0 %8273
        %8283 = vrot.lane.b32.xlu0 %v8258, 64
        %v8284 = vpop.permute.xlu0 %8283
        %v8287 = vsel %vm2173, %v8150, 0
        %v8290 = vsel %vm2173, %v8165, 0
        %v8293 = vsel %vm2173, %v8180, 0
        %v8296 = vsel %vm2173, %v8195, 0
        %v8299 = vsel %vm2173, %v8210, 0
        %v8302 = vsel %vm2173, %v8225, 0
        %v8305 = vsel %vm2173, %v8240, 0
        %v8308 = vsel %vm2173, %v8255, 0
        %8310 = vmatpush.msra.mxu0 0.0
        %8311 = vmatpush.msra.mxu0 0.0
        %8312 = vmatpush.msra.mxu0 0.0
        %8313 = vmatpush.msra.mxu0 0.0
        %8314 = vmatpush.msra.mxu0 0.0
        %8315 = vmatpush.msra.mxu0 0.0
        %8316 = vmatpush.msra.mxu0 0.0
        %8317 = vmatpush.msra.mxu0 0.0
        %8318 = vmatpush.msra.mxu0 %v8274
        %8319 = vmatpush.msra.mxu0 %v8272
        %8320 = vmatpush.msra.mxu0 %v8270
        %8321 = vmatpush.msra.mxu0 %v8268
        %8322 = vmatpush.msra.mxu0 %v8266
        %8323 = vmatpush.msra.mxu0 %v8264
        %8324 = vmatpush.msra.mxu0 %v8262
        %8325 = vmatpush.msra.mxu0 %v8260
        %8326 = vmatmul.f32.gmra.mxu0 %v8287
        %v8327 = vpop.f32.mrf.mxu0
        %v8328 = vadd.f32 %v8284, %v8327
        %8329 = vmatmul.f32.gmra.mxu0 %v8290
        %v8330 = vpop.f32.mrf.mxu0
        %v8331 = vadd.f32 %v8284, %v8330
        %8332 = vmatmul.f32.gmra.mxu0 %v8293
        %v8333 = vpop.f32.mrf.mxu0
        %v8334 = vadd.f32 %v8284, %v8333
        %8335 = vmatmul.f32.gmra.mxu0 %v8296
        %v8336 = vpop.f32.mrf.mxu0
        %v8337 = vadd.f32 %v8284, %v8336
        %8338 = vmatmul.f32.gmra.mxu0 %v8299
        %v8339 = vpop.f32.mrf.mxu0
        %v8340 = vadd.f32 %v8284, %v8339
        %8341 = vmatmul.f32.gmra.mxu0 %v8302
        %v8342 = vpop.f32.mrf.mxu0
        %v8343 = vadd.f32 %v8284, %v8342
        %8344 = vmatmul.f32.gmra.mxu0 %v8305
        %v8345 = vpop.f32.mrf.mxu0
        %v8346 = vadd.f32 %v8284, %v8345
        %8347 = vmatmul.f32.gmra.mxu0 %v8308
        %v8348 = vpop.f32.mrf.mxu0
        %v8349 = vadd.f32 %v8284, %v8348
        %8350 = vdwg.mxu0
        %v8351 = vmax.f32 %v8328, 0.0
        %v8352 = vmax.f32 %v8331, 0.0
        %v8353 = vmax.f32 %v8334, 0.0
        %v8354 = vmax.f32 %v8337, 0.0
        %v8355 = vmax.f32 %v8340, 0.0
        %v8356 = vmax.f32 %v8343, 0.0
        %v8357 = vmax.f32 %v8346, 0.0
        %v8358 = vmax.f32 %v8349, 0.0
        %8367 = vrot.lane.b32.xlu0 %v8351, 80
        %v8368 = vpop.permute.xlu0 %8367
        %8369 = vrot.lane.b32.xlu0 %v8352, 80
        %v8370 = vpop.permute.xlu0 %8369
        %8371 = vrot.lane.b32.xlu0 %v8353, 80
        %v8372 = vpop.permute.xlu0 %8371
        %8373 = vrot.lane.b32.xlu0 %v8354, 80
        %v8374 = vpop.permute.xlu0 %8373
        %8375 = vrot.lane.b32.xlu0 %v8355, 80
        %v8376 = vpop.permute.xlu0 %8375
        %8377 = vrot.lane.b32.xlu0 %v8356, 80
        %v8378 = vpop.permute.xlu0 %8377
        %8379 = vrot.lane.b32.xlu0 %v8357, 80
        %v8380 = vpop.permute.xlu0 %8379
        %8381 = vrot.lane.b32.xlu0 %v8358, 80
        %v8382 = vpop.permute.xlu0 %8381
        %vm8391 = vcmask 786048
        %8392 = vst.msk [vmem:[%s532] sm:$0xff] %vm8391, %v8368
        %8393 = vst.msk [vmem:[%s532 + $0x8] sm:$0xff] %vm8391, %v8370
        %8394 = vst.msk [vmem:[%s532 + $0x10] sm:$0xff] %vm8391, %v8372
        %8395 = vst.msk [vmem:[%s532 + $0x18] sm:$0xff] %vm8391, %v8374
        %8396 = vst.msk [vmem:[%s532 + $0x20] sm:$0xff] %vm8391, %v8376
        %8397 = vst.msk [vmem:[%s532 + $0x28] sm:$0xff] %vm8391, %v8378
        %8398 = vst.msk [vmem:[%s532 + $0x30] sm:$0xff] %vm8391, %v8380
        %8399 = vst.msk [vmem:[%s532 + $0x38] sm:$0xff] %vm8391, %v8382
        %s8400 = smul.u32 8, %s27
        %p8401 = scmp.lt.s32.totalorder %s8400, 15
        %s8402 = scalar_select %p8401, %s8400, 15
        %s8403 = smul.addr %s8402, 8
        %s8404 = scalar_lea.vmem %s15, %s8403
        // Predicated region
        $region85: #{tpu_custom_call.1} parent=79 // pred_check
          %p8405 = pneg %p370
        $region86: #{tpu_custom_call.1} parent=79 // pred_check_branch
          %8407 = sbr.rel (%p8405) target = $region88
        $region87: #{tpu_custom_call.1} parent=79 // pred_region
          %s8408 = smul.u32 8, %s27
        $region88: #{tpu_custom_call.1} parent=79 // pred_fallthru
          _
      $region80: #{tpu_custom_call.1} parent=5 // pred_fallthru
        _
      %p8409 = scmp.le.s32.totalorder 2, %s22
      // Predicated region
      $region89: #{tpu_custom_call.1} parent=5 // pred_check
        %p8410 = pneg %p8409
      $region90: #{tpu_custom_call.1} parent=5 // pred_check_branch
        %8412 = sbr.rel (%p8410) target = $region92
      $region91: #{tpu_custom_call.1} parent=5 // pred_region
        %s8413 = ssub.s32 %s22, 2
        // Predicated region
        $region93: #{tpu_custom_call.1} parent=91 // pred_check
          %p8414 = pneg %p376
        $region94: #{tpu_custom_call.1} parent=91 // pred_check_branch
          %8416 = sbr.rel (%p8414) target = $region96
        $region95: #{tpu_custom_call.1} parent=91 // pred_region
          %s8417 = smul.u32 8, %s28
          %p8418 = scmp.lt.s32.totalorder %s8417, 15
          %s8419 = scalar_select %p8418, %s8417, 15
          %s8420 = smul.addr %s8419, 8
          %s8421 = scalar_lea.vmem %s15, %s8420
        $region96: #{tpu_custom_call.1} parent=91 // pred_fallthru
          _
      $region92: #{tpu_custom_call.1} parent=5 // pred_fallthru
        _
    $region6: #{tpu_custom_call.1} parent=1 // loop_footer
      %s26 = sadd.s32 1, %s22
    $region7: #{tpu_custom_call.1} parent=1 // loop_footer_branch
      %21 = sbr.rel target = $region3
    $region8: #{tpu_custom_call.1} parent=1 // loop_exit
      _
    %8422 = vsyncpa [#allocation3], 1
    %s8423 = scalar_lea.sflag [#allocation3], 1
    %8424 = vsyncpa %s8423, 1

</llo_original>
